<compile_context>
chip_gen: v7x
topology: tpu7x:2x2x1
jax: 0.10.0
libtpu: 0.0.40
codegen_flags: <defaults>
</compile_context>

<pallas_src>
import functools

import jax
import jax.numpy as jnp
from jax import lax
from jax.experimental import pallas as pl
from jax.experimental.pallas import tpu as pltpu


def _round_up(x, m):
    return (x + m - 1) // m * m


# --------------------------- Pallas matmul kernel ---------------------------
def _matmul_bias_kernel(a_ref, b_ref, bias_ref, o_ref, acc_ref, *, relu):
    k = pl.program_id(2)

    @pl.when(k == 0)
    def _():
        acc_ref[...] = jnp.zeros_like(acc_ref)

    # bf16 x bf16 -> f32 accumulation on the MXU.
    acc_ref[...] += jnp.dot(a_ref[...], b_ref[...],
                            preferred_element_type=jnp.float32)

    @pl.when(k == pl.num_programs(2) - 1)
    def _():
        out = acc_ref[...] + bias_ref[...]
        if relu:
            out = jnp.maximum(out, 0.0)
        o_ref[...] = out.astype(o_ref.dtype)


def matmul_bias(a, b, bias, *, relu, out_dtype=jnp.bfloat16):
    """C = A @ B + bias (optional fused ReLU) on the MXU.

    A/B are fed to the MXU in bf16 (peak dtype on v5e/v6e/v7x, half the DMA
    bytes); the accumulator stays f32 in VMEM.  Tiles are 256-wide on N/K when
    shapes divide (fills the 2x256x256 MXU of v6e/v7x); when M yields a single
    tile, N is split into 128-wide tiles so v7x's two TensorCores both get work.
    """
    M, K = a.shape
    _, N = b.shape

    tm = min(256, _round_up(M, 16))
    Mp = _round_up(M, tm)
    tk = 256 if K > 128 else 128
    Kp = _round_up(K, tk)
    if N % 256 == 0 and Mp > tm:
        tn = 256
    else:
        tn = 128
    Np = _round_up(N, tn)

    a = a.astype(jnp.bfloat16)
    b = b.astype(jnp.bfloat16)
    bias = bias.astype(jnp.float32)
    if (Mp, Kp) != (M, K):
        a = jnp.pad(a, ((0, Mp - M), (0, Kp - K)))
    if (Kp, Np) != (K, N):
        b = jnp.pad(b, ((0, Kp - K), (0, Np - N)))
    if Np != N:
        bias = jnp.pad(bias, (0, Np - N))
    bias = bias.reshape(1, Np)

    out = pl.pallas_call(
        functools.partial(_matmul_bias_kernel, relu=relu),
        out_shape=jax.ShapeDtypeStruct((Mp, Np), out_dtype),
        grid_spec=pltpu.PrefetchScalarGridSpec(
            num_scalar_prefetch=0,
            grid=(Mp // tm, Np // tn, Kp // tk),
            in_specs=[
                pl.BlockSpec((tm, tk), lambda i, j, k: (i, k)),
                pl.BlockSpec((tk, tn), lambda i, j, k: (k, j)),
                pl.BlockSpec((1, tn), lambda i, j, k: (0, j)),
            ],
            out_specs=pl.BlockSpec((tm, tn), lambda i, j, k: (i, j)),
            scratch_shapes=[pltpu.VMEM((tm, tn), jnp.float32)],
        ),
        compiler_params=pltpu.CompilerParams(
            dimension_semantics=("parallel", "parallel", "arbitrary")),
    )(a, b, bias)
    if (Mp, Np) != (M, N):
        out = out[:M, :N]
    return out


# ------------------------ Pallas instance-norm kernels ----------------------
def _inorm_kernel(x_ref, o_ref, *, eps, relu):
    x = x_ref[...].astype(jnp.float32)            # (1, HW, tc)
    mean = jnp.mean(x, axis=1, keepdims=True)
    var = jnp.mean(jnp.square(x - mean), axis=1, keepdims=True)
    y = (x - mean) * lax.rsqrt(var + eps)
    if relu:
        y = jnp.maximum(y, 0.0)
    o_ref[...] = y.astype(o_ref.dtype)


def _inorm_residual_kernel(x_ref, res_ref, o_ref, *, eps):
    x = x_ref[...].astype(jnp.float32)
    mean = jnp.mean(x, axis=1, keepdims=True)
    var = jnp.mean(jnp.square(x - mean), axis=1, keepdims=True)
    y = (x - mean) * lax.rsqrt(var + eps)
    o_ref[...] = (res_ref[...].astype(jnp.float32) + y).astype(o_ref.dtype)


def instance_norm(x_nhwc, *, relu=False, residual=None, eps=1e-5):
    """InstanceNorm2d(affine=False), transpose-free on NHWC.

    The tensor is viewed as (N, H*W, C); statistics are reduced over the
    spatial axis (sublanes) in f32, channels stay lane-dense.  The grid tiles
    over (batch, channel-chunk) so no whole-array block is needed (fits v7x's
    64 MiB VMEM / v5e's scoped limit at realistic resolutions) and the two v7x
    TensorCores can split the work.  Optionally fuses ReLU or the residual add.
    """
    N, H, W, C = x_nhwc.shape
    L = H * W
    tc = 128 if C % 128 == 0 else C
    xr = x_nhwc.reshape(N, L, C)

    spec = pl.BlockSpec((1, L, tc), lambda n, c: (n, 0, c))
    common = dict(
        out_shape=jax.ShapeDtypeStruct((N, L, C), x_nhwc.dtype),
        grid=(N, C // tc),
        out_specs=spec,
        compiler_params=pltpu.CompilerParams(
            dimension_semantics=("parallel", "parallel")),
    )
    if residual is None:
        out = pl.pallas_call(
            functools.partial(_inorm_kernel, eps=eps, relu=relu),
            in_specs=[spec], **common)(xr)
    else:
        rr = residual.reshape(N, L, C)
        out = pl.pallas_call(
            functools.partial(_inorm_residual_kernel, eps=eps),
            in_specs=[spec, spec], **common)(xr, rr)
    return out.reshape(N, H, W, C)


# ------------------------------- conv helpers -------------------------------
def _im2col(x_nhwc, kh, kw, stride, dilation):
    # TODO(synk): fold the kh*kw tap loop into the matmul K grid axis with a
    # data-dependent index_map so the blown-up im2col tensor is never
    # materialized in HBM (currently only mitigated by keeping it in bf16).
    N, H, W, C = x_nhwc.shape
    oh = (H - dilation * (kh - 1) - 1) // stride + 1
    ow = (W - dilation * (kw - 1) - 1) // stride + 1
    cols = []
    for i in range(kh):
        for j in range(kw):
            cols.append(
                x_nhwc[:, i * dilation:i * dilation + stride * (oh - 1) + 1:stride,
                          j * dilation:j * dilation + stride * (ow - 1) + 1:stride, :])
    return jnp.concatenate(cols, axis=-1), oh, ow  # (N, oh, ow, kh*kw*C), bf16


def conv2d_mat(x_nhwc, bmat, bias, *, kh, kw, stride=1, dilation=1, relu=False):
    """Conv2d with a pre-transformed (kh*kw*Cin, Cout) bf16 weight matrix."""
    n, _, _, cin = x_nhwc.shape
    cols, oh, ow = _im2col(x_nhwc, kh, kw, stride, dilation)
    a = cols.reshape(n * oh * ow, kh * kw * cin)
    out = matmul_bias(a, bmat, bias, relu=relu)
    return out.reshape(n, oh, ow, bmat.shape[1])


_PHASES = ((0, 0), (0, 1), (1, 0), (1, 1))


def conv_transpose2d(x_nhwc, phase_mats, bias, *, relu=False):
    """ConvTranspose2d(k=4, s=2, p=1) via sub-pixel decomposition.

    Each output parity phase (r, s) is an ordinary 2x2 conv of the (1-padded)
    input with a pre-extracted sub-kernel; the four H x W phase outputs are
    interleaved (depth-to-space) into the 2H x 2W result.  No zero-dilated
    input, so no wasted MACs / im2col DMA on zeros.
    """
    N, H, W, _ = x_nhwc.shape
    cout = phase_mats[0].shape[1]
    xp = jnp.pad(x_nhwc, ((0, 0), (1, 1), (1, 1), (0, 0)))
    phase_outs = []
    for p, (r, s) in enumerate(_PHASES):
        xw = xp[:, r:r + H + 1, s:s + W + 1, :]
        phase_outs.append(
            conv2d_mat(xw, phase_mats[p], bias, kh=2, kw=2, relu=relu))
    o = jnp.stack(phase_outs, axis=3)                 # (N, H, W, 4, Cout)
    o = o.reshape(N, H, W, 2, 2, cout)
    o = jnp.transpose(o, (0, 1, 3, 2, 4, 5)).reshape(N, 2 * H, 2 * W, cout)
    return o


# ---------------------------------- params ----------------------------------
def init_params(key, residual_blocks=8):
    """PyTorch-layout parameters, init_weights('normal', 0.02)."""
    def normal(k, shape):
        return jax.random.normal(k, shape, jnp.float32) * 0.02

    keys = iter(jax.random.split(key, 3 + 2 * residual_blocks + 2))
    p = {
        "enc0_w": normal(next(keys), (64, 4, 7, 7)),    "enc0_b": jnp.zeros((64,), jnp.float32),
        "enc1_w": normal(next(keys), (128, 64, 4, 4)),  "enc1_b": jnp.zeros((128,), jnp.float32),
        "enc2_w": normal(next(keys), (256, 128, 4, 4)), "enc2_b": jnp.zeros((256,), jnp.float32),
    }
    blocks = []
    for _ in range(residual_blocks):
        blocks.append({
            "w1": normal(next(keys), (256, 256, 3, 3)), "b1": jnp.zeros((256,), jnp.float32),
            "w2": normal(next(keys), (256, 256, 3, 3)), "b2": jnp.zeros((256,), jnp.float32),
        })
    p["blocks"] = blocks
    # ConvTranspose2d weights in PyTorch layout (in_channels, out_channels, kh, kw)
    p["dec0_w"] = normal(next(keys), (256, 128, 4, 4)); p["dec0_b"] = jnp.zeros((128,), jnp.float32)
    p["dec1_w"] = normal(next(keys), (128, 64, 4, 4));  p["dec1_b"] = jnp.zeros((64,), jnp.float32)
    return p


def prepare_params(p):
    """One-time weight transform: im2col matrices in bf16, biases in f32."""
    def conv_mat(w_oihw):
        cout, cin, kh, kw = w_oihw.shape
        return (jnp.transpose(w_oihw, (2, 3, 1, 0))
                .reshape(kh * kw * cin, cout).astype(jnp.bfloat16))

    def convT_phase_mats(w_iohw):
        # Sub-kernel tap indices per output parity (derived from the stride-2,
        # pad-1, k=4 transposed conv): even phase uses taps (3,1), odd (2,0).
        idx = {0: jnp.array([3, 1]), 1: jnp.array([2, 0])}
        mats = []
        for r, s in _PHASES:
            k = jnp.take(jnp.take(w_iohw, idx[r], axis=2), idx[s], axis=3)
            mats.append(conv_mat(jnp.transpose(k, (1, 0, 2, 3))))  # -> OIHW 2x2
        return mats

    return {
        "enc0": {"w": conv_mat(p["enc0_w"]), "b": p["enc0_b"]},
        "enc1": {"w": conv_mat(p["enc1_w"]), "b": p["enc1_b"]},
        "enc2": {"w": conv_mat(p["enc2_w"]), "b": p["enc2_b"]},
        "blocks": [
            {"w1": conv_mat(blk["w1"]), "b1": blk["b1"],
             "w2": conv_mat(blk["w2"]), "b2": blk["b2"]}
            for blk in p["blocks"]
        ],
        "dec0": {"phases": convT_phase_mats(p["dec0_w"]), "b": p["dec0_b"]},
        "dec1": {"phases": convT_phase_mats(p["dec1_w"]), "b": p["dec1_b"]},
    }


# ---------------------------------- model -----------------------------------
def inpaint_generator_forward(x_nchw, params):
    """Forward of InpaintGenerator. Input NCHW (N,4,H,W) -> output NCHW (N,64,H,W)."""
    x = jnp.transpose(x_nchw, (0, 2, 3, 1)).astype(jnp.bfloat16)  # -> NHWC bf16

    # encoder0: ReflectionPad2d(3) -> Conv(4->64, k7) -> ReLU
    x = jnp.pad(x, ((0, 0), (3, 3), (3, 3), (0, 0)), mode="reflect")
    x = conv2d_mat(x, params["enc0"]["w"], params["enc0"]["b"], kh=7, kw=7, relu=True)

    # encoder1: Conv(64->128, k4, s2, p1) -> ReLU
    x = jnp.pad(x, ((0, 0), (1, 1), (1, 1), (0, 0)))
    x = conv2d_mat(x, params["enc1"]["w"], params["enc1"]["b"], kh=4, kw=4, stride=2, relu=True)

    # encoder2: Conv(128->256, k4, s2, p1) -> ReLU
    x = jnp.pad(x, ((0, 0), (1, 1), (1, 1), (0, 0)))
    x = conv2d_mat(x, params["enc2"]["w"], params["enc2"]["b"], kh=4, kw=4, stride=2, relu=True)

    # middle: 8 x ResnetBlock(256, dilation=2)
    for blk in params["blocks"]:
        y = jnp.pad(x, ((0, 0), (2, 2), (2, 2), (0, 0)), mode="reflect")
        y = conv2d_mat(y, blk["w1"], blk["b1"], kh=3, kw=3, dilation=2)
        y = instance_norm(y, relu=True)                      # IN + ReLU fused
        y = jnp.pad(y, ((0, 0), (1, 1), (1, 1), (0, 0)), mode="reflect")
        y = conv2d_mat(y, blk["w2"], blk["b2"], kh=3, kw=3)
        x = instance_norm(y, residual=x)                     # IN + residual add fused

    # decoder: ConvT(256->128, k4, s2, p1) -> ReLU -> ConvT(128->64, k4, s2, p1) -> ReLU
    x = conv_transpose2d(x, params["dec0"]["phases"], params["dec0"]["b"], relu=True)
    x = conv_transpose2d(x, params["dec1"]["phases"], params["dec1"]["b"], relu=True)

    return jnp.transpose(x.astype(jnp.float32), (0, 3, 1, 2))  # -> NCHW f32


if __name__ == "__main__":
    key = jax.random.PRNGKey(0)
    pkey, xkey = jax.random.split(key)
    params = prepare_params(init_params(pkey, residual_blocks=8))
    x = jax.random.normal(xkey, (2, 4, 16, 16), jnp.float32)  # NCHW, 4-channel input

    fwd = jax.jit(inpaint_generator_forward)
    out = jax.block_until_ready(fwd(x, params))

    assert out.shape == (2, 64, 16, 16), out.shape
    assert bool(jnp.all(jnp.isfinite(out)))
    print("KERNEL_OK")
</pallas_src>

<mosaic_0001>
module attributes {stable_mosaic.version = 11 : i64} {
  func.func @_matmul_bias_kernel(%arg0: i32, %arg1: i32, %arg2: i32, %arg3: memref<256x256xbf16, #tpu.memory_space<vmem>>, %arg4: memref<256x128xbf16, #tpu.memory_space<vmem>>, %arg5: memref<1x128xf32, #tpu.memory_space<vmem>>, %arg6: memref<256x128xbf16, #tpu.memory_space<vmem>>, %arg7: memref<256x128xf32, #tpu.memory_space<vmem>>) attributes {dimension_semantics = [#tpu.dimension_semantics<parallel>, #tpu.dimension_semantics<parallel>, #tpu.dimension_semantics<arbitrary>], iteration_bounds = array<i64: 2, 1, 1>, scalar_prefetch = 0 : i64, scratch_operands = 1 : i64, tpu.core_type = #tpu.core_type<tc>, window_params = [{transform_indices = @transform_0, window_bounds = array<i64: 256, 256>}, {transform_indices = @transform_1, window_bounds = array<i64: 256, 128>}, {transform_indices = @transform_2, window_bounds = array<i64: 1, 128>}, {transform_indices = @transform_3, window_bounds = array<i64: 256, 128>}]} {
    %c0_i32 = arith.constant 0 : i32
    %0 = arith.cmpi eq, %arg2, %c0_i32 : i32
    %1 = arith.extui %0 : i1 to i32
    %c0_i32_0 = arith.constant 0 : i32
    %2 = arith.cmpi ne, %1, %c0_i32_0 : i32
    scf.if %2 {
      %cst_10 = arith.constant 0.000000e+00 : f32
      %12 = vector.broadcast %cst_10 : f32 to vector<256x128xf32>
      %c0_11 = arith.constant 0 : index
      %c0_12 = arith.constant 0 : index
      %13 = vector.load %arg7[%c0_11, %c0_12] : memref<256x128xf32, #tpu.memory_space<vmem>>, vector<256x128xf32>
      tpu.vector_store %arg7[%c0_11, %c0_12], %12 {strides = array<i32>} : memref<256x128xf32, #tpu.memory_space<vmem>>, vector<256x128xf32>,
    } else {
    }
    %c0 = arith.constant 0 : index
    %c0_1 = arith.constant 0 : index
    %3 = vector.load %arg7[%c0, %c0_1] : memref<256x128xf32, #tpu.memory_space<vmem>>, vector<256x128xf32>
    %c0_2 = arith.constant 0 : index
    %c0_3 = arith.constant 0 : index
    %4 = vector.load %arg3[%c0_2, %c0_3] : memref<256x256xbf16, #tpu.memory_space<vmem>>, vector<256x256xbf16>
    %c0_4 = arith.constant 0 : index
    %c0_5 = arith.constant 0 : index
    %5 = vector.load %arg4[%c0_4, %c0_5] : memref<256x128xbf16, #tpu.memory_space<vmem>>, vector<256x128xbf16>
    %cst = arith.constant dense<0.000000e+00> : vector<256x128xf32>
    %6 = tpu.matmul %4, %5, %cst {dimension_numbers = #tpu.dot_dimension_numbers<[1], [0], [0], [1], [0, 0, 1, 1], [], []>} : vector<256x256xbf16>, vector<256x128xbf16>, vector<256x128xf32> -> vector<256x128xf32>
    %7 = arith.addf %3, %6 : vector<256x128xf32>
    %c0_6 = arith.constant 0 : index
    %c0_7 = arith.constant 0 : index
    %8 = vector.load %arg7[%c0_6, %c0_7] : memref<256x128xf32, #tpu.memory_space<vmem>>, vector<256x128xf32>
    tpu.vector_store %arg7[%c0_6, %c0_7], %7 {strides = array<i32>} : memref<256x128xf32, #tpu.memory_space<vmem>>, vector<256x128xf32>,
    %c0_i32_8 = arith.constant 0 : i32
    %9 = arith.cmpi eq, %arg2, %c0_i32_8 : i32
    %10 = arith.extui %9 : i1 to i32
    %c0_i32_9 = arith.constant 0 : i32
    %11 = arith.cmpi ne, %10, %c0_i32_9 : i32
    scf.if %11 {
      %c0_10 = arith.constant 0 : index
      %c0_11 = arith.constant 0 : index
      %12 = vector.load %arg7[%c0_10, %c0_11] : memref<256x128xf32, #tpu.memory_space<vmem>>, vector<256x128xf32>
      %c0_12 = arith.constant 0 : index
      %c0_13 = arith.constant 0 : index
      %13 = vector.load %arg5[%c0_12, %c0_13] : memref<1x128xf32, #tpu.memory_space<vmem>>, vector<1x128xf32>
      %14 = vector.broadcast %13 : vector<1x128xf32> to vector<256x128xf32>
      %15 = arith.addf %12, %14 : vector<256x128xf32>
      %cst_14 = arith.constant 0.000000e+00 : f32
      %16 = vector.broadcast %cst_14 : f32 to vector<256x128xf32>
      %17 = arith.maximumf %15, %16 : vector<256x128xf32>
      %18 = arith.truncf %17 : vector<256x128xf32> to vector<256x128xbf16>
      %c0_15 = arith.constant 0 : index
      %c0_16 = arith.constant 0 : index
      %19 = vector.load %arg6[%c0_15, %c0_16] : memref<256x128xbf16, #tpu.memory_space<vmem>>, vector<256x128xbf16>
      tpu.vector_store %arg6[%c0_15, %c0_16], %18 {strides = array<i32>} : memref<256x128xbf16, #tpu.memory_space<vmem>>, vector<256x128xbf16>,
    } else {
    }
    return
  }
  func.func @transform_0(%arg0: i32, %arg1: i32, %arg2: i32) -> (i32, i32) {
    %c0_i32 = arith.constant 0 : i32
    return %arg0, %arg2 : i32, i32
  }
  func.func @transform_1(%arg0: i32, %arg1: i32, %arg2: i32) -> (i32, i32) {
    %c0_i32 = arith.constant 0 : i32
    return %arg2, %arg1 : i32, i32
  }
  func.func @transform_2(%arg0: i32, %arg1: i32, %arg2: i32) -> (i32, i32) {
    %c0_i32 = arith.constant 0 : i32
    %c0_i32_0 = arith.constant 0 : i32
    return %c0_i32, %arg1 : i32, i32
  }
  func.func @transform_3(%arg0: i32, %arg1: i32, %arg2: i32) -> (i32, i32) {
    %c0_i32 = arith.constant 0 : i32
    return %arg0, %arg1 : i32, i32
  }
}

module attributes {stable_mosaic.version = 11 : i64} {
  func.func @_matmul_bias_kernel(%arg0: i32, %arg1: i32, %arg2: i32, %arg3: memref<128x256xbf16, #tpu.memory_space<vmem>>, %arg4: memref<256x128xbf16, #tpu.memory_space<vmem>>, %arg5: memref<1x128xf32, #tpu.memory_space<vmem>>, %arg6: memref<128x128xbf16, #tpu.memory_space<vmem>>, %arg7: memref<128x128xf32, #tpu.memory_space<vmem>>) attributes {dimension_semantics = [#tpu.dimension_semantics<parallel>, #tpu.dimension_semantics<parallel>, #tpu.dimension_semantics<arbitrary>], iteration_bounds = array<i64: 1, 1, 4>, scalar_prefetch = 0 : i64, scratch_operands = 1 : i64, tpu.core_type = #tpu.core_type<tc>, window_params = [{transform_indices = @transform_0, window_bounds = array<i64: 128, 256>}, {transform_indices = @transform_1, window_bounds = array<i64: 256, 128>}, {transform_indices = @transform_2, window_bounds = array<i64: 1, 128>}, {transform_indices = @transform_3, window_bounds = array<i64: 128, 128>}]} {
    %c0_i32 = arith.constant 0 : i32
    %0 = arith.cmpi eq, %arg2, %c0_i32 : i32
    %1 = arith.extui %0 : i1 to i32
    %c0_i32_0 = arith.constant 0 : i32
    %2 = arith.cmpi ne, %1, %c0_i32_0 : i32
    scf.if %2 {
      %cst_9 = arith.constant 0.000000e+00 : f32
      %12 = vector.broadcast %cst_9 : f32 to vector<128x128xf32>
      %c0_10 = arith.constant 0 : index
      %c0_11 = arith.constant 0 : index
      %13 = vector.load %arg7[%c0_10, %c0_11] : memref<128x128xf32, #tpu.memory_space<vmem>>, vector<128x128xf32>
      tpu.vector_store %arg7[%c0_10, %c0_11], %12 {strides = array<i32>} : memref<128x128xf32, #tpu.memory_space<vmem>>, vector<128x128xf32>,
    } else {
    }
    %c0 = arith.constant 0 : index
    %c0_1 = arith.constant 0 : index
    %3 = vector.load %arg7[%c0, %c0_1] : memref<128x128xf32, #tpu.memory_space<vmem>>, vector<128x128xf32>
    %c0_2 = arith.constant 0 : index
    %c0_3 = arith.constant 0 : index
    %4 = vector.load %arg3[%c0_2, %c0_3] : memref<128x256xbf16, #tpu.memory_space<vmem>>, vector<128x256xbf16>
    %c0_4 = arith.constant 0 : index
    %c0_5 = arith.constant 0 : index
    %5 = vector.load %arg4[%c0_4, %c0_5] : memref<256x128xbf16, #tpu.memory_space<vmem>>, vector<256x128xbf16>
    %cst = arith.constant dense<0.000000e+00> : vector<128x128xf32>
    %6 = tpu.matmul %4, %5, %cst {dimension_numbers = #tpu.dot_dimension_numbers<[1], [0], [0], [1], [0, 0, 1, 1], [], []>} : vector<128x256xbf16>, vector<256x128xbf16>, vector<128x128xf32> -> vector<128x128xf32>
    %7 = arith.addf %3, %6 : vector<128x128xf32>
    %c0_6 = arith.constant 0 : index
    %c0_7 = arith.constant 0 : index
    %8 = vector.load %arg7[%c0_6, %c0_7] : memref<128x128xf32, #tpu.memory_space<vmem>>, vector<128x128xf32>
    tpu.vector_store %arg7[%c0_6, %c0_7], %7 {strides = array<i32>} : memref<128x128xf32, #tpu.memory_space<vmem>>, vector<128x128xf32>,
    %c3_i32 = arith.constant 3 : i32
    %9 = arith.cmpi eq, %arg2, %c3_i32 : i32
    %10 = arith.extui %9 : i1 to i32
    %c0_i32_8 = arith.constant 0 : i32
    %11 = arith.cmpi ne, %10, %c0_i32_8 : i32
    scf.if %11 {
      %c0_9 = arith.constant 0 : index
      %c0_10 = arith.constant 0 : index
      %12 = vector.load %arg7[%c0_9, %c0_10] : memref<128x128xf32, #tpu.memory_space<vmem>>, vector<128x128xf32>
      %c0_11 = arith.constant 0 : index
      %c0_12 = arith.constant 0 : index
      %13 = vector.load %arg5[%c0_11, %c0_12] : memref<1x128xf32, #tpu.memory_space<vmem>>, vector<1x128xf32>
      %14 = vector.broadcast %13 : vector<1x128xf32> to vector<128x128xf32>
      %15 = arith.addf %12, %14 : vector<128x128xf32>
      %cst_13 = arith.constant 0.000000e+00 : f32
      %16 = vector.broadcast %cst_13 : f32 to vector<128x128xf32>
      %17 = arith.maximumf %15, %16 : vector<128x128xf32>
      %18 = arith.truncf %17 : vector<128x128xf32> to vector<128x128xbf16>
      %c0_14 = arith.constant 0 : index
      %c0_15 = arith.constant 0 : index
      %19 = vector.load %arg6[%c0_14, %c0_15] : memref<128x128xbf16, #tpu.memory_space<vmem>>, vector<128x128xbf16>
      tpu.vector_store %arg6[%c0_14, %c0_15], %18 {strides = array<i32>} : memref<128x128xbf16, #tpu.memory_space<vmem>>, vector<128x128xbf16>,
    } else {
    }
    return
  }
  func.func @transform_0(%arg0: i32, %arg1: i32, %arg2: i32) -> (i32, i32) {
    %c0_i32 = arith.constant 0 : i32
    return %arg0, %arg2 : i32, i32
  }
  func.func @transform_1(%arg0: i32, %arg1: i32, %arg2: i32) -> (i32, i32) {
    %c0_i32 = arith.constant 0 : i32
    return %arg2, %arg1 : i32, i32
  }
  func.func @transform_2(%arg0: i32, %arg1: i32, %arg2: i32) -> (i32, i32) {
    %c0_i32 = arith.constant 0 : i32
    %c0_i32_0 = arith.constant 0 : i32
    return %c0_i32, %arg1 : i32, i32
  }
  func.func @transform_3(%arg0: i32, %arg1: i32, %arg2: i32) -> (i32, i32) {
    %c0_i32 = arith.constant 0 : i32
    return %arg0, %arg1 : i32, i32
  }
}

module attributes {stable_mosaic.version = 11 : i64} {
  func.func @_matmul_bias_kernel(%arg0: i32, %arg1: i32, %arg2: i32, %arg3: memref<32x256xbf16, #tpu.memory_space<vmem>>, %arg4: memref<256x128xbf16, #tpu.memory_space<vmem>>, %arg5: memref<1x128xf32, #tpu.memory_space<vmem>>, %arg6: memref<32x128xbf16, #tpu.memory_space<vmem>>, %arg7: memref<32x128xf32, #tpu.memory_space<vmem>>) attributes {dimension_semantics = [#tpu.dimension_semantics<parallel>, #tpu.dimension_semantics<parallel>, #tpu.dimension_semantics<arbitrary>], iteration_bounds = array<i64: 1, 2, 8>, scalar_prefetch = 0 : i64, scratch_operands = 1 : i64, tpu.core_type = #tpu.core_type<tc>, window_params = [{transform_indices = @transform_0, window_bounds = array<i64: 32, 256>}, {transform_indices = @transform_1, window_bounds = array<i64: 256, 128>}, {transform_indices = @transform_2, window_bounds = array<i64: 1, 128>}, {transform_indices = @transform_3, window_bounds = array<i64: 32, 128>}]} {
    %c0_i32 = arith.constant 0 : i32
    %0 = arith.cmpi eq, %arg2, %c0_i32 : i32
    %1 = arith.extui %0 : i1 to i32
    %c0_i32_0 = arith.constant 0 : i32
    %2 = arith.cmpi ne, %1, %c0_i32_0 : i32
    scf.if %2 {
      %cst_9 = arith.constant 0.000000e+00 : f32
      %12 = vector.broadcast %cst_9 : f32 to vector<32x128xf32>
      %c0_10 = arith.constant 0 : index
      %c0_11 = arith.constant 0 : index
      %13 = vector.load %arg7[%c0_10, %c0_11] : memref<32x128xf32, #tpu.memory_space<vmem>>, vector<32x128xf32>
      tpu.vector_store %arg7[%c0_10, %c0_11], %12 {strides = array<i32>} : memref<32x128xf32, #tpu.memory_space<vmem>>, vector<32x128xf32>,
    } else {
    }
    %c0 = arith.constant 0 : index
    %c0_1 = arith.constant 0 : index
    %3 = vector.load %arg7[%c0, %c0_1] : memref<32x128xf32, #tpu.memory_space<vmem>>, vector<32x128xf32>
    %c0_2 = arith.constant 0 : index
    %c0_3 = arith.constant 0 : index
    %4 = vector.load %arg3[%c0_2, %c0_3] : memref<32x256xbf16, #tpu.memory_space<vmem>>, vector<32x256xbf16>
    %c0_4 = arith.constant 0 : index
    %c0_5 = arith.constant 0 : index
    %5 = vector.load %arg4[%c0_4, %c0_5] : memref<256x128xbf16, #tpu.memory_space<vmem>>, vector<256x128xbf16>
    %cst = arith.constant dense<0.000000e+00> : vector<32x128xf32>
    %6 = tpu.matmul %4, %5, %cst {dimension_numbers = #tpu.dot_dimension_numbers<[1], [0], [0], [1], [0, 0, 1, 1], [], []>} : vector<32x256xbf16>, vector<256x128xbf16>, vector<32x128xf32> -> vector<32x128xf32>
    %7 = arith.addf %3, %6 : vector<32x128xf32>
    %c0_6 = arith.constant 0 : index
    %c0_7 = arith.constant 0 : index
    %8 = vector.load %arg7[%c0_6, %c0_7] : memref<32x128xf32, #tpu.memory_space<vmem>>, vector<32x128xf32>
    tpu.vector_store %arg7[%c0_6, %c0_7], %7 {strides = array<i32>} : memref<32x128xf32, #tpu.memory_space<vmem>>, vector<32x128xf32>,
    %c7_i32 = arith.constant 7 : i32
    %9 = arith.cmpi eq, %arg2, %c7_i32 : i32
    %10 = arith.extui %9 : i1 to i32
    %c0_i32_8 = arith.constant 0 : i32
    %11 = arith.cmpi ne, %10, %c0_i32_8 : i32
    scf.if %11 {
      %c0_9 = arith.constant 0 : index
      %c0_10 = arith.constant 0 : index
      %12 = vector.load %arg7[%c0_9, %c0_10] : memref<32x128xf32, #tpu.memory_space<vmem>>, vector<32x128xf32>
      %c0_11 = arith.constant 0 : index
      %c0_12 = arith.constant 0 : index
      %13 = vector.load %arg5[%c0_11, %c0_12] : memref<1x128xf32, #tpu.memory_space<vmem>>, vector<1x128xf32>
      %14 = vector.broadcast %13 : vector<1x128xf32> to vector<32x128xf32>
      %15 = arith.addf %12, %14 : vector<32x128xf32>
      %cst_13 = arith.constant 0.000000e+00 : f32
      %16 = vector.broadcast %cst_13 : f32 to vector<32x128xf32>
      %17 = arith.maximumf %15, %16 : vector<32x128xf32>
      %18 = arith.truncf %17 : vector<32x128xf32> to vector<32x128xbf16>
      %c0_14 = arith.constant 0 : index
      %c0_15 = arith.constant 0 : index
      %19 = vector.load %arg6[%c0_14, %c0_15] : memref<32x128xbf16, #tpu.memory_space<vmem>>, vector<32x128xbf16>
      tpu.vector_store %arg6[%c0_14, %c0_15], %18 {strides = array<i32>} : memref<32x128xbf16, #tpu.memory_space<vmem>>, vector<32x128xbf16>,
    } else {
    }
    return
  }
  func.func @transform_0(%arg0: i32, %arg1: i32, %arg2: i32) -> (i32, i32) {
    %c0_i32 = arith.constant 0 : i32
    return %arg0, %arg2 : i32, i32
  }
  func.func @transform_1(%arg0: i32, %arg1: i32, %arg2: i32) -> (i32, i32) {
    %c0_i32 = arith.constant 0 : i32
    return %arg2, %arg1 : i32, i32
  }
  func.func @transform_2(%arg0: i32, %arg1: i32, %arg2: i32) -> (i32, i32) {
    %c0_i32 = arith.constant 0 : i32
    %c0_i32_0 = arith.constant 0 : i32
    return %c0_i32, %arg1 : i32, i32
  }
  func.func @transform_3(%arg0: i32, %arg1: i32, %arg2: i32) -> (i32, i32) {
    %c0_i32 = arith.constant 0 : i32
    return %arg0, %arg1 : i32, i32
  }
}

module attributes {stable_mosaic.version = 11 : i64} {
  func.func @_matmul_bias_kernel(%arg0: i32, %arg1: i32, %arg2: i32, %arg3: memref<32x256xbf16, #tpu.memory_space<vmem>>, %arg4: memref<256x128xbf16, #tpu.memory_space<vmem>>, %arg5: memref<1x128xf32, #tpu.memory_space<vmem>>, %arg6: memref<32x128xbf16, #tpu.memory_space<vmem>>, %arg7: memref<32x128xf32, #tpu.memory_space<vmem>>) attributes {dimension_semantics = [#tpu.dimension_semantics<parallel>, #tpu.dimension_semantics<parallel>, #tpu.dimension_semantics<arbitrary>], iteration_bounds = array<i64: 1, 2, 9>, scalar_prefetch = 0 : i64, scratch_operands = 1 : i64, tpu.core_type = #tpu.core_type<tc>, window_params = [{transform_indices = @transform_0, window_bounds = array<i64: 32, 256>}, {transform_indices = @transform_1, window_bounds = array<i64: 256, 128>}, {transform_indices = @transform_2, window_bounds = array<i64: 1, 128>}, {transform_indices = @transform_3, window_bounds = array<i64: 32, 128>}]} {
    %c0_i32 = arith.constant 0 : i32
    %0 = arith.cmpi eq, %arg2, %c0_i32 : i32
    %1 = arith.extui %0 : i1 to i32
    %c0_i32_0 = arith.constant 0 : i32
    %2 = arith.cmpi ne, %1, %c0_i32_0 : i32
    scf.if %2 {
      %cst_9 = arith.constant 0.000000e+00 : f32
      %12 = vector.broadcast %cst_9 : f32 to vector<32x128xf32>
      %c0_10 = arith.constant 0 : index
      %c0_11 = arith.constant 0 : index
      %13 = vector.load %arg7[%c0_10, %c0_11] : memref<32x128xf32, #tpu.memory_space<vmem>>, vector<32x128xf32>
      tpu.vector_store %arg7[%c0_10, %c0_11], %12 {strides = array<i32>} : memref<32x128xf32, #tpu.memory_space<vmem>>, vector<32x128xf32>,
    } else {
    }
    %c0 = arith.constant 0 : index
    %c0_1 = arith.constant 0 : index
    %3 = vector.load %arg7[%c0, %c0_1] : memref<32x128xf32, #tpu.memory_space<vmem>>, vector<32x128xf32>
    %c0_2 = arith.constant 0 : index
    %c0_3 = arith.constant 0 : index
    %4 = vector.load %arg3[%c0_2, %c0_3] : memref<32x256xbf16, #tpu.memory_space<vmem>>, vector<32x256xbf16>
    %c0_4 = arith.constant 0 : index
    %c0_5 = arith.constant 0 : index
    %5 = vector.load %arg4[%c0_4, %c0_5] : memref<256x128xbf16, #tpu.memory_space<vmem>>, vector<256x128xbf16>
    %cst = arith.constant dense<0.000000e+00> : vector<32x128xf32>
    %6 = tpu.matmul %4, %5, %cst {dimension_numbers = #tpu.dot_dimension_numbers<[1], [0], [0], [1], [0, 0, 1, 1], [], []>} : vector<32x256xbf16>, vector<256x128xbf16>, vector<32x128xf32> -> vector<32x128xf32>
    %7 = arith.addf %3, %6 : vector<32x128xf32>
    %c0_6 = arith.constant 0 : index
    %c0_7 = arith.constant 0 : index
    %8 = vector.load %arg7[%c0_6, %c0_7] : memref<32x128xf32, #tpu.memory_space<vmem>>, vector<32x128xf32>
    tpu.vector_store %arg7[%c0_6, %c0_7], %7 {strides = array<i32>} : memref<32x128xf32, #tpu.memory_space<vmem>>, vector<32x128xf32>,
    %c8_i32 = arith.constant 8 : i32
    %9 = arith.cmpi eq, %arg2, %c8_i32 : i32
    %10 = arith.extui %9 : i1 to i32
    %c0_i32_8 = arith.constant 0 : i32
    %11 = arith.cmpi ne, %10, %c0_i32_8 : i32
    scf.if %11 {
      %c0_9 = arith.constant 0 : index
      %c0_10 = arith.constant 0 : index
      %12 = vector.load %arg7[%c0_9, %c0_10] : memref<32x128xf32, #tpu.memory_space<vmem>>, vector<32x128xf32>
      %c0_11 = arith.constant 0 : index
      %c0_12 = arith.constant 0 : index
      %13 = vector.load %arg5[%c0_11, %c0_12] : memref<1x128xf32, #tpu.memory_space<vmem>>, vector<1x128xf32>
      %14 = vector.broadcast %13 : vector<1x128xf32> to vector<32x128xf32>
      %15 = arith.addf %12, %14 : vector<32x128xf32>
      %16 = arith.truncf %15 : vector<32x128xf32> to vector<32x128xbf16>
      %c0_13 = arith.constant 0 : index
      %c0_14 = arith.constant 0 : index
      %17 = vector.load %arg6[%c0_13, %c0_14] : memref<32x128xbf16, #tpu.memory_space<vmem>>, vector<32x128xbf16>
      tpu.vector_store %arg6[%c0_13, %c0_14], %16 {strides = array<i32>} : memref<32x128xbf16, #tpu.memory_space<vmem>>, vector<32x128xbf16>,
    } else {
    }
    return
  }
  func.func @transform_0(%arg0: i32, %arg1: i32, %arg2: i32) -> (i32, i32) {
    %c0_i32 = arith.constant 0 : i32
    return %arg0, %arg2 : i32, i32
  }
  func.func @transform_1(%arg0: i32, %arg1: i32, %arg2: i32) -> (i32, i32) {
    %c0_i32 = arith.constant 0 : i32
    return %arg2, %arg1 : i32, i32
  }
  func.func @transform_2(%arg0: i32, %arg1: i32, %arg2: i32) -> (i32, i32) {
    %c0_i32 = arith.constant 0 : i32
    %c0_i32_0 = arith.constant 0 : i32
    return %c0_i32, %arg1 : i32, i32
  }
  func.func @transform_3(%arg0: i32, %arg1: i32, %arg2: i32) -> (i32, i32) {
    %c0_i32 = arith.constant 0 : i32
    return %arg0, %arg1 : i32, i32
  }
}

module attributes {stable_mosaic.version = 11 : i64} {
  func.func @_inorm_kernel(%arg0: i32, %arg1: i32, %arg2: memref<1x16x128xbf16, #tpu.memory_space<vmem>>, %arg3: memref<1x16x128xbf16, #tpu.memory_space<vmem>>) attributes {dimension_semantics = [#tpu.dimension_semantics<parallel>, #tpu.dimension_semantics<parallel>], iteration_bounds = array<i64: 2, 2>, scalar_prefetch = 0 : i64, scratch_operands = 0 : i64, tpu.core_type = #tpu.core_type<tc>, window_params = [{transform_indices = @transform_0, window_bounds = array<i64: 1, 16, 128>}, {transform_indices = @transform_1, window_bounds = array<i64: 1, 16, 128>}]} {
    %c0 = arith.constant 0 : index
    %c0_0 = arith.constant 0 : index
    %c0_1 = arith.constant 0 : index
    %0 = vector.load %arg2[%c0, %c0_0, %c0_1] : memref<1x16x128xbf16, #tpu.memory_space<vmem>>, vector<1x16x128xbf16>
    %1 = arith.extf %0 : vector<1x16x128xbf16> to vector<1x16x128xf32>
    %cst = arith.constant dense<0.000000e+00> : vector<1x128xf32>
    %2 = vector.multi_reduction <add>, %1, %cst [1] : vector<1x16x128xf32> to vector<1x128xf32>
    %3 = vector.shape_cast %2 : vector<1x128xf32> to vector<1x1x128xf32>
    %cst_2 = arith.constant 1.600000e+01 : f32
    %4 = vector.broadcast %cst_2 : f32 to vector<1x1x128xf32>
    %5 = arith.divf %3, %4 : vector<1x1x128xf32>
    %6 = vector.broadcast %5 : vector<1x1x128xf32> to vector<1x16x128xf32>
    %7 = arith.subf %1, %6 : vector<1x16x128xf32>
    %8 = arith.mulf %7, %7 : vector<1x16x128xf32>
    %cst_3 = arith.constant dense<0.000000e+00> : vector<1x128xf32>
    %9 = vector.multi_reduction <add>, %8, %cst_3 [1] : vector<1x16x128xf32> to vector<1x128xf32>
    %10 = vector.shape_cast %9 : vector<1x128xf32> to vector<1x1x128xf32>
    %cst_4 = arith.constant 1.600000e+01 : f32
    %11 = vector.broadcast %cst_4 : f32 to vector<1x1x128xf32>
    %12 = arith.divf %10, %11 : vector<1x1x128xf32>
    %13 = vector.broadcast %5 : vector<1x1x128xf32> to vector<1x16x128xf32>
    %14 = arith.subf %1, %13 : vector<1x16x128xf32>
    %cst_5 = arith.constant 9.99999974E-6 : f32
    %15 = vector.broadcast %cst_5 : f32 to vector<1x1x128xf32>
    %16 = arith.addf %12, %15 : vector<1x1x128xf32>
    %17 = math.rsqrt %16 : vector<1x1x128xf32>
    %18 = vector.broadcast %17 : vector<1x1x128xf32> to vector<1x16x128xf32>
    %19 = arith.mulf %14, %18 : vector<1x16x128xf32>
    %cst_6 = arith.constant 0.000000e+00 : f32
    %20 = vector.broadcast %cst_6 : f32 to vector<1x16x128xf32>
    %21 = arith.maximumf %19, %20 : vector<1x16x128xf32>
    %22 = arith.truncf %21 : vector<1x16x128xf32> to vector<1x16x128xbf16>
    %c0_7 = arith.constant 0 : index
    %c0_8 = arith.constant 0 : index
    %c0_9 = arith.constant 0 : index
    %23 = vector.load %arg3[%c0_7, %c0_8, %c0_9] : memref<1x16x128xbf16, #tpu.memory_space<vmem>>, vector<1x16x128xbf16>
    tpu.vector_store %arg3[%c0_7, %c0_8, %c0_9], %22 {strides = array<i32>} : memref<1x16x128xbf16, #tpu.memory_space<vmem>>, vector<1x16x128xbf16>,
    return
  }
  func.func @transform_0(%arg0: i32, %arg1: i32) -> (i32, i32, i32) {
    %c0_i32 = arith.constant 0 : i32
    %c0_i32_0 = arith.constant 0 : i32
    return %arg0, %c0_i32, %arg1 : i32, i32, i32
  }
  func.func @transform_1(%arg0: i32, %arg1: i32) -> (i32, i32, i32) {
    %c0_i32 = arith.constant 0 : i32
    %c0_i32_0 = arith.constant 0 : i32
    return %arg0, %c0_i32, %arg1 : i32, i32, i32
  }
}

module attributes {stable_mosaic.version = 11 : i64} {
  func.func @_inorm_residual_kernel(%arg0: i32, %arg1: i32, %arg2: memref<1x16x128xbf16, #tpu.memory_space<vmem>>, %arg3: memref<1x16x128xbf16, #tpu.memory_space<vmem>>, %arg4: memref<1x16x128xbf16, #tpu.memory_space<vmem>>) attributes {dimension_semantics = [#tpu.dimension_semantics<parallel>, #tpu.dimension_semantics<parallel>], iteration_bounds = array<i64: 2, 2>, scalar_prefetch = 0 : i64, scratch_operands = 0 : i64, tpu.core_type = #tpu.core_type<tc>, window_params = [{transform_indices = @transform_0, window_bounds = array<i64: 1, 16, 128>}, {transform_indices = @transform_1, window_bounds = array<i64: 1, 16, 128>}, {transform_indices = @transform_2, window_bounds = array<i64: 1, 16, 128>}]} {
    %c0 = arith.constant 0 : index
    %c0_0 = arith.constant 0 : index
    %c0_1 = arith.constant 0 : index
    %0 = vector.load %arg2[%c0, %c0_0, %c0_1] : memref<1x16x128xbf16, #tpu.memory_space<vmem>>, vector<1x16x128xbf16>
    %1 = arith.extf %0 : vector<1x16x128xbf16> to vector<1x16x128xf32>
    %cst = arith.constant dense<0.000000e+00> : vector<1x128xf32>
    %2 = vector.multi_reduction <add>, %1, %cst [1] : vector<1x16x128xf32> to vector<1x128xf32>
    %3 = vector.shape_cast %2 : vector<1x128xf32> to vector<1x1x128xf32>
    %cst_2 = arith.constant 1.600000e+01 : f32
    %4 = vector.broadcast %cst_2 : f32 to vector<1x1x128xf32>
    %5 = arith.divf %3, %4 : vector<1x1x128xf32>
    %6 = vector.broadcast %5 : vector<1x1x128xf32> to vector<1x16x128xf32>
    %7 = arith.subf %1, %6 : vector<1x16x128xf32>
    %8 = arith.mulf %7, %7 : vector<1x16x128xf32>
    %cst_3 = arith.constant dense<0.000000e+00> : vector<1x128xf32>
    %9 = vector.multi_reduction <add>, %8, %cst_3 [1] : vector<1x16x128xf32> to vector<1x128xf32>
    %10 = vector.shape_cast %9 : vector<1x128xf32> to vector<1x1x128xf32>
    %cst_4 = arith.constant 1.600000e+01 : f32
    %11 = vector.broadcast %cst_4 : f32 to vector<1x1x128xf32>
    %12 = arith.divf %10, %11 : vector<1x1x128xf32>
    %13 = vector.broadcast %5 : vector<1x1x128xf32> to vector<1x16x128xf32>
    %14 = arith.subf %1, %13 : vector<1x16x128xf32>
    %cst_5 = arith.constant 9.99999974E-6 : f32
    %15 = vector.broadcast %cst_5 : f32 to vector<1x1x128xf32>
    %16 = arith.addf %12, %15 : vector<1x1x128xf32>
    %17 = math.rsqrt %16 : vector<1x1x128xf32>
    %18 = vector.broadcast %17 : vector<1x1x128xf32> to vector<1x16x128xf32>
    %19 = arith.mulf %14, %18 : vector<1x16x128xf32>
    %c0_6 = arith.constant 0 : index
    %c0_7 = arith.constant 0 : index
    %c0_8 = arith.constant 0 : index
    %20 = vector.load %arg3[%c0_6, %c0_7, %c0_8] : memref<1x16x128xbf16, #tpu.memory_space<vmem>>, vector<1x16x128xbf16>
    %21 = arith.extf %20 : vector<1x16x128xbf16> to vector<1x16x128xf32>
    %22 = arith.addf %21, %19 : vector<1x16x128xf32>
    %23 = arith.truncf %22 : vector<1x16x128xf32> to vector<1x16x128xbf16>
    %c0_9 = arith.constant 0 : index
    %c0_10 = arith.constant 0 : index
    %c0_11 = arith.constant 0 : index
    %24 = vector.load %arg4[%c0_9, %c0_10, %c0_11] : memref<1x16x128xbf16, #tpu.memory_space<vmem>>, vector<1x16x128xbf16>
    tpu.vector_store %arg4[%c0_9, %c0_10, %c0_11], %23 {strides = array<i32>} : memref<1x16x128xbf16, #tpu.memory_space<vmem>>, vector<1x16x128xbf16>,
    return
  }
  func.func @transform_0(%arg0: i32, %arg1: i32) -> (i32, i32, i32) {
    %c0_i32 = arith.constant 0 : i32
    %c0_i32_0 = arith.constant 0 : i32
    return %arg0, %c0_i32, %arg1 : i32, i32, i32
  }
  func.func @transform_1(%arg0: i32, %arg1: i32) -> (i32, i32, i32) {
    %c0_i32 = arith.constant 0 : i32
    %c0_i32_0 = arith.constant 0 : i32
    return %arg0, %c0_i32, %arg1 : i32, i32, i32
  }
  func.func @transform_2(%arg0: i32, %arg1: i32) -> (i32, i32, i32) {
    %c0_i32 = arith.constant 0 : i32
    %c0_i32_0 = arith.constant 0 : i32
    return %arg0, %c0_i32, %arg1 : i32, i32, i32
  }
}

module attributes {stable_mosaic.version = 11 : i64} {
  func.func @_matmul_bias_kernel(%arg0: i32, %arg1: i32, %arg2: i32, %arg3: memref<32x256xbf16, #tpu.memory_space<vmem>>, %arg4: memref<256x128xbf16, #tpu.memory_space<vmem>>, %arg5: memref<1x128xf32, #tpu.memory_space<vmem>>, %arg6: memref<32x128xbf16, #tpu.memory_space<vmem>>, %arg7: memref<32x128xf32, #tpu.memory_space<vmem>>) attributes {dimension_semantics = [#tpu.dimension_semantics<parallel>, #tpu.dimension_semantics<parallel>, #tpu.dimension_semantics<arbitrary>], iteration_bounds = array<i64: 1, 2, 9>, scalar_prefetch = 0 : i64, scratch_operands = 1 : i64, tpu.core_type = #tpu.core_type<tc>, window_params = [{transform_indices = @transform_0, window_bounds = array<i64: 32, 256>}, {transform_indices = @transform_1, window_bounds = array<i64: 256, 128>}, {transform_indices = @transform_2, window_bounds = array<i64: 1, 128>}, {transform_indices = @transform_3, window_bounds = array<i64: 32, 128>}]} {
    %c0_i32 = arith.constant 0 : i32
    %0 = arith.cmpi eq, %arg2, %c0_i32 : i32
    %1 = arith.extui %0 : i1 to i32
    %c0_i32_0 = arith.constant 0 : i32
    %2 = arith.cmpi ne, %1, %c0_i32_0 : i32
    scf.if %2 {
      %cst_9 = arith.constant 0.000000e+00 : f32
      %12 = vector.broadcast %cst_9 : f32 to vector<32x128xf32>
      %c0_10 = arith.constant 0 : index
      %c0_11 = arith.constant 0 : index
      %13 = vector.load %arg7[%c0_10, %c0_11] : memref<32x128xf32, #tpu.memory_space<vmem>>, vector<32x128xf32>
      tpu.vector_store %arg7[%c0_10, %c0_11], %12 {strides = array<i32>} : memref<32x128xf32, #tpu.memory_space<vmem>>, vector<32x128xf32>,
    } else {
    }
    %c0 = arith.constant 0 : index
    %c0_1 = arith.constant 0 : index
    %3 = vector.load %arg7[%c0, %c0_1] : memref<32x128xf32, #tpu.memory_space<vmem>>, vector<32x128xf32>
    %c0_2 = arith.constant 0 : index
    %c0_3 = arith.constant 0 : index
    %4 = vector.load %arg3[%c0_2, %c0_3] : memref<32x256xbf16, #tpu.memory_space<vmem>>, vector<32x256xbf16>
    %c0_4 = arith.constant 0 : index
    %c0_5 = arith.constant 0 : index
    %5 = vector.load %arg4[%c0_4, %c0_5] : memref<256x128xbf16, #tpu.memory_space<vmem>>, vector<256x128xbf16>
    %cst = arith.constant dense<0.000000e+00> : vector<32x128xf32>
    %6 = tpu.matmul %4, %5, %cst {dimension_numbers = #tpu.dot_dimension_numbers<[1], [0], [0], [1], [0, 0, 1, 1], [], []>} : vector<32x256xbf16>, vector<256x128xbf16>, vector<32x128xf32> -> vector<32x128xf32>
    %7 = arith.addf %3, %6 : vector<32x128xf32>
    %c0_6 = arith.constant 0 : index
    %c0_7 = arith.constant 0 : index
    %8 = vector.load %arg7[%c0_6, %c0_7] : memref<32x128xf32, #tpu.memory_space<vmem>>, vector<32x128xf32>
    tpu.vector_store %arg7[%c0_6, %c0_7], %7 {strides = array<i32>} : memref<32x128xf32, #tpu.memory_space<vmem>>, vector<32x128xf32>,
    %c8_i32 = arith.constant 8 : i32
    %9 = arith.cmpi eq, %arg2, %c8_i32 : i32
    %10 = arith.extui %9 : i1 to i32
    %c0_i32_8 = arith.constant 0 : i32
    %11 = arith.cmpi ne, %10, %c0_i32_8 : i32
    scf.if %11 {
      %c0_9 = arith.constant 0 : index
      %c0_10 = arith.constant 0 : index
      %12 = vector.load %arg7[%c0_9, %c0_10] : memref<32x128xf32, #tpu.memory_space<vmem>>, vector<32x128xf32>
      %c0_11 = arith.constant 0 : index
      %c0_12 = arith.constant 0 : index
      %13 = vector.load %arg5[%c0_11, %c0_12] : memref<1x128xf32, #tpu.memory_space<vmem>>, vector<1x128xf32>
      %14 = vector.broadcast %13 : vector<1x128xf32> to vector<32x128xf32>
      %15 = arith.addf %12, %14 : vector<32x128xf32>
      %16 = arith.truncf %15 : vector<32x128xf32> to vector<32x128xbf16>
      %c0_13 = arith.constant 0 : index
      %c0_14 = arith.constant 0 : index
      %17 = vector.load %arg6[%c0_13, %c0_14] : memref<32x128xbf16, #tpu.memory_space<vmem>>, vector<32x128xbf16>
      tpu.vector_store %arg6[%c0_13, %c0_14], %16 {strides = array<i32>} : memref<32x128xbf16, #tpu.memory_space<vmem>>, vector<32x128xbf16>,
    } else {
    }
    return
  }
  func.func @transform_0(%arg0: i32, %arg1: i32, %arg2: i32) -> (i32, i32) {
    %c0_i32 = arith.constant 0 : i32
    return %arg0, %arg2 : i32, i32
  }
  func.func @transform_1(%arg0: i32, %arg1: i32, %arg2: i32) -> (i32, i32) {
    %c0_i32 = arith.constant 0 : i32
    return %arg2, %arg1 : i32, i32
  }
  func.func @transform_2(%arg0: i32, %arg1: i32, %arg2: i32) -> (i32, i32) {
    %c0_i32 = arith.constant 0 : i32
    %c0_i32_0 = arith.constant 0 : i32
    return %c0_i32, %arg1 : i32, i32
  }
  func.func @transform_3(%arg0: i32, %arg1: i32, %arg2: i32) -> (i32, i32) {
    %c0_i32 = arith.constant 0 : i32
    return %arg0, %arg1 : i32, i32
  }
}

module attributes {stable_mosaic.version = 11 : i64} {
  func.func @_matmul_bias_kernel(%arg0: i32, %arg1: i32, %arg2: i32, %arg3: memref<32x256xbf16, #tpu.memory_space<vmem>>, %arg4: memref<256x128xbf16, #tpu.memory_space<vmem>>, %arg5: memref<1x128xf32, #tpu.memory_space<vmem>>, %arg6: memref<32x128xbf16, #tpu.memory_space<vmem>>, %arg7: memref<32x128xf32, #tpu.memory_space<vmem>>) attributes {dimension_semantics = [#tpu.dimension_semantics<parallel>, #tpu.dimension_semantics<parallel>, #tpu.dimension_semantics<arbitrary>], iteration_bounds = array<i64: 1, 1, 4>, scalar_prefetch = 0 : i64, scratch_operands = 1 : i64, tpu.core_type = #tpu.core_type<tc>, window_params = [{transform_indices = @transform_0, window_bounds = array<i64: 32, 256>}, {transform_indices = @transform_1, window_bounds = array<i64: 256, 128>}, {transform_indices = @transform_2, window_bounds = array<i64: 1, 128>}, {transform_indices = @transform_3, window_bounds = array<i64: 32, 128>}]} {
    %c0_i32 = arith.constant 0 : i32
    %0 = arith.cmpi eq, %arg2, %c0_i32 : i32
    %1 = arith.extui %0 : i1 to i32
    %c0_i32_0 = arith.constant 0 : i32
    %2 = arith.cmpi ne, %1, %c0_i32_0 : i32
    scf.if %2 {
      %cst_9 = arith.constant 0.000000e+00 : f32
      %12 = vector.broadcast %cst_9 : f32 to vector<32x128xf32>
      %c0_10 = arith.constant 0 : index
      %c0_11 = arith.constant 0 : index
      %13 = vector.load %arg7[%c0_10, %c0_11] : memref<32x128xf32, #tpu.memory_space<vmem>>, vector<32x128xf32>
      tpu.vector_store %arg7[%c0_10, %c0_11], %12 {strides = array<i32>} : memref<32x128xf32, #tpu.memory_space<vmem>>, vector<32x128xf32>,
    } else {
    }
    %c0 = arith.constant 0 : index
    %c0_1 = arith.constant 0 : index
    %3 = vector.load %arg7[%c0, %c0_1] : memref<32x128xf32, #tpu.memory_space<vmem>>, vector<32x128xf32>
    %c0_2 = arith.constant 0 : index
    %c0_3 = arith.constant 0 : index
    %4 = vector.load %arg3[%c0_2, %c0_3] : memref<32x256xbf16, #tpu.memory_space<vmem>>, vector<32x256xbf16>
    %c0_4 = arith.constant 0 : index
    %c0_5 = arith.constant 0 : index
    %5 = vector.load %arg4[%c0_4, %c0_5] : memref<256x128xbf16, #tpu.memory_space<vmem>>, vector<256x128xbf16>
    %cst = arith.constant dense<0.000000e+00> : vector<32x128xf32>
    %6 = tpu.matmul %4, %5, %cst {dimension_numbers = #tpu.dot_dimension_numbers<[1], [0], [0], [1], [0, 0, 1, 1], [], []>} : vector<32x256xbf16>, vector<256x128xbf16>, vector<32x128xf32> -> vector<32x128xf32>
    %7 = arith.addf %3, %6 : vector<32x128xf32>
    %c0_6 = arith.constant 0 : index
    %c0_7 = arith.constant 0 : index
    %8 = vector.load %arg7[%c0_6, %c0_7] : memref<32x128xf32, #tpu.memory_space<vmem>>, vector<32x128xf32>
    tpu.vector_store %arg7[%c0_6, %c0_7], %7 {strides = array<i32>} : memref<32x128xf32, #tpu.memory_space<vmem>>, vector<32x128xf32>,
    %c3_i32 = arith.constant 3 : i32
    %9 = arith.cmpi eq, %arg2, %c3_i32 : i32
    %10 = arith.extui %9 : i1 to i32
    %c0_i32_8 = arith.constant 0 : i32
    %11 = arith.cmpi ne, %10, %c0_i32_8 : i32
    scf.if %11 {
      %c0_9 = arith.constant 0 : index
      %c0_10 = arith.constant 0 : index
      %12 = vector.load %arg7[%c0_9, %c0_10] : memref<32x128xf32, #tpu.memory_space<vmem>>, vector<32x128xf32>
      %c0_11 = arith.constant 0 : index
      %c0_12 = arith.constant 0 : index
      %13 = vector.load %arg5[%c0_11, %c0_12] : memref<1x128xf32, #tpu.memory_space<vmem>>, vector<1x128xf32>
      %14 = vector.broadcast %13 : vector<1x128xf32> to vector<32x128xf32>
      %15 = arith.addf %12, %14 : vector<32x128xf32>
      %cst_13 = arith.constant 0.000000e+00 : f32
      %16 = vector.broadcast %cst_13 : f32 to vector<32x128xf32>
      %17 = arith.maximumf %15, %16 : vector<32x128xf32>
      %18 = arith.truncf %17 : vector<32x128xf32> to vector<32x128xbf16>
      %c0_14 = arith.constant 0 : index
      %c0_15 = arith.constant 0 : index
      %19 = vector.load %arg6[%c0_14, %c0_15] : memref<32x128xbf16, #tpu.memory_space<vmem>>, vector<32x128xbf16>
      tpu.vector_store %arg6[%c0_14, %c0_15], %18 {strides = array<i32>} : memref<32x128xbf16, #tpu.memory_space<vmem>>, vector<32x128xbf16>,
    } else {
    }
    return
  }
  func.func @transform_0(%arg0: i32, %arg1: i32, %arg2: i32) -> (i32, i32) {
    %c0_i32 = arith.constant 0 : i32
    return %arg0, %arg2 : i32, i32
  }
  func.func @transform_1(%arg0: i32, %arg1: i32, %arg2: i32) -> (i32, i32) {
    %c0_i32 = arith.constant 0 : i32
    return %arg2, %arg1 : i32, i32
  }
  func.func @transform_2(%arg0: i32, %arg1: i32, %arg2: i32) -> (i32, i32) {
    %c0_i32 = arith.constant 0 : i32
    %c0_i32_0 = arith.constant 0 : i32
    return %c0_i32, %arg1 : i32, i32
  }
  func.func @transform_3(%arg0: i32, %arg1: i32, %arg2: i32) -> (i32, i32) {
    %c0_i32 = arith.constant 0 : i32
    return %arg0, %arg1 : i32, i32
  }
}

module attributes {stable_mosaic.version = 11 : i64} {
  func.func @_matmul_bias_kernel(%arg0: i32, %arg1: i32, %arg2: i32, %arg3: memref<128x256xbf16, #tpu.memory_space<vmem>>, %arg4: memref<256x128xbf16, #tpu.memory_space<vmem>>, %arg5: memref<1x128xf32, #tpu.memory_space<vmem>>, %arg6: memref<128x128xbf16, #tpu.memory_space<vmem>>, %arg7: memref<128x128xf32, #tpu.memory_space<vmem>>) attributes {dimension_semantics = [#tpu.dimension_semantics<parallel>, #tpu.dimension_semantics<parallel>, #tpu.dimension_semantics<arbitrary>], iteration_bounds = array<i64: 1, 1, 2>, scalar_prefetch = 0 : i64, scratch_operands = 1 : i64, tpu.core_type = #tpu.core_type<tc>, window_params = [{transform_indices = @transform_0, window_bounds = array<i64: 128, 256>}, {transform_indices = @transform_1, window_bounds = array<i64: 256, 128>}, {transform_indices = @transform_2, window_bounds = array<i64: 1, 128>}, {transform_indices = @transform_3, window_bounds = array<i64: 128, 128>}]} {
    %c0_i32 = arith.constant 0 : i32
    %0 = arith.cmpi eq, %arg2, %c0_i32 : i32
    %1 = arith.extui %0 : i1 to i32
    %c0_i32_0 = arith.constant 0 : i32
    %2 = arith.cmpi ne, %1, %c0_i32_0 : i32
    scf.if %2 {
      %cst_9 = arith.constant 0.000000e+00 : f32
      %12 = vector.broadcast %cst_9 : f32 to vector<128x128xf32>
      %c0_10 = arith.constant 0 : index
      %c0_11 = arith.constant 0 : index
      %13 = vector.load %arg7[%c0_10, %c0_11] : memref<128x128xf32, #tpu.memory_space<vmem>>, vector<128x128xf32>
      tpu.vector_store %arg7[%c0_10, %c0_11], %12 {strides = array<i32>} : memref<128x128xf32, #tpu.memory_space<vmem>>, vector<128x128xf32>,
    } else {
    }
    %c0 = arith.constant 0 : index
    %c0_1 = arith.constant 0 : index
    %3 = vector.load %arg7[%c0, %c0_1] : memref<128x128xf32, #tpu.memory_space<vmem>>, vector<128x128xf32>
    %c0_2 = arith.constant 0 : index
    %c0_3 = arith.constant 0 : index
    %4 = vector.load %arg3[%c0_2, %c0_3] : memref<128x256xbf16, #tpu.memory_space<vmem>>, vector<128x256xbf16>
    %c0_4 = arith.constant 0 : index
    %c0_5 = arith.constant 0 : index
    %5 = vector.load %arg4[%c0_4, %c0_5] : memref<256x128xbf16, #tpu.memory_space<vmem>>, vector<256x128xbf16>
    %cst = arith.constant dense<0.000000e+00> : vector<128x128xf32>
    %6 = tpu.matmul %4, %5, %cst {dimension_numbers = #tpu.dot_dimension_numbers<[1], [0], [0], [1], [0, 0, 1, 1], [], []>} : vector<128x256xbf16>, vector<256x128xbf16>, vector<128x128xf32> -> vector<128x128xf32>
    %7 = arith.addf %3, %6 : vector<128x128xf32>
    %c0_6 = arith.constant 0 : index
    %c0_7 = arith.constant 0 : index
    %8 = vector.load %arg7[%c0_6, %c0_7] : memref<128x128xf32, #tpu.memory_space<vmem>>, vector<128x128xf32>
    tpu.vector_store %arg7[%c0_6, %c0_7], %7 {strides = array<i32>} : memref<128x128xf32, #tpu.memory_space<vmem>>, vector<128x128xf32>,
    %c1_i32 = arith.constant 1 : i32
    %9 = arith.cmpi eq, %arg2, %c1_i32 : i32
    %10 = arith.extui %9 : i1 to i32
    %c0_i32_8 = arith.constant 0 : i32
    %11 = arith.cmpi ne, %10, %c0_i32_8 : i32
    scf.if %11 {
      %c0_9 = arith.constant 0 : index
      %c0_10 = arith.constant 0 : index
      %12 = vector.load %arg7[%c0_9, %c0_10] : memref<128x128xf32, #tpu.memory_space<vmem>>, vector<128x128xf32>
      %c0_11 = arith.constant 0 : index
      %c0_12 = arith.constant 0 : index
      %13 = vector.load %arg5[%c0_11, %c0_12] : memref<1x128xf32, #tpu.memory_space<vmem>>, vector<1x128xf32>
      %14 = vector.broadcast %13 : vector<1x128xf32> to vector<128x128xf32>
      %15 = arith.addf %12, %14 : vector<128x128xf32>
      %cst_13 = arith.constant 0.000000e+00 : f32
      %16 = vector.broadcast %cst_13 : f32 to vector<128x128xf32>
      %17 = arith.maximumf %15, %16 : vector<128x128xf32>
      %18 = arith.truncf %17 : vector<128x128xf32> to vector<128x128xbf16>
      %c0_14 = arith.constant 0 : index
      %c0_15 = arith.constant 0 : index
      %19 = vector.load %arg6[%c0_14, %c0_15] : memref<128x128xbf16, #tpu.memory_space<vmem>>, vector<128x128xbf16>
      tpu.vector_store %arg6[%c0_14, %c0_15], %18 {strides = array<i32>} : memref<128x128xbf16, #tpu.memory_space<vmem>>, vector<128x128xbf16>,
    } else {
    }
    return
  }
  func.func @transform_0(%arg0: i32, %arg1: i32, %arg2: i32) -> (i32, i32) {
    %c0_i32 = arith.constant 0 : i32
    return %arg0, %arg2 : i32, i32
  }
  func.func @transform_1(%arg0: i32, %arg1: i32, %arg2: i32) -> (i32, i32) {
    %c0_i32 = arith.constant 0 : i32
    return %arg2, %arg1 : i32, i32
  }
  func.func @transform_2(%arg0: i32, %arg1: i32, %arg2: i32) -> (i32, i32) {
    %c0_i32 = arith.constant 0 : i32
    %c0_i32_0 = arith.constant 0 : i32
    return %c0_i32, %arg1 : i32, i32
  }
  func.func @transform_3(%arg0: i32, %arg1: i32, %arg2: i32) -> (i32, i32) {
    %c0_i32 = arith.constant 0 : i32
    return %arg0, %arg1 : i32, i32
  }
}

</mosaic_0001>

<llo_original>
// kernel: inpaint_generator_forward.43
$region0: #{inpaint_generator_forward.43}
  #allocation0 [shape = 'u32[]', space=smem, size = 0x4, offset = 0x4, fixed_abs, tag = 'smem constant byte address 0x4 - core index']
  #allocation1 [shape = 'u32[144,128]{1,0:T(1,128)}', space=vmem, size = 0x12000, scoped, tag = 'internal scratch']
  #allocation2 [shape = 'f32[256,128]{1,0:T(8,128)}', space=vmem, size = 0x20000, scoped, tag = 'scratch operand']
  %s0 = inlined_call_operand.vmem [shape: bf16[512,256], index: 0, kind: input, shape index: {}]
  %s1 = inlined_call_operand.vmem [shape: bf16[256,128], index: 1, kind: input, shape index: {}]
  %s2 = inlined_call_operand.vmem [shape: f32[1,128], index: 2, kind: input, shape index: {}]
  %s3 = inlined_call_operand.vmem [shape: bf16[512,128], index: 3, kind: output, shape index: {}]
  %s4 = sld [smem:[#allocation0]]
  $region53: #{inpaint_generator_forward.43} parent=0
    _
  %s6 = ssub.s32 1, %s4
  %s7 = scalar_select 0, %s6, %s4
  loop: start=0, step=1, limit=4
  $region2: #{inpaint_generator_forward.43} parent=0 // loop_pre_header
    _
  $region3: #{inpaint_generator_forward.43} parent=0 // loop_header
    %s9 = sphi 0, %s13
    %p10 = scmp.ge.s32.totalorder %s9, 4
    %s16 = sphi 0, %s35
    %s17 = sphi 0, %s31
    %s18 = sphi 0, %s27
    %s19 = sphi 0, %s16
    %s20 = sphi 0, %s17
    %s21 = sphi 0, %s18
    %s22 = sphi 0, %s19
    %s23 = sphi 0, %s20
    %s24 = sphi 0, %s21
    %s40 = sphi 0, %s42
    %s43 = sphi 0, %s40
    %s44 = sphi 0, %s43
    %s60 = sphi 0, %s44
    %s68 = sphi 0, %s70
    %s71 = sphi 0, %s68
    %s72 = sphi 0, %s71
    %s88 = sphi 0, %s72
    %s94 = sphi 0, %s96
    %s97 = sphi 0, %s94
    %s98 = sphi 0, %s97
    %s114 = sphi 0, %s98
    %s122 = sphi 0, %s124
    %s125 = sphi 0, %s122
    %s126 = sphi 0, %s125
    %s142 = sphi 0, %s126
  $region4: #{inpaint_generator_forward.43} parent=0 // loop_header_branch
    %12 = sbr.rel (%p10) target = $region8
  $region5: #{inpaint_generator_forward.43} parent=0 // loop_body
    %s14 = ssub.s32 %s9, 1
    %s15 = ssub.s32 %s9, 2
    %s25 = sadd.s32 1, %s18
    %p26 = scmp.ge.s32.totalorder %s25, 1
    %s27 = scalar_select %p26, 0, %s25
    %s28 = sadd.s32 1, %s17
    %s29 = scalar_select %p26, %s28, %s17
    %p30 = scmp.ge.s32.totalorder %s29, 1
    %s31 = scalar_select %p30, 0, %s29
    %s32 = sadd.s32 1, %s16
    %s33 = scalar_select %p30, %s32, %s16
    %p34 = scmp.ge.s32.totalorder %s33, 2
    %s35 = scalar_select %p34, 0, %s33
    %s36 = ssub.s32 %s16, %s35
    %s37 = ssub.s32 %s18, %s27
    %s38 = sor.u32 %s36, %s37
    %p39 = scmp.eq.s32.totalorder %s38, 0
    %s41 = sadd.s32 %s40, 1
    %s42 = scalar_select %p39, %s40, %s41
    %p45 = pneg %p39
    %p46 = scmp.eq.s32.totalorder %s9, 1
    %p47 = por %p45, %p46
    %p48 = scmp.ne.s32.totalorder %s40, %s43
    %p49 = scmp.eq.s32.totalorder %s9, 0
    %p50 = por %p48, %p49
    %p51 = scmp.ne.s32.totalorder %s40, %s43
    %p52 = scmp.eq.s32.totalorder %s14, 1
    %p53 = por %p51, %p52
    %p54 = scmp.ne.s32.totalorder %s43, %s44
    %p55 = scmp.eq.s32.totalorder %s14, 0
    %p56 = por %p54, %p55
    %p57 = scmp.ne.s32.totalorder %s43, %s44
    %p58 = scmp.eq.s32.totalorder %s15, 1
    %p59 = por %p57, %p58
    %p61 = scmp.ne.s32.totalorder %s44, %s60
    %p62 = scmp.eq.s32.totalorder %s15, 0
    %p63 = por %p61, %p62
    %s64 = ssub.s32 %s18, %s27
    %s65 = ssub.s32 %s17, %s31
    %s66 = sor.u32 %s64, %s65
    %p67 = scmp.eq.s32.totalorder %s66, 0
    %s69 = sadd.s32 %s68, 1
    %s70 = scalar_select %p67, %s68, %s69
    %p73 = pneg %p67
    %p74 = scmp.eq.s32.totalorder %s9, 1
    %p75 = por %p73, %p74
    %p76 = scmp.ne.s32.totalorder %s68, %s71
    %p77 = scmp.eq.s32.totalorder %s9, 0
    %p78 = por %p76, %p77
    %p79 = scmp.ne.s32.totalorder %s68, %s71
    %p80 = scmp.eq.s32.totalorder %s14, 1
    %p81 = por %p79, %p80
    %p82 = scmp.ne.s32.totalorder %s71, %s72
    %p83 = scmp.eq.s32.totalorder %s14, 0
    %p84 = por %p82, %p83
    %p85 = scmp.ne.s32.totalorder %s71, %s72
    %p86 = scmp.eq.s32.totalorder %s15, 1
    %p87 = por %p85, %p86
    %p89 = scmp.ne.s32.totalorder %s72, %s88
    %p90 = scmp.eq.s32.totalorder %s15, 0
    %p91 = por %p89, %p90
    %s92 = ssub.s32 %s17, %s31
    %p93 = scmp.eq.s32.totalorder %s92, 0
    %s95 = sadd.s32 %s94, 1
    %s96 = scalar_select %p93, %s94, %s95
    %p99 = pneg %p93
    %p100 = scmp.eq.s32.totalorder %s9, 1
    %p101 = por %p99, %p100
    %p102 = scmp.ne.s32.totalorder %s94, %s97
    %p103 = scmp.eq.s32.totalorder %s9, 0
    %p104 = por %p102, %p103
    %p105 = scmp.ne.s32.totalorder %s94, %s97
    %p106 = scmp.eq.s32.totalorder %s14, 1
    %p107 = por %p105, %p106
    %p108 = scmp.ne.s32.totalorder %s97, %s98
    %p109 = scmp.eq.s32.totalorder %s14, 0
    %p110 = por %p108, %p109
    %p111 = scmp.ne.s32.totalorder %s97, %s98
    %p112 = scmp.eq.s32.totalorder %s15, 1
    %p113 = por %p111, %p112
    %p115 = scmp.ne.s32.totalorder %s98, %s114
    %p116 = scmp.eq.s32.totalorder %s15, 0
    %p117 = por %p115, %p116
    %s118 = ssub.s32 %s16, %s35
    %s119 = ssub.s32 %s17, %s31
    %s120 = sor.u32 %s118, %s119
    %p121 = scmp.eq.s32.totalorder %s120, 0
    %s123 = sadd.s32 %s122, 1
    %s124 = scalar_select %p121, %s122, %s123
    %p127 = pneg %p121
    %p128 = scmp.eq.s32.totalorder %s9, 1
    %p129 = por %p127, %p128
    %p130 = scmp.ne.s32.totalorder %s122, %s125
    %p131 = scmp.eq.s32.totalorder %s9, 0
    %p132 = por %p130, %p131
    %p133 = scmp.ne.s32.totalorder %s122, %s125
    %p134 = scmp.eq.s32.totalorder %s14, 1
    %p135 = por %p133, %p134
    %p136 = scmp.ne.s32.totalorder %s125, %s126
    %p137 = scmp.eq.s32.totalorder %s14, 0
    %p138 = por %p136, %p137
    %p139 = scmp.ne.s32.totalorder %s125, %s126
    %p140 = scmp.eq.s32.totalorder %s15, 1
    %p141 = por %p139, %p140
    %p143 = scmp.ne.s32.totalorder %s126, %s142
    %p144 = scmp.eq.s32.totalorder %s15, 0
    %p145 = por %p143, %p144
    %p146 = scmp.le.s32.totalorder 1, %s9
    %p147 = scmp.lt.s32.totalorder %s9, 3
    %p148 = pnand %p146, %p147
    %p149 = pneg %p148
    // Predicated region
    $region9: #{inpaint_generator_forward.43} parent=5 // pred_check
      _
    $region10: #{inpaint_generator_forward.43} parent=5 // pred_check_branch
      %151 = sbr.rel (%p148) target = $region12
    $region11: #{inpaint_generator_forward.43} parent=5 // pred_region
      %s152 = ssub.s32 %s9, 1
      // Predicated region
      $region13: #{inpaint_generator_forward.43} parent=11 // pred_check
        %p153 = pneg %p84
      $region14: #{inpaint_generator_forward.43} parent=11 // pred_check_branch
        %155 = sbr.rel (%p153) target = $region16
      $region15: #{inpaint_generator_forward.43} parent=11 // pred_region
        %s156 = smul.u32 32, %s21
        %p157 = scmp.lt.s32.totalorder %s156, 31
        %s158 = scalar_select %p157, %s156, 31
        %p159 = scmp.lt.s32.totalorder %s20, 0
        %s160 = scalar_select %p159, %s20, 0
        %s161 = sadd.s32 %s160, %s158
        %s162 = smul.addr %s161, 4
        %s163 = scalar_lea.vmem %s1, %s162
        %s164 = smul.u32 32, %s21
      $region16: #{inpaint_generator_forward.43} parent=11 // pred_fallthru
        _
      // Predicated region
      $region17: #{inpaint_generator_forward.43} parent=11 // pred_check
        %p165 = pneg %p110
      $region18: #{inpaint_generator_forward.43} parent=11 // pred_check_branch
        %167 = sbr.rel (%p165) target = $region20
      $region19: #{inpaint_generator_forward.43} parent=11 // pred_region
        %p168 = scmp.lt.s32.totalorder %s20, 0
        %s169 = scalar_select %p168, %s20, 0
        %s170 = scalar_lea.vmem %s2, %s169
      $region20: #{inpaint_generator_forward.43} parent=11 // pred_fallthru
        _
    $region12: #{inpaint_generator_forward.43} parent=5 // pred_fallthru
      _
    %p171 = scmp.lt.s32.totalorder %s9, 2
    // Predicated region
    $region21: #{inpaint_generator_forward.43} parent=5 // pred_check
      %p172 = pneg %p171
    $region22: #{inpaint_generator_forward.43} parent=5 // pred_check_branch
      %174 = sbr.rel (%p172) target = $region24
    $region23: #{inpaint_generator_forward.43} parent=5 // pred_region
      // Predicated region
      $region25: #{inpaint_generator_forward.43} parent=23 // pred_check
        %p175 = pneg %p50
      $region26: #{inpaint_generator_forward.43} parent=23 // pred_check_branch
        %177 = sbr.rel (%p175) target = $region28
      $region27: #{inpaint_generator_forward.43} parent=23 // pred_region
        %s178 = smul.u32 32, %s16
        %s179 = smul.u32 2, %s18
        %p180 = scmp.lt.s32.totalorder %s178, 63
        %s181 = scalar_select %p180, %s178, 63
        %p182 = scmp.lt.s32.totalorder %s179, 1
        %s183 = scalar_select %p182, %s179, 1
        %s184 = smul.addr %s181, 2
        %s185 = sadd.s32 %s183, %s184
        %s186 = smul.addr %s185, 4
        %s187 = scalar_lea.vmem %s0, %s186
        %s188 = smul.u32 32, %s16
        %s189 = smul.u32 2, %s18
      $region28: #{inpaint_generator_forward.43} parent=23 // pred_fallthru
        _
    $region24: #{inpaint_generator_forward.43} parent=5 // pred_fallthru
      _
    %p190 = scmp.le.s32.totalorder 1, %s9
    %p191 = scmp.lt.s32.totalorder %s9, 3
    %p192 = pnand %p190, %p191
    %p193 = pneg %p192
    // Predicated region
    $region29: #{inpaint_generator_forward.43} parent=5 // pred_check
      _
    $region30: #{inpaint_generator_forward.43} parent=5 // pred_check_branch
      %195 = sbr.rel (%p192) target = $region32
    $region31: #{inpaint_generator_forward.43} parent=5 // pred_region
      %s196 = ssub.s32 %s9, 1
      %s197 = smul.u32 32, %s19
      %s198 = smul.u32 2, %s21
      %p199 = scmp.lt.s32.totalorder %s197, 63
      %s200 = scalar_select %p199, %s197, 63
      %p201 = scmp.lt.s32.totalorder %s198, 1
      %s202 = scalar_select %p201, %s198, 1
      %s203 = smul.addr %s200, 2
      %s204 = sadd.s32 %s202, %s203
      %s205 = smul.addr %s204, 4
      %s206 = scalar_lea.vmem %s0, %s205
      %p207 = pneg %p56
      %p208 = pneg %p53
      %s209 = smul.u32 32, %s21
      %p210 = scmp.lt.s32.totalorder %s209, 31
      %s211 = scalar_select %p210, %s209, 31
      %p212 = scmp.lt.s32.totalorder %s20, 0
      %s213 = scalar_select %p212, %s20, 0
      %s214 = sadd.s32 %s213, %s211
      %s215 = smul.addr %s214, 4
      %s216 = scalar_lea.vmem %s1, %s215
      %p217 = pneg %p84
      %p218 = pneg %p81
      %p219 = scmp.lt.s32.totalorder %s20, 0
      %s220 = scalar_select %p219, %s20, 0
      %s221 = scalar_lea.vmem %s2, %s220
      %p222 = pneg %p110
      %p223 = pneg %p107
      %p224 = pneg %p138
      %p225 = pneg %p135
      %s226 = smul.u32 32, %s19
      %p227 = scmp.lt.s32.totalorder %s226, 63
      %s228 = scalar_select %p227, %s226, 63
      %p229 = scmp.lt.s32.totalorder %s20, 0
      %s230 = scalar_select %p229, %s20, 0
      %s231 = sadd.s32 %s230, %s228
      %s232 = smul.addr %s231, 4
      %s233 = scalar_lea.vmem %s3, %s232
      %s234 = smul.u32 32, %s19
      %s235 = smul.u32 2, %s21
      %p236 = scmp.lt.s32.totalorder %s234, 63
      %s237 = scalar_select %p236, %s234, 63
      %p238 = scmp.lt.s32.totalorder %s235, 1
      %s239 = scalar_select %p238, %s235, 1
      %s240 = smul.addr %s237, 2
      %s241 = sadd.s32 %s239, %s240
      %s242 = smul.addr %s241, 4
      %s243 = scalar_lea.vmem %s0, %s242
      %s244 = smul.u32 32, %s19
      %s245 = smul.u32 2, %s21
      %s246 = smul.u32 32, %s21
      %p247 = scmp.lt.s32.totalorder %s246, 31
      %s248 = scalar_select %p247, %s246, 31
      %p249 = scmp.lt.s32.totalorder %s20, 0
      %s250 = scalar_select %p249, %s20, 0
      %s251 = sadd.s32 %s250, %s248
      %s252 = smul.addr %s251, 4
      %s253 = scalar_lea.vmem %s1, %s252
      %s254 = smul.u32 32, %s21
      %p255 = scmp.lt.s32.totalorder %s20, 0
      %s256 = scalar_select %p255, %s20, 0
      %s257 = scalar_lea.vmem %s2, %s256
      %s258 = smul.u32 32, %s19
      %p259 = scmp.lt.s32.totalorder %s258, 63
      %s260 = scalar_select %p259, %s258, 63
      %p261 = scmp.lt.s32.totalorder %s20, 0
      %s262 = scalar_select %p261, %s20, 0
      %s263 = sadd.s32 %s262, %s260
      %s264 = smul.addr %s263, 4
      %s265 = scalar_lea.vmem %s3, %s264
      %s266 = smul.u32 32, %s19
      %p268 = scmp.eq.s32.totalorder %s21, 0
      // Predicated region
      $region33: #{inpaint_generator_forward.43} parent=31 // pred_check
        %p269 = pneg %p268
      $region34: #{inpaint_generator_forward.43} parent=31 // pred_check_branch
        %271 = sbr.rel (%p269) target = $region36
      $region35: #{inpaint_generator_forward.43} parent=31 // pred_region
        %272 = vst [vmem:[#allocation2] sm:$0xff] 0.0
        %273 = vst [vmem:[#allocation2 + $0x8] sm:$0xff] 0.0
        %274 = vst [vmem:[#allocation2 + $0x10] sm:$0xff] 0.0
        %275 = vst [vmem:[#allocation2 + $0x18] sm:$0xff] 0.0
        %276 = vst [vmem:[#allocation2 + $0x20] sm:$0xff] 0.0
        %277 = vst [vmem:[#allocation2 + $0x28] sm:$0xff] 0.0
        %278 = vst [vmem:[#allocation2 + $0x30] sm:$0xff] 0.0
        %279 = vst [vmem:[#allocation2 + $0x38] sm:$0xff] 0.0
        %280 = vst [vmem:[#allocation2 + $0x40] sm:$0xff] 0.0
        %281 = vst [vmem:[#allocation2 + $0x48] sm:$0xff] 0.0
        %282 = vst [vmem:[#allocation2 + $0x50] sm:$0xff] 0.0
        %283 = vst [vmem:[#allocation2 + $0x58] sm:$0xff] 0.0
        %284 = vst [vmem:[#allocation2 + $0x60] sm:$0xff] 0.0
        %285 = vst [vmem:[#allocation2 + $0x68] sm:$0xff] 0.0
        %286 = vst [vmem:[#allocation2 + $0x70] sm:$0xff] 0.0
        %287 = vst [vmem:[#allocation2 + $0x78] sm:$0xff] 0.0
        %288 = vst [vmem:[#allocation2 + $0x80] sm:$0xff] 0.0
        %289 = vst [vmem:[#allocation2 + $0x88] sm:$0xff] 0.0
        %290 = vst [vmem:[#allocation2 + $0x90] sm:$0xff] 0.0
        %291 = vst [vmem:[#allocation2 + $0x98] sm:$0xff] 0.0
        %292 = vst [vmem:[#allocation2 + $0xa0] sm:$0xff] 0.0
        %293 = vst [vmem:[#allocation2 + $0xa8] sm:$0xff] 0.0
        %294 = vst [vmem:[#allocation2 + $0xb0] sm:$0xff] 0.0
        %295 = vst [vmem:[#allocation2 + $0xb8] sm:$0xff] 0.0
        %296 = vst [vmem:[#allocation2 + $0xc0] sm:$0xff] 0.0
        %297 = vst [vmem:[#allocation2 + $0xc8] sm:$0xff] 0.0
        %298 = vst [vmem:[#allocation2 + $0xd0] sm:$0xff] 0.0
        %299 = vst [vmem:[#allocation2 + $0xd8] sm:$0xff] 0.0
        %300 = vst [vmem:[#allocation2 + $0xe0] sm:$0xff] 0.0
        %301 = vst [vmem:[#allocation2 + $0xe8] sm:$0xff] 0.0
        %302 = vst [vmem:[#allocation2 + $0xf0] sm:$0xff] 0.0
        %303 = vst [vmem:[#allocation2 + $0xf8] sm:$0xff] 0.0
      $region36: #{inpaint_generator_forward.43} parent=31 // pred_fallthru
        _
      %v304 = vld [vmem:[#allocation2] sm:$0xff]
      %v305 = vld [vmem:[#allocation2 + $0x8] sm:$0xff]
      %v306 = vld [vmem:[#allocation2 + $0x10] sm:$0xff]
      %v307 = vld [vmem:[#allocation2 + $0x18] sm:$0xff]
      %v308 = vld [vmem:[#allocation2 + $0x20] sm:$0xff]
      %v309 = vld [vmem:[#allocation2 + $0x28] sm:$0xff]
      %v310 = vld [vmem:[#allocation2 + $0x30] sm:$0xff]
      %v311 = vld [vmem:[#allocation2 + $0x38] sm:$0xff]
      %v312 = vld [vmem:[#allocation2 + $0x40] sm:$0xff]
      %v313 = vld [vmem:[#allocation2 + $0x48] sm:$0xff]
      %v314 = vld [vmem:[#allocation2 + $0x50] sm:$0xff]
      %v315 = vld [vmem:[#allocation2 + $0x58] sm:$0xff]
      %v316 = vld [vmem:[#allocation2 + $0x60] sm:$0xff]
      %v317 = vld [vmem:[#allocation2 + $0x68] sm:$0xff]
      %v318 = vld [vmem:[#allocation2 + $0x70] sm:$0xff]
      %v319 = vld [vmem:[#allocation2 + $0x78] sm:$0xff]
      %v320 = vld [vmem:[#allocation2 + $0x80] sm:$0xff]
      %v321 = vld [vmem:[#allocation2 + $0x88] sm:$0xff]
      %v322 = vld [vmem:[#allocation2 + $0x90] sm:$0xff]
      %v323 = vld [vmem:[#allocation2 + $0x98] sm:$0xff]
      %v324 = vld [vmem:[#allocation2 + $0xa0] sm:$0xff]
      %v325 = vld [vmem:[#allocation2 + $0xa8] sm:$0xff]
      %v326 = vld [vmem:[#allocation2 + $0xb0] sm:$0xff]
      %v327 = vld [vmem:[#allocation2 + $0xb8] sm:$0xff]
      %v328 = vld [vmem:[#allocation2 + $0xc0] sm:$0xff]
      %v329 = vld [vmem:[#allocation2 + $0xc8] sm:$0xff]
      %v330 = vld [vmem:[#allocation2 + $0xd0] sm:$0xff]
      %v331 = vld [vmem:[#allocation2 + $0xd8] sm:$0xff]
      %v332 = vld [vmem:[#allocation2 + $0xe0] sm:$0xff]
      %v333 = vld [vmem:[#allocation2 + $0xe8] sm:$0xff]
      %v334 = vld [vmem:[#allocation2 + $0xf0] sm:$0xff]
      %v335 = vld [vmem:[#allocation2 + $0xf8] sm:$0xff]
      %v336 = vld [vmem:[%s243] sm:$0xff]
      %v337 = vld [vmem:[%s243 + $0x8] sm:$0xff]
      %v338 = vld [vmem:[%s243 + $0x10] sm:$0xff]
      %v339 = vld [vmem:[%s243 + $0x18] sm:$0xff]
      %v340 = vld [vmem:[%s243 + $0x20] sm:$0xff]
      %v341 = vld [vmem:[%s243 + $0x28] sm:$0xff]
      %v342 = vld [vmem:[%s243 + $0x30] sm:$0xff]
      %v343 = vld [vmem:[%s243 + $0x38] sm:$0xff]
      %v344 = vld [vmem:[%s243 + $0x40] sm:$0xff]
      %v345 = vld [vmem:[%s243 + $0x48] sm:$0xff]
      %v346 = vld [vmem:[%s243 + $0x50] sm:$0xff]
      %v347 = vld [vmem:[%s243 + $0x58] sm:$0xff]
      %v348 = vld [vmem:[%s243 + $0x60] sm:$0xff]
      %v349 = vld [vmem:[%s243 + $0x68] sm:$0xff]
      %v350 = vld [vmem:[%s243 + $0x70] sm:$0xff]
      %v351 = vld [vmem:[%s243 + $0x78] sm:$0xff]
      %v352 = vld [vmem:[%s243 + $0x80] sm:$0xff]
      %v353 = vld [vmem:[%s243 + $0x88] sm:$0xff]
      %v354 = vld [vmem:[%s243 + $0x90] sm:$0xff]
      %v355 = vld [vmem:[%s243 + $0x98] sm:$0xff]
      %v356 = vld [vmem:[%s243 + $0xa0] sm:$0xff]
      %v357 = vld [vmem:[%s243 + $0xa8] sm:$0xff]
      %v358 = vld [vmem:[%s243 + $0xb0] sm:$0xff]
      %v359 = vld [vmem:[%s243 + $0xb8] sm:$0xff]
      %v360 = vld [vmem:[%s243 + $0xc0] sm:$0xff]
      %v361 = vld [vmem:[%s243 + $0xc8] sm:$0xff]
      %v362 = vld [vmem:[%s243 + $0xd0] sm:$0xff]
      %v363 = vld [vmem:[%s243 + $0xd8] sm:$0xff]
      %v364 = vld [vmem:[%s243 + $0xe0] sm:$0xff]
      %v365 = vld [vmem:[%s243 + $0xe8] sm:$0xff]
      %v366 = vld [vmem:[%s243 + $0xf0] sm:$0xff]
      %v367 = vld [vmem:[%s243 + $0xf8] sm:$0xff]
      %v368 = vld [vmem:[%s253] sm:$0xf]
      %v369 = vld [vmem:[%s253 + $0x4] sm:$0xf]
      %v370 = vld [vmem:[%s253 + $0x8] sm:$0xf]
      %v371 = vld [vmem:[%s253 + $0xc] sm:$0xf]
      %v372 = vld [vmem:[%s253 + $0x10] sm:$0xf]
      %v373 = vld [vmem:[%s253 + $0x14] sm:$0xf]
      %v374 = vld [vmem:[%s253 + $0x18] sm:$0xf]
      %v375 = vld [vmem:[%s253 + $0x1c] sm:$0xf]
      %v376 = vld [vmem:[%s253 + $0x20] sm:$0xf]
      %v377 = vld [vmem:[%s253 + $0x24] sm:$0xf]
      %v378 = vld [vmem:[%s253 + $0x28] sm:$0xf]
      %v379 = vld [vmem:[%s253 + $0x2c] sm:$0xf]
      %v380 = vld [vmem:[%s253 + $0x30] sm:$0xf]
      %v381 = vld [vmem:[%s253 + $0x34] sm:$0xf]
      %v382 = vld [vmem:[%s253 + $0x38] sm:$0xf]
      %v383 = vld [vmem:[%s253 + $0x3c] sm:$0xf]
      %v384 = vld [vmem:[%s253 + $0x40] sm:$0xf]
      %v385 = vld [vmem:[%s253 + $0x44] sm:$0xf]
      %v386 = vld [vmem:[%s253 + $0x48] sm:$0xf]
      %v387 = vld [vmem:[%s253 + $0x4c] sm:$0xf]
      %v388 = vld [vmem:[%s253 + $0x50] sm:$0xf]
      %v389 = vld [vmem:[%s253 + $0x54] sm:$0xf]
      %v390 = vld [vmem:[%s253 + $0x58] sm:$0xf]
      %v391 = vld [vmem:[%s253 + $0x5c] sm:$0xf]
      %v392 = vld [vmem:[%s253 + $0x60] sm:$0xf]
      %v393 = vld [vmem:[%s253 + $0x64] sm:$0xf]
      %v394 = vld [vmem:[%s253 + $0x68] sm:$0xf]
      %v395 = vld [vmem:[%s253 + $0x6c] sm:$0xf]
      %v396 = vld [vmem:[%s253 + $0x70] sm:$0xf]
      %v397 = vld [vmem:[%s253 + $0x74] sm:$0xf]
      %v398 = vld [vmem:[%s253 + $0x78] sm:$0xf]
      %v399 = vld [vmem:[%s253 + $0x7c] sm:$0xf]
      %v432 = vunpack.c.l.b16 %v336
      %v433 = vunpack.c.h.b16 %v336
      %v434 = vunpack.c.l.b16 %v337
      %v435 = vunpack.c.h.b16 %v337
      %v436 = vunpack.c.l.b16 %v338
      %v437 = vunpack.c.h.b16 %v338
      %v438 = vunpack.c.l.b16 %v339
      %v439 = vunpack.c.h.b16 %v339
      %v440 = vunpack.c.l.b16 %v340
      %v441 = vunpack.c.h.b16 %v340
      %v442 = vunpack.c.l.b16 %v341
      %v443 = vunpack.c.h.b16 %v341
      %v444 = vunpack.c.l.b16 %v342
      %v445 = vunpack.c.h.b16 %v342
      %v446 = vunpack.c.l.b16 %v343
      %v447 = vunpack.c.h.b16 %v343
      %v448 = vunpack.c.l.b16 %v344
      %v449 = vunpack.c.h.b16 %v344
      %v450 = vunpack.c.l.b16 %v345
      %v451 = vunpack.c.h.b16 %v345
      %v452 = vunpack.c.l.b16 %v346
      %v453 = vunpack.c.h.b16 %v346
      %v454 = vunpack.c.l.b16 %v347
      %v455 = vunpack.c.h.b16 %v347
      %v456 = vunpack.c.l.b16 %v348
      %v457 = vunpack.c.h.b16 %v348
      %v458 = vunpack.c.l.b16 %v349
      %v459 = vunpack.c.h.b16 %v349
      %v460 = vunpack.c.l.b16 %v350
      %v461 = vunpack.c.h.b16 %v350
      %v462 = vunpack.c.l.b16 %v351
      %v463 = vunpack.c.h.b16 %v351
      %v464 = vunpack.c.l.b16 %v352
      %v465 = vunpack.c.h.b16 %v352
      %v466 = vunpack.c.l.b16 %v353
      %v467 = vunpack.c.h.b16 %v353
      %v468 = vunpack.c.l.b16 %v354
      %v469 = vunpack.c.h.b16 %v354
      %v470 = vunpack.c.l.b16 %v355
      %v471 = vunpack.c.h.b16 %v355
      %v472 = vunpack.c.l.b16 %v356
      %v473 = vunpack.c.h.b16 %v356
      %v474 = vunpack.c.l.b16 %v357
      %v475 = vunpack.c.h.b16 %v357
      %v476 = vunpack.c.l.b16 %v358
      %v477 = vunpack.c.h.b16 %v358
      %v478 = vunpack.c.l.b16 %v359
      %v479 = vunpack.c.h.b16 %v359
      %v480 = vunpack.c.l.b16 %v360
      %v481 = vunpack.c.h.b16 %v360
      %v482 = vunpack.c.l.b16 %v361
      %v483 = vunpack.c.h.b16 %v361
      %v484 = vunpack.c.l.b16 %v362
      %v485 = vunpack.c.h.b16 %v362
      %v486 = vunpack.c.l.b16 %v363
      %v487 = vunpack.c.h.b16 %v363
      %v488 = vunpack.c.l.b16 %v364
      %v489 = vunpack.c.h.b16 %v364
      %v490 = vunpack.c.l.b16 %v365
      %v491 = vunpack.c.h.b16 %v365
      %v492 = vunpack.c.l.b16 %v366
      %v493 = vunpack.c.h.b16 %v366
      %v494 = vunpack.c.l.b16 %v367
      %v495 = vunpack.c.h.b16 %v367
      %v496 = vpack.c.b16 %v434, %v432
      %v497 = vpack.c.b16 %v435, %v433
      %v498 = vpack.c.b16 %v438, %v436
      %v499 = vpack.c.b16 %v439, %v437
      %v500 = vpack.c.b16 %v442, %v440
      %v501 = vpack.c.b16 %v443, %v441
      %v502 = vpack.c.b16 %v446, %v444
      %v503 = vpack.c.b16 %v447, %v445
      %v504 = vpack.c.b16 %v450, %v448
      %v505 = vpack.c.b16 %v451, %v449
      %v506 = vpack.c.b16 %v454, %v452
      %v507 = vpack.c.b16 %v455, %v453
      %v508 = vpack.c.b16 %v458, %v456
      %v509 = vpack.c.b16 %v459, %v457
      %v510 = vpack.c.b16 %v462, %v460
      %v511 = vpack.c.b16 %v463, %v461
      %v512 = vpack.c.b16 %v466, %v464
      %v513 = vpack.c.b16 %v467, %v465
      %v514 = vpack.c.b16 %v470, %v468
      %v515 = vpack.c.b16 %v471, %v469
      %v516 = vpack.c.b16 %v474, %v472
      %v517 = vpack.c.b16 %v475, %v473
      %v518 = vpack.c.b16 %v478, %v476
      %v519 = vpack.c.b16 %v479, %v477
      %v520 = vpack.c.b16 %v482, %v480
      %v521 = vpack.c.b16 %v483, %v481
      %v522 = vpack.c.b16 %v486, %v484
      %v523 = vpack.c.b16 %v487, %v485
      %v524 = vpack.c.b16 %v490, %v488
      %v525 = vpack.c.b16 %v491, %v489
      %v526 = vpack.c.b16 %v494, %v492
      %v527 = vpack.c.b16 %v495, %v493
      %v592 = vunpack.c.l.b16 %v368
      %v593 = vunpack.c.l.b16 %v369
      %v594 = vunpack.c.l.b16 %v370
      %v595 = vunpack.c.l.b16 %v371
      %v596 = vunpack.c.l.b16 %v372
      %v597 = vunpack.c.l.b16 %v373
      %v598 = vunpack.c.l.b16 %v374
      %v599 = vunpack.c.l.b16 %v375
      %v600 = vunpack.c.l.b16 %v376
      %v601 = vunpack.c.l.b16 %v377
      %v602 = vunpack.c.l.b16 %v378
      %v603 = vunpack.c.l.b16 %v379
      %v604 = vunpack.c.l.b16 %v380
      %v605 = vunpack.c.l.b16 %v381
      %v606 = vunpack.c.l.b16 %v382
      %v607 = vunpack.c.l.b16 %v383
      %v608 = vunpack.c.l.b16 %v384
      %v609 = vunpack.c.l.b16 %v385
      %v610 = vunpack.c.l.b16 %v386
      %v611 = vunpack.c.l.b16 %v387
      %v612 = vunpack.c.l.b16 %v388
      %v613 = vunpack.c.l.b16 %v389
      %v614 = vunpack.c.l.b16 %v390
      %v615 = vunpack.c.l.b16 %v391
      %v616 = vunpack.c.l.b16 %v392
      %v617 = vunpack.c.l.b16 %v393
      %v618 = vunpack.c.l.b16 %v394
      %v619 = vunpack.c.l.b16 %v395
      %v620 = vunpack.c.l.b16 %v396
      %v621 = vunpack.c.l.b16 %v397
      %v622 = vunpack.c.l.b16 %v398
      %v623 = vunpack.c.l.b16 %v399
      %v624 = vpack.c.b16 %v593, %v592
      %v625 = vpack.c.b16 %v595, %v594
      %v626 = vpack.c.b16 %v597, %v596
      %v627 = vpack.c.b16 %v599, %v598
      %v628 = vpack.c.b16 %v601, %v600
      %v629 = vpack.c.b16 %v603, %v602
      %v630 = vpack.c.b16 %v605, %v604
      %v631 = vpack.c.b16 %v607, %v606
      %v632 = vpack.c.b16 %v609, %v608
      %v633 = vpack.c.b16 %v611, %v610
      %v634 = vpack.c.b16 %v613, %v612
      %v635 = vpack.c.b16 %v615, %v614
      %v636 = vpack.c.b16 %v617, %v616
      %v637 = vpack.c.b16 %v619, %v618
      %v638 = vpack.c.b16 %v621, %v620
      %v639 = vpack.c.b16 %v623, %v622
      %656 = vmatprep.subr.bf16.mxu0 0
      %657 = vmatpush1.bf16.msra.mxu0 %v624
      %658 = vmatprep.subr.bf16.mxu0 0
      %659 = vmatpush1.bf16.msra.mxu0 %v625
      %660 = vmatprep.subr.bf16.mxu0 0
      %661 = vmatpush1.bf16.msra.mxu0 %v626
      %662 = vmatprep.subr.bf16.mxu0 0
      %663 = vmatpush1.bf16.msra.mxu0 %v627
      %664 = vmatprep.subr.bf16.mxu0 0
      %665 = vmatpush1.bf16.msra.mxu0 %v628
      %666 = vmatprep.subr.bf16.mxu0 0
      %667 = vmatpush1.bf16.msra.mxu0 %v629
      %668 = vmatprep.subr.bf16.mxu0 0
      %669 = vmatpush1.bf16.msra.mxu0 %v630
      %670 = vmatprep.subr.bf16.mxu0 0
      %671 = vmatpush1.bf16.msra.mxu0 %v631
      %672 = vmatprep.subr.bf16.mxu0 0
      %673 = vmatpush1.bf16.msra.mxu0 %v632
      %674 = vmatprep.subr.bf16.mxu0 0
      %675 = vmatpush1.bf16.msra.mxu0 %v633
      %676 = vmatprep.subr.bf16.mxu0 0
      %677 = vmatpush1.bf16.msra.mxu0 %v634
      %678 = vmatprep.subr.bf16.mxu0 0
      %679 = vmatpush1.bf16.msra.mxu0 %v635
      %680 = vmatprep.subr.bf16.mxu0 0
      %681 = vmatpush1.bf16.msra.mxu0 %v636
      %682 = vmatprep.subr.bf16.mxu0 0
      %683 = vmatpush1.bf16.msra.mxu0 %v637
      %684 = vmatprep.subr.bf16.mxu0 0
      %685 = vmatpush1.bf16.msra.mxu0 %v638
      %686 = vmatprep.subr.bf16.mxu0 0
      %687 = vmatpush1.bf16.msra.mxu0 %v639
      %688 = vmatprep.mubr.bf16.mxu0 %v497
      %689 = vmatmul.mubr.bf16.gmra.mrb[0].mxu0 %v496
      %v690 = vpop.f32.mrb[0].mxu0
      %v691 = vadd.f32 0.0, %v690
      %v692 = vpop.f32.mrb[0].mxu0
      %v693 = vpop.f32.mrb[0].mxu0
      %v694 = vadd.f32 0.0, %v693
      %v695 = vpop.f32.mrb[0].mxu0
      %696 = vmatprep.mubr.bf16.mxu0 %v499
      %697 = vmatmul.mubr.bf16.gmra.mrb[0].mxu0 %v498
      %v698 = vpop.f32.mrb[0].mxu0
      %v699 = vadd.f32 0.0, %v698
      %v700 = vpop.f32.mrb[0].mxu0
      %v701 = vpop.f32.mrb[0].mxu0
      %v702 = vadd.f32 0.0, %v701
      %v703 = vpop.f32.mrb[0].mxu0
      %704 = vmatprep.mubr.bf16.mxu0 %v501
      %705 = vmatmul.mubr.bf16.gmra.mrb[0].mxu0 %v500
      %v706 = vpop.f32.mrb[0].mxu0
      %v707 = vadd.f32 0.0, %v706
      %v708 = vpop.f32.mrb[0].mxu0
      %v709 = vpop.f32.mrb[0].mxu0
      %v710 = vadd.f32 0.0, %v709
      %v711 = vpop.f32.mrb[0].mxu0
      %712 = vmatprep.mubr.bf16.mxu0 %v503
      %713 = vmatmul.mubr.bf16.gmra.mrb[0].mxu0 %v502
      %v714 = vpop.f32.mrb[0].mxu0
      %v715 = vadd.f32 0.0, %v714
      %v716 = vpop.f32.mrb[0].mxu0
      %v717 = vpop.f32.mrb[0].mxu0
      %v718 = vadd.f32 0.0, %v717
      %v719 = vpop.f32.mrb[0].mxu0
      %720 = vmatprep.mubr.bf16.mxu0 %v505
      %721 = vmatmul.mubr.bf16.gmra.mrb[0].mxu0 %v504
      %v722 = vpop.f32.mrb[0].mxu0
      %v723 = vadd.f32 0.0, %v722
      %v724 = vpop.f32.mrb[0].mxu0
      %v725 = vpop.f32.mrb[0].mxu0
      %v726 = vadd.f32 0.0, %v725
      %v727 = vpop.f32.mrb[0].mxu0
      %728 = vmatprep.mubr.bf16.mxu0 %v507
      %729 = vmatmul.mubr.bf16.gmra.mrb[0].mxu0 %v506
      %v730 = vpop.f32.mrb[0].mxu0
      %v731 = vadd.f32 0.0, %v730
      %v732 = vpop.f32.mrb[0].mxu0
      %v733 = vpop.f32.mrb[0].mxu0
      %v734 = vadd.f32 0.0, %v733
      %v735 = vpop.f32.mrb[0].mxu0
      %736 = vmatprep.mubr.bf16.mxu0 %v509
      %737 = vmatmul.mubr.bf16.gmra.mrb[0].mxu0 %v508
      %v738 = vpop.f32.mrb[0].mxu0
      %v739 = vadd.f32 0.0, %v738
      %v740 = vpop.f32.mrb[0].mxu0
      %v741 = vpop.f32.mrb[0].mxu0
      %v742 = vadd.f32 0.0, %v741
      %v743 = vpop.f32.mrb[0].mxu0
      %744 = vmatprep.mubr.bf16.mxu0 %v511
      %745 = vmatmul.mubr.bf16.gmra.mrb[0].mxu0 %v510
      %v746 = vpop.f32.mrb[0].mxu0
      %v747 = vadd.f32 0.0, %v746
      %v748 = vpop.f32.mrb[0].mxu0
      %v749 = vpop.f32.mrb[0].mxu0
      %v750 = vadd.f32 0.0, %v749
      %v751 = vpop.f32.mrb[0].mxu0
      %752 = vmatprep.mubr.bf16.mxu0 %v513
      %753 = vmatmul.mubr.bf16.gmra.mrb[0].mxu0 %v512
      %v754 = vpop.f32.mrb[0].mxu0
      %v755 = vadd.f32 0.0, %v754
      %v756 = vpop.f32.mrb[0].mxu0
      %v757 = vpop.f32.mrb[0].mxu0
      %v758 = vadd.f32 0.0, %v757
      %v759 = vpop.f32.mrb[0].mxu0
      %760 = vmatprep.mubr.bf16.mxu0 %v515
      %761 = vmatmul.mubr.bf16.gmra.mrb[0].mxu0 %v514
      %v762 = vpop.f32.mrb[0].mxu0
      %v763 = vadd.f32 0.0, %v762
      %v764 = vpop.f32.mrb[0].mxu0
      %v765 = vpop.f32.mrb[0].mxu0
      %v766 = vadd.f32 0.0, %v765
      %v767 = vpop.f32.mrb[0].mxu0
      %768 = vmatprep.mubr.bf16.mxu0 %v517
      %769 = vmatmul.mubr.bf16.gmra.mrb[0].mxu0 %v516
      %v770 = vpop.f32.mrb[0].mxu0
      %v771 = vadd.f32 0.0, %v770
      %v772 = vpop.f32.mrb[0].mxu0
      %v773 = vpop.f32.mrb[0].mxu0
      %v774 = vadd.f32 0.0, %v773
      %v775 = vpop.f32.mrb[0].mxu0
      %776 = vmatprep.mubr.bf16.mxu0 %v519
      %777 = vmatmul.mubr.bf16.gmra.mrb[0].mxu0 %v518
      %v778 = vpop.f32.mrb[0].mxu0
      %v779 = vadd.f32 0.0, %v778
      %v780 = vpop.f32.mrb[0].mxu0
      %v781 = vpop.f32.mrb[0].mxu0
      %v782 = vadd.f32 0.0, %v781
      %v783 = vpop.f32.mrb[0].mxu0
      %784 = vmatprep.mubr.bf16.mxu0 %v521
      %785 = vmatmul.mubr.bf16.gmra.mrb[0].mxu0 %v520
      %v786 = vpop.f32.mrb[0].mxu0
      %v787 = vadd.f32 0.0, %v786
      %v788 = vpop.f32.mrb[0].mxu0
      %v789 = vpop.f32.mrb[0].mxu0
      %v790 = vadd.f32 0.0, %v789
      %v791 = vpop.f32.mrb[0].mxu0
      %792 = vmatprep.mubr.bf16.mxu0 %v523
      %793 = vmatmul.mubr.bf16.gmra.mrb[0].mxu0 %v522
      %v794 = vpop.f32.mrb[0].mxu0
      %v795 = vadd.f32 0.0, %v794
      %v796 = vpop.f32.mrb[0].mxu0
      %v797 = vpop.f32.mrb[0].mxu0
      %v798 = vadd.f32 0.0, %v797
      %v799 = vpop.f32.mrb[0].mxu0
      %800 = vmatprep.mubr.bf16.mxu0 %v525
      %801 = vmatmul.mubr.bf16.gmra.mrb[0].mxu0 %v524
      %v802 = vpop.f32.mrb[0].mxu0
      %v803 = vadd.f32 0.0, %v802
      %v804 = vpop.f32.mrb[0].mxu0
      %v805 = vpop.f32.mrb[0].mxu0
      %v806 = vadd.f32 0.0, %v805
      %v807 = vpop.f32.mrb[0].mxu0
      %808 = vmatprep.mubr.bf16.mxu0 %v527
      %809 = vmatmul.mubr.bf16.gmra.mrb[0].mxu0 %v526
      %v810 = vpop.f32.mrb[0].mxu0
      %v811 = vadd.f32 0.0, %v810
      %v812 = vpop.f32.mrb[0].mxu0
      %v813 = vpop.f32.mrb[0].mxu0
      %v814 = vadd.f32 0.0, %v813
      %v815 = vpop.f32.mrb[0].mxu0
      %816 = vdwg.mxu0
      %v817 = vadd.f32 %v304, %v691
      %v818 = vadd.f32 %v305, %v694
      %v819 = vadd.f32 %v306, %v699
      %v820 = vadd.f32 %v307, %v702
      %v821 = vadd.f32 %v308, %v707
      %v822 = vadd.f32 %v309, %v710
      %v823 = vadd.f32 %v310, %v715
      %v824 = vadd.f32 %v311, %v718
      %v825 = vadd.f32 %v312, %v723
      %v826 = vadd.f32 %v313, %v726
      %v827 = vadd.f32 %v314, %v731
      %v828 = vadd.f32 %v315, %v734
      %v829 = vadd.f32 %v316, %v739
      %v830 = vadd.f32 %v317, %v742
      %v831 = vadd.f32 %v318, %v747
      %v832 = vadd.f32 %v319, %v750
      %v833 = vadd.f32 %v320, %v755
      %v834 = vadd.f32 %v321, %v758
      %v835 = vadd.f32 %v322, %v763
      %v836 = vadd.f32 %v323, %v766
      %v837 = vadd.f32 %v324, %v771
      %v838 = vadd.f32 %v325, %v774
      %v839 = vadd.f32 %v326, %v779
      %v840 = vadd.f32 %v327, %v782
      %v841 = vadd.f32 %v328, %v787
      %v842 = vadd.f32 %v329, %v790
      %v843 = vadd.f32 %v330, %v795
      %v844 = vadd.f32 %v331, %v798
      %v845 = vadd.f32 %v332, %v803
      %v846 = vadd.f32 %v333, %v806
      %v847 = vadd.f32 %v334, %v811
      %v848 = vadd.f32 %v335, %v814
      %849 = vst [vmem:[#allocation2] sm:$0xff] %v817
      %850 = vst [vmem:[#allocation2 + $0x8] sm:$0xff] %v818
      %851 = vst [vmem:[#allocation2 + $0x10] sm:$0xff] %v819
      %852 = vst [vmem:[#allocation2 + $0x18] sm:$0xff] %v820
      %853 = vst [vmem:[#allocation2 + $0x20] sm:$0xff] %v821
      %854 = vst [vmem:[#allocation2 + $0x28] sm:$0xff] %v822
      %855 = vst [vmem:[#allocation2 + $0x30] sm:$0xff] %v823
      %856 = vst [vmem:[#allocation2 + $0x38] sm:$0xff] %v824
      %857 = vst [vmem:[#allocation2 + $0x40] sm:$0xff] %v825
      %858 = vst [vmem:[#allocation2 + $0x48] sm:$0xff] %v826
      %859 = vst [vmem:[#allocation2 + $0x50] sm:$0xff] %v827
      %860 = vst [vmem:[#allocation2 + $0x58] sm:$0xff] %v828
      %861 = vst [vmem:[#allocation2 + $0x60] sm:$0xff] %v829
      %862 = vst [vmem:[#allocation2 + $0x68] sm:$0xff] %v830
      %863 = vst [vmem:[#allocation2 + $0x70] sm:$0xff] %v831
      %864 = vst [vmem:[#allocation2 + $0x78] sm:$0xff] %v832
      %865 = vst [vmem:[#allocation2 + $0x80] sm:$0xff] %v833
      %866 = vst [vmem:[#allocation2 + $0x88] sm:$0xff] %v834
      %867 = vst [vmem:[#allocation2 + $0x90] sm:$0xff] %v835
      %868 = vst [vmem:[#allocation2 + $0x98] sm:$0xff] %v836
      %869 = vst [vmem:[#allocation2 + $0xa0] sm:$0xff] %v837
      %870 = vst [vmem:[#allocation2 + $0xa8] sm:$0xff] %v838
      %871 = vst [vmem:[#allocation2 + $0xb0] sm:$0xff] %v839
      %872 = vst [vmem:[#allocation2 + $0xb8] sm:$0xff] %v840
      %873 = vst [vmem:[#allocation2 + $0xc0] sm:$0xff] %v841
      %874 = vst [vmem:[#allocation2 + $0xc8] sm:$0xff] %v842
      %875 = vst [vmem:[#allocation2 + $0xd0] sm:$0xff] %v843
      %876 = vst [vmem:[#allocation2 + $0xd8] sm:$0xff] %v844
      %877 = vst [vmem:[#allocation2 + $0xe0] sm:$0xff] %v845
      %878 = vst [vmem:[#allocation2 + $0xe8] sm:$0xff] %v846
      %879 = vst [vmem:[#allocation2 + $0xf0] sm:$0xff] %v847
      %880 = vst [vmem:[#allocation2 + $0xf8] sm:$0xff] %v848
      // Predicated region
      $region37: #{inpaint_generator_forward.43} parent=31 // pred_check
        %p881 = pneg %p268
      $region38: #{inpaint_generator_forward.43} parent=31 // pred_check_branch
        %883 = sbr.rel (%p881) target = $region40
      $region39: #{inpaint_generator_forward.43} parent=31 // pred_region
        %v884 = vld [vmem:[#allocation2] sm:$0xff]
        %v885 = vld [vmem:[#allocation2 + $0x8] sm:$0xff]
        %v886 = vld [vmem:[#allocation2 + $0x10] sm:$0xff]
        %v887 = vld [vmem:[#allocation2 + $0x18] sm:$0xff]
        %v888 = vld [vmem:[#allocation2 + $0x20] sm:$0xff]
        %v889 = vld [vmem:[#allocation2 + $0x28] sm:$0xff]
        %v890 = vld [vmem:[#allocation2 + $0x30] sm:$0xff]
        %v891 = vld [vmem:[#allocation2 + $0x38] sm:$0xff]
        %v892 = vld [vmem:[#allocation2 + $0x40] sm:$0xff]
        %v893 = vld [vmem:[#allocation2 + $0x48] sm:$0xff]
        %v894 = vld [vmem:[#allocation2 + $0x50] sm:$0xff]
        %v895 = vld [vmem:[#allocation2 + $0x58] sm:$0xff]
        %v896 = vld [vmem:[#allocation2 + $0x60] sm:$0xff]
        %v897 = vld [vmem:[#allocation2 + $0x68] sm:$0xff]
        %v898 = vld [vmem:[#allocation2 + $0x70] sm:$0xff]
        %v899 = vld [vmem:[#allocation2 + $0x78] sm:$0xff]
        %v900 = vld [vmem:[#allocation2 + $0x80] sm:$0xff]
        %v901 = vld [vmem:[#allocation2 + $0x88] sm:$0xff]
        %v902 = vld [vmem:[#allocation2 + $0x90] sm:$0xff]
        %v903 = vld [vmem:[#allocation2 + $0x98] sm:$0xff]
        %v904 = vld [vmem:[#allocation2 + $0xa0] sm:$0xff]
        %v905 = vld [vmem:[#allocation2 + $0xa8] sm:$0xff]
        %v906 = vld [vmem:[#allocation2 + $0xb0] sm:$0xff]
        %v907 = vld [vmem:[#allocation2 + $0xb8] sm:$0xff]
        %v908 = vld [vmem:[#allocation2 + $0xc0] sm:$0xff]
        %v909 = vld [vmem:[#allocation2 + $0xc8] sm:$0xff]
        %v910 = vld [vmem:[#allocation2 + $0xd0] sm:$0xff]
        %v911 = vld [vmem:[#allocation2 + $0xd8] sm:$0xff]
        %v912 = vld [vmem:[#allocation2 + $0xe0] sm:$0xff]
        %v913 = vld [vmem:[#allocation2 + $0xe8] sm:$0xff]
        %v914 = vld [vmem:[#allocation2 + $0xf0] sm:$0xff]
        %v915 = vld [vmem:[#allocation2 + $0xf8] sm:$0xff]
        %v916 = vld [vmem:[%s257] sm:$0x1]
        %v918 = vlaneseq
        %v919 = vshrl.u32 %v918, 7
        %v920 = vsub.s32 0, %v919
        %v921 = vrot.slane %v916, %v920
        %v923 = vadd.f32 %v884, %v921
        %v924 = vadd.f32 %v885, %v921
        %v925 = vadd.f32 %v886, %v921
        %v926 = vadd.f32 %v887, %v921
        %v927 = vadd.f32 %v888, %v921
        %v928 = vadd.f32 %v889, %v921
        %v929 = vadd.f32 %v890, %v921
        %v930 = vadd.f32 %v891, %v921
        %v931 = vadd.f32 %v892, %v921
        %v932 = vadd.f32 %v893, %v921
        %v933 = vadd.f32 %v894, %v921
        %v934 = vadd.f32 %v895, %v921
        %v935 = vadd.f32 %v896, %v921
        %v936 = vadd.f32 %v897, %v921
        %v937 = vadd.f32 %v898, %v921
        %v938 = vadd.f32 %v899, %v921
        %v939 = vadd.f32 %v900, %v921
        %v940 = vadd.f32 %v901, %v921
        %v941 = vadd.f32 %v902, %v921
        %v942 = vadd.f32 %v903, %v921
        %v943 = vadd.f32 %v904, %v921
        %v944 = vadd.f32 %v905, %v921
        %v945 = vadd.f32 %v906, %v921
        %v946 = vadd.f32 %v907, %v921
        %v947 = vadd.f32 %v908, %v921
        %v948 = vadd.f32 %v909, %v921
        %v949 = vadd.f32 %v910, %v921
        %v950 = vadd.f32 %v911, %v921
        %v951 = vadd.f32 %v912, %v921
        %v952 = vadd.f32 %v913, %v921
        %v953 = vadd.f32 %v914, %v921
        %v954 = vadd.f32 %v915, %v921
        %v955 = vmax.f32 %v923, 0.0
        %v956 = vmax.f32 %v924, 0.0
        %v957 = vmax.f32 %v925, 0.0
        %v958 = vmax.f32 %v926, 0.0
        %v959 = vmax.f32 %v927, 0.0
        %v960 = vmax.f32 %v928, 0.0
        %v961 = vmax.f32 %v929, 0.0
        %v962 = vmax.f32 %v930, 0.0
        %v963 = vmax.f32 %v931, 0.0
        %v964 = vmax.f32 %v932, 0.0
        %v965 = vmax.f32 %v933, 0.0
        %v966 = vmax.f32 %v934, 0.0
        %v967 = vmax.f32 %v935, 0.0
        %v968 = vmax.f32 %v936, 0.0
        %v969 = vmax.f32 %v937, 0.0
        %v970 = vmax.f32 %v938, 0.0
        %v971 = vmax.f32 %v939, 0.0
        %v972 = vmax.f32 %v940, 0.0
        %v973 = vmax.f32 %v941, 0.0
        %v974 = vmax.f32 %v942, 0.0
        %v975 = vmax.f32 %v943, 0.0
        %v976 = vmax.f32 %v944, 0.0
        %v977 = vmax.f32 %v945, 0.0
        %v978 = vmax.f32 %v946, 0.0
        %v979 = vmax.f32 %v947, 0.0
        %v980 = vmax.f32 %v948, 0.0
        %v981 = vmax.f32 %v949, 0.0
        %v982 = vmax.f32 %v950, 0.0
        %v983 = vmax.f32 %v951, 0.0
        %v984 = vmax.f32 %v952, 0.0
        %v985 = vmax.f32 %v953, 0.0
        %v986 = vmax.f32 %v954, 0.0
        %v987 = vpack.c.bf16 %v956, %v955
        %v988 = vpack.c.bf16 %v958, %v957
        %v989 = vpack.c.bf16 %v960, %v959
        %v990 = vpack.c.bf16 %v962, %v961
        %v991 = vpack.c.bf16 %v964, %v963
        %v992 = vpack.c.bf16 %v966, %v965
        %v993 = vpack.c.bf16 %v968, %v967
        %v994 = vpack.c.bf16 %v970, %v969
        %v995 = vpack.c.bf16 %v972, %v971
        %v996 = vpack.c.bf16 %v974, %v973
        %v997 = vpack.c.bf16 %v976, %v975
        %v998 = vpack.c.bf16 %v978, %v977
        %v999 = vpack.c.bf16 %v980, %v979
        %v1000 = vpack.c.bf16 %v982, %v981
        %v1001 = vpack.c.bf16 %v984, %v983
        %v1002 = vpack.c.bf16 %v986, %v985
        %v1019 = vunpack.c.l.b16 %v987
        %v1020 = vunpack.c.h.b16 %v987
        %v1021 = vunpack.c.l.b16 %v988
        %v1022 = vunpack.c.h.b16 %v988
        %v1023 = vunpack.c.l.b16 %v989
        %v1024 = vunpack.c.h.b16 %v989
        %v1025 = vunpack.c.l.b16 %v990
        %v1026 = vunpack.c.h.b16 %v990
        %v1027 = vunpack.c.l.b16 %v991
        %v1028 = vunpack.c.h.b16 %v991
        %v1029 = vunpack.c.l.b16 %v992
        %v1030 = vunpack.c.h.b16 %v992
        %v1031 = vunpack.c.l.b16 %v993
        %v1032 = vunpack.c.h.b16 %v993
        %v1033 = vunpack.c.l.b16 %v994
        %v1034 = vunpack.c.h.b16 %v994
        %v1035 = vunpack.c.l.b16 %v995
        %v1036 = vunpack.c.h.b16 %v995
        %v1037 = vunpack.c.l.b16 %v996
        %v1038 = vunpack.c.h.b16 %v996
        %v1039 = vunpack.c.l.b16 %v997
        %v1040 = vunpack.c.h.b16 %v997
        %v1041 = vunpack.c.l.b16 %v998
        %v1042 = vunpack.c.h.b16 %v998
        %v1043 = vunpack.c.l.b16 %v999
        %v1044 = vunpack.c.h.b16 %v999
        %v1045 = vunpack.c.l.b16 %v1000
        %v1046 = vunpack.c.h.b16 %v1000
        %v1047 = vunpack.c.l.b16 %v1001
        %v1048 = vunpack.c.h.b16 %v1001
        %v1049 = vunpack.c.l.b16 %v1002
        %v1050 = vunpack.c.h.b16 %v1002
        %v1051 = vpack.c.b16 %v1019, %v1019
        %v1052 = vpack.c.b16 %v1020, %v1020
        %v1053 = vpack.c.b16 %v1021, %v1021
        %v1054 = vpack.c.b16 %v1022, %v1022
        %v1055 = vpack.c.b16 %v1023, %v1023
        %v1056 = vpack.c.b16 %v1024, %v1024
        %v1057 = vpack.c.b16 %v1025, %v1025
        %v1058 = vpack.c.b16 %v1026, %v1026
        %v1059 = vpack.c.b16 %v1027, %v1027
        %v1060 = vpack.c.b16 %v1028, %v1028
        %v1061 = vpack.c.b16 %v1029, %v1029
        %v1062 = vpack.c.b16 %v1030, %v1030
        %v1063 = vpack.c.b16 %v1031, %v1031
        %v1064 = vpack.c.b16 %v1032, %v1032
        %v1065 = vpack.c.b16 %v1033, %v1033
        %v1066 = vpack.c.b16 %v1034, %v1034
        %v1067 = vpack.c.b16 %v1035, %v1035
        %v1068 = vpack.c.b16 %v1036, %v1036
        %v1069 = vpack.c.b16 %v1037, %v1037
        %v1070 = vpack.c.b16 %v1038, %v1038
        %v1071 = vpack.c.b16 %v1039, %v1039
        %v1072 = vpack.c.b16 %v1040, %v1040
        %v1073 = vpack.c.b16 %v1041, %v1041
        %v1074 = vpack.c.b16 %v1042, %v1042
        %v1075 = vpack.c.b16 %v1043, %v1043
        %v1076 = vpack.c.b16 %v1044, %v1044
        %v1077 = vpack.c.b16 %v1045, %v1045
        %v1078 = vpack.c.b16 %v1046, %v1046
        %v1079 = vpack.c.b16 %v1047, %v1047
        %v1080 = vpack.c.b16 %v1048, %v1048
        %v1081 = vpack.c.b16 %v1049, %v1049
        %v1082 = vpack.c.b16 %v1050, %v1050
        %1115 = vst [vmem:[%s265] sm:$0xf] %v1051
        %1116 = vst [vmem:[%s265 + $0x4] sm:$0xf] %v1052
        %1117 = vst [vmem:[%s265 + $0x8] sm:$0xf] %v1053
        %1118 = vst [vmem:[%s265 + $0xc] sm:$0xf] %v1054
        %1119 = vst [vmem:[%s265 + $0x10] sm:$0xf] %v1055
        %1120 = vst [vmem:[%s265 + $0x14] sm:$0xf] %v1056
        %1121 = vst [vmem:[%s265 + $0x18] sm:$0xf] %v1057
        %1122 = vst [vmem:[%s265 + $0x1c] sm:$0xf] %v1058
        %1123 = vst [vmem:[%s265 + $0x20] sm:$0xf] %v1059
        %1124 = vst [vmem:[%s265 + $0x24] sm:$0xf] %v1060
        %1125 = vst [vmem:[%s265 + $0x28] sm:$0xf] %v1061
        %1126 = vst [vmem:[%s265 + $0x2c] sm:$0xf] %v1062
        %1127 = vst [vmem:[%s265 + $0x30] sm:$0xf] %v1063
        %1128 = vst [vmem:[%s265 + $0x34] sm:$0xf] %v1064
        %1129 = vst [vmem:[%s265 + $0x38] sm:$0xf] %v1065
        %1130 = vst [vmem:[%s265 + $0x3c] sm:$0xf] %v1066
        %1131 = vst [vmem:[%s265 + $0x40] sm:$0xf] %v1067
        %1132 = vst [vmem:[%s265 + $0x44] sm:$0xf] %v1068
        %1133 = vst [vmem:[%s265 + $0x48] sm:$0xf] %v1069
        %1134 = vst [vmem:[%s265 + $0x4c] sm:$0xf] %v1070
        %1135 = vst [vmem:[%s265 + $0x50] sm:$0xf] %v1071
        %1136 = vst [vmem:[%s265 + $0x54] sm:$0xf] %v1072
        %1137 = vst [vmem:[%s265 + $0x58] sm:$0xf] %v1073
        %1138 = vst [vmem:[%s265 + $0x5c] sm:$0xf] %v1074
        %1139 = vst [vmem:[%s265 + $0x60] sm:$0xf] %v1075
        %1140 = vst [vmem:[%s265 + $0x64] sm:$0xf] %v1076
        %1141 = vst [vmem:[%s265 + $0x68] sm:$0xf] %v1077
        %1142 = vst [vmem:[%s265 + $0x6c] sm:$0xf] %v1078
        %1143 = vst [vmem:[%s265 + $0x70] sm:$0xf] %v1079
        %1144 = vst [vmem:[%s265 + $0x74] sm:$0xf] %v1080
        %1145 = vst [vmem:[%s265 + $0x78] sm:$0xf] %v1081
        %1146 = vst [vmem:[%s265 + $0x7c] sm:$0xf] %v1082
      $region40: #{inpaint_generator_forward.43} parent=31 // pred_fallthru
        _
      %s1147 = smul.u32 32, %s19
      %p1148 = scmp.lt.s32.totalorder %s1147, 63
      %s1149 = scalar_select %p1148, %s1147, 63
      %p1150 = scmp.lt.s32.totalorder %s20, 0
      %s1151 = scalar_select %p1150, %s20, 0
      %s1152 = sadd.s32 %s1151, %s1149
      %s1153 = smul.addr %s1152, 4
      %s1154 = scalar_lea.vmem %s3, %s1153
      // Predicated region
      $region41: #{inpaint_generator_forward.43} parent=31 // pred_check
        %p1155 = pneg %p135
      $region42: #{inpaint_generator_forward.43} parent=31 // pred_check_branch
        %1157 = sbr.rel (%p1155) target = $region44
      $region43: #{inpaint_generator_forward.43} parent=31 // pred_region
        %s1158 = smul.u32 32, %s19
      $region44: #{inpaint_generator_forward.43} parent=31 // pred_fallthru
        _
    $region32: #{inpaint_generator_forward.43} parent=5 // pred_fallthru
      _
    %p1159 = scmp.le.s32.totalorder 2, %s9
    // Predicated region
    $region45: #{inpaint_generator_forward.43} parent=5 // pred_check
      %p1160 = pneg %p1159
    $region46: #{inpaint_generator_forward.43} parent=5 // pred_check_branch
      %1162 = sbr.rel (%p1160) target = $region48
    $region47: #{inpaint_generator_forward.43} parent=5 // pred_region
      %s1163 = ssub.s32 %s9, 2
      // Predicated region
      $region49: #{inpaint_generator_forward.43} parent=47 // pred_check
        %p1164 = pneg %p141
      $region50: #{inpaint_generator_forward.43} parent=47 // pred_check_branch
        %1166 = sbr.rel (%p1164) target = $region52
      $region51: #{inpaint_generator_forward.43} parent=47 // pred_region
        %s1167 = smul.u32 32, %s22
        %p1168 = scmp.lt.s32.totalorder %s1167, 63
        %s1169 = scalar_select %p1168, %s1167, 63
        %p1170 = scmp.lt.s32.totalorder %s23, 0
        %s1171 = scalar_select %p1170, %s23, 0
        %s1172 = sadd.s32 %s1171, %s1169
        %s1173 = smul.addr %s1172, 4
        %s1174 = scalar_lea.vmem %s3, %s1173
      $region52: #{inpaint_generator_forward.43} parent=47 // pred_fallthru
        _
    $region48: #{inpaint_generator_forward.43} parent=5 // pred_fallthru
      _
  $region6: #{inpaint_generator_forward.43} parent=0 // loop_footer
    %s13 = sadd.s32 1, %s9
  $region7: #{inpaint_generator_forward.43} parent=0 // loop_footer_branch
    %8 = sbr.rel target = $region3
  $region8: #{inpaint_generator_forward.43} parent=0 // loop_exit
    _

// kernel: inpaint_generator_forward.44
$region0: #{inpaint_generator_forward.44}
  #allocation0 [shape = 'u32[]', space=smem, size = 0x4, offset = 0x4, fixed_abs, tag = 'smem constant byte address 0x4 - core index']
  #allocation1 [shape = 'u32[144,128]{1,0:T(1,128)}', space=vmem, size = 0x12000, scoped, tag = 'internal scratch']
  #allocation2 [shape = 'f32[128,128]{1,0:T(8,128)}', space=vmem, size = 0x10000, scoped, tag = 'scratch operand']
  %s0 = inlined_call_operand.vmem [shape: bf16[128,1024], index: 0, kind: input, shape index: {}]
  %s1 = inlined_call_operand.vmem [shape: bf16[1024,128], index: 1, kind: input, shape index: {}]
  %s2 = inlined_call_operand.vmem [shape: f32[1,128], index: 2, kind: input, shape index: {}]
  %s3 = inlined_call_operand.vmem [shape: bf16[128,128], index: 3, kind: output, shape index: {}]
  %s4 = sld [smem:[#allocation0]]
  $region91: #{inpaint_generator_forward.44} parent=0
    _
  %s6 = ssub.s32 1, %s4
  %s7 = scalar_select 0, %s6, %s4
  $region1: #{inpaint_generator_forward.44} parent=0
    #allocation3 [shape = 'u8[131072]{0}', space=vmem, size = 0x20000, scoped, tag = 'input window, operand 0']
    loop: start=0, step=1, limit=6
    $region2: #{inpaint_generator_forward.44} parent=1 // loop_pre_header
      _
    $region3: #{inpaint_generator_forward.44} parent=1 // loop_header
      %s9 = sphi 0, %s13
      %p10 = scmp.ge.s32.totalorder %s9, 6
      %s16 = sphi 0, %s35
      %s17 = sphi 0, %s31
      %s18 = sphi 0, %s27
      %s19 = sphi 0, %s16
      %s20 = sphi 0, %s17
      %s21 = sphi 0, %s18
      %s22 = sphi 0, %s19
      %s23 = sphi 0, %s20
      %s24 = sphi 0, %s21
      %s40 = sphi 0, %s42
      %s43 = sphi 0, %s40
      %s44 = sphi 0, %s43
      %s60 = sphi 0, %s44
      %s68 = sphi 0, %s70
      %s71 = sphi 0, %s68
      %s72 = sphi 0, %s71
      %s88 = sphi 0, %s72
      %s94 = sphi 0, %s96
      %s97 = sphi 0, %s94
      %s98 = sphi 0, %s97
      %s114 = sphi 0, %s98
      %s122 = sphi 0, %s124
      %s125 = sphi 0, %s122
      %s126 = sphi 0, %s125
      %s142 = sphi 0, %s126
    $region4: #{inpaint_generator_forward.44} parent=1 // loop_header_branch
      %12 = sbr.rel (%p10) target = $region8
    $region5: #{inpaint_generator_forward.44} parent=1 // loop_body
      %s14 = ssub.s32 %s9, 1
      %s15 = ssub.s32 %s9, 2
      %s25 = sadd.s32 1, %s18
      %p26 = scmp.ge.s32.totalorder %s25, 4
      %s27 = scalar_select %p26, 0, %s25
      %s28 = sadd.s32 1, %s17
      %s29 = scalar_select %p26, %s28, %s17
      %p30 = scmp.ge.s32.totalorder %s29, 1
      %s31 = scalar_select %p30, 0, %s29
      %s32 = sadd.s32 1, %s16
      %s33 = scalar_select %p30, %s32, %s16
      %p34 = scmp.ge.s32.totalorder %s33, 1
      %s35 = scalar_select %p34, 0, %s33
      %s36 = ssub.s32 %s16, %s35
      %s37 = ssub.s32 %s18, %s27
      %s38 = sor.u32 %s36, %s37
      %p39 = scmp.eq.s32.totalorder %s38, 0
      %s41 = sadd.s32 %s40, 1
      %s42 = scalar_select %p39, %s40, %s41
      %p45 = pneg %p39
      %p46 = scmp.eq.s32.totalorder %s9, 3
      %p47 = por %p45, %p46
      %p48 = scmp.ne.s32.totalorder %s40, %s43
      %p49 = scmp.eq.s32.totalorder %s9, 0
      %p50 = por %p48, %p49
      %p51 = scmp.ne.s32.totalorder %s40, %s43
      %p52 = scmp.eq.s32.totalorder %s14, 3
      %p53 = por %p51, %p52
      %p54 = scmp.ne.s32.totalorder %s43, %s44
      %p55 = scmp.eq.s32.totalorder %s14, 0
      %p56 = por %p54, %p55
      %p57 = scmp.ne.s32.totalorder %s43, %s44
      %p58 = scmp.eq.s32.totalorder %s15, 3
      %p59 = por %p57, %p58
      %p61 = scmp.ne.s32.totalorder %s44, %s60
      %p62 = scmp.eq.s32.totalorder %s15, 0
      %p63 = por %p61, %p62
      %s64 = ssub.s32 %s18, %s27
      %s65 = ssub.s32 %s17, %s31
      %s66 = sor.u32 %s64, %s65
      %p67 = scmp.eq.s32.totalorder %s66, 0
      %s69 = sadd.s32 %s68, 1
      %s70 = scalar_select %p67, %s68, %s69
      %p73 = pneg %p67
      %p74 = scmp.eq.s32.totalorder %s9, 3
      %p75 = por %p73, %p74
      %p76 = scmp.ne.s32.totalorder %s68, %s71
      %p77 = scmp.eq.s32.totalorder %s9, 0
      %p78 = por %p76, %p77
      %p79 = scmp.ne.s32.totalorder %s68, %s71
      %p80 = scmp.eq.s32.totalorder %s14, 3
      %p81 = por %p79, %p80
      %p82 = scmp.ne.s32.totalorder %s71, %s72
      %p83 = scmp.eq.s32.totalorder %s14, 0
      %p84 = por %p82, %p83
      %p85 = scmp.ne.s32.totalorder %s71, %s72
      %p86 = scmp.eq.s32.totalorder %s15, 3
      %p87 = por %p85, %p86
      %p89 = scmp.ne.s32.totalorder %s72, %s88
      %p90 = scmp.eq.s32.totalorder %s15, 0
      %p91 = por %p89, %p90
      %s92 = ssub.s32 %s17, %s31
      %p93 = scmp.eq.s32.totalorder %s92, 0
      %s95 = sadd.s32 %s94, 1
      %s96 = scalar_select %p93, %s94, %s95
      %p99 = pneg %p93
      %p100 = scmp.eq.s32.totalorder %s9, 3
      %p101 = por %p99, %p100
      %p102 = scmp.ne.s32.totalorder %s94, %s97
      %p103 = scmp.eq.s32.totalorder %s9, 0
      %p104 = por %p102, %p103
      %p105 = scmp.ne.s32.totalorder %s94, %s97
      %p106 = scmp.eq.s32.totalorder %s14, 3
      %p107 = por %p105, %p106
      %p108 = scmp.ne.s32.totalorder %s97, %s98
      %p109 = scmp.eq.s32.totalorder %s14, 0
      %p110 = por %p108, %p109
      %p111 = scmp.ne.s32.totalorder %s97, %s98
      %p112 = scmp.eq.s32.totalorder %s15, 3
      %p113 = por %p111, %p112
      %p115 = scmp.ne.s32.totalorder %s98, %s114
      %p116 = scmp.eq.s32.totalorder %s15, 0
      %p117 = por %p115, %p116
      %s118 = ssub.s32 %s16, %s35
      %s119 = ssub.s32 %s17, %s31
      %s120 = sor.u32 %s118, %s119
      %p121 = scmp.eq.s32.totalorder %s120, 0
      %s123 = sadd.s32 %s122, 1
      %s124 = scalar_select %p121, %s122, %s123
      %p127 = pneg %p121
      %p128 = scmp.eq.s32.totalorder %s9, 3
      %p129 = por %p127, %p128
      %p130 = scmp.ne.s32.totalorder %s122, %s125
      %p131 = scmp.eq.s32.totalorder %s9, 0
      %p132 = por %p130, %p131
      %p133 = scmp.ne.s32.totalorder %s122, %s125
      %p134 = scmp.eq.s32.totalorder %s14, 3
      %p135 = por %p133, %p134
      %p136 = scmp.ne.s32.totalorder %s125, %s126
      %p137 = scmp.eq.s32.totalorder %s14, 0
      %p138 = por %p136, %p137
      %p139 = scmp.ne.s32.totalorder %s125, %s126
      %p140 = scmp.eq.s32.totalorder %s15, 3
      %p141 = por %p139, %p140
      %p143 = scmp.ne.s32.totalorder %s126, %s142
      %p144 = scmp.eq.s32.totalorder %s15, 0
      %p145 = por %p143, %p144
      %p146 = scmp.le.s32.totalorder 1, %s9
      %p147 = scmp.lt.s32.totalorder %s9, 5
      %p148 = pnand %p146, %p147
      %p149 = pneg %p148
      // Predicated region
      $region9: #{inpaint_generator_forward.44} parent=5 // pred_check
        _
      $region10: #{inpaint_generator_forward.44} parent=5 // pred_check_branch
        %151 = sbr.rel (%p148) target = $region12
      $region11: #{inpaint_generator_forward.44} parent=5 // pred_region
        %s152 = ssub.s32 %s9, 1
        // Predicated region
        $region13: #{inpaint_generator_forward.44} parent=11 // pred_check
          %p153 = pneg %p110
        $region14: #{inpaint_generator_forward.44} parent=11 // pred_check_branch
          %155 = sbr.rel (%p153) target = $region16
        $region15: #{inpaint_generator_forward.44} parent=11 // pred_region
          %p156 = scmp.lt.s32.totalorder %s20, 0
          %s157 = scalar_select %p156, %s20, 0
          %s158 = scalar_lea.vmem %s2, %s157
        $region16: #{inpaint_generator_forward.44} parent=11 // pred_fallthru
          _
      $region12: #{inpaint_generator_forward.44} parent=5 // pred_fallthru
        _
      %p159 = scmp.lt.s32.totalorder %s9, 4
      // Predicated region
      $region17: #{inpaint_generator_forward.44} parent=5 // pred_check
        %p160 = pneg %p159
      $region18: #{inpaint_generator_forward.44} parent=5 // pred_check_branch
        %162 = sbr.rel (%p160) target = $region20
      $region19: #{inpaint_generator_forward.44} parent=5 // pred_region
        // Predicated region
        $region21: #{inpaint_generator_forward.44} parent=19 // pred_check
          %p163 = pneg %p50
        $region22: #{inpaint_generator_forward.44} parent=19 // pred_check_branch
          %165 = sbr.rel (%p163) target = $region24
        $region23: #{inpaint_generator_forward.44} parent=19 // pred_region
          %s166 = sand.u32 %s40, 1
          %s167 = sand.u32 %s40, 1
          %s168 = smul.addr %s167, 128
          %s169 = scalar_lea.vmem [#allocation3], %s168
          %s170 = smul.u32 16, %s16
          %s171 = smul.u32 2, %s18
          %s172 = smul.addr %s170, 8
          %s173 = sadd.s32 %s171, %s172
          %s174 = smul.addr %s173, 4
          %s175 = scalar_lea.vmem %s0, %s174
          // Predicated region
          $region25: #{inpaint_generator_forward.44} parent=23 // pred_check
            _
          $region26: #{inpaint_generator_forward.44} parent=23 // pred_check_branch
            %177 = sbr.rel (0) target = $region28
          $region27: #{inpaint_generator_forward.44} parent=23 // pred_region
            // Predicated region
            $region29: #{inpaint_generator_forward.44} parent=27 // pred_check
              _
            $region30: #{inpaint_generator_forward.44} parent=27 // pred_check_branch
              %179 = sbr.rel (0) target = $region32
            $region31: #{inpaint_generator_forward.44} parent=27 // pred_region
              // Predicated region
              $region44: #{inpaint_generator_forward.44} parent=31 // pred_check
                _
              $region45: #{inpaint_generator_forward.44} parent=31 // pred_check_branch
                %224 = sbr.rel (0) target = $region47
              $region46: #{inpaint_generator_forward.44} parent=31 // pred_region
                loop: start=0, step=1, limit=1
                $region48: #{inpaint_generator_forward.44} parent=46 // loop_pre_header
                  _
                $region49: #{inpaint_generator_forward.44} parent=46 // loop_header
                  %s226 = sphi 0, %s230
                  %p227 = scmp.ge.s32.totalorder %s226, 1
                  %s231 = sphi %s175, %s175
                  %s232 = sphi %s169, %s169
                $region50: #{inpaint_generator_forward.44} parent=46 // loop_header_branch
                  %229 = sbr.rel (%p227) target = $region54
                $region51: #{inpaint_generator_forward.44} parent=46 // loop_body
                  %v233 = vld [vmem:[%s231] sm:$0xff]
                  %234 = vst [vmem:[%s232] sm:$0xff] %v233
                  %v235 = vld [vmem:[%s231 + $0x20] sm:$0xff]
                  %236 = vst [vmem:[%s232 + $0x8] sm:$0xff] %v235
                  %v237 = vld [vmem:[%s231 + $0x40] sm:$0xff]
                  %238 = vst [vmem:[%s232 + $0x10] sm:$0xff] %v237
                  %v239 = vld [vmem:[%s231 + $0x60] sm:$0xff]
                  %240 = vst [vmem:[%s232 + $0x18] sm:$0xff] %v239
                  %v241 = vld [vmem:[%s231 + $0x80] sm:$0xff]
                  %242 = vst [vmem:[%s232 + $0x20] sm:$0xff] %v241
                  %v243 = vld [vmem:[%s231 + $0xa0] sm:$0xff]
                  %244 = vst [vmem:[%s232 + $0x28] sm:$0xff] %v243
                  %v245 = vld [vmem:[%s231 + $0xc0] sm:$0xff]
                  %246 = vst [vmem:[%s232 + $0x30] sm:$0xff] %v245
                  %v247 = vld [vmem:[%s231 + $0xe0] sm:$0xff]
                  %248 = vst [vmem:[%s232 + $0x38] sm:$0xff] %v247
                  %v249 = vld [vmem:[%s231 + $0x100] sm:$0xff]
                  %250 = vst [vmem:[%s232 + $0x40] sm:$0xff] %v249
                  %v251 = vld [vmem:[%s231 + $0x120] sm:$0xff]
                  %252 = vst [vmem:[%s232 + $0x48] sm:$0xff] %v251
                  %v253 = vld [vmem:[%s231 + $0x140] sm:$0xff]
                  %254 = vst [vmem:[%s232 + $0x50] sm:$0xff] %v253
                  %v255 = vld [vmem:[%s231 + $0x160] sm:$0xff]
                  %256 = vst [vmem:[%s232 + $0x58] sm:$0xff] %v255
                  %v257 = vld [vmem:[%s231 + $0x180] sm:$0xff]
                  %258 = vst [vmem:[%s232 + $0x60] sm:$0xff] %v257
                  %v259 = vld [vmem:[%s231 + $0x1a0] sm:$0xff]
                  %260 = vst [vmem:[%s232 + $0x68] sm:$0xff] %v259
                  %v261 = vld [vmem:[%s231 + $0x1c0] sm:$0xff]
                  %262 = vst [vmem:[%s232 + $0x70] sm:$0xff] %v261
                  %v263 = vld [vmem:[%s231 + $0x1e0] sm:$0xff]
                  %264 = vst [vmem:[%s232 + $0x78] sm:$0xff] %v263
                $region52: #{inpaint_generator_forward.44} parent=46 // loop_footer
                  %s230 = sadd.s32 1, %s226
                $region53: #{inpaint_generator_forward.44} parent=46 // loop_footer_branch
                  %225 = sbr.rel target = $region49
                $region54: #{inpaint_generator_forward.44} parent=46 // loop_exit
                  _
              $region47: #{inpaint_generator_forward.44} parent=31 // pred_fallthru
                _
              // Predicated region
              $region55: #{inpaint_generator_forward.44} parent=31 // pred_check
                _
              $region56: #{inpaint_generator_forward.44} parent=31 // pred_check_branch
                %266 = sbr.rel target = $region58
              $region57: #{inpaint_generator_forward.44} parent=31 // pred_region
                _
              $region58: #{inpaint_generator_forward.44} parent=31 // pred_fallthru
                _
            $region32: #{inpaint_generator_forward.44} parent=27 // pred_fallthru
              _
            // Predicated region
            $region33: #{inpaint_generator_forward.44} parent=27 // pred_check
              _
            $region34: #{inpaint_generator_forward.44} parent=27 // pred_check_branch
              %181 = sbr.rel target = $region36
            $region35: #{inpaint_generator_forward.44} parent=27 // pred_region
              loop: start=0, step=1, limit=1
              $region37: #{inpaint_generator_forward.44} parent=35 // loop_pre_header
                _
              $region38: #{inpaint_generator_forward.44} parent=35 // loop_header
                %s184 = sphi 0, %s188
                %p185 = scmp.ge.s32.totalorder %s184, 1
                %s189 = sphi %s175, %s175
                %s190 = sphi %s169, %s169
              $region39: #{inpaint_generator_forward.44} parent=35 // loop_header_branch
                %187 = sbr.rel (%p185) target = $region43
              $region40: #{inpaint_generator_forward.44} parent=35 // loop_body
                %v191 = vld [vmem:[%s189] sm:$0xff]
                %192 = vst [vmem:[%s190] sm:$0xff] %v191
                %v193 = vld [vmem:[%s189 + $0x20] sm:$0xff]
                %194 = vst [vmem:[%s190 + $0x8] sm:$0xff] %v193
                %v195 = vld [vmem:[%s189 + $0x40] sm:$0xff]
                %196 = vst [vmem:[%s190 + $0x10] sm:$0xff] %v195
                %v197 = vld [vmem:[%s189 + $0x60] sm:$0xff]
                %198 = vst [vmem:[%s190 + $0x18] sm:$0xff] %v197
                %v199 = vld [vmem:[%s189 + $0x80] sm:$0xff]
                %200 = vst [vmem:[%s190 + $0x20] sm:$0xff] %v199
                %v201 = vld [vmem:[%s189 + $0xa0] sm:$0xff]
                %202 = vst [vmem:[%s190 + $0x28] sm:$0xff] %v201
                %v203 = vld [vmem:[%s189 + $0xc0] sm:$0xff]
                %204 = vst [vmem:[%s190 + $0x30] sm:$0xff] %v203
                %v205 = vld [vmem:[%s189 + $0xe0] sm:$0xff]
                %206 = vst [vmem:[%s190 + $0x38] sm:$0xff] %v205
                %v207 = vld [vmem:[%s189 + $0x100] sm:$0xff]
                %208 = vst [vmem:[%s190 + $0x40] sm:$0xff] %v207
                %v209 = vld [vmem:[%s189 + $0x120] sm:$0xff]
                %210 = vst [vmem:[%s190 + $0x48] sm:$0xff] %v209
                %v211 = vld [vmem:[%s189 + $0x140] sm:$0xff]
                %212 = vst [vmem:[%s190 + $0x50] sm:$0xff] %v211
                %v213 = vld [vmem:[%s189 + $0x160] sm:$0xff]
                %214 = vst [vmem:[%s190 + $0x58] sm:$0xff] %v213
                %v215 = vld [vmem:[%s189 + $0x180] sm:$0xff]
                %216 = vst [vmem:[%s190 + $0x60] sm:$0xff] %v215
                %v217 = vld [vmem:[%s189 + $0x1a0] sm:$0xff]
                %218 = vst [vmem:[%s190 + $0x68] sm:$0xff] %v217
                %v219 = vld [vmem:[%s189 + $0x1c0] sm:$0xff]
                %220 = vst [vmem:[%s190 + $0x70] sm:$0xff] %v219
                %v221 = vld [vmem:[%s189 + $0x1e0] sm:$0xff]
                %222 = vst [vmem:[%s190 + $0x78] sm:$0xff] %v221
              $region41: #{inpaint_generator_forward.44} parent=35 // loop_footer
                %s188 = sadd.s32 1, %s184
              $region42: #{inpaint_generator_forward.44} parent=35 // loop_footer_branch
                %183 = sbr.rel target = $region38
              $region43: #{inpaint_generator_forward.44} parent=35 // loop_exit
                _
            $region36: #{inpaint_generator_forward.44} parent=27 // pred_fallthru
              _
          $region28: #{inpaint_generator_forward.44} parent=23 // pred_fallthru
            _
          %267 = vnop
        $region24: #{inpaint_generator_forward.44} parent=19 // pred_fallthru
          _
        // Predicated region
        $region59: #{inpaint_generator_forward.44} parent=19 // pred_check
          %p268 = pneg %p78
        $region60: #{inpaint_generator_forward.44} parent=19 // pred_check_branch
          %270 = sbr.rel (%p268) target = $region62
        $region61: #{inpaint_generator_forward.44} parent=19 // pred_region
          %s271 = smul.u32 32, %s18
          %p272 = scmp.lt.s32.totalorder %s271, 127
          %s273 = scalar_select %p272, %s271, 127
          %p274 = scmp.lt.s32.totalorder %s17, 0
          %s275 = scalar_select %p274, %s17, 0
          %s276 = sadd.s32 %s275, %s273
          %s277 = smul.addr %s276, 4
          %s278 = scalar_lea.vmem %s1, %s277
          %s279 = smul.u32 32, %s18
        $region62: #{inpaint_generator_forward.44} parent=19 // pred_fallthru
          _
      $region20: #{inpaint_generator_forward.44} parent=5 // pred_fallthru
        _
      %p280 = scmp.le.s32.totalorder 1, %s9
      %p281 = scmp.lt.s32.totalorder %s9, 5
      %p282 = pnand %p280, %p281
      %p283 = pneg %p282
      // Predicated region
      $region63: #{inpaint_generator_forward.44} parent=5 // pred_check
        _
      $region64: #{inpaint_generator_forward.44} parent=5 // pred_check_branch
        %285 = sbr.rel (%p282) target = $region66
      $region65: #{inpaint_generator_forward.44} parent=5 // pred_region
        %s286 = ssub.s32 %s9, 1
        %s287 = sand.u32 %s43, 1
        %s288 = sand.u32 %s43, 1
        %s289 = smul.addr %s288, 128
        %s290 = scalar_lea.vmem [#allocation3], %s289
        // Predicated region
        $region67: #{inpaint_generator_forward.44} parent=65 // pred_check
          %p291 = pneg %p56
        $region68: #{inpaint_generator_forward.44} parent=65 // pred_check_branch
          %293 = sbr.rel (%p291) target = $region70
        $region69: #{inpaint_generator_forward.44} parent=65 // pred_region
          _
        $region70: #{inpaint_generator_forward.44} parent=65 // pred_fallthru
          _
        %s294 = sand.u32 %s43, 1
        %s295 = sand.u32 %s43, 1
        %s296 = smul.addr %s295, 128
        %s297 = scalar_lea.vmem [#allocation3], %s296
        %p298 = pneg %p56
        %p299 = pneg %p53
        %s300 = smul.u32 32, %s21
        %p301 = scmp.lt.s32.totalorder %s300, 127
        %s302 = scalar_select %p301, %s300, 127
        %p303 = scmp.lt.s32.totalorder %s20, 0
        %s304 = scalar_select %p303, %s20, 0
        %s305 = sadd.s32 %s304, %s302
        %s306 = smul.addr %s305, 4
        %s307 = scalar_lea.vmem %s1, %s306
        %p308 = pneg %p84
        %p309 = pneg %p81
        %p310 = scmp.lt.s32.totalorder %s20, 0
        %s311 = scalar_select %p310, %s20, 0
        %s312 = scalar_lea.vmem %s2, %s311
        %p313 = pneg %p110
        %p314 = pneg %p107
        %p315 = pneg %p138
        %p316 = pneg %p135
        %s317 = smul.u32 16, %s19
        %p318 = scmp.lt.s32.totalorder %s317, 15
        %s319 = scalar_select %p318, %s317, 15
        %p320 = scmp.lt.s32.totalorder %s20, 0
        %s321 = scalar_select %p320, %s20, 0
        %s322 = sadd.s32 %s321, %s319
        %s323 = smul.addr %s322, 4
        %s324 = scalar_lea.vmem %s3, %s323
        %s325 = smul.u32 16, %s19
        %s326 = smul.u32 2, %s21
        %s327 = smul.u32 32, %s21
        %p328 = scmp.lt.s32.totalorder %s327, 127
        %s329 = scalar_select %p328, %s327, 127
        %p330 = scmp.lt.s32.totalorder %s20, 0
        %s331 = scalar_select %p330, %s20, 0
        %s332 = sadd.s32 %s331, %s329
        %s333 = smul.addr %s332, 4
        %s334 = scalar_lea.vmem %s1, %s333
        %s335 = smul.u32 32, %s21
        %p336 = scmp.lt.s32.totalorder %s20, 0
        %s337 = scalar_select %p336, %s20, 0
        %s338 = scalar_lea.vmem %s2, %s337
        %s339 = smul.u32 16, %s19
        %p340 = scmp.lt.s32.totalorder %s339, 15
        %s341 = scalar_select %p340, %s339, 15
        %p342 = scmp.lt.s32.totalorder %s20, 0
        %s343 = scalar_select %p342, %s20, 0
        %s344 = sadd.s32 %s343, %s341
        %s345 = smul.addr %s344, 4
        %s346 = scalar_lea.vmem %s3, %s345
        %s347 = smul.u32 16, %s19
        %p349 = scmp.eq.s32.totalorder %s21, 0
        // Predicated region
        $region71: #{inpaint_generator_forward.44} parent=65 // pred_check
          %p350 = pneg %p349
        $region72: #{inpaint_generator_forward.44} parent=65 // pred_check_branch
          %352 = sbr.rel (%p350) target = $region74
        $region73: #{inpaint_generator_forward.44} parent=65 // pred_region
          %353 = vst [vmem:[#allocation2] sm:$0xff] 0.0
          %354 = vst [vmem:[#allocation2 + $0x8] sm:$0xff] 0.0
          %355 = vst [vmem:[#allocation2 + $0x10] sm:$0xff] 0.0
          %356 = vst [vmem:[#allocation2 + $0x18] sm:$0xff] 0.0
          %357 = vst [vmem:[#allocation2 + $0x20] sm:$0xff] 0.0
          %358 = vst [vmem:[#allocation2 + $0x28] sm:$0xff] 0.0
          %359 = vst [vmem:[#allocation2 + $0x30] sm:$0xff] 0.0
          %360 = vst [vmem:[#allocation2 + $0x38] sm:$0xff] 0.0
          %361 = vst [vmem:[#allocation2 + $0x40] sm:$0xff] 0.0
          %362 = vst [vmem:[#allocation2 + $0x48] sm:$0xff] 0.0
          %363 = vst [vmem:[#allocation2 + $0x50] sm:$0xff] 0.0
          %364 = vst [vmem:[#allocation2 + $0x58] sm:$0xff] 0.0
          %365 = vst [vmem:[#allocation2 + $0x60] sm:$0xff] 0.0
          %366 = vst [vmem:[#allocation2 + $0x68] sm:$0xff] 0.0
          %367 = vst [vmem:[#allocation2 + $0x70] sm:$0xff] 0.0
          %368 = vst [vmem:[#allocation2 + $0x78] sm:$0xff] 0.0
        $region74: #{inpaint_generator_forward.44} parent=65 // pred_fallthru
          _
        %v369 = vld [vmem:[#allocation2] sm:$0xff]
        %v370 = vld [vmem:[#allocation2 + $0x8] sm:$0xff]
        %v371 = vld [vmem:[#allocation2 + $0x10] sm:$0xff]
        %v372 = vld [vmem:[#allocation2 + $0x18] sm:$0xff]
        %v373 = vld [vmem:[#allocation2 + $0x20] sm:$0xff]
        %v374 = vld [vmem:[#allocation2 + $0x28] sm:$0xff]
        %v375 = vld [vmem:[#allocation2 + $0x30] sm:$0xff]
        %v376 = vld [vmem:[#allocation2 + $0x38] sm:$0xff]
        %v377 = vld [vmem:[#allocation2 + $0x40] sm:$0xff]
        %v378 = vld [vmem:[#allocation2 + $0x48] sm:$0xff]
        %v379 = vld [vmem:[#allocation2 + $0x50] sm:$0xff]
        %v380 = vld [vmem:[#allocation2 + $0x58] sm:$0xff]
        %v381 = vld [vmem:[#allocation2 + $0x60] sm:$0xff]
        %v382 = vld [vmem:[#allocation2 + $0x68] sm:$0xff]
        %v383 = vld [vmem:[#allocation2 + $0x70] sm:$0xff]
        %v384 = vld [vmem:[#allocation2 + $0x78] sm:$0xff]
        %v385 = vld [vmem:[%s290] sm:$0xff]
        %v386 = vld [vmem:[%s290 + $0x8] sm:$0xff]
        %v387 = vld [vmem:[%s290 + $0x10] sm:$0xff]
        %v388 = vld [vmem:[%s290 + $0x18] sm:$0xff]
        %v389 = vld [vmem:[%s290 + $0x20] sm:$0xff]
        %v390 = vld [vmem:[%s290 + $0x28] sm:$0xff]
        %v391 = vld [vmem:[%s290 + $0x30] sm:$0xff]
        %v392 = vld [vmem:[%s290 + $0x38] sm:$0xff]
        %v393 = vld [vmem:[%s290 + $0x40] sm:$0xff]
        %v394 = vld [vmem:[%s290 + $0x48] sm:$0xff]
        %v395 = vld [vmem:[%s290 + $0x50] sm:$0xff]
        %v396 = vld [vmem:[%s290 + $0x58] sm:$0xff]
        %v397 = vld [vmem:[%s290 + $0x60] sm:$0xff]
        %v398 = vld [vmem:[%s290 + $0x68] sm:$0xff]
        %v399 = vld [vmem:[%s290 + $0x70] sm:$0xff]
        %v400 = vld [vmem:[%s290 + $0x78] sm:$0xff]
        %v401 = vld [vmem:[%s334] sm:$0xf]
        %v402 = vld [vmem:[%s334 + $0x4] sm:$0xf]
        %v403 = vld [vmem:[%s334 + $0x8] sm:$0xf]
        %v404 = vld [vmem:[%s334 + $0xc] sm:$0xf]
        %v405 = vld [vmem:[%s334 + $0x10] sm:$0xf]
        %v406 = vld [vmem:[%s334 + $0x14] sm:$0xf]
        %v407 = vld [vmem:[%s334 + $0x18] sm:$0xf]
        %v408 = vld [vmem:[%s334 + $0x1c] sm:$0xf]
        %v409 = vld [vmem:[%s334 + $0x20] sm:$0xf]
        %v410 = vld [vmem:[%s334 + $0x24] sm:$0xf]
        %v411 = vld [vmem:[%s334 + $0x28] sm:$0xf]
        %v412 = vld [vmem:[%s334 + $0x2c] sm:$0xf]
        %v413 = vld [vmem:[%s334 + $0x30] sm:$0xf]
        %v414 = vld [vmem:[%s334 + $0x34] sm:$0xf]
        %v415 = vld [vmem:[%s334 + $0x38] sm:$0xf]
        %v416 = vld [vmem:[%s334 + $0x3c] sm:$0xf]
        %v417 = vld [vmem:[%s334 + $0x40] sm:$0xf]
        %v418 = vld [vmem:[%s334 + $0x44] sm:$0xf]
        %v419 = vld [vmem:[%s334 + $0x48] sm:$0xf]
        %v420 = vld [vmem:[%s334 + $0x4c] sm:$0xf]
        %v421 = vld [vmem:[%s334 + $0x50] sm:$0xf]
        %v422 = vld [vmem:[%s334 + $0x54] sm:$0xf]
        %v423 = vld [vmem:[%s334 + $0x58] sm:$0xf]
        %v424 = vld [vmem:[%s334 + $0x5c] sm:$0xf]
        %v425 = vld [vmem:[%s334 + $0x60] sm:$0xf]
        %v426 = vld [vmem:[%s334 + $0x64] sm:$0xf]
        %v427 = vld [vmem:[%s334 + $0x68] sm:$0xf]
        %v428 = vld [vmem:[%s334 + $0x6c] sm:$0xf]
        %v429 = vld [vmem:[%s334 + $0x70] sm:$0xf]
        %v430 = vld [vmem:[%s334 + $0x74] sm:$0xf]
        %v431 = vld [vmem:[%s334 + $0x78] sm:$0xf]
        %v432 = vld [vmem:[%s334 + $0x7c] sm:$0xf]
        %v449 = vunpack.c.l.b16 %v385
        %v450 = vunpack.c.h.b16 %v385
        %v451 = vunpack.c.l.b16 %v386
        %v452 = vunpack.c.h.b16 %v386
        %v453 = vunpack.c.l.b16 %v387
        %v454 = vunpack.c.h.b16 %v387
        %v455 = vunpack.c.l.b16 %v388
        %v456 = vunpack.c.h.b16 %v388
        %v457 = vunpack.c.l.b16 %v389
        %v458 = vunpack.c.h.b16 %v389
        %v459 = vunpack.c.l.b16 %v390
        %v460 = vunpack.c.h.b16 %v390
        %v461 = vunpack.c.l.b16 %v391
        %v462 = vunpack.c.h.b16 %v391
        %v463 = vunpack.c.l.b16 %v392
        %v464 = vunpack.c.h.b16 %v392
        %v465 = vunpack.c.l.b16 %v393
        %v466 = vunpack.c.h.b16 %v393
        %v467 = vunpack.c.l.b16 %v394
        %v468 = vunpack.c.h.b16 %v394
        %v469 = vunpack.c.l.b16 %v395
        %v470 = vunpack.c.h.b16 %v395
        %v471 = vunpack.c.l.b16 %v396
        %v472 = vunpack.c.h.b16 %v396
        %v473 = vunpack.c.l.b16 %v397
        %v474 = vunpack.c.h.b16 %v397
        %v475 = vunpack.c.l.b16 %v398
        %v476 = vunpack.c.h.b16 %v398
        %v477 = vunpack.c.l.b16 %v399
        %v478 = vunpack.c.h.b16 %v399
        %v479 = vunpack.c.l.b16 %v400
        %v480 = vunpack.c.h.b16 %v400
        %v481 = vpack.c.b16 %v451, %v449
        %v482 = vpack.c.b16 %v452, %v450
        %v483 = vpack.c.b16 %v455, %v453
        %v484 = vpack.c.b16 %v456, %v454
        %v485 = vpack.c.b16 %v459, %v457
        %v486 = vpack.c.b16 %v460, %v458
        %v487 = vpack.c.b16 %v463, %v461
        %v488 = vpack.c.b16 %v464, %v462
        %v489 = vpack.c.b16 %v467, %v465
        %v490 = vpack.c.b16 %v468, %v466
        %v491 = vpack.c.b16 %v471, %v469
        %v492 = vpack.c.b16 %v472, %v470
        %v493 = vpack.c.b16 %v475, %v473
        %v494 = vpack.c.b16 %v476, %v474
        %v495 = vpack.c.b16 %v479, %v477
        %v496 = vpack.c.b16 %v480, %v478
        %v545 = vunpack.c.l.b16 %v401
        %v546 = vunpack.c.l.b16 %v402
        %v547 = vunpack.c.l.b16 %v403
        %v548 = vunpack.c.l.b16 %v404
        %v549 = vunpack.c.l.b16 %v405
        %v550 = vunpack.c.l.b16 %v406
        %v551 = vunpack.c.l.b16 %v407
        %v552 = vunpack.c.l.b16 %v408
        %v553 = vunpack.c.l.b16 %v409
        %v554 = vunpack.c.l.b16 %v410
        %v555 = vunpack.c.l.b16 %v411
        %v556 = vunpack.c.l.b16 %v412
        %v557 = vunpack.c.l.b16 %v413
        %v558 = vunpack.c.l.b16 %v414
        %v559 = vunpack.c.l.b16 %v415
        %v560 = vunpack.c.l.b16 %v416
        %v561 = vunpack.c.l.b16 %v417
        %v562 = vunpack.c.l.b16 %v418
        %v563 = vunpack.c.l.b16 %v419
        %v564 = vunpack.c.l.b16 %v420
        %v565 = vunpack.c.l.b16 %v421
        %v566 = vunpack.c.l.b16 %v422
        %v567 = vunpack.c.l.b16 %v423
        %v568 = vunpack.c.l.b16 %v424
        %v569 = vunpack.c.l.b16 %v425
        %v570 = vunpack.c.l.b16 %v426
        %v571 = vunpack.c.l.b16 %v427
        %v572 = vunpack.c.l.b16 %v428
        %v573 = vunpack.c.l.b16 %v429
        %v574 = vunpack.c.l.b16 %v430
        %v575 = vunpack.c.l.b16 %v431
        %v576 = vunpack.c.l.b16 %v432
        %v577 = vpack.c.b16 %v546, %v545
        %v578 = vpack.c.b16 %v548, %v547
        %v579 = vpack.c.b16 %v550, %v549
        %v580 = vpack.c.b16 %v552, %v551
        %v581 = vpack.c.b16 %v554, %v553
        %v582 = vpack.c.b16 %v556, %v555
        %v583 = vpack.c.b16 %v558, %v557
        %v584 = vpack.c.b16 %v560, %v559
        %v585 = vpack.c.b16 %v562, %v561
        %v586 = vpack.c.b16 %v564, %v563
        %v587 = vpack.c.b16 %v566, %v565
        %v588 = vpack.c.b16 %v568, %v567
        %v589 = vpack.c.b16 %v570, %v569
        %v590 = vpack.c.b16 %v572, %v571
        %v591 = vpack.c.b16 %v574, %v573
        %v592 = vpack.c.b16 %v576, %v575
        %609 = vmatprep.subr.bf16.mxu0 0
        %610 = vmatpush1.bf16.msra.mxu0 %v577
        %611 = vmatprep.subr.bf16.mxu0 0
        %612 = vmatpush1.bf16.msra.mxu0 %v578
        %613 = vmatprep.subr.bf16.mxu0 0
        %614 = vmatpush1.bf16.msra.mxu0 %v579
        %615 = vmatprep.subr.bf16.mxu0 0
        %616 = vmatpush1.bf16.msra.mxu0 %v580
        %617 = vmatprep.subr.bf16.mxu0 0
        %618 = vmatpush1.bf16.msra.mxu0 %v581
        %619 = vmatprep.subr.bf16.mxu0 0
        %620 = vmatpush1.bf16.msra.mxu0 %v582
        %621 = vmatprep.subr.bf16.mxu0 0
        %622 = vmatpush1.bf16.msra.mxu0 %v583
        %623 = vmatprep.subr.bf16.mxu0 0
        %624 = vmatpush1.bf16.msra.mxu0 %v584
        %625 = vmatprep.subr.bf16.mxu0 0
        %626 = vmatpush1.bf16.msra.mxu0 %v585
        %627 = vmatprep.subr.bf16.mxu0 0
        %628 = vmatpush1.bf16.msra.mxu0 %v586
        %629 = vmatprep.subr.bf16.mxu0 0
        %630 = vmatpush1.bf16.msra.mxu0 %v587
        %631 = vmatprep.subr.bf16.mxu0 0
        %632 = vmatpush1.bf16.msra.mxu0 %v588
        %633 = vmatprep.subr.bf16.mxu0 0
        %634 = vmatpush1.bf16.msra.mxu0 %v589
        %635 = vmatprep.subr.bf16.mxu0 0
        %636 = vmatpush1.bf16.msra.mxu0 %v590
        %637 = vmatprep.subr.bf16.mxu0 0
        %638 = vmatpush1.bf16.msra.mxu0 %v591
        %639 = vmatprep.subr.bf16.mxu0 0
        %640 = vmatpush1.bf16.msra.mxu0 %v592
        %641 = vmatprep.mubr.bf16.mxu0 %v482
        %642 = vmatmul.mubr.bf16.gmra.mrb[0].mxu0 %v481
        %v643 = vpop.f32.mrb[0].mxu0
        %v644 = vadd.f32 0.0, %v643
        %v645 = vpop.f32.mrb[0].mxu0
        %v646 = vpop.f32.mrb[0].mxu0
        %v647 = vadd.f32 0.0, %v646
        %v648 = vpop.f32.mrb[0].mxu0
        %649 = vmatprep.mubr.bf16.mxu0 %v484
        %650 = vmatmul.mubr.bf16.gmra.mrb[0].mxu0 %v483
        %v651 = vpop.f32.mrb[0].mxu0
        %v652 = vadd.f32 0.0, %v651
        %v653 = vpop.f32.mrb[0].mxu0
        %v654 = vpop.f32.mrb[0].mxu0
        %v655 = vadd.f32 0.0, %v654
        %v656 = vpop.f32.mrb[0].mxu0
        %657 = vmatprep.mubr.bf16.mxu0 %v486
        %658 = vmatmul.mubr.bf16.gmra.mrb[0].mxu0 %v485
        %v659 = vpop.f32.mrb[0].mxu0
        %v660 = vadd.f32 0.0, %v659
        %v661 = vpop.f32.mrb[0].mxu0
        %v662 = vpop.f32.mrb[0].mxu0
        %v663 = vadd.f32 0.0, %v662
        %v664 = vpop.f32.mrb[0].mxu0
        %665 = vmatprep.mubr.bf16.mxu0 %v488
        %666 = vmatmul.mubr.bf16.gmra.mrb[0].mxu0 %v487
        %v667 = vpop.f32.mrb[0].mxu0
        %v668 = vadd.f32 0.0, %v667
        %v669 = vpop.f32.mrb[0].mxu0
        %v670 = vpop.f32.mrb[0].mxu0
        %v671 = vadd.f32 0.0, %v670
        %v672 = vpop.f32.mrb[0].mxu0
        %673 = vmatprep.mubr.bf16.mxu0 %v490
        %674 = vmatmul.mubr.bf16.gmra.mrb[0].mxu0 %v489
        %v675 = vpop.f32.mrb[0].mxu0
        %v676 = vadd.f32 0.0, %v675
        %v677 = vpop.f32.mrb[0].mxu0
        %v678 = vpop.f32.mrb[0].mxu0
        %v679 = vadd.f32 0.0, %v678
        %v680 = vpop.f32.mrb[0].mxu0
        %681 = vmatprep.mubr.bf16.mxu0 %v492
        %682 = vmatmul.mubr.bf16.gmra.mrb[0].mxu0 %v491
        %v683 = vpop.f32.mrb[0].mxu0
        %v684 = vadd.f32 0.0, %v683
        %v685 = vpop.f32.mrb[0].mxu0
        %v686 = vpop.f32.mrb[0].mxu0
        %v687 = vadd.f32 0.0, %v686
        %v688 = vpop.f32.mrb[0].mxu0
        %689 = vmatprep.mubr.bf16.mxu0 %v494
        %690 = vmatmul.mubr.bf16.gmra.mrb[0].mxu0 %v493
        %v691 = vpop.f32.mrb[0].mxu0
        %v692 = vadd.f32 0.0, %v691
        %v693 = vpop.f32.mrb[0].mxu0
        %v694 = vpop.f32.mrb[0].mxu0
        %v695 = vadd.f32 0.0, %v694
        %v696 = vpop.f32.mrb[0].mxu0
        %697 = vmatprep.mubr.bf16.mxu0 %v496
        %698 = vmatmul.mubr.bf16.gmra.mrb[0].mxu0 %v495
        %v699 = vpop.f32.mrb[0].mxu0
        %v700 = vadd.f32 0.0, %v699
        %v701 = vpop.f32.mrb[0].mxu0
        %v702 = vpop.f32.mrb[0].mxu0
        %v703 = vadd.f32 0.0, %v702
        %v704 = vpop.f32.mrb[0].mxu0
        %705 = vdwg.mxu0
        %v706 = vadd.f32 %v369, %v644
        %v707 = vadd.f32 %v370, %v647
        %v708 = vadd.f32 %v371, %v652
        %v709 = vadd.f32 %v372, %v655
        %v710 = vadd.f32 %v373, %v660
        %v711 = vadd.f32 %v374, %v663
        %v712 = vadd.f32 %v375, %v668
        %v713 = vadd.f32 %v376, %v671
        %v714 = vadd.f32 %v377, %v676
        %v715 = vadd.f32 %v378, %v679
        %v716 = vadd.f32 %v379, %v684
        %v717 = vadd.f32 %v380, %v687
        %v718 = vadd.f32 %v381, %v692
        %v719 = vadd.f32 %v382, %v695
        %v720 = vadd.f32 %v383, %v700
        %v721 = vadd.f32 %v384, %v703
        %722 = vst [vmem:[#allocation2] sm:$0xff] %v706
        %723 = vst [vmem:[#allocation2 + $0x8] sm:$0xff] %v707
        %724 = vst [vmem:[#allocation2 + $0x10] sm:$0xff] %v708
        %725 = vst [vmem:[#allocation2 + $0x18] sm:$0xff] %v709
        %726 = vst [vmem:[#allocation2 + $0x20] sm:$0xff] %v710
        %727 = vst [vmem:[#allocation2 + $0x28] sm:$0xff] %v711
        %728 = vst [vmem:[#allocation2 + $0x30] sm:$0xff] %v712
        %729 = vst [vmem:[#allocation2 + $0x38] sm:$0xff] %v713
        %730 = vst [vmem:[#allocation2 + $0x40] sm:$0xff] %v714
        %731 = vst [vmem:[#allocation2 + $0x48] sm:$0xff] %v715
        %732 = vst [vmem:[#allocation2 + $0x50] sm:$0xff] %v716
        %733 = vst [vmem:[#allocation2 + $0x58] sm:$0xff] %v717
        %734 = vst [vmem:[#allocation2 + $0x60] sm:$0xff] %v718
        %735 = vst [vmem:[#allocation2 + $0x68] sm:$0xff] %v719
        %736 = vst [vmem:[#allocation2 + $0x70] sm:$0xff] %v720
        %737 = vst [vmem:[#allocation2 + $0x78] sm:$0xff] %v721
        %p738 = scmp.eq.s32.totalorder %s21, 3
        // Predicated region
        $region75: #{inpaint_generator_forward.44} parent=65 // pred_check
          %p739 = pneg %p738
        $region76: #{inpaint_generator_forward.44} parent=65 // pred_check_branch
          %741 = sbr.rel (%p739) target = $region78
        $region77: #{inpaint_generator_forward.44} parent=65 // pred_region
          %v742 = vld [vmem:[#allocation2] sm:$0xff]
          %v743 = vld [vmem:[#allocation2 + $0x8] sm:$0xff]
          %v744 = vld [vmem:[#allocation2 + $0x10] sm:$0xff]
          %v745 = vld [vmem:[#allocation2 + $0x18] sm:$0xff]
          %v746 = vld [vmem:[#allocation2 + $0x20] sm:$0xff]
          %v747 = vld [vmem:[#allocation2 + $0x28] sm:$0xff]
          %v748 = vld [vmem:[#allocation2 + $0x30] sm:$0xff]
          %v749 = vld [vmem:[#allocation2 + $0x38] sm:$0xff]
          %v750 = vld [vmem:[#allocation2 + $0x40] sm:$0xff]
          %v751 = vld [vmem:[#allocation2 + $0x48] sm:$0xff]
          %v752 = vld [vmem:[#allocation2 + $0x50] sm:$0xff]
          %v753 = vld [vmem:[#allocation2 + $0x58] sm:$0xff]
          %v754 = vld [vmem:[#allocation2 + $0x60] sm:$0xff]
          %v755 = vld [vmem:[#allocation2 + $0x68] sm:$0xff]
          %v756 = vld [vmem:[#allocation2 + $0x70] sm:$0xff]
          %v757 = vld [vmem:[#allocation2 + $0x78] sm:$0xff]
          %v758 = vld [vmem:[%s338] sm:$0x1]
          %v760 = vlaneseq
          %v761 = vshrl.u32 %v760, 7
          %v762 = vsub.s32 0, %v761
          %v763 = vrot.slane %v758, %v762
          %v765 = vadd.f32 %v742, %v763
          %v766 = vadd.f32 %v743, %v763
          %v767 = vadd.f32 %v744, %v763
          %v768 = vadd.f32 %v745, %v763
          %v769 = vadd.f32 %v746, %v763
          %v770 = vadd.f32 %v747, %v763
          %v771 = vadd.f32 %v748, %v763
          %v772 = vadd.f32 %v749, %v763
          %v773 = vadd.f32 %v750, %v763
          %v774 = vadd.f32 %v751, %v763
          %v775 = vadd.f32 %v752, %v763
          %v776 = vadd.f32 %v753, %v763
          %v777 = vadd.f32 %v754, %v763
          %v778 = vadd.f32 %v755, %v763
          %v779 = vadd.f32 %v756, %v763
          %v780 = vadd.f32 %v757, %v763
          %v781 = vmax.f32 %v765, 0.0
          %v782 = vmax.f32 %v766, 0.0
          %v783 = vmax.f32 %v767, 0.0
          %v784 = vmax.f32 %v768, 0.0
          %v785 = vmax.f32 %v769, 0.0
          %v786 = vmax.f32 %v770, 0.0
          %v787 = vmax.f32 %v771, 0.0
          %v788 = vmax.f32 %v772, 0.0
          %v789 = vmax.f32 %v773, 0.0
          %v790 = vmax.f32 %v774, 0.0
          %v791 = vmax.f32 %v775, 0.0
          %v792 = vmax.f32 %v776, 0.0
          %v793 = vmax.f32 %v777, 0.0
          %v794 = vmax.f32 %v778, 0.0
          %v795 = vmax.f32 %v779, 0.0
          %v796 = vmax.f32 %v780, 0.0
          %v797 = vpack.c.bf16 %v782, %v781
          %v798 = vpack.c.bf16 %v784, %v783
          %v799 = vpack.c.bf16 %v786, %v785
          %v800 = vpack.c.bf16 %v788, %v787
          %v801 = vpack.c.bf16 %v790, %v789
          %v802 = vpack.c.bf16 %v792, %v791
          %v803 = vpack.c.bf16 %v794, %v793
          %v804 = vpack.c.bf16 %v796, %v795
          %v813 = vunpack.c.l.b16 %v797
          %v814 = vunpack.c.h.b16 %v797
          %v815 = vunpack.c.l.b16 %v798
          %v816 = vunpack.c.h.b16 %v798
          %v817 = vunpack.c.l.b16 %v799
          %v818 = vunpack.c.h.b16 %v799
          %v819 = vunpack.c.l.b16 %v800
          %v820 = vunpack.c.h.b16 %v800
          %v821 = vunpack.c.l.b16 %v801
          %v822 = vunpack.c.h.b16 %v801
          %v823 = vunpack.c.l.b16 %v802
          %v824 = vunpack.c.h.b16 %v802
          %v825 = vunpack.c.l.b16 %v803
          %v826 = vunpack.c.h.b16 %v803
          %v827 = vunpack.c.l.b16 %v804
          %v828 = vunpack.c.h.b16 %v804
          %v829 = vpack.c.b16 %v813, %v813
          %v830 = vpack.c.b16 %v814, %v814
          %v831 = vpack.c.b16 %v815, %v815
          %v832 = vpack.c.b16 %v816, %v816
          %v833 = vpack.c.b16 %v817, %v817
          %v834 = vpack.c.b16 %v818, %v818
          %v835 = vpack.c.b16 %v819, %v819
          %v836 = vpack.c.b16 %v820, %v820
          %v837 = vpack.c.b16 %v821, %v821
          %v838 = vpack.c.b16 %v822, %v822
          %v839 = vpack.c.b16 %v823, %v823
          %v840 = vpack.c.b16 %v824, %v824
          %v841 = vpack.c.b16 %v825, %v825
          %v842 = vpack.c.b16 %v826, %v826
          %v843 = vpack.c.b16 %v827, %v827
          %v844 = vpack.c.b16 %v828, %v828
          %861 = vst [vmem:[%s346] sm:$0xf] %v829
          %862 = vst [vmem:[%s346 + $0x4] sm:$0xf] %v830
          %863 = vst [vmem:[%s346 + $0x8] sm:$0xf] %v831
          %864 = vst [vmem:[%s346 + $0xc] sm:$0xf] %v832
          %865 = vst [vmem:[%s346 + $0x10] sm:$0xf] %v833
          %866 = vst [vmem:[%s346 + $0x14] sm:$0xf] %v834
          %867 = vst [vmem:[%s346 + $0x18] sm:$0xf] %v835
          %868 = vst [vmem:[%s346 + $0x1c] sm:$0xf] %v836
          %869 = vst [vmem:[%s346 + $0x20] sm:$0xf] %v837
          %870 = vst [vmem:[%s346 + $0x24] sm:$0xf] %v838
          %871 = vst [vmem:[%s346 + $0x28] sm:$0xf] %v839
          %872 = vst [vmem:[%s346 + $0x2c] sm:$0xf] %v840
          %873 = vst [vmem:[%s346 + $0x30] sm:$0xf] %v841
          %874 = vst [vmem:[%s346 + $0x34] sm:$0xf] %v842
          %875 = vst [vmem:[%s346 + $0x38] sm:$0xf] %v843
          %876 = vst [vmem:[%s346 + $0x3c] sm:$0xf] %v844
        $region78: #{inpaint_generator_forward.44} parent=65 // pred_fallthru
          _
        %s877 = smul.u32 16, %s19
        %p878 = scmp.lt.s32.totalorder %s877, 15
        %s879 = scalar_select %p878, %s877, 15
        %p880 = scmp.lt.s32.totalorder %s20, 0
        %s881 = scalar_select %p880, %s20, 0
        %s882 = sadd.s32 %s881, %s879
        %s883 = smul.addr %s882, 4
        %s884 = scalar_lea.vmem %s3, %s883
        // Predicated region
        $region79: #{inpaint_generator_forward.44} parent=65 // pred_check
          %p885 = pneg %p135
        $region80: #{inpaint_generator_forward.44} parent=65 // pred_check_branch
          %887 = sbr.rel (%p885) target = $region82
        $region81: #{inpaint_generator_forward.44} parent=65 // pred_region
          %s888 = smul.u32 16, %s19
        $region82: #{inpaint_generator_forward.44} parent=65 // pred_fallthru
          _
        // Predicated region
        $region83: #{inpaint_generator_forward.44} parent=65 // pred_check
          %p889 = pneg %p135
        $region84: #{inpaint_generator_forward.44} parent=65 // pred_check_branch
          %891 = sbr.rel (%p889) target = $region86
        $region85: #{inpaint_generator_forward.44} parent=65 // pred_region
          %s892 = smul.u32 16, %s19
          %p893 = scmp.lt.s32.totalorder %s892, 15
          %s894 = scalar_select %p893, %s892, 15
          %p895 = scmp.lt.s32.totalorder %s20, 0
          %s896 = scalar_select %p895, %s20, 0
          %s897 = sadd.s32 %s896, %s894
          %s898 = smul.addr %s897, 4
          %s899 = scalar_lea.vmem %s3, %s898
        $region86: #{inpaint_generator_forward.44} parent=65 // pred_fallthru
          _
      $region66: #{inpaint_generator_forward.44} parent=5 // pred_fallthru
        _
      %p900 = scmp.le.s32.totalorder 2, %s9
      // Predicated region
      $region87: #{inpaint_generator_forward.44} parent=5 // pred_check
        %p901 = pneg %p900
      $region88: #{inpaint_generator_forward.44} parent=5 // pred_check_branch
        %903 = sbr.rel (%p901) target = $region90
      $region89: #{inpaint_generator_forward.44} parent=5 // pred_region
        %s904 = ssub.s32 %s9, 2
      $region90: #{inpaint_generator_forward.44} parent=5 // pred_fallthru
        _
    $region6: #{inpaint_generator_forward.44} parent=1 // loop_footer
      %s13 = sadd.s32 1, %s9
    $region7: #{inpaint_generator_forward.44} parent=1 // loop_footer_branch
      %8 = sbr.rel target = $region3
    $region8: #{inpaint_generator_forward.44} parent=1 // loop_exit
      _

// kernel: inpaint_generator_forward.45
$region0: #{inpaint_generator_forward.45}
  #allocation0 [shape = 'u32[]', space=smem, size = 0x4, offset = 0x4, fixed_abs, tag = 'smem constant byte address 0x4 - core index']
  #allocation1 [shape = 'u32[144,128]{1,0:T(1,128)}', space=vmem, size = 0x12000, scoped, tag = 'internal scratch']
  #allocation2 [shape = 'f32[32,128]{1,0:T(8,128)}', space=vmem, size = 0x4000, scoped, tag = 'scratch operand']
  %s0 = inlined_call_operand.vmem [shape: bf16[32,2048], index: 0, kind: input, shape index: {}]
  %s1 = inlined_call_operand.vmem [shape: bf16[2048,256], index: 1, kind: input, shape index: {}]
  %s2 = inlined_call_operand.vmem [shape: f32[1,256], index: 2, kind: input, shape index: {}]
  %s3 = inlined_call_operand.vmem [shape: bf16[32,256], index: 3, kind: output, shape index: {}]
  %s4 = sld [smem:[#allocation0]]
  $region169: #{inpaint_generator_forward.45} parent=0
    _
  %s6 = ssub.s32 1, %s4
  %s7 = scalar_select 0, %s6, %s4
  $region1: #{inpaint_generator_forward.45} parent=0
    #allocation3 [shape = 'u8[32768]{0}', space=vmem, size = 0x8000, scoped, tag = 'input window, operand 0']
    #allocation4 [shape = 'u8[131072]{0}', space=vmem, size = 0x20000, scoped, tag = 'input window, operand 1']
    #allocation5 [shape = 'u8[16384]{0}', space=vmem, size = 0x4000, scoped, tag = 'output window, operand 0']
    loop: start=0, step=1, limit=18
    $region2: #{inpaint_generator_forward.45} parent=1 // loop_pre_header
      _
    $region3: #{inpaint_generator_forward.45} parent=1 // loop_header
      %s9 = sphi 0, %s13
      %p10 = scmp.ge.s32.totalorder %s9, 18
      %s16 = sphi 0, %s35
      %s17 = sphi 0, %s31
      %s18 = sphi 0, %s27
      %s19 = sphi 0, %s16
      %s20 = sphi 0, %s17
      %s21 = sphi 0, %s18
      %s22 = sphi 0, %s19
      %s23 = sphi 0, %s20
      %s24 = sphi 0, %s21
      %s40 = sphi 0, %s42
      %s43 = sphi 0, %s40
      %s44 = sphi 0, %s43
      %s60 = sphi 0, %s44
      %s68 = sphi 0, %s70
      %s71 = sphi 0, %s68
      %s72 = sphi 0, %s71
      %s88 = sphi 0, %s72
      %s94 = sphi 0, %s96
      %s97 = sphi 0, %s94
      %s98 = sphi 0, %s97
      %s114 = sphi 0, %s98
      %s122 = sphi 0, %s124
      %s125 = sphi 0, %s122
      %s126 = sphi 0, %s125
      %s142 = sphi 0, %s126
    $region4: #{inpaint_generator_forward.45} parent=1 // loop_header_branch
      %12 = sbr.rel (%p10) target = $region8
    $region5: #{inpaint_generator_forward.45} parent=1 // loop_body
      %s14 = ssub.s32 %s9, 1
      %s15 = ssub.s32 %s9, 2
      %s25 = sadd.s32 1, %s18
      %p26 = scmp.ge.s32.totalorder %s25, 8
      %s27 = scalar_select %p26, 0, %s25
      %s28 = sadd.s32 1, %s17
      %s29 = scalar_select %p26, %s28, %s17
      %p30 = scmp.ge.s32.totalorder %s29, 2
      %s31 = scalar_select %p30, 0, %s29
      %s32 = sadd.s32 1, %s16
      %s33 = scalar_select %p30, %s32, %s16
      %p34 = scmp.ge.s32.totalorder %s33, 1
      %s35 = scalar_select %p34, 0, %s33
      %s36 = ssub.s32 %s16, %s35
      %s37 = ssub.s32 %s18, %s27
      %s38 = sor.u32 %s36, %s37
      %p39 = scmp.eq.s32.totalorder %s38, 0
      %s41 = sadd.s32 %s40, 1
      %s42 = scalar_select %p39, %s40, %s41
      %p45 = pneg %p39
      %p46 = scmp.eq.s32.totalorder %s9, 15
      %p47 = por %p45, %p46
      %p48 = scmp.ne.s32.totalorder %s40, %s43
      %p49 = scmp.eq.s32.totalorder %s9, 0
      %p50 = por %p48, %p49
      %p51 = scmp.ne.s32.totalorder %s40, %s43
      %p52 = scmp.eq.s32.totalorder %s14, 15
      %p53 = por %p51, %p52
      %p54 = scmp.ne.s32.totalorder %s43, %s44
      %p55 = scmp.eq.s32.totalorder %s14, 0
      %p56 = por %p54, %p55
      %p57 = scmp.ne.s32.totalorder %s43, %s44
      %p58 = scmp.eq.s32.totalorder %s15, 15
      %p59 = por %p57, %p58
      %p61 = scmp.ne.s32.totalorder %s44, %s60
      %p62 = scmp.eq.s32.totalorder %s15, 0
      %p63 = por %p61, %p62
      %s64 = ssub.s32 %s18, %s27
      %s65 = ssub.s32 %s17, %s31
      %s66 = sor.u32 %s64, %s65
      %p67 = scmp.eq.s32.totalorder %s66, 0
      %s69 = sadd.s32 %s68, 1
      %s70 = scalar_select %p67, %s68, %s69
      %p73 = pneg %p67
      %p74 = scmp.eq.s32.totalorder %s9, 15
      %p75 = por %p73, %p74
      %p76 = scmp.ne.s32.totalorder %s68, %s71
      %p77 = scmp.eq.s32.totalorder %s9, 0
      %p78 = por %p76, %p77
      %p79 = scmp.ne.s32.totalorder %s68, %s71
      %p80 = scmp.eq.s32.totalorder %s14, 15
      %p81 = por %p79, %p80
      %p82 = scmp.ne.s32.totalorder %s71, %s72
      %p83 = scmp.eq.s32.totalorder %s14, 0
      %p84 = por %p82, %p83
      %p85 = scmp.ne.s32.totalorder %s71, %s72
      %p86 = scmp.eq.s32.totalorder %s15, 15
      %p87 = por %p85, %p86
      %p89 = scmp.ne.s32.totalorder %s72, %s88
      %p90 = scmp.eq.s32.totalorder %s15, 0
      %p91 = por %p89, %p90
      %s92 = ssub.s32 %s17, %s31
      %p93 = scmp.eq.s32.totalorder %s92, 0
      %s95 = sadd.s32 %s94, 1
      %s96 = scalar_select %p93, %s94, %s95
      %p99 = pneg %p93
      %p100 = scmp.eq.s32.totalorder %s9, 15
      %p101 = por %p99, %p100
      %p102 = scmp.ne.s32.totalorder %s94, %s97
      %p103 = scmp.eq.s32.totalorder %s9, 0
      %p104 = por %p102, %p103
      %p105 = scmp.ne.s32.totalorder %s94, %s97
      %p106 = scmp.eq.s32.totalorder %s14, 15
      %p107 = por %p105, %p106
      %p108 = scmp.ne.s32.totalorder %s97, %s98
      %p109 = scmp.eq.s32.totalorder %s14, 0
      %p110 = por %p108, %p109
      %p111 = scmp.ne.s32.totalorder %s97, %s98
      %p112 = scmp.eq.s32.totalorder %s15, 15
      %p113 = por %p111, %p112
      %p115 = scmp.ne.s32.totalorder %s98, %s114
      %p116 = scmp.eq.s32.totalorder %s15, 0
      %p117 = por %p115, %p116
      %s118 = ssub.s32 %s16, %s35
      %s119 = ssub.s32 %s17, %s31
      %s120 = sor.u32 %s118, %s119
      %p121 = scmp.eq.s32.totalorder %s120, 0
      %s123 = sadd.s32 %s122, 1
      %s124 = scalar_select %p121, %s122, %s123
      %p127 = pneg %p121
      %p128 = scmp.eq.s32.totalorder %s9, 15
      %p129 = por %p127, %p128
      %p130 = scmp.ne.s32.totalorder %s122, %s125
      %p131 = scmp.eq.s32.totalorder %s9, 0
      %p132 = por %p130, %p131
      %p133 = scmp.ne.s32.totalorder %s122, %s125
      %p134 = scmp.eq.s32.totalorder %s14, 15
      %p135 = por %p133, %p134
      %p136 = scmp.ne.s32.totalorder %s125, %s126
      %p137 = scmp.eq.s32.totalorder %s14, 0
      %p138 = por %p136, %p137
      %p139 = scmp.ne.s32.totalorder %s125, %s126
      %p140 = scmp.eq.s32.totalorder %s15, 15
      %p141 = por %p139, %p140
      %p143 = scmp.ne.s32.totalorder %s126, %s142
      %p144 = scmp.eq.s32.totalorder %s15, 0
      %p145 = por %p143, %p144
      %p146 = scmp.le.s32.totalorder 1, %s9
      %p147 = scmp.lt.s32.totalorder %s9, 17
      %p148 = pnand %p146, %p147
      %p149 = pneg %p148
      // Predicated region
      $region9: #{inpaint_generator_forward.45} parent=5 // pred_check
        _
      $region10: #{inpaint_generator_forward.45} parent=5 // pred_check_branch
        %151 = sbr.rel (%p148) target = $region12
      $region11: #{inpaint_generator_forward.45} parent=5 // pred_region
        %s152 = ssub.s32 %s9, 1
      $region12: #{inpaint_generator_forward.45} parent=5 // pred_fallthru
        _
      %p153 = scmp.lt.s32.totalorder %s9, 16
      // Predicated region
      $region13: #{inpaint_generator_forward.45} parent=5 // pred_check
        %p154 = pneg %p153
      $region14: #{inpaint_generator_forward.45} parent=5 // pred_check_branch
        %156 = sbr.rel (%p154) target = $region16
      $region15: #{inpaint_generator_forward.45} parent=5 // pred_region
        // Predicated region
        $region17: #{inpaint_generator_forward.45} parent=15 // pred_check
          %p157 = pneg %p50
        $region18: #{inpaint_generator_forward.45} parent=15 // pred_check_branch
          %159 = sbr.rel (%p157) target = $region20
        $region19: #{inpaint_generator_forward.45} parent=15 // pred_region
          %s160 = sand.u32 %s40, 1
          %s161 = sand.u32 %s40, 1
          %s162 = smul.addr %s161, 32
          %s163 = scalar_lea.vmem [#allocation3], %s162
          %s164 = smul.u32 4, %s16
          %s165 = smul.u32 2, %s18
          %s166 = smul.addr %s164, 16
          %s167 = sadd.s32 %s165, %s166
          %s168 = smul.addr %s167, 4
          %s169 = scalar_lea.vmem %s0, %s168
          // Predicated region
          $region21: #{inpaint_generator_forward.45} parent=19 // pred_check
            _
          $region22: #{inpaint_generator_forward.45} parent=19 // pred_check_branch
            %171 = sbr.rel (0) target = $region24
          $region23: #{inpaint_generator_forward.45} parent=19 // pred_region
            // Predicated region
            $region25: #{inpaint_generator_forward.45} parent=23 // pred_check
              _
            $region26: #{inpaint_generator_forward.45} parent=23 // pred_check_branch
              %173 = sbr.rel (0) target = $region28
            $region27: #{inpaint_generator_forward.45} parent=23 // pred_region
              // Predicated region
              $region40: #{inpaint_generator_forward.45} parent=27 // pred_check
                _
              $region41: #{inpaint_generator_forward.45} parent=27 // pred_check_branch
                %194 = sbr.rel (0) target = $region43
              $region42: #{inpaint_generator_forward.45} parent=27 // pred_region
                loop: start=0, step=1, limit=1
                $region44: #{inpaint_generator_forward.45} parent=42 // loop_pre_header
                  _
                $region45: #{inpaint_generator_forward.45} parent=42 // loop_header
                  %s196 = sphi 0, %s200
                  %p197 = scmp.ge.s32.totalorder %s196, 1
                  %s201 = sphi %s169, %s169
                  %s202 = sphi %s163, %s163
                $region46: #{inpaint_generator_forward.45} parent=42 // loop_header_branch
                  %199 = sbr.rel (%p197) target = $region50
                $region47: #{inpaint_generator_forward.45} parent=42 // loop_body
                  %v203 = vld [vmem:[%s201] sm:$0xff]
                  %204 = vst [vmem:[%s202] sm:$0xff] %v203
                  %v205 = vld [vmem:[%s201 + $0x40] sm:$0xff]
                  %206 = vst [vmem:[%s202 + $0x8] sm:$0xff] %v205
                  %v207 = vld [vmem:[%s201 + $0x80] sm:$0xff]
                  %208 = vst [vmem:[%s202 + $0x10] sm:$0xff] %v207
                  %v209 = vld [vmem:[%s201 + $0xc0] sm:$0xff]
                  %210 = vst [vmem:[%s202 + $0x18] sm:$0xff] %v209
                $region48: #{inpaint_generator_forward.45} parent=42 // loop_footer
                  %s200 = sadd.s32 1, %s196
                $region49: #{inpaint_generator_forward.45} parent=42 // loop_footer_branch
                  %195 = sbr.rel target = $region45
                $region50: #{inpaint_generator_forward.45} parent=42 // loop_exit
                  _
              $region43: #{inpaint_generator_forward.45} parent=27 // pred_fallthru
                _
              // Predicated region
              $region51: #{inpaint_generator_forward.45} parent=27 // pred_check
                _
              $region52: #{inpaint_generator_forward.45} parent=27 // pred_check_branch
                %212 = sbr.rel target = $region54
              $region53: #{inpaint_generator_forward.45} parent=27 // pred_region
                _
              $region54: #{inpaint_generator_forward.45} parent=27 // pred_fallthru
                _
            $region28: #{inpaint_generator_forward.45} parent=23 // pred_fallthru
              _
            // Predicated region
            $region29: #{inpaint_generator_forward.45} parent=23 // pred_check
              _
            $region30: #{inpaint_generator_forward.45} parent=23 // pred_check_branch
              %175 = sbr.rel target = $region32
            $region31: #{inpaint_generator_forward.45} parent=23 // pred_region
              loop: start=0, step=1, limit=1
              $region33: #{inpaint_generator_forward.45} parent=31 // loop_pre_header
                _
              $region34: #{inpaint_generator_forward.45} parent=31 // loop_header
                %s178 = sphi 0, %s182
                %p179 = scmp.ge.s32.totalorder %s178, 1
                %s183 = sphi %s169, %s169
                %s184 = sphi %s163, %s163
              $region35: #{inpaint_generator_forward.45} parent=31 // loop_header_branch
                %181 = sbr.rel (%p179) target = $region39
              $region36: #{inpaint_generator_forward.45} parent=31 // loop_body
                %v185 = vld [vmem:[%s183] sm:$0xff]
                %186 = vst [vmem:[%s184] sm:$0xff] %v185
                %v187 = vld [vmem:[%s183 + $0x40] sm:$0xff]
                %188 = vst [vmem:[%s184 + $0x8] sm:$0xff] %v187
                %v189 = vld [vmem:[%s183 + $0x80] sm:$0xff]
                %190 = vst [vmem:[%s184 + $0x10] sm:$0xff] %v189
                %v191 = vld [vmem:[%s183 + $0xc0] sm:$0xff]
                %192 = vst [vmem:[%s184 + $0x18] sm:$0xff] %v191
              $region37: #{inpaint_generator_forward.45} parent=31 // loop_footer
                %s182 = sadd.s32 1, %s178
              $region38: #{inpaint_generator_forward.45} parent=31 // loop_footer_branch
                %177 = sbr.rel target = $region34
              $region39: #{inpaint_generator_forward.45} parent=31 // loop_exit
                _
            $region32: #{inpaint_generator_forward.45} parent=23 // pred_fallthru
              _
          $region24: #{inpaint_generator_forward.45} parent=19 // pred_fallthru
            _
          %213 = vnop
        $region20: #{inpaint_generator_forward.45} parent=15 // pred_fallthru
          _
        // Predicated region
        $region55: #{inpaint_generator_forward.45} parent=15 // pred_check
          %p214 = pneg %p78
        $region56: #{inpaint_generator_forward.45} parent=15 // pred_check_branch
          %216 = sbr.rel (%p214) target = $region58
        $region57: #{inpaint_generator_forward.45} parent=15 // pred_region
          %s217 = sand.u32 %s68, 1
          %s218 = sand.u32 %s68, 1
          %s219 = smul.addr %s218, 128
          %s220 = scalar_lea.vmem [#allocation4], %s219
          %s221 = smul.u32 32, %s18
          %s222 = smul.addr %s221, 2
          %s223 = sadd.s32 %s17, %s222
          %s224 = smul.addr %s223, 4
          %s225 = scalar_lea.vmem %s1, %s224
          // Predicated region
          $region59: #{inpaint_generator_forward.45} parent=57 // pred_check
            _
          $region60: #{inpaint_generator_forward.45} parent=57 // pred_check_branch
            %227 = sbr.rel (0) target = $region62
          $region61: #{inpaint_generator_forward.45} parent=57 // pred_region
            // Predicated region
            $region63: #{inpaint_generator_forward.45} parent=61 // pred_check
              _
            $region64: #{inpaint_generator_forward.45} parent=61 // pred_check_branch
              %229 = sbr.rel target = $region66
            $region65: #{inpaint_generator_forward.45} parent=61 // pred_region
              // Predicated region
              $region78: #{inpaint_generator_forward.45} parent=65 // pred_check
                _
              $region79: #{inpaint_generator_forward.45} parent=65 // pred_check_branch
                %306 = sbr.rel (0) target = $region81
              $region80: #{inpaint_generator_forward.45} parent=65 // pred_region
                loop: start=0, step=1, limit=1
                $region82: #{inpaint_generator_forward.45} parent=80 // loop_pre_header
                  _
                $region83: #{inpaint_generator_forward.45} parent=80 // loop_header
                  %s308 = sphi 0, %s312
                  %p309 = scmp.ge.s32.totalorder %s308, 1
                  %s313 = sphi %s225, %s225
                  %s314 = sphi %s220, %s220
                $region84: #{inpaint_generator_forward.45} parent=80 // loop_header_branch
                  %311 = sbr.rel (%p309) target = $region88
                $region85: #{inpaint_generator_forward.45} parent=80 // loop_body
                  _
                $region86: #{inpaint_generator_forward.45} parent=80 // loop_footer
                  %s312 = sadd.s32 1, %s308
                $region87: #{inpaint_generator_forward.45} parent=80 // loop_footer_branch
                  %307 = sbr.rel target = $region83
                $region88: #{inpaint_generator_forward.45} parent=80 // loop_exit
                  _
                loop: start=0, step=1, limit=1
                $region89: #{inpaint_generator_forward.45} parent=80 // loop_pre_header
                  _
                $region90: #{inpaint_generator_forward.45} parent=80 // loop_header
                  %s317 = sphi 0, %s321
                  %p318 = scmp.ge.s32.totalorder %s317, 1
                  %s322 = sphi %s225, %s225
                  %s323 = sphi %s220, %s220
                $region91: #{inpaint_generator_forward.45} parent=80 // loop_header_branch
                  %320 = sbr.rel (%p318) target = $region95
                $region92: #{inpaint_generator_forward.45} parent=80 // loop_body
                  %v324 = vld [vmem:[%s322] sm:$0xf]
                  %325 = vst [vmem:[%s323] sm:$0xf] %v324
                  %v326 = vld [vmem:[%s322 + $0x8] sm:$0xf]
                  %327 = vst [vmem:[%s323 + $0x4] sm:$0xf] %v326
                  %v328 = vld [vmem:[%s322 + $0x10] sm:$0xf]
                  %329 = vst [vmem:[%s323 + $0x8] sm:$0xf] %v328
                  %v330 = vld [vmem:[%s322 + $0x18] sm:$0xf]
                  %331 = vst [vmem:[%s323 + $0xc] sm:$0xf] %v330
                  %v332 = vld [vmem:[%s322 + $0x20] sm:$0xf]
                  %333 = vst [vmem:[%s323 + $0x10] sm:$0xf] %v332
                  %v334 = vld [vmem:[%s322 + $0x28] sm:$0xf]
                  %335 = vst [vmem:[%s323 + $0x14] sm:$0xf] %v334
                  %v336 = vld [vmem:[%s322 + $0x30] sm:$0xf]
                  %337 = vst [vmem:[%s323 + $0x18] sm:$0xf] %v336
                  %v338 = vld [vmem:[%s322 + $0x38] sm:$0xf]
                  %339 = vst [vmem:[%s323 + $0x1c] sm:$0xf] %v338
                  %v340 = vld [vmem:[%s322 + $0x40] sm:$0xf]
                  %341 = vst [vmem:[%s323 + $0x20] sm:$0xf] %v340
                  %v342 = vld [vmem:[%s322 + $0x48] sm:$0xf]
                  %343 = vst [vmem:[%s323 + $0x24] sm:$0xf] %v342
                  %v344 = vld [vmem:[%s322 + $0x50] sm:$0xf]
                  %345 = vst [vmem:[%s323 + $0x28] sm:$0xf] %v344
                  %v346 = vld [vmem:[%s322 + $0x58] sm:$0xf]
                  %347 = vst [vmem:[%s323 + $0x2c] sm:$0xf] %v346
                  %v348 = vld [vmem:[%s322 + $0x60] sm:$0xf]
                  %349 = vst [vmem:[%s323 + $0x30] sm:$0xf] %v348
                  %v350 = vld [vmem:[%s322 + $0x68] sm:$0xf]
                  %351 = vst [vmem:[%s323 + $0x34] sm:$0xf] %v350
                  %v352 = vld [vmem:[%s322 + $0x70] sm:$0xf]
                  %353 = vst [vmem:[%s323 + $0x38] sm:$0xf] %v352
                  %v354 = vld [vmem:[%s322 + $0x78] sm:$0xf]
                  %355 = vst [vmem:[%s323 + $0x3c] sm:$0xf] %v354
                  %v356 = vld [vmem:[%s322 + $0x80] sm:$0xf]
                  %357 = vst [vmem:[%s323 + $0x40] sm:$0xf] %v356
                  %v358 = vld [vmem:[%s322 + $0x88] sm:$0xf]
                  %359 = vst [vmem:[%s323 + $0x44] sm:$0xf] %v358
                  %v360 = vld [vmem:[%s322 + $0x90] sm:$0xf]
                  %361 = vst [vmem:[%s323 + $0x48] sm:$0xf] %v360
                  %v362 = vld [vmem:[%s322 + $0x98] sm:$0xf]
                  %363 = vst [vmem:[%s323 + $0x4c] sm:$0xf] %v362
                  %v364 = vld [vmem:[%s322 + $0xa0] sm:$0xf]
                  %365 = vst [vmem:[%s323 + $0x50] sm:$0xf] %v364
                  %v366 = vld [vmem:[%s322 + $0xa8] sm:$0xf]
                  %367 = vst [vmem:[%s323 + $0x54] sm:$0xf] %v366
                  %v368 = vld [vmem:[%s322 + $0xb0] sm:$0xf]
                  %369 = vst [vmem:[%s323 + $0x58] sm:$0xf] %v368
                  %v370 = vld [vmem:[%s322 + $0xb8] sm:$0xf]
                  %371 = vst [vmem:[%s323 + $0x5c] sm:$0xf] %v370
                  %v372 = vld [vmem:[%s322 + $0xc0] sm:$0xf]
                  %373 = vst [vmem:[%s323 + $0x60] sm:$0xf] %v372
                  %v374 = vld [vmem:[%s322 + $0xc8] sm:$0xf]
                  %375 = vst [vmem:[%s323 + $0x64] sm:$0xf] %v374
                  %v376 = vld [vmem:[%s322 + $0xd0] sm:$0xf]
                  %377 = vst [vmem:[%s323 + $0x68] sm:$0xf] %v376
                  %v378 = vld [vmem:[%s322 + $0xd8] sm:$0xf]
                  %379 = vst [vmem:[%s323 + $0x6c] sm:$0xf] %v378
                  %v380 = vld [vmem:[%s322 + $0xe0] sm:$0xf]
                  %381 = vst [vmem:[%s323 + $0x70] sm:$0xf] %v380
                  %v382 = vld [vmem:[%s322 + $0xe8] sm:$0xf]
                  %383 = vst [vmem:[%s323 + $0x74] sm:$0xf] %v382
                  %v384 = vld [vmem:[%s322 + $0xf0] sm:$0xf]
                  %385 = vst [vmem:[%s323 + $0x78] sm:$0xf] %v384
                  %v386 = vld [vmem:[%s322 + $0xf8] sm:$0xf]
                  %387 = vst [vmem:[%s323 + $0x7c] sm:$0xf] %v386
                $region93: #{inpaint_generator_forward.45} parent=80 // loop_footer
                  %s321 = sadd.s32 1, %s317
                $region94: #{inpaint_generator_forward.45} parent=80 // loop_footer_branch
                  %316 = sbr.rel target = $region90
                $region95: #{inpaint_generator_forward.45} parent=80 // loop_exit
                  _
              $region81: #{inpaint_generator_forward.45} parent=65 // pred_fallthru
                _
            $region66: #{inpaint_generator_forward.45} parent=61 // pred_fallthru
              _
            // Predicated region
            $region67: #{inpaint_generator_forward.45} parent=61 // pred_check
              _
            $region68: #{inpaint_generator_forward.45} parent=61 // pred_check_branch
              %231 = sbr.rel (0) target = $region70
            $region69: #{inpaint_generator_forward.45} parent=61 // pred_region
              loop: start=0, step=1, limit=1
              $region71: #{inpaint_generator_forward.45} parent=69 // loop_pre_header
                _
              $region72: #{inpaint_generator_forward.45} parent=69 // loop_header
                %s234 = sphi 0, %s238
                %p235 = scmp.ge.s32.totalorder %s234, 1
                %s239 = sphi %s225, %s225
                %s240 = sphi %s220, %s220
              $region73: #{inpaint_generator_forward.45} parent=69 // loop_header_branch
                %237 = sbr.rel (%p235) target = $region77
              $region74: #{inpaint_generator_forward.45} parent=69 // loop_body
                %v241 = vld [vmem:[%s239] sm:$0xf]
                %242 = vst [vmem:[%s240] sm:$0xf] %v241
                %v243 = vld [vmem:[%s239 + $0x8] sm:$0xf]
                %244 = vst [vmem:[%s240 + $0x4] sm:$0xf] %v243
                %v245 = vld [vmem:[%s239 + $0x10] sm:$0xf]
                %246 = vst [vmem:[%s240 + $0x8] sm:$0xf] %v245
                %v247 = vld [vmem:[%s239 + $0x18] sm:$0xf]
                %248 = vst [vmem:[%s240 + $0xc] sm:$0xf] %v247
                %v249 = vld [vmem:[%s239 + $0x20] sm:$0xf]
                %250 = vst [vmem:[%s240 + $0x10] sm:$0xf] %v249
                %v251 = vld [vmem:[%s239 + $0x28] sm:$0xf]
                %252 = vst [vmem:[%s240 + $0x14] sm:$0xf] %v251
                %v253 = vld [vmem:[%s239 + $0x30] sm:$0xf]
                %254 = vst [vmem:[%s240 + $0x18] sm:$0xf] %v253
                %v255 = vld [vmem:[%s239 + $0x38] sm:$0xf]
                %256 = vst [vmem:[%s240 + $0x1c] sm:$0xf] %v255
                %v257 = vld [vmem:[%s239 + $0x40] sm:$0xf]
                %258 = vst [vmem:[%s240 + $0x20] sm:$0xf] %v257
                %v259 = vld [vmem:[%s239 + $0x48] sm:$0xf]
                %260 = vst [vmem:[%s240 + $0x24] sm:$0xf] %v259
                %v261 = vld [vmem:[%s239 + $0x50] sm:$0xf]
                %262 = vst [vmem:[%s240 + $0x28] sm:$0xf] %v261
                %v263 = vld [vmem:[%s239 + $0x58] sm:$0xf]
                %264 = vst [vmem:[%s240 + $0x2c] sm:$0xf] %v263
                %v265 = vld [vmem:[%s239 + $0x60] sm:$0xf]
                %266 = vst [vmem:[%s240 + $0x30] sm:$0xf] %v265
                %v267 = vld [vmem:[%s239 + $0x68] sm:$0xf]
                %268 = vst [vmem:[%s240 + $0x34] sm:$0xf] %v267
                %v269 = vld [vmem:[%s239 + $0x70] sm:$0xf]
                %270 = vst [vmem:[%s240 + $0x38] sm:$0xf] %v269
                %v271 = vld [vmem:[%s239 + $0x78] sm:$0xf]
                %272 = vst [vmem:[%s240 + $0x3c] sm:$0xf] %v271
                %v273 = vld [vmem:[%s239 + $0x80] sm:$0xf]
                %274 = vst [vmem:[%s240 + $0x40] sm:$0xf] %v273
                %v275 = vld [vmem:[%s239 + $0x88] sm:$0xf]
                %276 = vst [vmem:[%s240 + $0x44] sm:$0xf] %v275
                %v277 = vld [vmem:[%s239 + $0x90] sm:$0xf]
                %278 = vst [vmem:[%s240 + $0x48] sm:$0xf] %v277
                %v279 = vld [vmem:[%s239 + $0x98] sm:$0xf]
                %280 = vst [vmem:[%s240 + $0x4c] sm:$0xf] %v279
                %v281 = vld [vmem:[%s239 + $0xa0] sm:$0xf]
                %282 = vst [vmem:[%s240 + $0x50] sm:$0xf] %v281
                %v283 = vld [vmem:[%s239 + $0xa8] sm:$0xf]
                %284 = vst [vmem:[%s240 + $0x54] sm:$0xf] %v283
                %v285 = vld [vmem:[%s239 + $0xb0] sm:$0xf]
                %286 = vst [vmem:[%s240 + $0x58] sm:$0xf] %v285
                %v287 = vld [vmem:[%s239 + $0xb8] sm:$0xf]
                %288 = vst [vmem:[%s240 + $0x5c] sm:$0xf] %v287
                %v289 = vld [vmem:[%s239 + $0xc0] sm:$0xf]
                %290 = vst [vmem:[%s240 + $0x60] sm:$0xf] %v289
                %v291 = vld [vmem:[%s239 + $0xc8] sm:$0xf]
                %292 = vst [vmem:[%s240 + $0x64] sm:$0xf] %v291
                %v293 = vld [vmem:[%s239 + $0xd0] sm:$0xf]
                %294 = vst [vmem:[%s240 + $0x68] sm:$0xf] %v293
                %v295 = vld [vmem:[%s239 + $0xd8] sm:$0xf]
                %296 = vst [vmem:[%s240 + $0x6c] sm:$0xf] %v295
                %v297 = vld [vmem:[%s239 + $0xe0] sm:$0xf]
                %298 = vst [vmem:[%s240 + $0x70] sm:$0xf] %v297
                %v299 = vld [vmem:[%s239 + $0xe8] sm:$0xf]
                %300 = vst [vmem:[%s240 + $0x74] sm:$0xf] %v299
                %v301 = vld [vmem:[%s239 + $0xf0] sm:$0xf]
                %302 = vst [vmem:[%s240 + $0x78] sm:$0xf] %v301
                %v303 = vld [vmem:[%s239 + $0xf8] sm:$0xf]
                %304 = vst [vmem:[%s240 + $0x7c] sm:$0xf] %v303
              $region75: #{inpaint_generator_forward.45} parent=69 // loop_footer
                %s238 = sadd.s32 1, %s234
              $region76: #{inpaint_generator_forward.45} parent=69 // loop_footer_branch
                %233 = sbr.rel target = $region72
              $region77: #{inpaint_generator_forward.45} parent=69 // loop_exit
                _
            $region70: #{inpaint_generator_forward.45} parent=61 // pred_fallthru
              _
          $region62: #{inpaint_generator_forward.45} parent=57 // pred_fallthru
            _
          %388 = vnop
        $region58: #{inpaint_generator_forward.45} parent=15 // pred_fallthru
          _
        // Predicated region
        $region96: #{inpaint_generator_forward.45} parent=15 // pred_check
          %p389 = pneg %p104
        $region97: #{inpaint_generator_forward.45} parent=15 // pred_check_branch
          %391 = sbr.rel (%p389) target = $region99
        $region98: #{inpaint_generator_forward.45} parent=15 // pred_region
          %p392 = scmp.lt.s32.totalorder %s17, 1
          %s393 = scalar_select %p392, %s17, 1
          %s394 = scalar_lea.vmem %s2, %s393
        $region99: #{inpaint_generator_forward.45} parent=15 // pred_fallthru
          _
      $region16: #{inpaint_generator_forward.45} parent=5 // pred_fallthru
        _
      %p395 = scmp.le.s32.totalorder 1, %s9
      %p396 = scmp.lt.s32.totalorder %s9, 17
      %p397 = pnand %p395, %p396
      %p398 = pneg %p397
      // Predicated region
      $region100: #{inpaint_generator_forward.45} parent=5 // pred_check
        _
      $region101: #{inpaint_generator_forward.45} parent=5 // pred_check_branch
        %400 = sbr.rel (%p397) target = $region103
      $region102: #{inpaint_generator_forward.45} parent=5 // pred_region
        %s401 = ssub.s32 %s9, 1
        %s402 = sand.u32 %s43, 1
        %s403 = sand.u32 %s43, 1
        %s404 = smul.addr %s403, 32
        %s405 = scalar_lea.vmem [#allocation3], %s404
        // Predicated region
        $region104: #{inpaint_generator_forward.45} parent=102 // pred_check
          %p406 = pneg %p56
        $region105: #{inpaint_generator_forward.45} parent=102 // pred_check_branch
          %408 = sbr.rel (%p406) target = $region107
        $region106: #{inpaint_generator_forward.45} parent=102 // pred_region
          _
        $region107: #{inpaint_generator_forward.45} parent=102 // pred_fallthru
          _
        %s409 = sand.u32 %s71, 1
        %s410 = sand.u32 %s71, 1
        %s411 = smul.addr %s410, 128
        %s412 = scalar_lea.vmem [#allocation4], %s411
        // Predicated region
        $region108: #{inpaint_generator_forward.45} parent=102 // pred_check
          %p413 = pneg %p84
        $region109: #{inpaint_generator_forward.45} parent=102 // pred_check_branch
          %415 = sbr.rel (%p413) target = $region111
        $region110: #{inpaint_generator_forward.45} parent=102 // pred_region
          _
        $region111: #{inpaint_generator_forward.45} parent=102 // pred_fallthru
          _
        %s416 = sand.u32 %s43, 1
        %s417 = sand.u32 %s43, 1
        %s418 = smul.addr %s417, 32
        %s419 = scalar_lea.vmem [#allocation3], %s418
        %p420 = pneg %p56
        %p421 = pneg %p53
        %s422 = sand.u32 %s71, 1
        %s423 = sand.u32 %s71, 1
        %s424 = smul.addr %s423, 128
        %s425 = scalar_lea.vmem [#allocation4], %s424
        %p426 = pneg %p84
        %p427 = pneg %p81
        %p428 = scmp.lt.s32.totalorder %s20, 1
        %s429 = scalar_select %p428, %s20, 1
        %s430 = scalar_lea.vmem %s2, %s429
        %p431 = pneg %p110
        %p432 = pneg %p107
        %p433 = pneg %p138
        %p434 = pneg %p135
        %s435 = sand.u32 %s125, 1
        %s436 = sand.u32 %s125, 1
        %s437 = smul.addr %s436, 16
        %s438 = scalar_lea.vmem [#allocation5], %s437
        %s439 = smul.u32 4, %s19
        %s440 = smul.u32 2, %s21
        %s441 = smul.u32 32, %s21
        %p442 = scmp.lt.s32.totalorder %s20, 1
        %s443 = scalar_select %p442, %s20, 1
        %s444 = scalar_lea.vmem %s2, %s443
        %s445 = smul.u32 4, %s19
        %p447 = scmp.eq.s32.totalorder %s21, 0
        // Predicated region
        $region112: #{inpaint_generator_forward.45} parent=102 // pred_check
          %p448 = pneg %p447
        $region113: #{inpaint_generator_forward.45} parent=102 // pred_check_branch
          %450 = sbr.rel (%p448) target = $region115
        $region114: #{inpaint_generator_forward.45} parent=102 // pred_region
          %451 = vst [vmem:[#allocation2] sm:$0xff] 0.0
          %452 = vst [vmem:[#allocation2 + $0x8] sm:$0xff] 0.0
          %453 = vst [vmem:[#allocation2 + $0x10] sm:$0xff] 0.0
          %454 = vst [vmem:[#allocation2 + $0x18] sm:$0xff] 0.0
        $region115: #{inpaint_generator_forward.45} parent=102 // pred_fallthru
          _
        %v455 = vld [vmem:[#allocation2] sm:$0xff]
        %v456 = vld [vmem:[#allocation2 + $0x8] sm:$0xff]
        %v457 = vld [vmem:[#allocation2 + $0x10] sm:$0xff]
        %v458 = vld [vmem:[#allocation2 + $0x18] sm:$0xff]
        %v459 = vld [vmem:[%s405] sm:$0xff]
        %v460 = vld [vmem:[%s405 + $0x8] sm:$0xff]
        %v461 = vld [vmem:[%s405 + $0x10] sm:$0xff]
        %v462 = vld [vmem:[%s405 + $0x18] sm:$0xff]
        %v463 = vld [vmem:[%s412] sm:$0xf]
        %v464 = vld [vmem:[%s412 + $0x4] sm:$0xf]
        %v465 = vld [vmem:[%s412 + $0x8] sm:$0xf]
        %v466 = vld [vmem:[%s412 + $0xc] sm:$0xf]
        %v467 = vld [vmem:[%s412 + $0x10] sm:$0xf]
        %v468 = vld [vmem:[%s412 + $0x14] sm:$0xf]
        %v469 = vld [vmem:[%s412 + $0x18] sm:$0xf]
        %v470 = vld [vmem:[%s412 + $0x1c] sm:$0xf]
        %v471 = vld [vmem:[%s412 + $0x20] sm:$0xf]
        %v472 = vld [vmem:[%s412 + $0x24] sm:$0xf]
        %v473 = vld [vmem:[%s412 + $0x28] sm:$0xf]
        %v474 = vld [vmem:[%s412 + $0x2c] sm:$0xf]
        %v475 = vld [vmem:[%s412 + $0x30] sm:$0xf]
        %v476 = vld [vmem:[%s412 + $0x34] sm:$0xf]
        %v477 = vld [vmem:[%s412 + $0x38] sm:$0xf]
        %v478 = vld [vmem:[%s412 + $0x3c] sm:$0xf]
        %v479 = vld [vmem:[%s412 + $0x40] sm:$0xf]
        %v480 = vld [vmem:[%s412 + $0x44] sm:$0xf]
        %v481 = vld [vmem:[%s412 + $0x48] sm:$0xf]
        %v482 = vld [vmem:[%s412 + $0x4c] sm:$0xf]
        %v483 = vld [vmem:[%s412 + $0x50] sm:$0xf]
        %v484 = vld [vmem:[%s412 + $0x54] sm:$0xf]
        %v485 = vld [vmem:[%s412 + $0x58] sm:$0xf]
        %v486 = vld [vmem:[%s412 + $0x5c] sm:$0xf]
        %v487 = vld [vmem:[%s412 + $0x60] sm:$0xf]
        %v488 = vld [vmem:[%s412 + $0x64] sm:$0xf]
        %v489 = vld [vmem:[%s412 + $0x68] sm:$0xf]
        %v490 = vld [vmem:[%s412 + $0x6c] sm:$0xf]
        %v491 = vld [vmem:[%s412 + $0x70] sm:$0xf]
        %v492 = vld [vmem:[%s412 + $0x74] sm:$0xf]
        %v493 = vld [vmem:[%s412 + $0x78] sm:$0xf]
        %v494 = vld [vmem:[%s412 + $0x7c] sm:$0xf]
        %v499 = vunpack.c.l.b16 %v459
        %v500 = vunpack.c.h.b16 %v459
        %v501 = vunpack.c.l.b16 %v460
        %v502 = vunpack.c.h.b16 %v460
        %v503 = vunpack.c.l.b16 %v461
        %v504 = vunpack.c.h.b16 %v461
        %v505 = vunpack.c.l.b16 %v462
        %v506 = vunpack.c.h.b16 %v462
        %v507 = vpack.c.b16 %v501, %v499
        %v508 = vpack.c.b16 %v502, %v500
        %v509 = vpack.c.b16 %v505, %v503
        %v510 = vpack.c.b16 %v506, %v504
        %v547 = vunpack.c.l.b16 %v463
        %v548 = vunpack.c.l.b16 %v464
        %v549 = vunpack.c.l.b16 %v465
        %v550 = vunpack.c.l.b16 %v466
        %v551 = vunpack.c.l.b16 %v467
        %v552 = vunpack.c.l.b16 %v468
        %v553 = vunpack.c.l.b16 %v469
        %v554 = vunpack.c.l.b16 %v470
        %v555 = vunpack.c.l.b16 %v471
        %v556 = vunpack.c.l.b16 %v472
        %v557 = vunpack.c.l.b16 %v473
        %v558 = vunpack.c.l.b16 %v474
        %v559 = vunpack.c.l.b16 %v475
        %v560 = vunpack.c.l.b16 %v476
        %v561 = vunpack.c.l.b16 %v477
        %v562 = vunpack.c.l.b16 %v478
        %v563 = vunpack.c.l.b16 %v479
        %v564 = vunpack.c.l.b16 %v480
        %v565 = vunpack.c.l.b16 %v481
        %v566 = vunpack.c.l.b16 %v482
        %v567 = vunpack.c.l.b16 %v483
        %v568 = vunpack.c.l.b16 %v484
        %v569 = vunpack.c.l.b16 %v485
        %v570 = vunpack.c.l.b16 %v486
        %v571 = vunpack.c.l.b16 %v487
        %v572 = vunpack.c.l.b16 %v488
        %v573 = vunpack.c.l.b16 %v489
        %v574 = vunpack.c.l.b16 %v490
        %v575 = vunpack.c.l.b16 %v491
        %v576 = vunpack.c.l.b16 %v492
        %v577 = vunpack.c.l.b16 %v493
        %v578 = vunpack.c.l.b16 %v494
        %v579 = vpack.c.b16 %v548, %v547
        %v580 = vpack.c.b16 %v550, %v549
        %v581 = vpack.c.b16 %v552, %v551
        %v582 = vpack.c.b16 %v554, %v553
        %v583 = vpack.c.b16 %v556, %v555
        %v584 = vpack.c.b16 %v558, %v557
        %v585 = vpack.c.b16 %v560, %v559
        %v586 = vpack.c.b16 %v562, %v561
        %v587 = vpack.c.b16 %v564, %v563
        %v588 = vpack.c.b16 %v566, %v565
        %v589 = vpack.c.b16 %v568, %v567
        %v590 = vpack.c.b16 %v570, %v569
        %v591 = vpack.c.b16 %v572, %v571
        %v592 = vpack.c.b16 %v574, %v573
        %v593 = vpack.c.b16 %v576, %v575
        %v594 = vpack.c.b16 %v578, %v577
        %611 = vmatprep.subr.bf16.mxu0 0
        %612 = vmatpush1.bf16.msra.mxu0 %v579
        %613 = vmatprep.subr.bf16.mxu0 0
        %614 = vmatpush1.bf16.msra.mxu0 %v580
        %615 = vmatprep.subr.bf16.mxu0 0
        %616 = vmatpush1.bf16.msra.mxu0 %v581
        %617 = vmatprep.subr.bf16.mxu0 0
        %618 = vmatpush1.bf16.msra.mxu0 %v582
        %619 = vmatprep.subr.bf16.mxu0 0
        %620 = vmatpush1.bf16.msra.mxu0 %v583
        %621 = vmatprep.subr.bf16.mxu0 0
        %622 = vmatpush1.bf16.msra.mxu0 %v584
        %623 = vmatprep.subr.bf16.mxu0 0
        %624 = vmatpush1.bf16.msra.mxu0 %v585
        %625 = vmatprep.subr.bf16.mxu0 0
        %626 = vmatpush1.bf16.msra.mxu0 %v586
        %627 = vmatprep.subr.bf16.mxu0 0
        %628 = vmatpush1.bf16.msra.mxu0 %v587
        %629 = vmatprep.subr.bf16.mxu0 0
        %630 = vmatpush1.bf16.msra.mxu0 %v588
        %631 = vmatprep.subr.bf16.mxu0 0
        %632 = vmatpush1.bf16.msra.mxu0 %v589
        %633 = vmatprep.subr.bf16.mxu0 0
        %634 = vmatpush1.bf16.msra.mxu0 %v590
        %635 = vmatprep.subr.bf16.mxu0 0
        %636 = vmatpush1.bf16.msra.mxu0 %v591
        %637 = vmatprep.subr.bf16.mxu0 0
        %638 = vmatpush1.bf16.msra.mxu0 %v592
        %639 = vmatprep.subr.bf16.mxu0 0
        %640 = vmatpush1.bf16.msra.mxu0 %v593
        %641 = vmatprep.subr.bf16.mxu0 0
        %642 = vmatpush1.bf16.msra.mxu0 %v594
        %643 = vmatprep.mubr.bf16.mxu0 %v508
        %644 = vmatmul.mubr.bf16.gmra.mrb[0].mxu0 %v507
        %v645 = vpop.f32.mrb[0].mxu0
        %v646 = vadd.f32 0.0, %v645
        %v647 = vpop.f32.mrb[0].mxu0
        %v648 = vpop.f32.mrb[0].mxu0
        %v649 = vadd.f32 0.0, %v648
        %v650 = vpop.f32.mrb[0].mxu0
        %651 = vmatprep.mubr.bf16.mxu0 %v510
        %652 = vmatmul.mubr.bf16.gmra.mrb[0].mxu0 %v509
        %v653 = vpop.f32.mrb[0].mxu0
        %v654 = vadd.f32 0.0, %v653
        %v655 = vpop.f32.mrb[0].mxu0
        %v656 = vpop.f32.mrb[0].mxu0
        %v657 = vadd.f32 0.0, %v656
        %v658 = vpop.f32.mrb[0].mxu0
        %659 = vdwg.mxu0
        %v660 = vadd.f32 %v455, %v646
        %v661 = vadd.f32 %v456, %v649
        %v662 = vadd.f32 %v457, %v654
        %v663 = vadd.f32 %v458, %v657
        %664 = vst [vmem:[#allocation2] sm:$0xff] %v660
        %665 = vst [vmem:[#allocation2 + $0x8] sm:$0xff] %v661
        %666 = vst [vmem:[#allocation2 + $0x10] sm:$0xff] %v662
        %667 = vst [vmem:[#allocation2 + $0x18] sm:$0xff] %v663
        %p668 = scmp.eq.s32.totalorder %s21, 7
        // Predicated region
        $region116: #{inpaint_generator_forward.45} parent=102 // pred_check
          %p669 = pneg %p668
        $region117: #{inpaint_generator_forward.45} parent=102 // pred_check_branch
          %671 = sbr.rel (%p669) target = $region119
        $region118: #{inpaint_generator_forward.45} parent=102 // pred_region
          %v672 = vld [vmem:[#allocation2] sm:$0xff]
          %v673 = vld [vmem:[#allocation2 + $0x8] sm:$0xff]
          %v674 = vld [vmem:[#allocation2 + $0x10] sm:$0xff]
          %v675 = vld [vmem:[#allocation2 + $0x18] sm:$0xff]
          %v676 = vld [vmem:[%s444] sm:$0x1]
          %v678 = vlaneseq
          %v679 = vshrl.u32 %v678, 7
          %v680 = vsub.s32 0, %v679
          %v681 = vrot.slane %v676, %v680
          %v683 = vadd.f32 %v672, %v681
          %v684 = vadd.f32 %v673, %v681
          %v685 = vadd.f32 %v674, %v681
          %v686 = vadd.f32 %v675, %v681
          %v687 = vmax.f32 %v683, 0.0
          %v688 = vmax.f32 %v684, 0.0
          %v689 = vmax.f32 %v685, 0.0
          %v690 = vmax.f32 %v686, 0.0
          %v691 = vpack.c.bf16 %v688, %v687
          %v692 = vpack.c.bf16 %v690, %v689
          %v695 = vunpack.c.l.b16 %v691
          %v696 = vunpack.c.h.b16 %v691
          %v697 = vunpack.c.l.b16 %v692
          %v698 = vunpack.c.h.b16 %v692
          %v699 = vpack.c.b16 %v695, %v695
          %v700 = vpack.c.b16 %v696, %v696
          %v701 = vpack.c.b16 %v697, %v697
          %v702 = vpack.c.b16 %v698, %v698
          %707 = vst [vmem:[%s438] sm:$0xf] %v699
          %708 = vst [vmem:[%s438 + $0x4] sm:$0xf] %v700
          %709 = vst [vmem:[%s438 + $0x8] sm:$0xf] %v701
          %710 = vst [vmem:[%s438 + $0xc] sm:$0xf] %v702
        $region119: #{inpaint_generator_forward.45} parent=102 // pred_fallthru
          _
        %s711 = sand.u32 %s125, 1
        %s712 = sand.u32 %s125, 1
        %s713 = smul.addr %s712, 16
        %s714 = scalar_lea.vmem [#allocation5], %s713
        // Predicated region
        $region120: #{inpaint_generator_forward.45} parent=102 // pred_check
          %p715 = pneg %p135
        $region121: #{inpaint_generator_forward.45} parent=102 // pred_check_branch
          %717 = sbr.rel (%p715) target = $region123
        $region122: #{inpaint_generator_forward.45} parent=102 // pred_region
          %s718 = smul.u32 4, %s19
          %s719 = smul.addr %s718, 2
          %s720 = sadd.s32 %s20, %s719
          %s721 = smul.addr %s720, 4
          %s722 = scalar_lea.vmem %s3, %s721
          // Predicated region
          $region124: #{inpaint_generator_forward.45} parent=122 // pred_check
            _
          $region125: #{inpaint_generator_forward.45} parent=122 // pred_check_branch
            %724 = sbr.rel (0) target = $region127
          $region126: #{inpaint_generator_forward.45} parent=122 // pred_region
            // Predicated region
            $region128: #{inpaint_generator_forward.45} parent=126 // pred_check
              _
            $region129: #{inpaint_generator_forward.45} parent=126 // pred_check_branch
              %726 = sbr.rel target = $region131
            $region130: #{inpaint_generator_forward.45} parent=126 // pred_region
              // Predicated region
              $region143: #{inpaint_generator_forward.45} parent=130 // pred_check
                _
              $region144: #{inpaint_generator_forward.45} parent=130 // pred_check_branch
                %747 = sbr.rel (0) target = $region146
              $region145: #{inpaint_generator_forward.45} parent=130 // pred_region
                loop: start=0, step=1, limit=1
                $region147: #{inpaint_generator_forward.45} parent=145 // loop_pre_header
                  _
                $region148: #{inpaint_generator_forward.45} parent=145 // loop_header
                  %s749 = sphi 0, %s753
                  %p750 = scmp.ge.s32.totalorder %s749, 1
                  %s754 = sphi %s714, %s714
                  %s755 = sphi %s722, %s722
                $region149: #{inpaint_generator_forward.45} parent=145 // loop_header_branch
                  %752 = sbr.rel (%p750) target = $region153
                $region150: #{inpaint_generator_forward.45} parent=145 // loop_body
                  _
                $region151: #{inpaint_generator_forward.45} parent=145 // loop_footer
                  %s753 = sadd.s32 1, %s749
                $region152: #{inpaint_generator_forward.45} parent=145 // loop_footer_branch
                  %748 = sbr.rel target = $region148
                $region153: #{inpaint_generator_forward.45} parent=145 // loop_exit
                  _
                loop: start=0, step=1, limit=1
                $region154: #{inpaint_generator_forward.45} parent=145 // loop_pre_header
                  _
                $region155: #{inpaint_generator_forward.45} parent=145 // loop_header
                  %s758 = sphi 0, %s762
                  %p759 = scmp.ge.s32.totalorder %s758, 1
                  %s763 = sphi %s714, %s714
                  %s764 = sphi %s722, %s722
                $region156: #{inpaint_generator_forward.45} parent=145 // loop_header_branch
                  %761 = sbr.rel (%p759) target = $region160
                $region157: #{inpaint_generator_forward.45} parent=145 // loop_body
                  %v765 = vld [vmem:[%s763] sm:$0xf]
                  %766 = vst [vmem:[%s764] sm:$0xf] %v765
                  %v767 = vld [vmem:[%s763 + $0x4] sm:$0xf]
                  %768 = vst [vmem:[%s764 + $0x8] sm:$0xf] %v767
                  %v769 = vld [vmem:[%s763 + $0x8] sm:$0xf]
                  %770 = vst [vmem:[%s764 + $0x10] sm:$0xf] %v769
                  %v771 = vld [vmem:[%s763 + $0xc] sm:$0xf]
                  %772 = vst [vmem:[%s764 + $0x18] sm:$0xf] %v771
                $region158: #{inpaint_generator_forward.45} parent=145 // loop_footer
                  %s762 = sadd.s32 1, %s758
                $region159: #{inpaint_generator_forward.45} parent=145 // loop_footer_branch
                  %757 = sbr.rel target = $region155
                $region160: #{inpaint_generator_forward.45} parent=145 // loop_exit
                  _
              $region146: #{inpaint_generator_forward.45} parent=130 // pred_fallthru
                _
            $region131: #{inpaint_generator_forward.45} parent=126 // pred_fallthru
              _
            // Predicated region
            $region132: #{inpaint_generator_forward.45} parent=126 // pred_check
              _
            $region133: #{inpaint_generator_forward.45} parent=126 // pred_check_branch
              %728 = sbr.rel (0) target = $region135
            $region134: #{inpaint_generator_forward.45} parent=126 // pred_region
              loop: start=0, step=1, limit=1
              $region136: #{inpaint_generator_forward.45} parent=134 // loop_pre_header
                _
              $region137: #{inpaint_generator_forward.45} parent=134 // loop_header
                %s731 = sphi 0, %s735
                %p732 = scmp.ge.s32.totalorder %s731, 1
                %s736 = sphi %s714, %s714
                %s737 = sphi %s722, %s722
              $region138: #{inpaint_generator_forward.45} parent=134 // loop_header_branch
                %734 = sbr.rel (%p732) target = $region142
              $region139: #{inpaint_generator_forward.45} parent=134 // loop_body
                %v738 = vld [vmem:[%s736] sm:$0xf]
                %739 = vst [vmem:[%s737] sm:$0xf] %v738
                %v740 = vld [vmem:[%s736 + $0x4] sm:$0xf]
                %741 = vst [vmem:[%s737 + $0x8] sm:$0xf] %v740
                %v742 = vld [vmem:[%s736 + $0x8] sm:$0xf]
                %743 = vst [vmem:[%s737 + $0x10] sm:$0xf] %v742
                %v744 = vld [vmem:[%s736 + $0xc] sm:$0xf]
                %745 = vst [vmem:[%s737 + $0x18] sm:$0xf] %v744
              $region140: #{inpaint_generator_forward.45} parent=134 // loop_footer
                %s735 = sadd.s32 1, %s731
              $region141: #{inpaint_generator_forward.45} parent=134 // loop_footer_branch
                %730 = sbr.rel target = $region137
              $region142: #{inpaint_generator_forward.45} parent=134 // loop_exit
                _
            $region135: #{inpaint_generator_forward.45} parent=126 // pred_fallthru
              _
          $region127: #{inpaint_generator_forward.45} parent=122 // pred_fallthru
            _
          %773 = vnop
        $region123: #{inpaint_generator_forward.45} parent=102 // pred_fallthru
          _
      $region103: #{inpaint_generator_forward.45} parent=5 // pred_fallthru
        _
      %p774 = scmp.le.s32.totalorder 2, %s9
      // Predicated region
      $region161: #{inpaint_generator_forward.45} parent=5 // pred_check
        %p775 = pneg %p774
      $region162: #{inpaint_generator_forward.45} parent=5 // pred_check_branch
        %777 = sbr.rel (%p775) target = $region164
      $region163: #{inpaint_generator_forward.45} parent=5 // pred_region
        %s778 = ssub.s32 %s9, 2
        // Predicated region
        $region165: #{inpaint_generator_forward.45} parent=163 // pred_check
          %p779 = pneg %p141
        $region166: #{inpaint_generator_forward.45} parent=163 // pred_check_branch
          %781 = sbr.rel (%p779) target = $region168
        $region167: #{inpaint_generator_forward.45} parent=163 // pred_region
          %s782 = sand.u32 %s126, 1
          %s783 = sand.u32 %s126, 1
          %s784 = smul.addr %s783, 16
          %s785 = scalar_lea.vmem [#allocation5], %s784
        $region168: #{inpaint_generator_forward.45} parent=163 // pred_fallthru
          _
      $region164: #{inpaint_generator_forward.45} parent=5 // pred_fallthru
        _
    $region6: #{inpaint_generator_forward.45} parent=1 // loop_footer
      %s13 = sadd.s32 1, %s9
    $region7: #{inpaint_generator_forward.45} parent=1 // loop_footer_branch
      %8 = sbr.rel target = $region3
    $region8: #{inpaint_generator_forward.45} parent=1 // loop_exit
      _

// kernel: inpaint_generator_forward.47
$region0: #{inpaint_generator_forward.47}
  #allocation0 [shape = 'u32[]', space=smem, size = 0x4, offset = 0x4, fixed_abs, tag = 'smem constant byte address 0x4 - core index']
  #allocation1 [shape = 'u32[144,128]{1,0:T(1,128)}', space=vmem, size = 0x12000, scoped, tag = 'internal scratch']
  %s0 = inlined_call_operand.vmem [shape: bf16[2,16,256], index: 0, kind: input, shape index: {}]
  %s1 = inlined_call_operand.vmem [shape: bf16[2,16,256], index: 1, kind: output, shape index: {}]
  %s2 = sld [smem:[#allocation0]]
  $region115: #{inpaint_generator_forward.47} parent=0
    _
  %s4 = ssub.s32 1, %s2
  %s5 = scalar_select 0, %s4, %s2
  $region1: #{inpaint_generator_forward.47} parent=0
    #allocation2 [shape = 'u8[8192]{0}', space=vmem, size = 0x2000, scoped, tag = 'input window, operand 0']
    #allocation3 [shape = 'u8[8192]{0}', space=vmem, size = 0x2000, scoped, tag = 'output window, operand 0']
    loop: start=0, step=1, limit=6
    $region2: #{inpaint_generator_forward.47} parent=1 // loop_pre_header
      _
    $region3: #{inpaint_generator_forward.47} parent=1 // loop_header
      %s7 = sphi 0, %s11
      %p8 = scmp.ge.s32.totalorder %s7, 6
      %s14 = sphi 0, %s26
      %s15 = sphi 0, %s22
      %s16 = sphi 0, %s14
      %s17 = sphi 0, %s15
      %s18 = sphi 0, %s16
      %s19 = sphi 0, %s17
      %s31 = sphi 0, %s33
      %s34 = sphi 0, %s31
      %s35 = sphi 0, %s34
      %s51 = sphi 0, %s35
      %s59 = sphi 0, %s61
      %s62 = sphi 0, %s59
      %s63 = sphi 0, %s62
      %s79 = sphi 0, %s63
    $region4: #{inpaint_generator_forward.47} parent=1 // loop_header_branch
      %10 = sbr.rel (%p8) target = $region8
    $region5: #{inpaint_generator_forward.47} parent=1 // loop_body
      %s12 = ssub.s32 %s7, 1
      %s13 = ssub.s32 %s7, 2
      %s20 = sadd.s32 1, %s15
      %p21 = scmp.ge.s32.totalorder %s20, 2
      %s22 = scalar_select %p21, 0, %s20
      %s23 = sadd.s32 1, %s14
      %s24 = scalar_select %p21, %s23, %s14
      %p25 = scmp.ge.s32.totalorder %s24, 2
      %s26 = scalar_select %p25, 0, %s24
      %s27 = ssub.s32 %s14, %s26
      %s28 = ssub.s32 %s15, %s22
      %s29 = sor.u32 %s27, %s28
      %p30 = scmp.eq.s32.totalorder %s29, 0
      %s32 = sadd.s32 %s31, 1
      %s33 = scalar_select %p30, %s31, %s32
      %p36 = pneg %p30
      %p37 = scmp.eq.s32.totalorder %s7, 3
      %p38 = por %p36, %p37
      %p39 = scmp.ne.s32.totalorder %s31, %s34
      %p40 = scmp.eq.s32.totalorder %s7, 0
      %p41 = por %p39, %p40
      %p42 = scmp.ne.s32.totalorder %s31, %s34
      %p43 = scmp.eq.s32.totalorder %s12, 3
      %p44 = por %p42, %p43
      %p45 = scmp.ne.s32.totalorder %s34, %s35
      %p46 = scmp.eq.s32.totalorder %s12, 0
      %p47 = por %p45, %p46
      %p48 = scmp.ne.s32.totalorder %s34, %s35
      %p49 = scmp.eq.s32.totalorder %s13, 3
      %p50 = por %p48, %p49
      %p52 = scmp.ne.s32.totalorder %s35, %s51
      %p53 = scmp.eq.s32.totalorder %s13, 0
      %p54 = por %p52, %p53
      %s55 = ssub.s32 %s14, %s26
      %s56 = ssub.s32 %s15, %s22
      %s57 = sor.u32 %s55, %s56
      %p58 = scmp.eq.s32.totalorder %s57, 0
      %s60 = sadd.s32 %s59, 1
      %s61 = scalar_select %p58, %s59, %s60
      %p64 = pneg %p58
      %p65 = scmp.eq.s32.totalorder %s7, 3
      %p66 = por %p64, %p65
      %p67 = scmp.ne.s32.totalorder %s59, %s62
      %p68 = scmp.eq.s32.totalorder %s7, 0
      %p69 = por %p67, %p68
      %p70 = scmp.ne.s32.totalorder %s59, %s62
      %p71 = scmp.eq.s32.totalorder %s12, 3
      %p72 = por %p70, %p71
      %p73 = scmp.ne.s32.totalorder %s62, %s63
      %p74 = scmp.eq.s32.totalorder %s12, 0
      %p75 = por %p73, %p74
      %p76 = scmp.ne.s32.totalorder %s62, %s63
      %p77 = scmp.eq.s32.totalorder %s13, 3
      %p78 = por %p76, %p77
      %p80 = scmp.ne.s32.totalorder %s63, %s79
      %p81 = scmp.eq.s32.totalorder %s13, 0
      %p82 = por %p80, %p81
      %p83 = scmp.le.s32.totalorder 1, %s7
      %p84 = scmp.lt.s32.totalorder %s7, 5
      %p85 = pnand %p83, %p84
      %p86 = pneg %p85
      // Predicated region
      $region9: #{inpaint_generator_forward.47} parent=5 // pred_check
        _
      $region10: #{inpaint_generator_forward.47} parent=5 // pred_check_branch
        %88 = sbr.rel (%p85) target = $region12
      $region11: #{inpaint_generator_forward.47} parent=5 // pred_region
        %s89 = ssub.s32 %s7, 1
      $region12: #{inpaint_generator_forward.47} parent=5 // pred_fallthru
        _
      %p90 = scmp.lt.s32.totalorder %s7, 4
      // Predicated region
      $region13: #{inpaint_generator_forward.47} parent=5 // pred_check
        %p91 = pneg %p90
      $region14: #{inpaint_generator_forward.47} parent=5 // pred_check_branch
        %93 = sbr.rel (%p91) target = $region16
      $region15: #{inpaint_generator_forward.47} parent=5 // pred_region
        // Predicated region
        $region17: #{inpaint_generator_forward.47} parent=15 // pred_check
          %p94 = pneg %p41
        $region18: #{inpaint_generator_forward.47} parent=15 // pred_check_branch
          %96 = sbr.rel (%p94) target = $region20
        $region19: #{inpaint_generator_forward.47} parent=15 // pred_region
          %s97 = sand.u32 %s31, 1
          %s98 = sand.u32 %s31, 1
          %s99 = smul.addr %s98, 8
          %s100 = scalar_lea.vmem [#allocation2], %s99
          %s101 = smul.addr %s14, 4
          %s102 = sadd.s32 %s15, %s101
          %s103 = smul.addr %s102, 4
          %s104 = scalar_lea.vmem %s0, %s103
          // Predicated region
          $region21: #{inpaint_generator_forward.47} parent=19 // pred_check
            _
          $region22: #{inpaint_generator_forward.47} parent=19 // pred_check_branch
            %106 = sbr.rel (0) target = $region24
          $region23: #{inpaint_generator_forward.47} parent=19 // pred_region
            // Predicated region
            $region25: #{inpaint_generator_forward.47} parent=23 // pred_check
              _
            $region26: #{inpaint_generator_forward.47} parent=23 // pred_check_branch
              %108 = sbr.rel target = $region28
            $region27: #{inpaint_generator_forward.47} parent=23 // pred_region
              // Predicated region
              $region40: #{inpaint_generator_forward.47} parent=27 // pred_check
                _
              $region41: #{inpaint_generator_forward.47} parent=27 // pred_check_branch
                %125 = sbr.rel (0) target = $region43
              $region42: #{inpaint_generator_forward.47} parent=27 // pred_region
                loop: start=0, step=1, limit=1
                $region44: #{inpaint_generator_forward.47} parent=42 // loop_pre_header
                  _
                $region45: #{inpaint_generator_forward.47} parent=42 // loop_header
                  %s127 = sphi 0, %s131
                  %p128 = scmp.ge.s32.totalorder %s127, 1
                  %s132 = sphi %s104, %s104
                  %s133 = sphi %s100, %s100
                $region46: #{inpaint_generator_forward.47} parent=42 // loop_header_branch
                  %130 = sbr.rel (%p128) target = $region50
                $region47: #{inpaint_generator_forward.47} parent=42 // loop_body
                  _
                $region48: #{inpaint_generator_forward.47} parent=42 // loop_footer
                  %s131 = sadd.s32 1, %s127
                $region49: #{inpaint_generator_forward.47} parent=42 // loop_footer_branch
                  %126 = sbr.rel target = $region45
                $region50: #{inpaint_generator_forward.47} parent=42 // loop_exit
                  _
                loop: start=0, step=1, limit=1
                $region51: #{inpaint_generator_forward.47} parent=42 // loop_pre_header
                  _
                $region52: #{inpaint_generator_forward.47} parent=42 // loop_header
                  %s136 = sphi 0, %s140
                  %p137 = scmp.ge.s32.totalorder %s136, 1
                  %s141 = sphi %s104, %s104
                  %s142 = sphi %s100, %s100
                $region53: #{inpaint_generator_forward.47} parent=42 // loop_header_branch
                  %139 = sbr.rel (%p137) target = $region57
                $region54: #{inpaint_generator_forward.47} parent=42 // loop_body
                  %v143 = vld [vmem:[%s141] sm:$0xf]
                  %144 = vst [vmem:[%s142] sm:$0xf] %v143
                  %v145 = vld [vmem:[%s141 + $0x8] sm:$0xf]
                  %146 = vst [vmem:[%s142 + $0x4] sm:$0xf] %v145
                $region55: #{inpaint_generator_forward.47} parent=42 // loop_footer
                  %s140 = sadd.s32 1, %s136
                $region56: #{inpaint_generator_forward.47} parent=42 // loop_footer_branch
                  %135 = sbr.rel target = $region52
                $region57: #{inpaint_generator_forward.47} parent=42 // loop_exit
                  _
              $region43: #{inpaint_generator_forward.47} parent=27 // pred_fallthru
                _
            $region28: #{inpaint_generator_forward.47} parent=23 // pred_fallthru
              _
            // Predicated region
            $region29: #{inpaint_generator_forward.47} parent=23 // pred_check
              _
            $region30: #{inpaint_generator_forward.47} parent=23 // pred_check_branch
              %110 = sbr.rel (0) target = $region32
            $region31: #{inpaint_generator_forward.47} parent=23 // pred_region
              loop: start=0, step=1, limit=1
              $region33: #{inpaint_generator_forward.47} parent=31 // loop_pre_header
                _
              $region34: #{inpaint_generator_forward.47} parent=31 // loop_header
                %s113 = sphi 0, %s117
                %p114 = scmp.ge.s32.totalorder %s113, 1
                %s118 = sphi %s104, %s104
                %s119 = sphi %s100, %s100
              $region35: #{inpaint_generator_forward.47} parent=31 // loop_header_branch
                %116 = sbr.rel (%p114) target = $region39
              $region36: #{inpaint_generator_forward.47} parent=31 // loop_body
                %v120 = vld [vmem:[%s118] sm:$0xf]
                %121 = vst [vmem:[%s119] sm:$0xf] %v120
                %v122 = vld [vmem:[%s118 + $0x8] sm:$0xf]
                %123 = vst [vmem:[%s119 + $0x4] sm:$0xf] %v122
              $region37: #{inpaint_generator_forward.47} parent=31 // loop_footer
                %s117 = sadd.s32 1, %s113
              $region38: #{inpaint_generator_forward.47} parent=31 // loop_footer_branch
                %112 = sbr.rel target = $region34
              $region39: #{inpaint_generator_forward.47} parent=31 // loop_exit
                _
            $region32: #{inpaint_generator_forward.47} parent=23 // pred_fallthru
              _
          $region24: #{inpaint_generator_forward.47} parent=19 // pred_fallthru
            _
          %147 = vnop
        $region20: #{inpaint_generator_forward.47} parent=15 // pred_fallthru
          _
      $region16: #{inpaint_generator_forward.47} parent=5 // pred_fallthru
        _
      %p148 = scmp.le.s32.totalorder 1, %s7
      %p149 = scmp.lt.s32.totalorder %s7, 5
      %p150 = pnand %p148, %p149
      %p151 = pneg %p150
      // Predicated region
      $region58: #{inpaint_generator_forward.47} parent=5 // pred_check
        _
      $region59: #{inpaint_generator_forward.47} parent=5 // pred_check_branch
        %153 = sbr.rel (%p150) target = $region61
      $region60: #{inpaint_generator_forward.47} parent=5 // pred_region
        %s154 = ssub.s32 %s7, 1
        %s155 = sand.u32 %s34, 1
        %s156 = sand.u32 %s34, 1
        %s157 = smul.addr %s156, 8
        %s158 = scalar_lea.vmem [#allocation2], %s157
        // Predicated region
        $region62: #{inpaint_generator_forward.47} parent=60 // pred_check
          %p159 = pneg %p47
        $region63: #{inpaint_generator_forward.47} parent=60 // pred_check_branch
          %161 = sbr.rel (%p159) target = $region65
        $region64: #{inpaint_generator_forward.47} parent=60 // pred_region
          _
        $region65: #{inpaint_generator_forward.47} parent=60 // pred_fallthru
          _
        %s162 = sand.u32 %s34, 1
        %s163 = sand.u32 %s34, 1
        %s164 = smul.addr %s163, 8
        %s165 = scalar_lea.vmem [#allocation2], %s164
        %p166 = pneg %p47
        %p167 = pneg %p44
        %p168 = pneg %p75
        %p169 = pneg %p72
        %s170 = sand.u32 %s62, 1
        %s171 = sand.u32 %s62, 1
        %s172 = smul.addr %s171, 8
        %s173 = scalar_lea.vmem [#allocation3], %s172
        %v174 = vld [vmem:[%s158] sm:$0xf]
        %v175 = vld [vmem:[%s158 + $0x4] sm:$0xf]
        %v176 = vunpack.c.l.bf16 %v174
        %v177 = vunpack.c.l.bf16 %v175
        %v178 = vadd.f32 %v176, %v177
        %v179 = vrot.slane %v178, 4
        %v180 = vadd.f32 %v178, %v179
        %v181 = vrot.slane %v180, 2
        %v182 = vadd.f32 %v180, %v181
        %v183 = vrot.slane %v182, 1
        %v184 = vadd.f32 %v182, %v183
        %v185 = vrcp.pop 16.0
        %v186 = vmul.f32 %v184, %v185
        %v187 = vsub.f32 %v176, %v186
        %v188 = vsub.f32 %v177, %v186
        %v189 = vmul.f32 %v187, %v187
        %v190 = vmul.f32 %v188, %v188
        %v191 = vadd.f32 %v189, %v190
        %v192 = vrot.slane %v191, 4
        %v193 = vadd.f32 %v191, %v192
        %v194 = vrot.slane %v193, 2
        %v195 = vadd.f32 %v193, %v194
        %v196 = vrot.slane %v195, 1
        %v197 = vadd.f32 %v195, %v196
        %v198 = vmul.f32 %v197, %v185
        %v199 = vadd.f32 %v198, 1e-05
        %v200 = vrsqrt.pop %v199
        %v201 = vmul.f32 %v187, %v200
        %v202 = vmul.f32 %v188, %v200
        %v203 = vmax.f32 %v201, 0.0
        %v204 = vmax.f32 %v202, 0.0
        %v205 = vpack.c.bf16 %v204, %v203
        %v207 = vunpack.c.l.b16 %v205
        %v208 = vunpack.c.h.b16 %v205
        %v209 = vpack.c.b16 %v207, %v207
        %v210 = vpack.c.b16 %v208, %v208
        %213 = vst [vmem:[%s173] sm:$0xf] %v209
        %214 = vst [vmem:[%s173 + $0x4] sm:$0xf] %v210
        %s215 = sand.u32 %s62, 1
        %s216 = sand.u32 %s62, 1
        %s217 = smul.addr %s216, 8
        %s218 = scalar_lea.vmem [#allocation3], %s217
        // Predicated region
        $region66: #{inpaint_generator_forward.47} parent=60 // pred_check
          %p219 = pneg %p72
        $region67: #{inpaint_generator_forward.47} parent=60 // pred_check_branch
          %221 = sbr.rel (%p219) target = $region69
        $region68: #{inpaint_generator_forward.47} parent=60 // pred_region
          %s222 = smul.addr %s16, 4
          %s223 = sadd.s32 %s17, %s222
          %s224 = smul.addr %s223, 4
          %s225 = scalar_lea.vmem %s1, %s224
          // Predicated region
          $region70: #{inpaint_generator_forward.47} parent=68 // pred_check
            _
          $region71: #{inpaint_generator_forward.47} parent=68 // pred_check_branch
            %227 = sbr.rel (0) target = $region73
          $region72: #{inpaint_generator_forward.47} parent=68 // pred_region
            // Predicated region
            $region74: #{inpaint_generator_forward.47} parent=72 // pred_check
              _
            $region75: #{inpaint_generator_forward.47} parent=72 // pred_check_branch
              %229 = sbr.rel target = $region77
            $region76: #{inpaint_generator_forward.47} parent=72 // pred_region
              // Predicated region
              $region89: #{inpaint_generator_forward.47} parent=76 // pred_check
                _
              $region90: #{inpaint_generator_forward.47} parent=76 // pred_check_branch
                %246 = sbr.rel (0) target = $region92
              $region91: #{inpaint_generator_forward.47} parent=76 // pred_region
                loop: start=0, step=1, limit=1
                $region93: #{inpaint_generator_forward.47} parent=91 // loop_pre_header
                  _
                $region94: #{inpaint_generator_forward.47} parent=91 // loop_header
                  %s248 = sphi 0, %s252
                  %p249 = scmp.ge.s32.totalorder %s248, 1
                  %s253 = sphi %s218, %s218
                  %s254 = sphi %s225, %s225
                $region95: #{inpaint_generator_forward.47} parent=91 // loop_header_branch
                  %251 = sbr.rel (%p249) target = $region99
                $region96: #{inpaint_generator_forward.47} parent=91 // loop_body
                  _
                $region97: #{inpaint_generator_forward.47} parent=91 // loop_footer
                  %s252 = sadd.s32 1, %s248
                $region98: #{inpaint_generator_forward.47} parent=91 // loop_footer_branch
                  %247 = sbr.rel target = $region94
                $region99: #{inpaint_generator_forward.47} parent=91 // loop_exit
                  _
                loop: start=0, step=1, limit=1
                $region100: #{inpaint_generator_forward.47} parent=91 // loop_pre_header
                  _
                $region101: #{inpaint_generator_forward.47} parent=91 // loop_header
                  %s257 = sphi 0, %s261
                  %p258 = scmp.ge.s32.totalorder %s257, 1
                  %s262 = sphi %s218, %s218
                  %s263 = sphi %s225, %s225
                $region102: #{inpaint_generator_forward.47} parent=91 // loop_header_branch
                  %260 = sbr.rel (%p258) target = $region106
                $region103: #{inpaint_generator_forward.47} parent=91 // loop_body
                  %v264 = vld [vmem:[%s262] sm:$0xf]
                  %265 = vst [vmem:[%s263] sm:$0xf] %v264
                  %v266 = vld [vmem:[%s262 + $0x4] sm:$0xf]
                  %267 = vst [vmem:[%s263 + $0x8] sm:$0xf] %v266
                $region104: #{inpaint_generator_forward.47} parent=91 // loop_footer
                  %s261 = sadd.s32 1, %s257
                $region105: #{inpaint_generator_forward.47} parent=91 // loop_footer_branch
                  %256 = sbr.rel target = $region101
                $region106: #{inpaint_generator_forward.47} parent=91 // loop_exit
                  _
              $region92: #{inpaint_generator_forward.47} parent=76 // pred_fallthru
                _
            $region77: #{inpaint_generator_forward.47} parent=72 // pred_fallthru
              _
            // Predicated region
            $region78: #{inpaint_generator_forward.47} parent=72 // pred_check
              _
            $region79: #{inpaint_generator_forward.47} parent=72 // pred_check_branch
              %231 = sbr.rel (0) target = $region81
            $region80: #{inpaint_generator_forward.47} parent=72 // pred_region
              loop: start=0, step=1, limit=1
              $region82: #{inpaint_generator_forward.47} parent=80 // loop_pre_header
                _
              $region83: #{inpaint_generator_forward.47} parent=80 // loop_header
                %s234 = sphi 0, %s238
                %p235 = scmp.ge.s32.totalorder %s234, 1
                %s239 = sphi %s218, %s218
                %s240 = sphi %s225, %s225
              $region84: #{inpaint_generator_forward.47} parent=80 // loop_header_branch
                %237 = sbr.rel (%p235) target = $region88
              $region85: #{inpaint_generator_forward.47} parent=80 // loop_body
                %v241 = vld [vmem:[%s239] sm:$0xf]
                %242 = vst [vmem:[%s240] sm:$0xf] %v241
                %v243 = vld [vmem:[%s239 + $0x4] sm:$0xf]
                %244 = vst [vmem:[%s240 + $0x8] sm:$0xf] %v243
              $region86: #{inpaint_generator_forward.47} parent=80 // loop_footer
                %s238 = sadd.s32 1, %s234
              $region87: #{inpaint_generator_forward.47} parent=80 // loop_footer_branch
                %233 = sbr.rel target = $region83
              $region88: #{inpaint_generator_forward.47} parent=80 // loop_exit
                _
            $region81: #{inpaint_generator_forward.47} parent=72 // pred_fallthru
              _
          $region73: #{inpaint_generator_forward.47} parent=68 // pred_fallthru
            _
          %268 = vnop
        $region69: #{inpaint_generator_forward.47} parent=60 // pred_fallthru
          _
      $region61: #{inpaint_generator_forward.47} parent=5 // pred_fallthru
        _
      %p269 = scmp.le.s32.totalorder 2, %s7
      // Predicated region
      $region107: #{inpaint_generator_forward.47} parent=5 // pred_check
        %p270 = pneg %p269
      $region108: #{inpaint_generator_forward.47} parent=5 // pred_check_branch
        %272 = sbr.rel (%p270) target = $region110
      $region109: #{inpaint_generator_forward.47} parent=5 // pred_region
        %s273 = ssub.s32 %s7, 2
        // Predicated region
        $region111: #{inpaint_generator_forward.47} parent=109 // pred_check
          %p274 = pneg %p78
        $region112: #{inpaint_generator_forward.47} parent=109 // pred_check_branch
          %276 = sbr.rel (%p274) target = $region114
        $region113: #{inpaint_generator_forward.47} parent=109 // pred_region
          %s277 = sand.u32 %s63, 1
          %s278 = sand.u32 %s63, 1
          %s279 = smul.addr %s278, 8
          %s280 = scalar_lea.vmem [#allocation3], %s279
        $region114: #{inpaint_generator_forward.47} parent=109 // pred_fallthru
          _
      $region110: #{inpaint_generator_forward.47} parent=5 // pred_fallthru
        _
    $region6: #{inpaint_generator_forward.47} parent=1 // loop_footer
      %s11 = sadd.s32 1, %s7
    $region7: #{inpaint_generator_forward.47} parent=1 // loop_footer_branch
      %6 = sbr.rel target = $region3
    $region8: #{inpaint_generator_forward.47} parent=1 // loop_exit
      _

// kernel: inpaint_generator_forward.46
$region0: #{inpaint_generator_forward.46}
  #allocation0 [shape = 'u32[]', space=smem, size = 0x4, offset = 0x4, fixed_abs, tag = 'smem constant byte address 0x4 - core index']
  #allocation1 [shape = 'u32[144,128]{1,0:T(1,128)}', space=vmem, size = 0x12000, scoped, tag = 'internal scratch']
  #allocation2 [shape = 'f32[32,128]{1,0:T(8,128)}', space=vmem, size = 0x4000, scoped, tag = 'scratch operand']
  %s0 = inlined_call_operand.vmem [shape: bf16[32,2304], index: 0, kind: input, shape index: {}]
  %s1 = inlined_call_operand.vmem [shape: bf16[2304,256], index: 1, kind: input, shape index: {}]
  %s2 = inlined_call_operand.vmem [shape: f32[1,256], index: 2, kind: input, shape index: {}]
  %s3 = inlined_call_operand.vmem [shape: bf16[32,256], index: 3, kind: output, shape index: {}]
  %s4 = sld [smem:[#allocation0]]
  $region169: #{inpaint_generator_forward.46} parent=0
    _
  %s6 = ssub.s32 1, %s4
  %s7 = scalar_select 0, %s6, %s4
  $region1: #{inpaint_generator_forward.46} parent=0
    #allocation3 [shape = 'u8[32768]{0}', space=vmem, size = 0x8000, scoped, tag = 'input window, operand 0']
    #allocation4 [shape = 'u8[131072]{0}', space=vmem, size = 0x20000, scoped, tag = 'input window, operand 1']
    #allocation5 [shape = 'u8[16384]{0}', space=vmem, size = 0x4000, scoped, tag = 'output window, operand 0']
    loop: start=0, step=1, limit=20
    $region2: #{inpaint_generator_forward.46} parent=1 // loop_pre_header
      _
    $region3: #{inpaint_generator_forward.46} parent=1 // loop_header
      %s9 = sphi 0, %s13
      %p10 = scmp.ge.s32.totalorder %s9, 20
      %s16 = sphi 0, %s35
      %s17 = sphi 0, %s31
      %s18 = sphi 0, %s27
      %s19 = sphi 0, %s16
      %s20 = sphi 0, %s17
      %s21 = sphi 0, %s18
      %s22 = sphi 0, %s19
      %s23 = sphi 0, %s20
      %s24 = sphi 0, %s21
      %s40 = sphi 0, %s42
      %s43 = sphi 0, %s40
      %s44 = sphi 0, %s43
      %s60 = sphi 0, %s44
      %s68 = sphi 0, %s70
      %s71 = sphi 0, %s68
      %s72 = sphi 0, %s71
      %s88 = sphi 0, %s72
      %s94 = sphi 0, %s96
      %s97 = sphi 0, %s94
      %s98 = sphi 0, %s97
      %s114 = sphi 0, %s98
      %s122 = sphi 0, %s124
      %s125 = sphi 0, %s122
      %s126 = sphi 0, %s125
      %s142 = sphi 0, %s126
    $region4: #{inpaint_generator_forward.46} parent=1 // loop_header_branch
      %12 = sbr.rel (%p10) target = $region8
    $region5: #{inpaint_generator_forward.46} parent=1 // loop_body
      %s14 = ssub.s32 %s9, 1
      %s15 = ssub.s32 %s9, 2
      %s25 = sadd.s32 1, %s18
      %p26 = scmp.ge.s32.totalorder %s25, 9
      %s27 = scalar_select %p26, 0, %s25
      %s28 = sadd.s32 1, %s17
      %s29 = scalar_select %p26, %s28, %s17
      %p30 = scmp.ge.s32.totalorder %s29, 2
      %s31 = scalar_select %p30, 0, %s29
      %s32 = sadd.s32 1, %s16
      %s33 = scalar_select %p30, %s32, %s16
      %p34 = scmp.ge.s32.totalorder %s33, 1
      %s35 = scalar_select %p34, 0, %s33
      %s36 = ssub.s32 %s16, %s35
      %s37 = ssub.s32 %s18, %s27
      %s38 = sor.u32 %s36, %s37
      %p39 = scmp.eq.s32.totalorder %s38, 0
      %s41 = sadd.s32 %s40, 1
      %s42 = scalar_select %p39, %s40, %s41
      %p45 = pneg %p39
      %p46 = scmp.eq.s32.totalorder %s9, 17
      %p47 = por %p45, %p46
      %p48 = scmp.ne.s32.totalorder %s40, %s43
      %p49 = scmp.eq.s32.totalorder %s9, 0
      %p50 = por %p48, %p49
      %p51 = scmp.ne.s32.totalorder %s40, %s43
      %p52 = scmp.eq.s32.totalorder %s14, 17
      %p53 = por %p51, %p52
      %p54 = scmp.ne.s32.totalorder %s43, %s44
      %p55 = scmp.eq.s32.totalorder %s14, 0
      %p56 = por %p54, %p55
      %p57 = scmp.ne.s32.totalorder %s43, %s44
      %p58 = scmp.eq.s32.totalorder %s15, 17
      %p59 = por %p57, %p58
      %p61 = scmp.ne.s32.totalorder %s44, %s60
      %p62 = scmp.eq.s32.totalorder %s15, 0
      %p63 = por %p61, %p62
      %s64 = ssub.s32 %s18, %s27
      %s65 = ssub.s32 %s17, %s31
      %s66 = sor.u32 %s64, %s65
      %p67 = scmp.eq.s32.totalorder %s66, 0
      %s69 = sadd.s32 %s68, 1
      %s70 = scalar_select %p67, %s68, %s69
      %p73 = pneg %p67
      %p74 = scmp.eq.s32.totalorder %s9, 17
      %p75 = por %p73, %p74
      %p76 = scmp.ne.s32.totalorder %s68, %s71
      %p77 = scmp.eq.s32.totalorder %s9, 0
      %p78 = por %p76, %p77
      %p79 = scmp.ne.s32.totalorder %s68, %s71
      %p80 = scmp.eq.s32.totalorder %s14, 17
      %p81 = por %p79, %p80
      %p82 = scmp.ne.s32.totalorder %s71, %s72
      %p83 = scmp.eq.s32.totalorder %s14, 0
      %p84 = por %p82, %p83
      %p85 = scmp.ne.s32.totalorder %s71, %s72
      %p86 = scmp.eq.s32.totalorder %s15, 17
      %p87 = por %p85, %p86
      %p89 = scmp.ne.s32.totalorder %s72, %s88
      %p90 = scmp.eq.s32.totalorder %s15, 0
      %p91 = por %p89, %p90
      %s92 = ssub.s32 %s17, %s31
      %p93 = scmp.eq.s32.totalorder %s92, 0
      %s95 = sadd.s32 %s94, 1
      %s96 = scalar_select %p93, %s94, %s95
      %p99 = pneg %p93
      %p100 = scmp.eq.s32.totalorder %s9, 17
      %p101 = por %p99, %p100
      %p102 = scmp.ne.s32.totalorder %s94, %s97
      %p103 = scmp.eq.s32.totalorder %s9, 0
      %p104 = por %p102, %p103
      %p105 = scmp.ne.s32.totalorder %s94, %s97
      %p106 = scmp.eq.s32.totalorder %s14, 17
      %p107 = por %p105, %p106
      %p108 = scmp.ne.s32.totalorder %s97, %s98
      %p109 = scmp.eq.s32.totalorder %s14, 0
      %p110 = por %p108, %p109
      %p111 = scmp.ne.s32.totalorder %s97, %s98
      %p112 = scmp.eq.s32.totalorder %s15, 17
      %p113 = por %p111, %p112
      %p115 = scmp.ne.s32.totalorder %s98, %s114
      %p116 = scmp.eq.s32.totalorder %s15, 0
      %p117 = por %p115, %p116
      %s118 = ssub.s32 %s16, %s35
      %s119 = ssub.s32 %s17, %s31
      %s120 = sor.u32 %s118, %s119
      %p121 = scmp.eq.s32.totalorder %s120, 0
      %s123 = sadd.s32 %s122, 1
      %s124 = scalar_select %p121, %s122, %s123
      %p127 = pneg %p121
      %p128 = scmp.eq.s32.totalorder %s9, 17
      %p129 = por %p127, %p128
      %p130 = scmp.ne.s32.totalorder %s122, %s125
      %p131 = scmp.eq.s32.totalorder %s9, 0
      %p132 = por %p130, %p131
      %p133 = scmp.ne.s32.totalorder %s122, %s125
      %p134 = scmp.eq.s32.totalorder %s14, 17
      %p135 = por %p133, %p134
      %p136 = scmp.ne.s32.totalorder %s125, %s126
      %p137 = scmp.eq.s32.totalorder %s14, 0
      %p138 = por %p136, %p137
      %p139 = scmp.ne.s32.totalorder %s125, %s126
      %p140 = scmp.eq.s32.totalorder %s15, 17
      %p141 = por %p139, %p140
      %p143 = scmp.ne.s32.totalorder %s126, %s142
      %p144 = scmp.eq.s32.totalorder %s15, 0
      %p145 = por %p143, %p144
      %p146 = scmp.le.s32.totalorder 1, %s9
      %p147 = scmp.lt.s32.totalorder %s9, 19
      %p148 = pnand %p146, %p147
      %p149 = pneg %p148
      // Predicated region
      $region9: #{inpaint_generator_forward.46} parent=5 // pred_check
        _
      $region10: #{inpaint_generator_forward.46} parent=5 // pred_check_branch
        %151 = sbr.rel (%p148) target = $region12
      $region11: #{inpaint_generator_forward.46} parent=5 // pred_region
        %s152 = ssub.s32 %s9, 1
      $region12: #{inpaint_generator_forward.46} parent=5 // pred_fallthru
        _
      %p153 = scmp.lt.s32.totalorder %s9, 18
      // Predicated region
      $region13: #{inpaint_generator_forward.46} parent=5 // pred_check
        %p154 = pneg %p153
      $region14: #{inpaint_generator_forward.46} parent=5 // pred_check_branch
        %156 = sbr.rel (%p154) target = $region16
      $region15: #{inpaint_generator_forward.46} parent=5 // pred_region
        // Predicated region
        $region17: #{inpaint_generator_forward.46} parent=15 // pred_check
          %p157 = pneg %p50
        $region18: #{inpaint_generator_forward.46} parent=15 // pred_check_branch
          %159 = sbr.rel (%p157) target = $region20
        $region19: #{inpaint_generator_forward.46} parent=15 // pred_region
          %s160 = sand.u32 %s40, 1
          %s161 = sand.u32 %s40, 1
          %s162 = smul.addr %s161, 32
          %s163 = scalar_lea.vmem [#allocation3], %s162
          %s164 = smul.u32 4, %s16
          %s165 = smul.u32 2, %s18
          %s166 = smul.addr %s164, 18
          %s167 = sadd.s32 %s165, %s166
          %s168 = smul.addr %s167, 4
          %s169 = scalar_lea.vmem %s0, %s168
          // Predicated region
          $region21: #{inpaint_generator_forward.46} parent=19 // pred_check
            _
          $region22: #{inpaint_generator_forward.46} parent=19 // pred_check_branch
            %171 = sbr.rel (0) target = $region24
          $region23: #{inpaint_generator_forward.46} parent=19 // pred_region
            // Predicated region
            $region25: #{inpaint_generator_forward.46} parent=23 // pred_check
              _
            $region26: #{inpaint_generator_forward.46} parent=23 // pred_check_branch
              %173 = sbr.rel (0) target = $region28
            $region27: #{inpaint_generator_forward.46} parent=23 // pred_region
              // Predicated region
              $region40: #{inpaint_generator_forward.46} parent=27 // pred_check
                _
              $region41: #{inpaint_generator_forward.46} parent=27 // pred_check_branch
                %194 = sbr.rel (0) target = $region43
              $region42: #{inpaint_generator_forward.46} parent=27 // pred_region
                loop: start=0, step=1, limit=1
                $region44: #{inpaint_generator_forward.46} parent=42 // loop_pre_header
                  _
                $region45: #{inpaint_generator_forward.46} parent=42 // loop_header
                  %s196 = sphi 0, %s200
                  %p197 = scmp.ge.s32.totalorder %s196, 1
                  %s201 = sphi %s169, %s169
                  %s202 = sphi %s163, %s163
                $region46: #{inpaint_generator_forward.46} parent=42 // loop_header_branch
                  %199 = sbr.rel (%p197) target = $region50
                $region47: #{inpaint_generator_forward.46} parent=42 // loop_body
                  %v203 = vld [vmem:[%s201] sm:$0xff]
                  %204 = vst [vmem:[%s202] sm:$0xff] %v203
                  %v205 = vld [vmem:[%s201 + $0x48] sm:$0xff]
                  %206 = vst [vmem:[%s202 + $0x8] sm:$0xff] %v205
                  %v207 = vld [vmem:[%s201 + $0x90] sm:$0xff]
                  %208 = vst [vmem:[%s202 + $0x10] sm:$0xff] %v207
                  %v209 = vld [vmem:[%s201 + $0xd8] sm:$0xff]
                  %210 = vst [vmem:[%s202 + $0x18] sm:$0xff] %v209
                $region48: #{inpaint_generator_forward.46} parent=42 // loop_footer
                  %s200 = sadd.s32 1, %s196
                $region49: #{inpaint_generator_forward.46} parent=42 // loop_footer_branch
                  %195 = sbr.rel target = $region45
                $region50: #{inpaint_generator_forward.46} parent=42 // loop_exit
                  _
              $region43: #{inpaint_generator_forward.46} parent=27 // pred_fallthru
                _
              // Predicated region
              $region51: #{inpaint_generator_forward.46} parent=27 // pred_check
                _
              $region52: #{inpaint_generator_forward.46} parent=27 // pred_check_branch
                %212 = sbr.rel target = $region54
              $region53: #{inpaint_generator_forward.46} parent=27 // pred_region
                _
              $region54: #{inpaint_generator_forward.46} parent=27 // pred_fallthru
                _
            $region28: #{inpaint_generator_forward.46} parent=23 // pred_fallthru
              _
            // Predicated region
            $region29: #{inpaint_generator_forward.46} parent=23 // pred_check
              _
            $region30: #{inpaint_generator_forward.46} parent=23 // pred_check_branch
              %175 = sbr.rel target = $region32
            $region31: #{inpaint_generator_forward.46} parent=23 // pred_region
              loop: start=0, step=1, limit=1
              $region33: #{inpaint_generator_forward.46} parent=31 // loop_pre_header
                _
              $region34: #{inpaint_generator_forward.46} parent=31 // loop_header
                %s178 = sphi 0, %s182
                %p179 = scmp.ge.s32.totalorder %s178, 1
                %s183 = sphi %s169, %s169
                %s184 = sphi %s163, %s163
              $region35: #{inpaint_generator_forward.46} parent=31 // loop_header_branch
                %181 = sbr.rel (%p179) target = $region39
              $region36: #{inpaint_generator_forward.46} parent=31 // loop_body
                %v185 = vld [vmem:[%s183] sm:$0xff]
                %186 = vst [vmem:[%s184] sm:$0xff] %v185
                %v187 = vld [vmem:[%s183 + $0x48] sm:$0xff]
                %188 = vst [vmem:[%s184 + $0x8] sm:$0xff] %v187
                %v189 = vld [vmem:[%s183 + $0x90] sm:$0xff]
                %190 = vst [vmem:[%s184 + $0x10] sm:$0xff] %v189
                %v191 = vld [vmem:[%s183 + $0xd8] sm:$0xff]
                %192 = vst [vmem:[%s184 + $0x18] sm:$0xff] %v191
              $region37: #{inpaint_generator_forward.46} parent=31 // loop_footer
                %s182 = sadd.s32 1, %s178
              $region38: #{inpaint_generator_forward.46} parent=31 // loop_footer_branch
                %177 = sbr.rel target = $region34
              $region39: #{inpaint_generator_forward.46} parent=31 // loop_exit
                _
            $region32: #{inpaint_generator_forward.46} parent=23 // pred_fallthru
              _
          $region24: #{inpaint_generator_forward.46} parent=19 // pred_fallthru
            _
          %213 = vnop
        $region20: #{inpaint_generator_forward.46} parent=15 // pred_fallthru
          _
        // Predicated region
        $region55: #{inpaint_generator_forward.46} parent=15 // pred_check
          %p214 = pneg %p78
        $region56: #{inpaint_generator_forward.46} parent=15 // pred_check_branch
          %216 = sbr.rel (%p214) target = $region58
        $region57: #{inpaint_generator_forward.46} parent=15 // pred_region
          %s217 = sand.u32 %s68, 1
          %s218 = sand.u32 %s68, 1
          %s219 = smul.addr %s218, 128
          %s220 = scalar_lea.vmem [#allocation4], %s219
          %s221 = smul.u32 32, %s18
          %s222 = smul.addr %s221, 2
          %s223 = sadd.s32 %s17, %s222
          %s224 = smul.addr %s223, 4
          %s225 = scalar_lea.vmem %s1, %s224
          // Predicated region
          $region59: #{inpaint_generator_forward.46} parent=57 // pred_check
            _
          $region60: #{inpaint_generator_forward.46} parent=57 // pred_check_branch
            %227 = sbr.rel (0) target = $region62
          $region61: #{inpaint_generator_forward.46} parent=57 // pred_region
            // Predicated region
            $region63: #{inpaint_generator_forward.46} parent=61 // pred_check
              _
            $region64: #{inpaint_generator_forward.46} parent=61 // pred_check_branch
              %229 = sbr.rel target = $region66
            $region65: #{inpaint_generator_forward.46} parent=61 // pred_region
              // Predicated region
              $region78: #{inpaint_generator_forward.46} parent=65 // pred_check
                _
              $region79: #{inpaint_generator_forward.46} parent=65 // pred_check_branch
                %306 = sbr.rel (0) target = $region81
              $region80: #{inpaint_generator_forward.46} parent=65 // pred_region
                loop: start=0, step=1, limit=1
                $region82: #{inpaint_generator_forward.46} parent=80 // loop_pre_header
                  _
                $region83: #{inpaint_generator_forward.46} parent=80 // loop_header
                  %s308 = sphi 0, %s312
                  %p309 = scmp.ge.s32.totalorder %s308, 1
                  %s313 = sphi %s225, %s225
                  %s314 = sphi %s220, %s220
                $region84: #{inpaint_generator_forward.46} parent=80 // loop_header_branch
                  %311 = sbr.rel (%p309) target = $region88
                $region85: #{inpaint_generator_forward.46} parent=80 // loop_body
                  _
                $region86: #{inpaint_generator_forward.46} parent=80 // loop_footer
                  %s312 = sadd.s32 1, %s308
                $region87: #{inpaint_generator_forward.46} parent=80 // loop_footer_branch
                  %307 = sbr.rel target = $region83
                $region88: #{inpaint_generator_forward.46} parent=80 // loop_exit
                  _
                loop: start=0, step=1, limit=1
                $region89: #{inpaint_generator_forward.46} parent=80 // loop_pre_header
                  _
                $region90: #{inpaint_generator_forward.46} parent=80 // loop_header
                  %s317 = sphi 0, %s321
                  %p318 = scmp.ge.s32.totalorder %s317, 1
                  %s322 = sphi %s225, %s225
                  %s323 = sphi %s220, %s220
                $region91: #{inpaint_generator_forward.46} parent=80 // loop_header_branch
                  %320 = sbr.rel (%p318) target = $region95
                $region92: #{inpaint_generator_forward.46} parent=80 // loop_body
                  %v324 = vld [vmem:[%s322] sm:$0xf]
                  %325 = vst [vmem:[%s323] sm:$0xf] %v324
                  %v326 = vld [vmem:[%s322 + $0x8] sm:$0xf]
                  %327 = vst [vmem:[%s323 + $0x4] sm:$0xf] %v326
                  %v328 = vld [vmem:[%s322 + $0x10] sm:$0xf]
                  %329 = vst [vmem:[%s323 + $0x8] sm:$0xf] %v328
                  %v330 = vld [vmem:[%s322 + $0x18] sm:$0xf]
                  %331 = vst [vmem:[%s323 + $0xc] sm:$0xf] %v330
                  %v332 = vld [vmem:[%s322 + $0x20] sm:$0xf]
                  %333 = vst [vmem:[%s323 + $0x10] sm:$0xf] %v332
                  %v334 = vld [vmem:[%s322 + $0x28] sm:$0xf]
                  %335 = vst [vmem:[%s323 + $0x14] sm:$0xf] %v334
                  %v336 = vld [vmem:[%s322 + $0x30] sm:$0xf]
                  %337 = vst [vmem:[%s323 + $0x18] sm:$0xf] %v336
                  %v338 = vld [vmem:[%s322 + $0x38] sm:$0xf]
                  %339 = vst [vmem:[%s323 + $0x1c] sm:$0xf] %v338
                  %v340 = vld [vmem:[%s322 + $0x40] sm:$0xf]
                  %341 = vst [vmem:[%s323 + $0x20] sm:$0xf] %v340
                  %v342 = vld [vmem:[%s322 + $0x48] sm:$0xf]
                  %343 = vst [vmem:[%s323 + $0x24] sm:$0xf] %v342
                  %v344 = vld [vmem:[%s322 + $0x50] sm:$0xf]
                  %345 = vst [vmem:[%s323 + $0x28] sm:$0xf] %v344
                  %v346 = vld [vmem:[%s322 + $0x58] sm:$0xf]
                  %347 = vst [vmem:[%s323 + $0x2c] sm:$0xf] %v346
                  %v348 = vld [vmem:[%s322 + $0x60] sm:$0xf]
                  %349 = vst [vmem:[%s323 + $0x30] sm:$0xf] %v348
                  %v350 = vld [vmem:[%s322 + $0x68] sm:$0xf]
                  %351 = vst [vmem:[%s323 + $0x34] sm:$0xf] %v350
                  %v352 = vld [vmem:[%s322 + $0x70] sm:$0xf]
                  %353 = vst [vmem:[%s323 + $0x38] sm:$0xf] %v352
                  %v354 = vld [vmem:[%s322 + $0x78] sm:$0xf]
                  %355 = vst [vmem:[%s323 + $0x3c] sm:$0xf] %v354
                  %v356 = vld [vmem:[%s322 + $0x80] sm:$0xf]
                  %357 = vst [vmem:[%s323 + $0x40] sm:$0xf] %v356
                  %v358 = vld [vmem:[%s322 + $0x88] sm:$0xf]
                  %359 = vst [vmem:[%s323 + $0x44] sm:$0xf] %v358
                  %v360 = vld [vmem:[%s322 + $0x90] sm:$0xf]
                  %361 = vst [vmem:[%s323 + $0x48] sm:$0xf] %v360
                  %v362 = vld [vmem:[%s322 + $0x98] sm:$0xf]
                  %363 = vst [vmem:[%s323 + $0x4c] sm:$0xf] %v362
                  %v364 = vld [vmem:[%s322 + $0xa0] sm:$0xf]
                  %365 = vst [vmem:[%s323 + $0x50] sm:$0xf] %v364
                  %v366 = vld [vmem:[%s322 + $0xa8] sm:$0xf]
                  %367 = vst [vmem:[%s323 + $0x54] sm:$0xf] %v366
                  %v368 = vld [vmem:[%s322 + $0xb0] sm:$0xf]
                  %369 = vst [vmem:[%s323 + $0x58] sm:$0xf] %v368
                  %v370 = vld [vmem:[%s322 + $0xb8] sm:$0xf]
                  %371 = vst [vmem:[%s323 + $0x5c] sm:$0xf] %v370
                  %v372 = vld [vmem:[%s322 + $0xc0] sm:$0xf]
                  %373 = vst [vmem:[%s323 + $0x60] sm:$0xf] %v372
                  %v374 = vld [vmem:[%s322 + $0xc8] sm:$0xf]
                  %375 = vst [vmem:[%s323 + $0x64] sm:$0xf] %v374
                  %v376 = vld [vmem:[%s322 + $0xd0] sm:$0xf]
                  %377 = vst [vmem:[%s323 + $0x68] sm:$0xf] %v376
                  %v378 = vld [vmem:[%s322 + $0xd8] sm:$0xf]
                  %379 = vst [vmem:[%s323 + $0x6c] sm:$0xf] %v378
                  %v380 = vld [vmem:[%s322 + $0xe0] sm:$0xf]
                  %381 = vst [vmem:[%s323 + $0x70] sm:$0xf] %v380
                  %v382 = vld [vmem:[%s322 + $0xe8] sm:$0xf]
                  %383 = vst [vmem:[%s323 + $0x74] sm:$0xf] %v382
                  %v384 = vld [vmem:[%s322 + $0xf0] sm:$0xf]
                  %385 = vst [vmem:[%s323 + $0x78] sm:$0xf] %v384
                  %v386 = vld [vmem:[%s322 + $0xf8] sm:$0xf]
                  %387 = vst [vmem:[%s323 + $0x7c] sm:$0xf] %v386
                $region93: #{inpaint_generator_forward.46} parent=80 // loop_footer
                  %s321 = sadd.s32 1, %s317
                $region94: #{inpaint_generator_forward.46} parent=80 // loop_footer_branch
                  %316 = sbr.rel target = $region90
                $region95: #{inpaint_generator_forward.46} parent=80 // loop_exit
                  _
              $region81: #{inpaint_generator_forward.46} parent=65 // pred_fallthru
                _
            $region66: #{inpaint_generator_forward.46} parent=61 // pred_fallthru
              _
            // Predicated region
            $region67: #{inpaint_generator_forward.46} parent=61 // pred_check
              _
            $region68: #{inpaint_generator_forward.46} parent=61 // pred_check_branch
              %231 = sbr.rel (0) target = $region70
            $region69: #{inpaint_generator_forward.46} parent=61 // pred_region
              loop: start=0, step=1, limit=1
              $region71: #{inpaint_generator_forward.46} parent=69 // loop_pre_header
                _
              $region72: #{inpaint_generator_forward.46} parent=69 // loop_header
                %s234 = sphi 0, %s238
                %p235 = scmp.ge.s32.totalorder %s234, 1
                %s239 = sphi %s225, %s225
                %s240 = sphi %s220, %s220
              $region73: #{inpaint_generator_forward.46} parent=69 // loop_header_branch
                %237 = sbr.rel (%p235) target = $region77
              $region74: #{inpaint_generator_forward.46} parent=69 // loop_body
                %v241 = vld [vmem:[%s239] sm:$0xf]
                %242 = vst [vmem:[%s240] sm:$0xf] %v241
                %v243 = vld [vmem:[%s239 + $0x8] sm:$0xf]
                %244 = vst [vmem:[%s240 + $0x4] sm:$0xf] %v243
                %v245 = vld [vmem:[%s239 + $0x10] sm:$0xf]
                %246 = vst [vmem:[%s240 + $0x8] sm:$0xf] %v245
                %v247 = vld [vmem:[%s239 + $0x18] sm:$0xf]
                %248 = vst [vmem:[%s240 + $0xc] sm:$0xf] %v247
                %v249 = vld [vmem:[%s239 + $0x20] sm:$0xf]
                %250 = vst [vmem:[%s240 + $0x10] sm:$0xf] %v249
                %v251 = vld [vmem:[%s239 + $0x28] sm:$0xf]
                %252 = vst [vmem:[%s240 + $0x14] sm:$0xf] %v251
                %v253 = vld [vmem:[%s239 + $0x30] sm:$0xf]
                %254 = vst [vmem:[%s240 + $0x18] sm:$0xf] %v253
                %v255 = vld [vmem:[%s239 + $0x38] sm:$0xf]
                %256 = vst [vmem:[%s240 + $0x1c] sm:$0xf] %v255
                %v257 = vld [vmem:[%s239 + $0x40] sm:$0xf]
                %258 = vst [vmem:[%s240 + $0x20] sm:$0xf] %v257
                %v259 = vld [vmem:[%s239 + $0x48] sm:$0xf]
                %260 = vst [vmem:[%s240 + $0x24] sm:$0xf] %v259
                %v261 = vld [vmem:[%s239 + $0x50] sm:$0xf]
                %262 = vst [vmem:[%s240 + $0x28] sm:$0xf] %v261
                %v263 = vld [vmem:[%s239 + $0x58] sm:$0xf]
                %264 = vst [vmem:[%s240 + $0x2c] sm:$0xf] %v263
                %v265 = vld [vmem:[%s239 + $0x60] sm:$0xf]
                %266 = vst [vmem:[%s240 + $0x30] sm:$0xf] %v265
                %v267 = vld [vmem:[%s239 + $0x68] sm:$0xf]
                %268 = vst [vmem:[%s240 + $0x34] sm:$0xf] %v267
                %v269 = vld [vmem:[%s239 + $0x70] sm:$0xf]
                %270 = vst [vmem:[%s240 + $0x38] sm:$0xf] %v269
                %v271 = vld [vmem:[%s239 + $0x78] sm:$0xf]
                %272 = vst [vmem:[%s240 + $0x3c] sm:$0xf] %v271
                %v273 = vld [vmem:[%s239 + $0x80] sm:$0xf]
                %274 = vst [vmem:[%s240 + $0x40] sm:$0xf] %v273
                %v275 = vld [vmem:[%s239 + $0x88] sm:$0xf]
                %276 = vst [vmem:[%s240 + $0x44] sm:$0xf] %v275
                %v277 = vld [vmem:[%s239 + $0x90] sm:$0xf]
                %278 = vst [vmem:[%s240 + $0x48] sm:$0xf] %v277
                %v279 = vld [vmem:[%s239 + $0x98] sm:$0xf]
                %280 = vst [vmem:[%s240 + $0x4c] sm:$0xf] %v279
                %v281 = vld [vmem:[%s239 + $0xa0] sm:$0xf]
                %282 = vst [vmem:[%s240 + $0x50] sm:$0xf] %v281
                %v283 = vld [vmem:[%s239 + $0xa8] sm:$0xf]
                %284 = vst [vmem:[%s240 + $0x54] sm:$0xf] %v283
                %v285 = vld [vmem:[%s239 + $0xb0] sm:$0xf]
                %286 = vst [vmem:[%s240 + $0x58] sm:$0xf] %v285
                %v287 = vld [vmem:[%s239 + $0xb8] sm:$0xf]
                %288 = vst [vmem:[%s240 + $0x5c] sm:$0xf] %v287
                %v289 = vld [vmem:[%s239 + $0xc0] sm:$0xf]
                %290 = vst [vmem:[%s240 + $0x60] sm:$0xf] %v289
                %v291 = vld [vmem:[%s239 + $0xc8] sm:$0xf]
                %292 = vst [vmem:[%s240 + $0x64] sm:$0xf] %v291
                %v293 = vld [vmem:[%s239 + $0xd0] sm:$0xf]
                %294 = vst [vmem:[%s240 + $0x68] sm:$0xf] %v293
                %v295 = vld [vmem:[%s239 + $0xd8] sm:$0xf]
                %296 = vst [vmem:[%s240 + $0x6c] sm:$0xf] %v295
                %v297 = vld [vmem:[%s239 + $0xe0] sm:$0xf]
                %298 = vst [vmem:[%s240 + $0x70] sm:$0xf] %v297
                %v299 = vld [vmem:[%s239 + $0xe8] sm:$0xf]
                %300 = vst [vmem:[%s240 + $0x74] sm:$0xf] %v299
                %v301 = vld [vmem:[%s239 + $0xf0] sm:$0xf]
                %302 = vst [vmem:[%s240 + $0x78] sm:$0xf] %v301
                %v303 = vld [vmem:[%s239 + $0xf8] sm:$0xf]
                %304 = vst [vmem:[%s240 + $0x7c] sm:$0xf] %v303
              $region75: #{inpaint_generator_forward.46} parent=69 // loop_footer
                %s238 = sadd.s32 1, %s234
              $region76: #{inpaint_generator_forward.46} parent=69 // loop_footer_branch
                %233 = sbr.rel target = $region72
              $region77: #{inpaint_generator_forward.46} parent=69 // loop_exit
                _
            $region70: #{inpaint_generator_forward.46} parent=61 // pred_fallthru
              _
          $region62: #{inpaint_generator_forward.46} parent=57 // pred_fallthru
            _
          %388 = vnop
        $region58: #{inpaint_generator_forward.46} parent=15 // pred_fallthru
          _
        // Predicated region
        $region96: #{inpaint_generator_forward.46} parent=15 // pred_check
          %p389 = pneg %p104
        $region97: #{inpaint_generator_forward.46} parent=15 // pred_check_branch
          %391 = sbr.rel (%p389) target = $region99
        $region98: #{inpaint_generator_forward.46} parent=15 // pred_region
          %p392 = scmp.lt.s32.totalorder %s17, 1
          %s393 = scalar_select %p392, %s17, 1
          %s394 = scalar_lea.vmem %s2, %s393
        $region99: #{inpaint_generator_forward.46} parent=15 // pred_fallthru
          _
      $region16: #{inpaint_generator_forward.46} parent=5 // pred_fallthru
        _
      %p395 = scmp.le.s32.totalorder 1, %s9
      %p396 = scmp.lt.s32.totalorder %s9, 19
      %p397 = pnand %p395, %p396
      %p398 = pneg %p397
      // Predicated region
      $region100: #{inpaint_generator_forward.46} parent=5 // pred_check
        _
      $region101: #{inpaint_generator_forward.46} parent=5 // pred_check_branch
        %400 = sbr.rel (%p397) target = $region103
      $region102: #{inpaint_generator_forward.46} parent=5 // pred_region
        %s401 = ssub.s32 %s9, 1
        %s402 = sand.u32 %s43, 1
        %s403 = sand.u32 %s43, 1
        %s404 = smul.addr %s403, 32
        %s405 = scalar_lea.vmem [#allocation3], %s404
        // Predicated region
        $region104: #{inpaint_generator_forward.46} parent=102 // pred_check
          %p406 = pneg %p56
        $region105: #{inpaint_generator_forward.46} parent=102 // pred_check_branch
          %408 = sbr.rel (%p406) target = $region107
        $region106: #{inpaint_generator_forward.46} parent=102 // pred_region
          _
        $region107: #{inpaint_generator_forward.46} parent=102 // pred_fallthru
          _
        %s409 = sand.u32 %s71, 1
        %s410 = sand.u32 %s71, 1
        %s411 = smul.addr %s410, 128
        %s412 = scalar_lea.vmem [#allocation4], %s411
        // Predicated region
        $region108: #{inpaint_generator_forward.46} parent=102 // pred_check
          %p413 = pneg %p84
        $region109: #{inpaint_generator_forward.46} parent=102 // pred_check_branch
          %415 = sbr.rel (%p413) target = $region111
        $region110: #{inpaint_generator_forward.46} parent=102 // pred_region
          _
        $region111: #{inpaint_generator_forward.46} parent=102 // pred_fallthru
          _
        %s416 = sand.u32 %s43, 1
        %s417 = sand.u32 %s43, 1
        %s418 = smul.addr %s417, 32
        %s419 = scalar_lea.vmem [#allocation3], %s418
        %p420 = pneg %p56
        %p421 = pneg %p53
        %s422 = sand.u32 %s71, 1
        %s423 = sand.u32 %s71, 1
        %s424 = smul.addr %s423, 128
        %s425 = scalar_lea.vmem [#allocation4], %s424
        %p426 = pneg %p84
        %p427 = pneg %p81
        %p428 = scmp.lt.s32.totalorder %s20, 1
        %s429 = scalar_select %p428, %s20, 1
        %s430 = scalar_lea.vmem %s2, %s429
        %p431 = pneg %p110
        %p432 = pneg %p107
        %p433 = pneg %p138
        %p434 = pneg %p135
        %s435 = sand.u32 %s125, 1
        %s436 = sand.u32 %s125, 1
        %s437 = smul.addr %s436, 16
        %s438 = scalar_lea.vmem [#allocation5], %s437
        %s439 = smul.u32 4, %s19
        %s440 = smul.u32 2, %s21
        %s441 = smul.u32 32, %s21
        %p442 = scmp.lt.s32.totalorder %s20, 1
        %s443 = scalar_select %p442, %s20, 1
        %s444 = scalar_lea.vmem %s2, %s443
        %s445 = smul.u32 4, %s19
        %p447 = scmp.eq.s32.totalorder %s21, 0
        // Predicated region
        $region112: #{inpaint_generator_forward.46} parent=102 // pred_check
          %p448 = pneg %p447
        $region113: #{inpaint_generator_forward.46} parent=102 // pred_check_branch
          %450 = sbr.rel (%p448) target = $region115
        $region114: #{inpaint_generator_forward.46} parent=102 // pred_region
          %451 = vst [vmem:[#allocation2] sm:$0xff] 0.0
          %452 = vst [vmem:[#allocation2 + $0x8] sm:$0xff] 0.0
          %453 = vst [vmem:[#allocation2 + $0x10] sm:$0xff] 0.0
          %454 = vst [vmem:[#allocation2 + $0x18] sm:$0xff] 0.0
        $region115: #{inpaint_generator_forward.46} parent=102 // pred_fallthru
          _
        %v455 = vld [vmem:[#allocation2] sm:$0xff]
        %v456 = vld [vmem:[#allocation2 + $0x8] sm:$0xff]
        %v457 = vld [vmem:[#allocation2 + $0x10] sm:$0xff]
        %v458 = vld [vmem:[#allocation2 + $0x18] sm:$0xff]
        %v459 = vld [vmem:[%s405] sm:$0xff]
        %v460 = vld [vmem:[%s405 + $0x8] sm:$0xff]
        %v461 = vld [vmem:[%s405 + $0x10] sm:$0xff]
        %v462 = vld [vmem:[%s405 + $0x18] sm:$0xff]
        %v463 = vld [vmem:[%s412] sm:$0xf]
        %v464 = vld [vmem:[%s412 + $0x4] sm:$0xf]
        %v465 = vld [vmem:[%s412 + $0x8] sm:$0xf]
        %v466 = vld [vmem:[%s412 + $0xc] sm:$0xf]
        %v467 = vld [vmem:[%s412 + $0x10] sm:$0xf]
        %v468 = vld [vmem:[%s412 + $0x14] sm:$0xf]
        %v469 = vld [vmem:[%s412 + $0x18] sm:$0xf]
        %v470 = vld [vmem:[%s412 + $0x1c] sm:$0xf]
        %v471 = vld [vmem:[%s412 + $0x20] sm:$0xf]
        %v472 = vld [vmem:[%s412 + $0x24] sm:$0xf]
        %v473 = vld [vmem:[%s412 + $0x28] sm:$0xf]
        %v474 = vld [vmem:[%s412 + $0x2c] sm:$0xf]
        %v475 = vld [vmem:[%s412 + $0x30] sm:$0xf]
        %v476 = vld [vmem:[%s412 + $0x34] sm:$0xf]
        %v477 = vld [vmem:[%s412 + $0x38] sm:$0xf]
        %v478 = vld [vmem:[%s412 + $0x3c] sm:$0xf]
        %v479 = vld [vmem:[%s412 + $0x40] sm:$0xf]
        %v480 = vld [vmem:[%s412 + $0x44] sm:$0xf]
        %v481 = vld [vmem:[%s412 + $0x48] sm:$0xf]
        %v482 = vld [vmem:[%s412 + $0x4c] sm:$0xf]
        %v483 = vld [vmem:[%s412 + $0x50] sm:$0xf]
        %v484 = vld [vmem:[%s412 + $0x54] sm:$0xf]
        %v485 = vld [vmem:[%s412 + $0x58] sm:$0xf]
        %v486 = vld [vmem:[%s412 + $0x5c] sm:$0xf]
        %v487 = vld [vmem:[%s412 + $0x60] sm:$0xf]
        %v488 = vld [vmem:[%s412 + $0x64] sm:$0xf]
        %v489 = vld [vmem:[%s412 + $0x68] sm:$0xf]
        %v490 = vld [vmem:[%s412 + $0x6c] sm:$0xf]
        %v491 = vld [vmem:[%s412 + $0x70] sm:$0xf]
        %v492 = vld [vmem:[%s412 + $0x74] sm:$0xf]
        %v493 = vld [vmem:[%s412 + $0x78] sm:$0xf]
        %v494 = vld [vmem:[%s412 + $0x7c] sm:$0xf]
        %v499 = vunpack.c.l.b16 %v459
        %v500 = vunpack.c.h.b16 %v459
        %v501 = vunpack.c.l.b16 %v460
        %v502 = vunpack.c.h.b16 %v460
        %v503 = vunpack.c.l.b16 %v461
        %v504 = vunpack.c.h.b16 %v461
        %v505 = vunpack.c.l.b16 %v462
        %v506 = vunpack.c.h.b16 %v462
        %v507 = vpack.c.b16 %v501, %v499
        %v508 = vpack.c.b16 %v502, %v500
        %v509 = vpack.c.b16 %v505, %v503
        %v510 = vpack.c.b16 %v506, %v504
        %v547 = vunpack.c.l.b16 %v463
        %v548 = vunpack.c.l.b16 %v464
        %v549 = vunpack.c.l.b16 %v465
        %v550 = vunpack.c.l.b16 %v466
        %v551 = vunpack.c.l.b16 %v467
        %v552 = vunpack.c.l.b16 %v468
        %v553 = vunpack.c.l.b16 %v469
        %v554 = vunpack.c.l.b16 %v470
        %v555 = vunpack.c.l.b16 %v471
        %v556 = vunpack.c.l.b16 %v472
        %v557 = vunpack.c.l.b16 %v473
        %v558 = vunpack.c.l.b16 %v474
        %v559 = vunpack.c.l.b16 %v475
        %v560 = vunpack.c.l.b16 %v476
        %v561 = vunpack.c.l.b16 %v477
        %v562 = vunpack.c.l.b16 %v478
        %v563 = vunpack.c.l.b16 %v479
        %v564 = vunpack.c.l.b16 %v480
        %v565 = vunpack.c.l.b16 %v481
        %v566 = vunpack.c.l.b16 %v482
        %v567 = vunpack.c.l.b16 %v483
        %v568 = vunpack.c.l.b16 %v484
        %v569 = vunpack.c.l.b16 %v485
        %v570 = vunpack.c.l.b16 %v486
        %v571 = vunpack.c.l.b16 %v487
        %v572 = vunpack.c.l.b16 %v488
        %v573 = vunpack.c.l.b16 %v489
        %v574 = vunpack.c.l.b16 %v490
        %v575 = vunpack.c.l.b16 %v491
        %v576 = vunpack.c.l.b16 %v492
        %v577 = vunpack.c.l.b16 %v493
        %v578 = vunpack.c.l.b16 %v494
        %v579 = vpack.c.b16 %v548, %v547
        %v580 = vpack.c.b16 %v550, %v549
        %v581 = vpack.c.b16 %v552, %v551
        %v582 = vpack.c.b16 %v554, %v553
        %v583 = vpack.c.b16 %v556, %v555
        %v584 = vpack.c.b16 %v558, %v557
        %v585 = vpack.c.b16 %v560, %v559
        %v586 = vpack.c.b16 %v562, %v561
        %v587 = vpack.c.b16 %v564, %v563
        %v588 = vpack.c.b16 %v566, %v565
        %v589 = vpack.c.b16 %v568, %v567
        %v590 = vpack.c.b16 %v570, %v569
        %v591 = vpack.c.b16 %v572, %v571
        %v592 = vpack.c.b16 %v574, %v573
        %v593 = vpack.c.b16 %v576, %v575
        %v594 = vpack.c.b16 %v578, %v577
        %611 = vmatprep.subr.bf16.mxu0 0
        %612 = vmatpush1.bf16.msra.mxu0 %v579
        %613 = vmatprep.subr.bf16.mxu0 0
        %614 = vmatpush1.bf16.msra.mxu0 %v580
        %615 = vmatprep.subr.bf16.mxu0 0
        %616 = vmatpush1.bf16.msra.mxu0 %v581
        %617 = vmatprep.subr.bf16.mxu0 0
        %618 = vmatpush1.bf16.msra.mxu0 %v582
        %619 = vmatprep.subr.bf16.mxu0 0
        %620 = vmatpush1.bf16.msra.mxu0 %v583
        %621 = vmatprep.subr.bf16.mxu0 0
        %622 = vmatpush1.bf16.msra.mxu0 %v584
        %623 = vmatprep.subr.bf16.mxu0 0
        %624 = vmatpush1.bf16.msra.mxu0 %v585
        %625 = vmatprep.subr.bf16.mxu0 0
        %626 = vmatpush1.bf16.msra.mxu0 %v586
        %627 = vmatprep.subr.bf16.mxu0 0
        %628 = vmatpush1.bf16.msra.mxu0 %v587
        %629 = vmatprep.subr.bf16.mxu0 0
        %630 = vmatpush1.bf16.msra.mxu0 %v588
        %631 = vmatprep.subr.bf16.mxu0 0
        %632 = vmatpush1.bf16.msra.mxu0 %v589
        %633 = vmatprep.subr.bf16.mxu0 0
        %634 = vmatpush1.bf16.msra.mxu0 %v590
        %635 = vmatprep.subr.bf16.mxu0 0
        %636 = vmatpush1.bf16.msra.mxu0 %v591
        %637 = vmatprep.subr.bf16.mxu0 0
        %638 = vmatpush1.bf16.msra.mxu0 %v592
        %639 = vmatprep.subr.bf16.mxu0 0
        %640 = vmatpush1.bf16.msra.mxu0 %v593
        %641 = vmatprep.subr.bf16.mxu0 0
        %642 = vmatpush1.bf16.msra.mxu0 %v594
        %643 = vmatprep.mubr.bf16.mxu0 %v508
        %644 = vmatmul.mubr.bf16.gmra.mrb[0].mxu0 %v507
        %v645 = vpop.f32.mrb[0].mxu0
        %v646 = vadd.f32 0.0, %v645
        %v647 = vpop.f32.mrb[0].mxu0
        %v648 = vpop.f32.mrb[0].mxu0
        %v649 = vadd.f32 0.0, %v648
        %v650 = vpop.f32.mrb[0].mxu0
        %651 = vmatprep.mubr.bf16.mxu0 %v510
        %652 = vmatmul.mubr.bf16.gmra.mrb[0].mxu0 %v509
        %v653 = vpop.f32.mrb[0].mxu0
        %v654 = vadd.f32 0.0, %v653
        %v655 = vpop.f32.mrb[0].mxu0
        %v656 = vpop.f32.mrb[0].mxu0
        %v657 = vadd.f32 0.0, %v656
        %v658 = vpop.f32.mrb[0].mxu0
        %659 = vdwg.mxu0
        %v660 = vadd.f32 %v455, %v646
        %v661 = vadd.f32 %v456, %v649
        %v662 = vadd.f32 %v457, %v654
        %v663 = vadd.f32 %v458, %v657
        %664 = vst [vmem:[#allocation2] sm:$0xff] %v660
        %665 = vst [vmem:[#allocation2 + $0x8] sm:$0xff] %v661
        %666 = vst [vmem:[#allocation2 + $0x10] sm:$0xff] %v662
        %667 = vst [vmem:[#allocation2 + $0x18] sm:$0xff] %v663
        %p668 = scmp.eq.s32.totalorder %s21, 8
        // Predicated region
        $region116: #{inpaint_generator_forward.46} parent=102 // pred_check
          %p669 = pneg %p668
        $region117: #{inpaint_generator_forward.46} parent=102 // pred_check_branch
          %671 = sbr.rel (%p669) target = $region119
        $region118: #{inpaint_generator_forward.46} parent=102 // pred_region
          %v672 = vld [vmem:[#allocation2] sm:$0xff]
          %v673 = vld [vmem:[#allocation2 + $0x8] sm:$0xff]
          %v674 = vld [vmem:[#allocation2 + $0x10] sm:$0xff]
          %v675 = vld [vmem:[#allocation2 + $0x18] sm:$0xff]
          %v676 = vld [vmem:[%s444] sm:$0x1]
          %v678 = vlaneseq
          %v679 = vshrl.u32 %v678, 7
          %v680 = vsub.s32 0, %v679
          %v681 = vrot.slane %v676, %v680
          %v683 = vadd.f32 %v672, %v681
          %v684 = vadd.f32 %v673, %v681
          %v685 = vadd.f32 %v674, %v681
          %v686 = vadd.f32 %v675, %v681
          %v687 = vpack.c.bf16 %v684, %v683
          %v688 = vpack.c.bf16 %v686, %v685
          %v691 = vunpack.c.l.b16 %v687
          %v692 = vunpack.c.h.b16 %v687
          %v693 = vunpack.c.l.b16 %v688
          %v694 = vunpack.c.h.b16 %v688
          %v695 = vpack.c.b16 %v691, %v691
          %v696 = vpack.c.b16 %v692, %v692
          %v697 = vpack.c.b16 %v693, %v693
          %v698 = vpack.c.b16 %v694, %v694
          %703 = vst [vmem:[%s438] sm:$0xf] %v695
          %704 = vst [vmem:[%s438 + $0x4] sm:$0xf] %v696
          %705 = vst [vmem:[%s438 + $0x8] sm:$0xf] %v697
          %706 = vst [vmem:[%s438 + $0xc] sm:$0xf] %v698
        $region119: #{inpaint_generator_forward.46} parent=102 // pred_fallthru
          _
        %s707 = sand.u32 %s125, 1
        %s708 = sand.u32 %s125, 1
        %s709 = smul.addr %s708, 16
        %s710 = scalar_lea.vmem [#allocation5], %s709
        // Predicated region
        $region120: #{inpaint_generator_forward.46} parent=102 // pred_check
          %p711 = pneg %p135
        $region121: #{inpaint_generator_forward.46} parent=102 // pred_check_branch
          %713 = sbr.rel (%p711) target = $region123
        $region122: #{inpaint_generator_forward.46} parent=102 // pred_region
          %s714 = smul.u32 4, %s19
          %s715 = smul.addr %s714, 2
          %s716 = sadd.s32 %s20, %s715
          %s717 = smul.addr %s716, 4
          %s718 = scalar_lea.vmem %s3, %s717
          // Predicated region
          $region124: #{inpaint_generator_forward.46} parent=122 // pred_check
            _
          $region125: #{inpaint_generator_forward.46} parent=122 // pred_check_branch
            %720 = sbr.rel (0) target = $region127
          $region126: #{inpaint_generator_forward.46} parent=122 // pred_region
            // Predicated region
            $region128: #{inpaint_generator_forward.46} parent=126 // pred_check
              _
            $region129: #{inpaint_generator_forward.46} parent=126 // pred_check_branch
              %722 = sbr.rel target = $region131
            $region130: #{inpaint_generator_forward.46} parent=126 // pred_region
              // Predicated region
              $region143: #{inpaint_generator_forward.46} parent=130 // pred_check
                _
              $region144: #{inpaint_generator_forward.46} parent=130 // pred_check_branch
                %743 = sbr.rel (0) target = $region146
              $region145: #{inpaint_generator_forward.46} parent=130 // pred_region
                loop: start=0, step=1, limit=1
                $region147: #{inpaint_generator_forward.46} parent=145 // loop_pre_header
                  _
                $region148: #{inpaint_generator_forward.46} parent=145 // loop_header
                  %s745 = sphi 0, %s749
                  %p746 = scmp.ge.s32.totalorder %s745, 1
                  %s750 = sphi %s710, %s710
                  %s751 = sphi %s718, %s718
                $region149: #{inpaint_generator_forward.46} parent=145 // loop_header_branch
                  %748 = sbr.rel (%p746) target = $region153
                $region150: #{inpaint_generator_forward.46} parent=145 // loop_body
                  _
                $region151: #{inpaint_generator_forward.46} parent=145 // loop_footer
                  %s749 = sadd.s32 1, %s745
                $region152: #{inpaint_generator_forward.46} parent=145 // loop_footer_branch
                  %744 = sbr.rel target = $region148
                $region153: #{inpaint_generator_forward.46} parent=145 // loop_exit
                  _
                loop: start=0, step=1, limit=1
                $region154: #{inpaint_generator_forward.46} parent=145 // loop_pre_header
                  _
                $region155: #{inpaint_generator_forward.46} parent=145 // loop_header
                  %s754 = sphi 0, %s758
                  %p755 = scmp.ge.s32.totalorder %s754, 1
                  %s759 = sphi %s710, %s710
                  %s760 = sphi %s718, %s718
                $region156: #{inpaint_generator_forward.46} parent=145 // loop_header_branch
                  %757 = sbr.rel (%p755) target = $region160
                $region157: #{inpaint_generator_forward.46} parent=145 // loop_body
                  %v761 = vld [vmem:[%s759] sm:$0xf]
                  %762 = vst [vmem:[%s760] sm:$0xf] %v761
                  %v763 = vld [vmem:[%s759 + $0x4] sm:$0xf]
                  %764 = vst [vmem:[%s760 + $0x8] sm:$0xf] %v763
                  %v765 = vld [vmem:[%s759 + $0x8] sm:$0xf]
                  %766 = vst [vmem:[%s760 + $0x10] sm:$0xf] %v765
                  %v767 = vld [vmem:[%s759 + $0xc] sm:$0xf]
                  %768 = vst [vmem:[%s760 + $0x18] sm:$0xf] %v767
                $region158: #{inpaint_generator_forward.46} parent=145 // loop_footer
                  %s758 = sadd.s32 1, %s754
                $region159: #{inpaint_generator_forward.46} parent=145 // loop_footer_branch
                  %753 = sbr.rel target = $region155
                $region160: #{inpaint_generator_forward.46} parent=145 // loop_exit
                  _
              $region146: #{inpaint_generator_forward.46} parent=130 // pred_fallthru
                _
            $region131: #{inpaint_generator_forward.46} parent=126 // pred_fallthru
              _
            // Predicated region
            $region132: #{inpaint_generator_forward.46} parent=126 // pred_check
              _
            $region133: #{inpaint_generator_forward.46} parent=126 // pred_check_branch
              %724 = sbr.rel (0) target = $region135
            $region134: #{inpaint_generator_forward.46} parent=126 // pred_region
              loop: start=0, step=1, limit=1
              $region136: #{inpaint_generator_forward.46} parent=134 // loop_pre_header
                _
              $region137: #{inpaint_generator_forward.46} parent=134 // loop_header
                %s727 = sphi 0, %s731
                %p728 = scmp.ge.s32.totalorder %s727, 1
                %s732 = sphi %s710, %s710
                %s733 = sphi %s718, %s718
              $region138: #{inpaint_generator_forward.46} parent=134 // loop_header_branch
                %730 = sbr.rel (%p728) target = $region142
              $region139: #{inpaint_generator_forward.46} parent=134 // loop_body
                %v734 = vld [vmem:[%s732] sm:$0xf]
                %735 = vst [vmem:[%s733] sm:$0xf] %v734
                %v736 = vld [vmem:[%s732 + $0x4] sm:$0xf]
                %737 = vst [vmem:[%s733 + $0x8] sm:$0xf] %v736
                %v738 = vld [vmem:[%s732 + $0x8] sm:$0xf]
                %739 = vst [vmem:[%s733 + $0x10] sm:$0xf] %v738
                %v740 = vld [vmem:[%s732 + $0xc] sm:$0xf]
                %741 = vst [vmem:[%s733 + $0x18] sm:$0xf] %v740
              $region140: #{inpaint_generator_forward.46} parent=134 // loop_footer
                %s731 = sadd.s32 1, %s727
              $region141: #{inpaint_generator_forward.46} parent=134 // loop_footer_branch
                %726 = sbr.rel target = $region137
              $region142: #{inpaint_generator_forward.46} parent=134 // loop_exit
                _
            $region135: #{inpaint_generator_forward.46} parent=126 // pred_fallthru
              _
          $region127: #{inpaint_generator_forward.46} parent=122 // pred_fallthru
            _
          %769 = vnop
        $region123: #{inpaint_generator_forward.46} parent=102 // pred_fallthru
          _
      $region103: #{inpaint_generator_forward.46} parent=5 // pred_fallthru
        _
      %p770 = scmp.le.s32.totalorder 2, %s9
      // Predicated region
      $region161: #{inpaint_generator_forward.46} parent=5 // pred_check
        %p771 = pneg %p770
      $region162: #{inpaint_generator_forward.46} parent=5 // pred_check_branch
        %773 = sbr.rel (%p771) target = $region164
      $region163: #{inpaint_generator_forward.46} parent=5 // pred_region
        %s774 = ssub.s32 %s9, 2
        // Predicated region
        $region165: #{inpaint_generator_forward.46} parent=163 // pred_check
          %p775 = pneg %p141
        $region166: #{inpaint_generator_forward.46} parent=163 // pred_check_branch
          %777 = sbr.rel (%p775) target = $region168
        $region167: #{inpaint_generator_forward.46} parent=163 // pred_region
          %s778 = sand.u32 %s126, 1
          %s779 = sand.u32 %s126, 1
          %s780 = smul.addr %s779, 16
          %s781 = scalar_lea.vmem [#allocation5], %s780
        $region168: #{inpaint_generator_forward.46} parent=163 // pred_fallthru
          _
      $region164: #{inpaint_generator_forward.46} parent=5 // pred_fallthru
        _
    $region6: #{inpaint_generator_forward.46} parent=1 // loop_footer
      %s13 = sadd.s32 1, %s9
    $region7: #{inpaint_generator_forward.46} parent=1 // loop_footer_branch
      %8 = sbr.rel target = $region3
    $region8: #{inpaint_generator_forward.46} parent=1 // loop_exit
      _

// kernel: inpaint_generator_forward.49
$region0: #{inpaint_generator_forward.49}
  #allocation0 [shape = 'u32[]', space=smem, size = 0x4, offset = 0x4, fixed_abs, tag = 'smem constant byte address 0x4 - core index']
  #allocation1 [shape = 'u32[144,128]{1,0:T(1,128)}', space=vmem, size = 0x12000, scoped, tag = 'internal scratch']
  %s0 = inlined_call_operand.vmem [shape: bf16[2,16,256], index: 0, kind: input, shape index: {}]
  %s1 = inlined_call_operand.vmem [shape: bf16[2,16,256], index: 1, kind: input, shape index: {}]
  %s2 = inlined_call_operand.vmem [shape: bf16[2,16,256], index: 2, kind: output, shape index: {}]
  %s3 = sld [smem:[#allocation0]]
  $region160: #{inpaint_generator_forward.49} parent=0
    _
  %s5 = ssub.s32 1, %s3
  %s6 = scalar_select 0, %s5, %s3
  $region1: #{inpaint_generator_forward.49} parent=0
    #allocation2 [shape = 'u8[8192]{0}', space=vmem, size = 0x2000, scoped, tag = 'input window, operand 0']
    #allocation3 [shape = 'u8[8192]{0}', space=vmem, size = 0x2000, scoped, tag = 'input window, operand 1']
    #allocation4 [shape = 'u8[8192]{0}', space=vmem, size = 0x2000, scoped, tag = 'output window, operand 0']
    loop: start=0, step=1, limit=6
    $region2: #{inpaint_generator_forward.49} parent=1 // loop_pre_header
      _
    $region3: #{inpaint_generator_forward.49} parent=1 // loop_header
      %s8 = sphi 0, %s12
      %p9 = scmp.ge.s32.totalorder %s8, 6
      %s15 = sphi 0, %s27
      %s16 = sphi 0, %s23
      %s17 = sphi 0, %s15
      %s18 = sphi 0, %s16
      %s19 = sphi 0, %s17
      %s20 = sphi 0, %s18
      %s32 = sphi 0, %s34
      %s35 = sphi 0, %s32
      %s36 = sphi 0, %s35
      %s52 = sphi 0, %s36
      %s60 = sphi 0, %s62
      %s63 = sphi 0, %s60
      %s64 = sphi 0, %s63
      %s80 = sphi 0, %s64
      %s88 = sphi 0, %s90
      %s91 = sphi 0, %s88
      %s92 = sphi 0, %s91
      %s108 = sphi 0, %s92
    $region4: #{inpaint_generator_forward.49} parent=1 // loop_header_branch
      %11 = sbr.rel (%p9) target = $region8
    $region5: #{inpaint_generator_forward.49} parent=1 // loop_body
      %s13 = ssub.s32 %s8, 1
      %s14 = ssub.s32 %s8, 2
      %s21 = sadd.s32 1, %s16
      %p22 = scmp.ge.s32.totalorder %s21, 2
      %s23 = scalar_select %p22, 0, %s21
      %s24 = sadd.s32 1, %s15
      %s25 = scalar_select %p22, %s24, %s15
      %p26 = scmp.ge.s32.totalorder %s25, 2
      %s27 = scalar_select %p26, 0, %s25
      %s28 = ssub.s32 %s15, %s27
      %s29 = ssub.s32 %s16, %s23
      %s30 = sor.u32 %s28, %s29
      %p31 = scmp.eq.s32.totalorder %s30, 0
      %s33 = sadd.s32 %s32, 1
      %s34 = scalar_select %p31, %s32, %s33
      %p37 = pneg %p31
      %p38 = scmp.eq.s32.totalorder %s8, 3
      %p39 = por %p37, %p38
      %p40 = scmp.ne.s32.totalorder %s32, %s35
      %p41 = scmp.eq.s32.totalorder %s8, 0
      %p42 = por %p40, %p41
      %p43 = scmp.ne.s32.totalorder %s32, %s35
      %p44 = scmp.eq.s32.totalorder %s13, 3
      %p45 = por %p43, %p44
      %p46 = scmp.ne.s32.totalorder %s35, %s36
      %p47 = scmp.eq.s32.totalorder %s13, 0
      %p48 = por %p46, %p47
      %p49 = scmp.ne.s32.totalorder %s35, %s36
      %p50 = scmp.eq.s32.totalorder %s14, 3
      %p51 = por %p49, %p50
      %p53 = scmp.ne.s32.totalorder %s36, %s52
      %p54 = scmp.eq.s32.totalorder %s14, 0
      %p55 = por %p53, %p54
      %s56 = ssub.s32 %s15, %s27
      %s57 = ssub.s32 %s16, %s23
      %s58 = sor.u32 %s56, %s57
      %p59 = scmp.eq.s32.totalorder %s58, 0
      %s61 = sadd.s32 %s60, 1
      %s62 = scalar_select %p59, %s60, %s61
      %p65 = pneg %p59
      %p66 = scmp.eq.s32.totalorder %s8, 3
      %p67 = por %p65, %p66
      %p68 = scmp.ne.s32.totalorder %s60, %s63
      %p69 = scmp.eq.s32.totalorder %s8, 0
      %p70 = por %p68, %p69
      %p71 = scmp.ne.s32.totalorder %s60, %s63
      %p72 = scmp.eq.s32.totalorder %s13, 3
      %p73 = por %p71, %p72
      %p74 = scmp.ne.s32.totalorder %s63, %s64
      %p75 = scmp.eq.s32.totalorder %s13, 0
      %p76 = por %p74, %p75
      %p77 = scmp.ne.s32.totalorder %s63, %s64
      %p78 = scmp.eq.s32.totalorder %s14, 3
      %p79 = por %p77, %p78
      %p81 = scmp.ne.s32.totalorder %s64, %s80
      %p82 = scmp.eq.s32.totalorder %s14, 0
      %p83 = por %p81, %p82
      %s84 = ssub.s32 %s15, %s27
      %s85 = ssub.s32 %s16, %s23
      %s86 = sor.u32 %s84, %s85
      %p87 = scmp.eq.s32.totalorder %s86, 0
      %s89 = sadd.s32 %s88, 1
      %s90 = scalar_select %p87, %s88, %s89
      %p93 = pneg %p87
      %p94 = scmp.eq.s32.totalorder %s8, 3
      %p95 = por %p93, %p94
      %p96 = scmp.ne.s32.totalorder %s88, %s91
      %p97 = scmp.eq.s32.totalorder %s8, 0
      %p98 = por %p96, %p97
      %p99 = scmp.ne.s32.totalorder %s88, %s91
      %p100 = scmp.eq.s32.totalorder %s13, 3
      %p101 = por %p99, %p100
      %p102 = scmp.ne.s32.totalorder %s91, %s92
      %p103 = scmp.eq.s32.totalorder %s13, 0
      %p104 = por %p102, %p103
      %p105 = scmp.ne.s32.totalorder %s91, %s92
      %p106 = scmp.eq.s32.totalorder %s14, 3
      %p107 = por %p105, %p106
      %p109 = scmp.ne.s32.totalorder %s92, %s108
      %p110 = scmp.eq.s32.totalorder %s14, 0
      %p111 = por %p109, %p110
      %p112 = scmp.le.s32.totalorder 1, %s8
      %p113 = scmp.lt.s32.totalorder %s8, 5
      %p114 = pnand %p112, %p113
      %p115 = pneg %p114
      // Predicated region
      $region9: #{inpaint_generator_forward.49} parent=5 // pred_check
        _
      $region10: #{inpaint_generator_forward.49} parent=5 // pred_check_branch
        %117 = sbr.rel (%p114) target = $region12
      $region11: #{inpaint_generator_forward.49} parent=5 // pred_region
        %s118 = ssub.s32 %s8, 1
      $region12: #{inpaint_generator_forward.49} parent=5 // pred_fallthru
        _
      %p119 = scmp.lt.s32.totalorder %s8, 4
      // Predicated region
      $region13: #{inpaint_generator_forward.49} parent=5 // pred_check
        %p120 = pneg %p119
      $region14: #{inpaint_generator_forward.49} parent=5 // pred_check_branch
        %122 = sbr.rel (%p120) target = $region16
      $region15: #{inpaint_generator_forward.49} parent=5 // pred_region
        // Predicated region
        $region17: #{inpaint_generator_forward.49} parent=15 // pred_check
          %p123 = pneg %p42
        $region18: #{inpaint_generator_forward.49} parent=15 // pred_check_branch
          %125 = sbr.rel (%p123) target = $region20
        $region19: #{inpaint_generator_forward.49} parent=15 // pred_region
          %s126 = sand.u32 %s32, 1
          %s127 = sand.u32 %s32, 1
          %s128 = smul.addr %s127, 8
          %s129 = scalar_lea.vmem [#allocation2], %s128
          %s130 = smul.addr %s15, 4
          %s131 = sadd.s32 %s16, %s130
          %s132 = smul.addr %s131, 4
          %s133 = scalar_lea.vmem %s0, %s132
          // Predicated region
          $region21: #{inpaint_generator_forward.49} parent=19 // pred_check
            _
          $region22: #{inpaint_generator_forward.49} parent=19 // pred_check_branch
            %135 = sbr.rel (0) target = $region24
          $region23: #{inpaint_generator_forward.49} parent=19 // pred_region
            // Predicated region
            $region25: #{inpaint_generator_forward.49} parent=23 // pred_check
              _
            $region26: #{inpaint_generator_forward.49} parent=23 // pred_check_branch
              %137 = sbr.rel target = $region28
            $region27: #{inpaint_generator_forward.49} parent=23 // pred_region
              // Predicated region
              $region40: #{inpaint_generator_forward.49} parent=27 // pred_check
                _
              $region41: #{inpaint_generator_forward.49} parent=27 // pred_check_branch
                %154 = sbr.rel (0) target = $region43
              $region42: #{inpaint_generator_forward.49} parent=27 // pred_region
                loop: start=0, step=1, limit=1
                $region44: #{inpaint_generator_forward.49} parent=42 // loop_pre_header
                  _
                $region45: #{inpaint_generator_forward.49} parent=42 // loop_header
                  %s156 = sphi 0, %s160
                  %p157 = scmp.ge.s32.totalorder %s156, 1
                  %s161 = sphi %s133, %s133
                  %s162 = sphi %s129, %s129
                $region46: #{inpaint_generator_forward.49} parent=42 // loop_header_branch
                  %159 = sbr.rel (%p157) target = $region50
                $region47: #{inpaint_generator_forward.49} parent=42 // loop_body
                  _
                $region48: #{inpaint_generator_forward.49} parent=42 // loop_footer
                  %s160 = sadd.s32 1, %s156
                $region49: #{inpaint_generator_forward.49} parent=42 // loop_footer_branch
                  %155 = sbr.rel target = $region45
                $region50: #{inpaint_generator_forward.49} parent=42 // loop_exit
                  _
                loop: start=0, step=1, limit=1
                $region51: #{inpaint_generator_forward.49} parent=42 // loop_pre_header
                  _
                $region52: #{inpaint_generator_forward.49} parent=42 // loop_header
                  %s165 = sphi 0, %s169
                  %p166 = scmp.ge.s32.totalorder %s165, 1
                  %s170 = sphi %s133, %s133
                  %s171 = sphi %s129, %s129
                $region53: #{inpaint_generator_forward.49} parent=42 // loop_header_branch
                  %168 = sbr.rel (%p166) target = $region57
                $region54: #{inpaint_generator_forward.49} parent=42 // loop_body
                  %v172 = vld [vmem:[%s170] sm:$0xf]
                  %173 = vst [vmem:[%s171] sm:$0xf] %v172
                  %v174 = vld [vmem:[%s170 + $0x8] sm:$0xf]
                  %175 = vst [vmem:[%s171 + $0x4] sm:$0xf] %v174
                $region55: #{inpaint_generator_forward.49} parent=42 // loop_footer
                  %s169 = sadd.s32 1, %s165
                $region56: #{inpaint_generator_forward.49} parent=42 // loop_footer_branch
                  %164 = sbr.rel target = $region52
                $region57: #{inpaint_generator_forward.49} parent=42 // loop_exit
                  _
              $region43: #{inpaint_generator_forward.49} parent=27 // pred_fallthru
                _
            $region28: #{inpaint_generator_forward.49} parent=23 // pred_fallthru
              _
            // Predicated region
            $region29: #{inpaint_generator_forward.49} parent=23 // pred_check
              _
            $region30: #{inpaint_generator_forward.49} parent=23 // pred_check_branch
              %139 = sbr.rel (0) target = $region32
            $region31: #{inpaint_generator_forward.49} parent=23 // pred_region
              loop: start=0, step=1, limit=1
              $region33: #{inpaint_generator_forward.49} parent=31 // loop_pre_header
                _
              $region34: #{inpaint_generator_forward.49} parent=31 // loop_header
                %s142 = sphi 0, %s146
                %p143 = scmp.ge.s32.totalorder %s142, 1
                %s147 = sphi %s133, %s133
                %s148 = sphi %s129, %s129
              $region35: #{inpaint_generator_forward.49} parent=31 // loop_header_branch
                %145 = sbr.rel (%p143) target = $region39
              $region36: #{inpaint_generator_forward.49} parent=31 // loop_body
                %v149 = vld [vmem:[%s147] sm:$0xf]
                %150 = vst [vmem:[%s148] sm:$0xf] %v149
                %v151 = vld [vmem:[%s147 + $0x8] sm:$0xf]
                %152 = vst [vmem:[%s148 + $0x4] sm:$0xf] %v151
              $region37: #{inpaint_generator_forward.49} parent=31 // loop_footer
                %s146 = sadd.s32 1, %s142
              $region38: #{inpaint_generator_forward.49} parent=31 // loop_footer_branch
                %141 = sbr.rel target = $region34
              $region39: #{inpaint_generator_forward.49} parent=31 // loop_exit
                _
            $region32: #{inpaint_generator_forward.49} parent=23 // pred_fallthru
              _
          $region24: #{inpaint_generator_forward.49} parent=19 // pred_fallthru
            _
          %176 = vnop
        $region20: #{inpaint_generator_forward.49} parent=15 // pred_fallthru
          _
        // Predicated region
        $region58: #{inpaint_generator_forward.49} parent=15 // pred_check
          %p177 = pneg %p70
        $region59: #{inpaint_generator_forward.49} parent=15 // pred_check_branch
          %179 = sbr.rel (%p177) target = $region61
        $region60: #{inpaint_generator_forward.49} parent=15 // pred_region
          %s180 = sand.u32 %s60, 1
          %s181 = sand.u32 %s60, 1
          %s182 = smul.addr %s181, 8
          %s183 = scalar_lea.vmem [#allocation3], %s182
          %s184 = smul.addr %s15, 4
          %s185 = sadd.s32 %s16, %s184
          %s186 = smul.addr %s185, 4
          %s187 = scalar_lea.vmem %s1, %s186
          // Predicated region
          $region62: #{inpaint_generator_forward.49} parent=60 // pred_check
            _
          $region63: #{inpaint_generator_forward.49} parent=60 // pred_check_branch
            %189 = sbr.rel (0) target = $region65
          $region64: #{inpaint_generator_forward.49} parent=60 // pred_region
            // Predicated region
            $region66: #{inpaint_generator_forward.49} parent=64 // pred_check
              _
            $region67: #{inpaint_generator_forward.49} parent=64 // pred_check_branch
              %191 = sbr.rel target = $region69
            $region68: #{inpaint_generator_forward.49} parent=64 // pred_region
              // Predicated region
              $region81: #{inpaint_generator_forward.49} parent=68 // pred_check
                _
              $region82: #{inpaint_generator_forward.49} parent=68 // pred_check_branch
                %208 = sbr.rel (0) target = $region84
              $region83: #{inpaint_generator_forward.49} parent=68 // pred_region
                loop: start=0, step=1, limit=1
                $region85: #{inpaint_generator_forward.49} parent=83 // loop_pre_header
                  _
                $region86: #{inpaint_generator_forward.49} parent=83 // loop_header
                  %s210 = sphi 0, %s214
                  %p211 = scmp.ge.s32.totalorder %s210, 1
                  %s215 = sphi %s187, %s187
                  %s216 = sphi %s183, %s183
                $region87: #{inpaint_generator_forward.49} parent=83 // loop_header_branch
                  %213 = sbr.rel (%p211) target = $region91
                $region88: #{inpaint_generator_forward.49} parent=83 // loop_body
                  _
                $region89: #{inpaint_generator_forward.49} parent=83 // loop_footer
                  %s214 = sadd.s32 1, %s210
                $region90: #{inpaint_generator_forward.49} parent=83 // loop_footer_branch
                  %209 = sbr.rel target = $region86
                $region91: #{inpaint_generator_forward.49} parent=83 // loop_exit
                  _
                loop: start=0, step=1, limit=1
                $region92: #{inpaint_generator_forward.49} parent=83 // loop_pre_header
                  _
                $region93: #{inpaint_generator_forward.49} parent=83 // loop_header
                  %s219 = sphi 0, %s223
                  %p220 = scmp.ge.s32.totalorder %s219, 1
                  %s224 = sphi %s187, %s187
                  %s225 = sphi %s183, %s183
                $region94: #{inpaint_generator_forward.49} parent=83 // loop_header_branch
                  %222 = sbr.rel (%p220) target = $region98
                $region95: #{inpaint_generator_forward.49} parent=83 // loop_body
                  %v226 = vld [vmem:[%s224] sm:$0xf]
                  %227 = vst [vmem:[%s225] sm:$0xf] %v226
                  %v228 = vld [vmem:[%s224 + $0x8] sm:$0xf]
                  %229 = vst [vmem:[%s225 + $0x4] sm:$0xf] %v228
                $region96: #{inpaint_generator_forward.49} parent=83 // loop_footer
                  %s223 = sadd.s32 1, %s219
                $region97: #{inpaint_generator_forward.49} parent=83 // loop_footer_branch
                  %218 = sbr.rel target = $region93
                $region98: #{inpaint_generator_forward.49} parent=83 // loop_exit
                  _
              $region84: #{inpaint_generator_forward.49} parent=68 // pred_fallthru
                _
            $region69: #{inpaint_generator_forward.49} parent=64 // pred_fallthru
              _
            // Predicated region
            $region70: #{inpaint_generator_forward.49} parent=64 // pred_check
              _
            $region71: #{inpaint_generator_forward.49} parent=64 // pred_check_branch
              %193 = sbr.rel (0) target = $region73
            $region72: #{inpaint_generator_forward.49} parent=64 // pred_region
              loop: start=0, step=1, limit=1
              $region74: #{inpaint_generator_forward.49} parent=72 // loop_pre_header
                _
              $region75: #{inpaint_generator_forward.49} parent=72 // loop_header
                %s196 = sphi 0, %s200
                %p197 = scmp.ge.s32.totalorder %s196, 1
                %s201 = sphi %s187, %s187
                %s202 = sphi %s183, %s183
              $region76: #{inpaint_generator_forward.49} parent=72 // loop_header_branch
                %199 = sbr.rel (%p197) target = $region80
              $region77: #{inpaint_generator_forward.49} parent=72 // loop_body
                %v203 = vld [vmem:[%s201] sm:$0xf]
                %204 = vst [vmem:[%s202] sm:$0xf] %v203
                %v205 = vld [vmem:[%s201 + $0x8] sm:$0xf]
                %206 = vst [vmem:[%s202 + $0x4] sm:$0xf] %v205
              $region78: #{inpaint_generator_forward.49} parent=72 // loop_footer
                %s200 = sadd.s32 1, %s196
              $region79: #{inpaint_generator_forward.49} parent=72 // loop_footer_branch
                %195 = sbr.rel target = $region75
              $region80: #{inpaint_generator_forward.49} parent=72 // loop_exit
                _
            $region73: #{inpaint_generator_forward.49} parent=64 // pred_fallthru
              _
          $region65: #{inpaint_generator_forward.49} parent=60 // pred_fallthru
            _
          %230 = vnop
        $region61: #{inpaint_generator_forward.49} parent=15 // pred_fallthru
          _
      $region16: #{inpaint_generator_forward.49} parent=5 // pred_fallthru
        _
      %p231 = scmp.le.s32.totalorder 1, %s8
      %p232 = scmp.lt.s32.totalorder %s8, 5
      %p233 = pnand %p231, %p232
      %p234 = pneg %p233
      // Predicated region
      $region99: #{inpaint_generator_forward.49} parent=5 // pred_check
        _
      $region100: #{inpaint_generator_forward.49} parent=5 // pred_check_branch
        %236 = sbr.rel (%p233) target = $region102
      $region101: #{inpaint_generator_forward.49} parent=5 // pred_region
        %s237 = ssub.s32 %s8, 1
        %s238 = sand.u32 %s35, 1
        %s239 = sand.u32 %s35, 1
        %s240 = smul.addr %s239, 8
        %s241 = scalar_lea.vmem [#allocation2], %s240
        // Predicated region
        $region103: #{inpaint_generator_forward.49} parent=101 // pred_check
          %p242 = pneg %p48
        $region104: #{inpaint_generator_forward.49} parent=101 // pred_check_branch
          %244 = sbr.rel (%p242) target = $region106
        $region105: #{inpaint_generator_forward.49} parent=101 // pred_region
          _
        $region106: #{inpaint_generator_forward.49} parent=101 // pred_fallthru
          _
        %s245 = sand.u32 %s63, 1
        %s246 = sand.u32 %s63, 1
        %s247 = smul.addr %s246, 8
        %s248 = scalar_lea.vmem [#allocation3], %s247
        // Predicated region
        $region107: #{inpaint_generator_forward.49} parent=101 // pred_check
          %p249 = pneg %p76
        $region108: #{inpaint_generator_forward.49} parent=101 // pred_check_branch
          %251 = sbr.rel (%p249) target = $region110
        $region109: #{inpaint_generator_forward.49} parent=101 // pred_region
          _
        $region110: #{inpaint_generator_forward.49} parent=101 // pred_fallthru
          _
        %s252 = sand.u32 %s35, 1
        %s253 = sand.u32 %s35, 1
        %s254 = smul.addr %s253, 8
        %s255 = scalar_lea.vmem [#allocation2], %s254
        %p256 = pneg %p48
        %p257 = pneg %p45
        %s258 = sand.u32 %s63, 1
        %s259 = sand.u32 %s63, 1
        %s260 = smul.addr %s259, 8
        %s261 = scalar_lea.vmem [#allocation3], %s260
        %p262 = pneg %p76
        %p263 = pneg %p73
        %p264 = pneg %p104
        %p265 = pneg %p101
        %s266 = sand.u32 %s91, 1
        %s267 = sand.u32 %s91, 1
        %s268 = smul.addr %s267, 8
        %s269 = scalar_lea.vmem [#allocation4], %s268
        %v270 = vld [vmem:[%s241] sm:$0xf]
        %v271 = vld [vmem:[%s241 + $0x4] sm:$0xf]
        %v272 = vunpack.c.l.bf16 %v270
        %v273 = vunpack.c.l.bf16 %v271
        %v274 = vadd.f32 %v272, %v273
        %v275 = vrot.slane %v274, 4
        %v276 = vadd.f32 %v274, %v275
        %v277 = vrot.slane %v276, 2
        %v278 = vadd.f32 %v276, %v277
        %v279 = vrot.slane %v278, 1
        %v280 = vadd.f32 %v278, %v279
        %v281 = vrcp.pop 16.0
        %v282 = vmul.f32 %v280, %v281
        %v283 = vsub.f32 %v272, %v282
        %v284 = vsub.f32 %v273, %v282
        %v285 = vmul.f32 %v283, %v283
        %v286 = vmul.f32 %v284, %v284
        %v287 = vadd.f32 %v285, %v286
        %v288 = vrot.slane %v287, 4
        %v289 = vadd.f32 %v287, %v288
        %v290 = vrot.slane %v289, 2
        %v291 = vadd.f32 %v289, %v290
        %v292 = vrot.slane %v291, 1
        %v293 = vadd.f32 %v291, %v292
        %v294 = vmul.f32 %v293, %v281
        %v295 = vadd.f32 %v294, 1e-05
        %v296 = vrsqrt.pop %v295
        %v297 = vmul.f32 %v283, %v296
        %v298 = vmul.f32 %v284, %v296
        %v299 = vld [vmem:[%s248] sm:$0xf]
        %v300 = vld [vmem:[%s248 + $0x4] sm:$0xf]
        %v301 = vunpack.c.l.bf16 %v299
        %v302 = vunpack.c.l.bf16 %v300
        %v303 = vadd.f32 %v301, %v297
        %v304 = vadd.f32 %v302, %v298
        %v305 = vpack.c.bf16 %v304, %v303
        %v307 = vunpack.c.l.b16 %v305
        %v308 = vunpack.c.h.b16 %v305
        %v309 = vpack.c.b16 %v307, %v307
        %v310 = vpack.c.b16 %v308, %v308
        %313 = vst [vmem:[%s269] sm:$0xf] %v309
        %314 = vst [vmem:[%s269 + $0x4] sm:$0xf] %v310
        %s315 = sand.u32 %s91, 1
        %s316 = sand.u32 %s91, 1
        %s317 = smul.addr %s316, 8
        %s318 = scalar_lea.vmem [#allocation4], %s317
        // Predicated region
        $region111: #{inpaint_generator_forward.49} parent=101 // pred_check
          %p319 = pneg %p101
        $region112: #{inpaint_generator_forward.49} parent=101 // pred_check_branch
          %321 = sbr.rel (%p319) target = $region114
        $region113: #{inpaint_generator_forward.49} parent=101 // pred_region
          %s322 = smul.addr %s17, 4
          %s323 = sadd.s32 %s18, %s322
          %s324 = smul.addr %s323, 4
          %s325 = scalar_lea.vmem %s2, %s324
          // Predicated region
          $region115: #{inpaint_generator_forward.49} parent=113 // pred_check
            _
          $region116: #{inpaint_generator_forward.49} parent=113 // pred_check_branch
            %327 = sbr.rel (0) target = $region118
          $region117: #{inpaint_generator_forward.49} parent=113 // pred_region
            // Predicated region
            $region119: #{inpaint_generator_forward.49} parent=117 // pred_check
              _
            $region120: #{inpaint_generator_forward.49} parent=117 // pred_check_branch
              %329 = sbr.rel target = $region122
            $region121: #{inpaint_generator_forward.49} parent=117 // pred_region
              // Predicated region
              $region134: #{inpaint_generator_forward.49} parent=121 // pred_check
                _
              $region135: #{inpaint_generator_forward.49} parent=121 // pred_check_branch
                %346 = sbr.rel (0) target = $region137
              $region136: #{inpaint_generator_forward.49} parent=121 // pred_region
                loop: start=0, step=1, limit=1
                $region138: #{inpaint_generator_forward.49} parent=136 // loop_pre_header
                  _
                $region139: #{inpaint_generator_forward.49} parent=136 // loop_header
                  %s348 = sphi 0, %s352
                  %p349 = scmp.ge.s32.totalorder %s348, 1
                  %s353 = sphi %s318, %s318
                  %s354 = sphi %s325, %s325
                $region140: #{inpaint_generator_forward.49} parent=136 // loop_header_branch
                  %351 = sbr.rel (%p349) target = $region144
                $region141: #{inpaint_generator_forward.49} parent=136 // loop_body
                  _
                $region142: #{inpaint_generator_forward.49} parent=136 // loop_footer
                  %s352 = sadd.s32 1, %s348
                $region143: #{inpaint_generator_forward.49} parent=136 // loop_footer_branch
                  %347 = sbr.rel target = $region139
                $region144: #{inpaint_generator_forward.49} parent=136 // loop_exit
                  _
                loop: start=0, step=1, limit=1
                $region145: #{inpaint_generator_forward.49} parent=136 // loop_pre_header
                  _
                $region146: #{inpaint_generator_forward.49} parent=136 // loop_header
                  %s357 = sphi 0, %s361
                  %p358 = scmp.ge.s32.totalorder %s357, 1
                  %s362 = sphi %s318, %s318
                  %s363 = sphi %s325, %s325
                $region147: #{inpaint_generator_forward.49} parent=136 // loop_header_branch
                  %360 = sbr.rel (%p358) target = $region151
                $region148: #{inpaint_generator_forward.49} parent=136 // loop_body
                  %v364 = vld [vmem:[%s362] sm:$0xf]
                  %365 = vst [vmem:[%s363] sm:$0xf] %v364
                  %v366 = vld [vmem:[%s362 + $0x4] sm:$0xf]
                  %367 = vst [vmem:[%s363 + $0x8] sm:$0xf] %v366
                $region149: #{inpaint_generator_forward.49} parent=136 // loop_footer
                  %s361 = sadd.s32 1, %s357
                $region150: #{inpaint_generator_forward.49} parent=136 // loop_footer_branch
                  %356 = sbr.rel target = $region146
                $region151: #{inpaint_generator_forward.49} parent=136 // loop_exit
                  _
              $region137: #{inpaint_generator_forward.49} parent=121 // pred_fallthru
                _
            $region122: #{inpaint_generator_forward.49} parent=117 // pred_fallthru
              _
            // Predicated region
            $region123: #{inpaint_generator_forward.49} parent=117 // pred_check
              _
            $region124: #{inpaint_generator_forward.49} parent=117 // pred_check_branch
              %331 = sbr.rel (0) target = $region126
            $region125: #{inpaint_generator_forward.49} parent=117 // pred_region
              loop: start=0, step=1, limit=1
              $region127: #{inpaint_generator_forward.49} parent=125 // loop_pre_header
                _
              $region128: #{inpaint_generator_forward.49} parent=125 // loop_header
                %s334 = sphi 0, %s338
                %p335 = scmp.ge.s32.totalorder %s334, 1
                %s339 = sphi %s318, %s318
                %s340 = sphi %s325, %s325
              $region129: #{inpaint_generator_forward.49} parent=125 // loop_header_branch
                %337 = sbr.rel (%p335) target = $region133
              $region130: #{inpaint_generator_forward.49} parent=125 // loop_body
                %v341 = vld [vmem:[%s339] sm:$0xf]
                %342 = vst [vmem:[%s340] sm:$0xf] %v341
                %v343 = vld [vmem:[%s339 + $0x4] sm:$0xf]
                %344 = vst [vmem:[%s340 + $0x8] sm:$0xf] %v343
              $region131: #{inpaint_generator_forward.49} parent=125 // loop_footer
                %s338 = sadd.s32 1, %s334
              $region132: #{inpaint_generator_forward.49} parent=125 // loop_footer_branch
                %333 = sbr.rel target = $region128
              $region133: #{inpaint_generator_forward.49} parent=125 // loop_exit
                _
            $region126: #{inpaint_generator_forward.49} parent=117 // pred_fallthru
              _
          $region118: #{inpaint_generator_forward.49} parent=113 // pred_fallthru
            _
          %368 = vnop
        $region114: #{inpaint_generator_forward.49} parent=101 // pred_fallthru
          _
      $region102: #{inpaint_generator_forward.49} parent=5 // pred_fallthru
        _
      %p369 = scmp.le.s32.totalorder 2, %s8
      // Predicated region
      $region152: #{inpaint_generator_forward.49} parent=5 // pred_check
        %p370 = pneg %p369
      $region153: #{inpaint_generator_forward.49} parent=5 // pred_check_branch
        %372 = sbr.rel (%p370) target = $region155
      $region154: #{inpaint_generator_forward.49} parent=5 // pred_region
        %s373 = ssub.s32 %s8, 2
        // Predicated region
        $region156: #{inpaint_generator_forward.49} parent=154 // pred_check
          %p374 = pneg %p107
        $region157: #{inpaint_generator_forward.49} parent=154 // pred_check_branch
          %376 = sbr.rel (%p374) target = $region159
        $region158: #{inpaint_generator_forward.49} parent=154 // pred_region
          %s377 = sand.u32 %s92, 1
          %s378 = sand.u32 %s92, 1
          %s379 = smul.addr %s378, 8
          %s380 = scalar_lea.vmem [#allocation4], %s379
        $region159: #{inpaint_generator_forward.49} parent=154 // pred_fallthru
          _
      $region155: #{inpaint_generator_forward.49} parent=5 // pred_fallthru
        _
    $region6: #{inpaint_generator_forward.49} parent=1 // loop_footer
      %s12 = sadd.s32 1, %s8
    $region7: #{inpaint_generator_forward.49} parent=1 // loop_footer_branch
      %7 = sbr.rel target = $region3
    $region8: #{inpaint_generator_forward.49} parent=1 // loop_exit
      _

// kernel: inpaint_generator_forward.50
$region0: #{inpaint_generator_forward.50}
  #allocation0 [shape = 'u32[]', space=smem, size = 0x4, offset = 0x4, fixed_abs, tag = 'smem constant byte address 0x4 - core index']
  #allocation1 [shape = 'u32[144,128]{1,0:T(1,128)}', space=vmem, size = 0x12000, scoped, tag = 'internal scratch']
  #allocation2 [shape = 'f32[32,128]{1,0:T(8,128)}', space=vmem, size = 0x4000, scoped, tag = 'scratch operand']
  %s0 = inlined_call_operand.hbm [shape: bf16[32,2304], index: 0, kind: input, shape index: {}]
  %s1 = inlined_call_operand.vmem [shape: bf16[2304,256], index: 1, kind: input, shape index: {}]
  %s2 = inlined_call_operand.vmem [shape: f32[1,256], index: 2, kind: input, shape index: {}]
  %s3 = inlined_call_operand.vmem [shape: bf16[32,256], index: 3, kind: output, shape index: {}]
  %s4 = sld [smem:[#allocation0]]
  $region135: #{inpaint_generator_forward.50} parent=0
    _
  %s6 = ssub.s32 1, %s4
  %s7 = scalar_select 0, %s6, %s4
  $region1: #{inpaint_generator_forward.50} parent=0
    #allocation3 [shape = 'u8[32768]{0}', space=vmem, size = 0x8000, scoped, tag = 'input window, operand 0']
    #allocation4 [shape = 's32[2]{0}', space=sflag, size = 0x8, scoped, tag = 'scoped memory for inpaint_generator_forward.50']
    #allocation5 [shape = 'u8[131072]{0}', space=vmem, size = 0x20000, scoped, tag = 'input window, operand 1']
    #allocation6 [shape = 'u8[16384]{0}', space=vmem, size = 0x4000, scoped, tag = 'output window, operand 0']
    %8 = vsyncpa [#allocation4], 0
    %s9 = scalar_lea.sflag [#allocation4], 1
    %10 = vsyncpa %s9, 0
    loop: start=0, step=1, limit=20
    $region2: #{inpaint_generator_forward.50} parent=1 // loop_pre_header
      _
    $region3: #{inpaint_generator_forward.50} parent=1 // loop_header
      %s12 = sphi 0, %s16
      %p13 = scmp.ge.s32.totalorder %s12, 20
      %s19 = sphi 0, %s38
      %s20 = sphi 0, %s34
      %s21 = sphi 0, %s30
      %s22 = sphi 0, %s19
      %s23 = sphi 0, %s20
      %s24 = sphi 0, %s21
      %s25 = sphi 0, %s22
      %s26 = sphi 0, %s23
      %s27 = sphi 0, %s24
      %s43 = sphi 0, %s45
      %s46 = sphi 0, %s43
      %s47 = sphi 0, %s46
      %s63 = sphi 0, %s47
      %s71 = sphi 0, %s73
      %s74 = sphi 0, %s71
      %s75 = sphi 0, %s74
      %s91 = sphi 0, %s75
      %s97 = sphi 0, %s99
      %s100 = sphi 0, %s97
      %s101 = sphi 0, %s100
      %s117 = sphi 0, %s101
      %s125 = sphi 0, %s127
      %s128 = sphi 0, %s125
      %s129 = sphi 0, %s128
      %s145 = sphi 0, %s129
    $region4: #{inpaint_generator_forward.50} parent=1 // loop_header_branch
      %15 = sbr.rel (%p13) target = $region8
    $region5: #{inpaint_generator_forward.50} parent=1 // loop_body
      %s17 = ssub.s32 %s12, 1
      %s18 = ssub.s32 %s12, 2
      %s28 = sadd.s32 1, %s21
      %p29 = scmp.ge.s32.totalorder %s28, 9
      %s30 = scalar_select %p29, 0, %s28
      %s31 = sadd.s32 1, %s20
      %s32 = scalar_select %p29, %s31, %s20
      %p33 = scmp.ge.s32.totalorder %s32, 2
      %s34 = scalar_select %p33, 0, %s32
      %s35 = sadd.s32 1, %s19
      %s36 = scalar_select %p33, %s35, %s19
      %p37 = scmp.ge.s32.totalorder %s36, 1
      %s38 = scalar_select %p37, 0, %s36
      %s39 = ssub.s32 %s19, %s38
      %s40 = ssub.s32 %s21, %s30
      %s41 = sor.u32 %s39, %s40
      %p42 = scmp.eq.s32.totalorder %s41, 0
      %s44 = sadd.s32 %s43, 1
      %s45 = scalar_select %p42, %s43, %s44
      %p48 = pneg %p42
      %p49 = scmp.eq.s32.totalorder %s12, 17
      %p50 = por %p48, %p49
      %p51 = scmp.ne.s32.totalorder %s43, %s46
      %p52 = scmp.eq.s32.totalorder %s12, 0
      %p53 = por %p51, %p52
      %p54 = scmp.ne.s32.totalorder %s43, %s46
      %p55 = scmp.eq.s32.totalorder %s17, 17
      %p56 = por %p54, %p55
      %p57 = scmp.ne.s32.totalorder %s46, %s47
      %p58 = scmp.eq.s32.totalorder %s17, 0
      %p59 = por %p57, %p58
      %p60 = scmp.ne.s32.totalorder %s46, %s47
      %p61 = scmp.eq.s32.totalorder %s18, 17
      %p62 = por %p60, %p61
      %p64 = scmp.ne.s32.totalorder %s47, %s63
      %p65 = scmp.eq.s32.totalorder %s18, 0
      %p66 = por %p64, %p65
      %s67 = ssub.s32 %s21, %s30
      %s68 = ssub.s32 %s20, %s34
      %s69 = sor.u32 %s67, %s68
      %p70 = scmp.eq.s32.totalorder %s69, 0
      %s72 = sadd.s32 %s71, 1
      %s73 = scalar_select %p70, %s71, %s72
      %p76 = pneg %p70
      %p77 = scmp.eq.s32.totalorder %s12, 17
      %p78 = por %p76, %p77
      %p79 = scmp.ne.s32.totalorder %s71, %s74
      %p80 = scmp.eq.s32.totalorder %s12, 0
      %p81 = por %p79, %p80
      %p82 = scmp.ne.s32.totalorder %s71, %s74
      %p83 = scmp.eq.s32.totalorder %s17, 17
      %p84 = por %p82, %p83
      %p85 = scmp.ne.s32.totalorder %s74, %s75
      %p86 = scmp.eq.s32.totalorder %s17, 0
      %p87 = por %p85, %p86
      %p88 = scmp.ne.s32.totalorder %s74, %s75
      %p89 = scmp.eq.s32.totalorder %s18, 17
      %p90 = por %p88, %p89
      %p92 = scmp.ne.s32.totalorder %s75, %s91
      %p93 = scmp.eq.s32.totalorder %s18, 0
      %p94 = por %p92, %p93
      %s95 = ssub.s32 %s20, %s34
      %p96 = scmp.eq.s32.totalorder %s95, 0
      %s98 = sadd.s32 %s97, 1
      %s99 = scalar_select %p96, %s97, %s98
      %p102 = pneg %p96
      %p103 = scmp.eq.s32.totalorder %s12, 17
      %p104 = por %p102, %p103
      %p105 = scmp.ne.s32.totalorder %s97, %s100
      %p106 = scmp.eq.s32.totalorder %s12, 0
      %p107 = por %p105, %p106
      %p108 = scmp.ne.s32.totalorder %s97, %s100
      %p109 = scmp.eq.s32.totalorder %s17, 17
      %p110 = por %p108, %p109
      %p111 = scmp.ne.s32.totalorder %s100, %s101
      %p112 = scmp.eq.s32.totalorder %s17, 0
      %p113 = por %p111, %p112
      %p114 = scmp.ne.s32.totalorder %s100, %s101
      %p115 = scmp.eq.s32.totalorder %s18, 17
      %p116 = por %p114, %p115
      %p118 = scmp.ne.s32.totalorder %s101, %s117
      %p119 = scmp.eq.s32.totalorder %s18, 0
      %p120 = por %p118, %p119
      %s121 = ssub.s32 %s19, %s38
      %s122 = ssub.s32 %s20, %s34
      %s123 = sor.u32 %s121, %s122
      %p124 = scmp.eq.s32.totalorder %s123, 0
      %s126 = sadd.s32 %s125, 1
      %s127 = scalar_select %p124, %s125, %s126
      %p130 = pneg %p124
      %p131 = scmp.eq.s32.totalorder %s12, 17
      %p132 = por %p130, %p131
      %p133 = scmp.ne.s32.totalorder %s125, %s128
      %p134 = scmp.eq.s32.totalorder %s12, 0
      %p135 = por %p133, %p134
      %p136 = scmp.ne.s32.totalorder %s125, %s128
      %p137 = scmp.eq.s32.totalorder %s17, 17
      %p138 = por %p136, %p137
      %p139 = scmp.ne.s32.totalorder %s128, %s129
      %p140 = scmp.eq.s32.totalorder %s17, 0
      %p141 = por %p139, %p140
      %p142 = scmp.ne.s32.totalorder %s128, %s129
      %p143 = scmp.eq.s32.totalorder %s18, 17
      %p144 = por %p142, %p143
      %p146 = scmp.ne.s32.totalorder %s129, %s145
      %p147 = scmp.eq.s32.totalorder %s18, 0
      %p148 = por %p146, %p147
      %p149 = scmp.le.s32.totalorder 1, %s12
      %p150 = scmp.lt.s32.totalorder %s12, 19
      %p151 = pnand %p149, %p150
      %p152 = pneg %p151
      // Predicated region
      $region9: #{inpaint_generator_forward.50} parent=5 // pred_check
        _
      $region10: #{inpaint_generator_forward.50} parent=5 // pred_check_branch
        %154 = sbr.rel (%p151) target = $region12
      $region11: #{inpaint_generator_forward.50} parent=5 // pred_region
        %s155 = ssub.s32 %s12, 1
      $region12: #{inpaint_generator_forward.50} parent=5 // pred_fallthru
        _
      %p156 = scmp.lt.s32.totalorder %s12, 18
      // Predicated region
      $region13: #{inpaint_generator_forward.50} parent=5 // pred_check
        %p157 = pneg %p156
      $region14: #{inpaint_generator_forward.50} parent=5 // pred_check_branch
        %159 = sbr.rel (%p157) target = $region16
      $region15: #{inpaint_generator_forward.50} parent=5 // pred_region
        // Predicated region
        $region17: #{inpaint_generator_forward.50} parent=15 // pred_check
          %p160 = pneg %p53
        $region18: #{inpaint_generator_forward.50} parent=15 // pred_check_branch
          %162 = sbr.rel (%p160) target = $region20
        $region19: #{inpaint_generator_forward.50} parent=15 // pred_region
          %s163 = sand.u32 %s43, 1
          %s164 = scalar_lea.sflag [#allocation4], %s163
          %s165 = sand.u32 %s43, 1
          %s166 = smul.addr %s165, 32
          %s167 = scalar_lea.vmem [#allocation3], %s166
          %s168 = smul.u32 4, %s19
          %s169 = smul.u32 2, %s21
          %s171 = ssub.s32 512, 512
          %172 = vsyncadd %s164, %s171
          %s173 = smul.addr %s168, 18
          %s174 = sadd.s32 %s169, %s173
          %s175 = smul.addr %s174, 64
          %s176 = scalar_lea.hbm %s0, %s175
          %s177 = sshll.u32 %s167, 4
          %s178 = int_to_ptr.vmem [resolvable:$true] %s177
          %183 = dma.hbm_to_vmem [thread:$0]  %s176, 512, %s178, %s164, 1152, 128, 8
        $region20: #{inpaint_generator_forward.50} parent=15 // pred_fallthru
          _
        // Predicated region
        $region21: #{inpaint_generator_forward.50} parent=15 // pred_check
          %p184 = pneg %p81
        $region22: #{inpaint_generator_forward.50} parent=15 // pred_check_branch
          %186 = sbr.rel (%p184) target = $region24
        $region23: #{inpaint_generator_forward.50} parent=15 // pred_region
          %s187 = sand.u32 %s71, 1
          %s188 = sand.u32 %s71, 1
          %s189 = smul.addr %s188, 128
          %s190 = scalar_lea.vmem [#allocation5], %s189
          %s191 = smul.u32 32, %s21
          %s192 = smul.addr %s191, 2
          %s193 = sadd.s32 %s20, %s192
          %s194 = smul.addr %s193, 4
          %s195 = scalar_lea.vmem %s1, %s194
          // Predicated region
          $region25: #{inpaint_generator_forward.50} parent=23 // pred_check
            _
          $region26: #{inpaint_generator_forward.50} parent=23 // pred_check_branch
            %197 = sbr.rel (0) target = $region28
          $region27: #{inpaint_generator_forward.50} parent=23 // pred_region
            // Predicated region
            $region29: #{inpaint_generator_forward.50} parent=27 // pred_check
              _
            $region30: #{inpaint_generator_forward.50} parent=27 // pred_check_branch
              %199 = sbr.rel target = $region32
            $region31: #{inpaint_generator_forward.50} parent=27 // pred_region
              // Predicated region
              $region44: #{inpaint_generator_forward.50} parent=31 // pred_check
                _
              $region45: #{inpaint_generator_forward.50} parent=31 // pred_check_branch
                %276 = sbr.rel (0) target = $region47
              $region46: #{inpaint_generator_forward.50} parent=31 // pred_region
                loop: start=0, step=1, limit=1
                $region48: #{inpaint_generator_forward.50} parent=46 // loop_pre_header
                  _
                $region49: #{inpaint_generator_forward.50} parent=46 // loop_header
                  %s278 = sphi 0, %s282
                  %p279 = scmp.ge.s32.totalorder %s278, 1
                  %s283 = sphi %s195, %s195
                  %s284 = sphi %s190, %s190
                $region50: #{inpaint_generator_forward.50} parent=46 // loop_header_branch
                  %281 = sbr.rel (%p279) target = $region54
                $region51: #{inpaint_generator_forward.50} parent=46 // loop_body
                  _
                $region52: #{inpaint_generator_forward.50} parent=46 // loop_footer
                  %s282 = sadd.s32 1, %s278
                $region53: #{inpaint_generator_forward.50} parent=46 // loop_footer_branch
                  %277 = sbr.rel target = $region49
                $region54: #{inpaint_generator_forward.50} parent=46 // loop_exit
                  _
                loop: start=0, step=1, limit=1
                $region55: #{inpaint_generator_forward.50} parent=46 // loop_pre_header
                  _
                $region56: #{inpaint_generator_forward.50} parent=46 // loop_header
                  %s287 = sphi 0, %s291
                  %p288 = scmp.ge.s32.totalorder %s287, 1
                  %s292 = sphi %s195, %s195
                  %s293 = sphi %s190, %s190
                $region57: #{inpaint_generator_forward.50} parent=46 // loop_header_branch
                  %290 = sbr.rel (%p288) target = $region61
                $region58: #{inpaint_generator_forward.50} parent=46 // loop_body
                  %v294 = vld [vmem:[%s292] sm:$0xf]
                  %295 = vst [vmem:[%s293] sm:$0xf] %v294
                  %v296 = vld [vmem:[%s292 + $0x8] sm:$0xf]
                  %297 = vst [vmem:[%s293 + $0x4] sm:$0xf] %v296
                  %v298 = vld [vmem:[%s292 + $0x10] sm:$0xf]
                  %299 = vst [vmem:[%s293 + $0x8] sm:$0xf] %v298
                  %v300 = vld [vmem:[%s292 + $0x18] sm:$0xf]
                  %301 = vst [vmem:[%s293 + $0xc] sm:$0xf] %v300
                  %v302 = vld [vmem:[%s292 + $0x20] sm:$0xf]
                  %303 = vst [vmem:[%s293 + $0x10] sm:$0xf] %v302
                  %v304 = vld [vmem:[%s292 + $0x28] sm:$0xf]
                  %305 = vst [vmem:[%s293 + $0x14] sm:$0xf] %v304
                  %v306 = vld [vmem:[%s292 + $0x30] sm:$0xf]
                  %307 = vst [vmem:[%s293 + $0x18] sm:$0xf] %v306
                  %v308 = vld [vmem:[%s292 + $0x38] sm:$0xf]
                  %309 = vst [vmem:[%s293 + $0x1c] sm:$0xf] %v308
                  %v310 = vld [vmem:[%s292 + $0x40] sm:$0xf]
                  %311 = vst [vmem:[%s293 + $0x20] sm:$0xf] %v310
                  %v312 = vld [vmem:[%s292 + $0x48] sm:$0xf]
                  %313 = vst [vmem:[%s293 + $0x24] sm:$0xf] %v312
                  %v314 = vld [vmem:[%s292 + $0x50] sm:$0xf]
                  %315 = vst [vmem:[%s293 + $0x28] sm:$0xf] %v314
                  %v316 = vld [vmem:[%s292 + $0x58] sm:$0xf]
                  %317 = vst [vmem:[%s293 + $0x2c] sm:$0xf] %v316
                  %v318 = vld [vmem:[%s292 + $0x60] sm:$0xf]
                  %319 = vst [vmem:[%s293 + $0x30] sm:$0xf] %v318
                  %v320 = vld [vmem:[%s292 + $0x68] sm:$0xf]
                  %321 = vst [vmem:[%s293 + $0x34] sm:$0xf] %v320
                  %v322 = vld [vmem:[%s292 + $0x70] sm:$0xf]
                  %323 = vst [vmem:[%s293 + $0x38] sm:$0xf] %v322
                  %v324 = vld [vmem:[%s292 + $0x78] sm:$0xf]
                  %325 = vst [vmem:[%s293 + $0x3c] sm:$0xf] %v324
                  %v326 = vld [vmem:[%s292 + $0x80] sm:$0xf]
                  %327 = vst [vmem:[%s293 + $0x40] sm:$0xf] %v326
                  %v328 = vld [vmem:[%s292 + $0x88] sm:$0xf]
                  %329 = vst [vmem:[%s293 + $0x44] sm:$0xf] %v328
                  %v330 = vld [vmem:[%s292 + $0x90] sm:$0xf]
                  %331 = vst [vmem:[%s293 + $0x48] sm:$0xf] %v330
                  %v332 = vld [vmem:[%s292 + $0x98] sm:$0xf]
                  %333 = vst [vmem:[%s293 + $0x4c] sm:$0xf] %v332
                  %v334 = vld [vmem:[%s292 + $0xa0] sm:$0xf]
                  %335 = vst [vmem:[%s293 + $0x50] sm:$0xf] %v334
                  %v336 = vld [vmem:[%s292 + $0xa8] sm:$0xf]
                  %337 = vst [vmem:[%s293 + $0x54] sm:$0xf] %v336
                  %v338 = vld [vmem:[%s292 + $0xb0] sm:$0xf]
                  %339 = vst [vmem:[%s293 + $0x58] sm:$0xf] %v338
                  %v340 = vld [vmem:[%s292 + $0xb8] sm:$0xf]
                  %341 = vst [vmem:[%s293 + $0x5c] sm:$0xf] %v340
                  %v342 = vld [vmem:[%s292 + $0xc0] sm:$0xf]
                  %343 = vst [vmem:[%s293 + $0x60] sm:$0xf] %v342
                  %v344 = vld [vmem:[%s292 + $0xc8] sm:$0xf]
                  %345 = vst [vmem:[%s293 + $0x64] sm:$0xf] %v344
                  %v346 = vld [vmem:[%s292 + $0xd0] sm:$0xf]
                  %347 = vst [vmem:[%s293 + $0x68] sm:$0xf] %v346
                  %v348 = vld [vmem:[%s292 + $0xd8] sm:$0xf]
                  %349 = vst [vmem:[%s293 + $0x6c] sm:$0xf] %v348
                  %v350 = vld [vmem:[%s292 + $0xe0] sm:$0xf]
                  %351 = vst [vmem:[%s293 + $0x70] sm:$0xf] %v350
                  %v352 = vld [vmem:[%s292 + $0xe8] sm:$0xf]
                  %353 = vst [vmem:[%s293 + $0x74] sm:$0xf] %v352
                  %v354 = vld [vmem:[%s292 + $0xf0] sm:$0xf]
                  %355 = vst [vmem:[%s293 + $0x78] sm:$0xf] %v354
                  %v356 = vld [vmem:[%s292 + $0xf8] sm:$0xf]
                  %357 = vst [vmem:[%s293 + $0x7c] sm:$0xf] %v356
                $region59: #{inpaint_generator_forward.50} parent=46 // loop_footer
                  %s291 = sadd.s32 1, %s287
                $region60: #{inpaint_generator_forward.50} parent=46 // loop_footer_branch
                  %286 = sbr.rel target = $region56
                $region61: #{inpaint_generator_forward.50} parent=46 // loop_exit
                  _
              $region47: #{inpaint_generator_forward.50} parent=31 // pred_fallthru
                _
            $region32: #{inpaint_generator_forward.50} parent=27 // pred_fallthru
              _
            // Predicated region
            $region33: #{inpaint_generator_forward.50} parent=27 // pred_check
              _
            $region34: #{inpaint_generator_forward.50} parent=27 // pred_check_branch
              %201 = sbr.rel (0) target = $region36
            $region35: #{inpaint_generator_forward.50} parent=27 // pred_region
              loop: start=0, step=1, limit=1
              $region37: #{inpaint_generator_forward.50} parent=35 // loop_pre_header
                _
              $region38: #{inpaint_generator_forward.50} parent=35 // loop_header
                %s204 = sphi 0, %s208
                %p205 = scmp.ge.s32.totalorder %s204, 1
                %s209 = sphi %s195, %s195
                %s210 = sphi %s190, %s190
              $region39: #{inpaint_generator_forward.50} parent=35 // loop_header_branch
                %207 = sbr.rel (%p205) target = $region43
              $region40: #{inpaint_generator_forward.50} parent=35 // loop_body
                %v211 = vld [vmem:[%s209] sm:$0xf]
                %212 = vst [vmem:[%s210] sm:$0xf] %v211
                %v213 = vld [vmem:[%s209 + $0x8] sm:$0xf]
                %214 = vst [vmem:[%s210 + $0x4] sm:$0xf] %v213
                %v215 = vld [vmem:[%s209 + $0x10] sm:$0xf]
                %216 = vst [vmem:[%s210 + $0x8] sm:$0xf] %v215
                %v217 = vld [vmem:[%s209 + $0x18] sm:$0xf]
                %218 = vst [vmem:[%s210 + $0xc] sm:$0xf] %v217
                %v219 = vld [vmem:[%s209 + $0x20] sm:$0xf]
                %220 = vst [vmem:[%s210 + $0x10] sm:$0xf] %v219
                %v221 = vld [vmem:[%s209 + $0x28] sm:$0xf]
                %222 = vst [vmem:[%s210 + $0x14] sm:$0xf] %v221
                %v223 = vld [vmem:[%s209 + $0x30] sm:$0xf]
                %224 = vst [vmem:[%s210 + $0x18] sm:$0xf] %v223
                %v225 = vld [vmem:[%s209 + $0x38] sm:$0xf]
                %226 = vst [vmem:[%s210 + $0x1c] sm:$0xf] %v225
                %v227 = vld [vmem:[%s209 + $0x40] sm:$0xf]
                %228 = vst [vmem:[%s210 + $0x20] sm:$0xf] %v227
                %v229 = vld [vmem:[%s209 + $0x48] sm:$0xf]
                %230 = vst [vmem:[%s210 + $0x24] sm:$0xf] %v229
                %v231 = vld [vmem:[%s209 + $0x50] sm:$0xf]
                %232 = vst [vmem:[%s210 + $0x28] sm:$0xf] %v231
                %v233 = vld [vmem:[%s209 + $0x58] sm:$0xf]
                %234 = vst [vmem:[%s210 + $0x2c] sm:$0xf] %v233
                %v235 = vld [vmem:[%s209 + $0x60] sm:$0xf]
                %236 = vst [vmem:[%s210 + $0x30] sm:$0xf] %v235
                %v237 = vld [vmem:[%s209 + $0x68] sm:$0xf]
                %238 = vst [vmem:[%s210 + $0x34] sm:$0xf] %v237
                %v239 = vld [vmem:[%s209 + $0x70] sm:$0xf]
                %240 = vst [vmem:[%s210 + $0x38] sm:$0xf] %v239
                %v241 = vld [vmem:[%s209 + $0x78] sm:$0xf]
                %242 = vst [vmem:[%s210 + $0x3c] sm:$0xf] %v241
                %v243 = vld [vmem:[%s209 + $0x80] sm:$0xf]
                %244 = vst [vmem:[%s210 + $0x40] sm:$0xf] %v243
                %v245 = vld [vmem:[%s209 + $0x88] sm:$0xf]
                %246 = vst [vmem:[%s210 + $0x44] sm:$0xf] %v245
                %v247 = vld [vmem:[%s209 + $0x90] sm:$0xf]
                %248 = vst [vmem:[%s210 + $0x48] sm:$0xf] %v247
                %v249 = vld [vmem:[%s209 + $0x98] sm:$0xf]
                %250 = vst [vmem:[%s210 + $0x4c] sm:$0xf] %v249
                %v251 = vld [vmem:[%s209 + $0xa0] sm:$0xf]
                %252 = vst [vmem:[%s210 + $0x50] sm:$0xf] %v251
                %v253 = vld [vmem:[%s209 + $0xa8] sm:$0xf]
                %254 = vst [vmem:[%s210 + $0x54] sm:$0xf] %v253
                %v255 = vld [vmem:[%s209 + $0xb0] sm:$0xf]
                %256 = vst [vmem:[%s210 + $0x58] sm:$0xf] %v255
                %v257 = vld [vmem:[%s209 + $0xb8] sm:$0xf]
                %258 = vst [vmem:[%s210 + $0x5c] sm:$0xf] %v257
                %v259 = vld [vmem:[%s209 + $0xc0] sm:$0xf]
                %260 = vst [vmem:[%s210 + $0x60] sm:$0xf] %v259
                %v261 = vld [vmem:[%s209 + $0xc8] sm:$0xf]
                %262 = vst [vmem:[%s210 + $0x64] sm:$0xf] %v261
                %v263 = vld [vmem:[%s209 + $0xd0] sm:$0xf]
                %264 = vst [vmem:[%s210 + $0x68] sm:$0xf] %v263
                %v265 = vld [vmem:[%s209 + $0xd8] sm:$0xf]
                %266 = vst [vmem:[%s210 + $0x6c] sm:$0xf] %v265
                %v267 = vld [vmem:[%s209 + $0xe0] sm:$0xf]
                %268 = vst [vmem:[%s210 + $0x70] sm:$0xf] %v267
                %v269 = vld [vmem:[%s209 + $0xe8] sm:$0xf]
                %270 = vst [vmem:[%s210 + $0x74] sm:$0xf] %v269
                %v271 = vld [vmem:[%s209 + $0xf0] sm:$0xf]
                %272 = vst [vmem:[%s210 + $0x78] sm:$0xf] %v271
                %v273 = vld [vmem:[%s209 + $0xf8] sm:$0xf]
                %274 = vst [vmem:[%s210 + $0x7c] sm:$0xf] %v273
              $region41: #{inpaint_generator_forward.50} parent=35 // loop_footer
                %s208 = sadd.s32 1, %s204
              $region42: #{inpaint_generator_forward.50} parent=35 // loop_footer_branch
                %203 = sbr.rel target = $region38
              $region43: #{inpaint_generator_forward.50} parent=35 // loop_exit
                _
            $region36: #{inpaint_generator_forward.50} parent=27 // pred_fallthru
              _
          $region28: #{inpaint_generator_forward.50} parent=23 // pred_fallthru
            _
          %358 = vnop
        $region24: #{inpaint_generator_forward.50} parent=15 // pred_fallthru
          _
        // Predicated region
        $region62: #{inpaint_generator_forward.50} parent=15 // pred_check
          %p359 = pneg %p107
        $region63: #{inpaint_generator_forward.50} parent=15 // pred_check_branch
          %361 = sbr.rel (%p359) target = $region65
        $region64: #{inpaint_generator_forward.50} parent=15 // pred_region
          %p362 = scmp.lt.s32.totalorder %s20, 1
          %s363 = scalar_select %p362, %s20, 1
          %s364 = scalar_lea.vmem %s2, %s363
        $region65: #{inpaint_generator_forward.50} parent=15 // pred_fallthru
          _
      $region16: #{inpaint_generator_forward.50} parent=5 // pred_fallthru
        _
      %p365 = scmp.le.s32.totalorder 1, %s12
      %p366 = scmp.lt.s32.totalorder %s12, 19
      %p367 = pnand %p365, %p366
      %p368 = pneg %p367
      // Predicated region
      $region66: #{inpaint_generator_forward.50} parent=5 // pred_check
        _
      $region67: #{inpaint_generator_forward.50} parent=5 // pred_check_branch
        %370 = sbr.rel (%p367) target = $region69
      $region68: #{inpaint_generator_forward.50} parent=5 // pred_region
        %s371 = ssub.s32 %s12, 1
        %s372 = sand.u32 %s46, 1
        %s373 = scalar_lea.sflag [#allocation4], %s372
        %s374 = sand.u32 %s46, 1
        %s375 = smul.addr %s374, 32
        %s376 = scalar_lea.vmem [#allocation3], %s375
        // Predicated region
        $region70: #{inpaint_generator_forward.50} parent=68 // pred_check
          %p377 = pneg %p59
        $region71: #{inpaint_generator_forward.50} parent=68 // pred_check_branch
          %379 = sbr.rel (%p377) target = $region73
        $region72: #{inpaint_generator_forward.50} parent=68 // pred_region
          %380 = dma.done %s373, 512
        $region73: #{inpaint_generator_forward.50} parent=68 // pred_fallthru
          _
        %s381 = sand.u32 %s74, 1
        %s382 = sand.u32 %s74, 1
        %s383 = smul.addr %s382, 128
        %s384 = scalar_lea.vmem [#allocation5], %s383
        // Predicated region
        $region74: #{inpaint_generator_forward.50} parent=68 // pred_check
          %p385 = pneg %p87
        $region75: #{inpaint_generator_forward.50} parent=68 // pred_check_branch
          %387 = sbr.rel (%p385) target = $region77
        $region76: #{inpaint_generator_forward.50} parent=68 // pred_region
          _
        $region77: #{inpaint_generator_forward.50} parent=68 // pred_fallthru
          _
        %s388 = sand.u32 %s46, 1
        %s389 = scalar_lea.sflag [#allocation4], %s388
        %s390 = sand.u32 %s46, 1
        %s391 = smul.addr %s390, 32
        %s392 = scalar_lea.vmem [#allocation3], %s391
        %p393 = pneg %p59
        %p394 = pneg %p56
        %s395 = sand.u32 %s74, 1
        %s396 = sand.u32 %s74, 1
        %s397 = smul.addr %s396, 128
        %s398 = scalar_lea.vmem [#allocation5], %s397
        %p399 = pneg %p87
        %p400 = pneg %p84
        %p401 = scmp.lt.s32.totalorder %s23, 1
        %s402 = scalar_select %p401, %s23, 1
        %s403 = scalar_lea.vmem %s2, %s402
        %p404 = pneg %p113
        %p405 = pneg %p110
        %p406 = pneg %p141
        %p407 = pneg %p138
        %s408 = sand.u32 %s128, 1
        %s409 = sand.u32 %s128, 1
        %s410 = smul.addr %s409, 16
        %s411 = scalar_lea.vmem [#allocation6], %s410
        %s412 = smul.u32 4, %s22
        %s413 = smul.u32 2, %s24
        %s414 = smul.u32 32, %s24
        %p415 = scmp.lt.s32.totalorder %s23, 1
        %s416 = scalar_select %p415, %s23, 1
        %s417 = scalar_lea.vmem %s2, %s416
        %s418 = smul.u32 4, %s22
        %p420 = scmp.eq.s32.totalorder %s24, 0
        // Predicated region
        $region78: #{inpaint_generator_forward.50} parent=68 // pred_check
          %p421 = pneg %p420
        $region79: #{inpaint_generator_forward.50} parent=68 // pred_check_branch
          %423 = sbr.rel (%p421) target = $region81
        $region80: #{inpaint_generator_forward.50} parent=68 // pred_region
          %424 = vst [vmem:[#allocation2] sm:$0xff] 0.0
          %425 = vst [vmem:[#allocation2 + $0x8] sm:$0xff] 0.0
          %426 = vst [vmem:[#allocation2 + $0x10] sm:$0xff] 0.0
          %427 = vst [vmem:[#allocation2 + $0x18] sm:$0xff] 0.0
        $region81: #{inpaint_generator_forward.50} parent=68 // pred_fallthru
          _
        %v428 = vld [vmem:[#allocation2] sm:$0xff]
        %v429 = vld [vmem:[#allocation2 + $0x8] sm:$0xff]
        %v430 = vld [vmem:[#allocation2 + $0x10] sm:$0xff]
        %v431 = vld [vmem:[#allocation2 + $0x18] sm:$0xff]
        %v432 = vld [vmem:[%s376] sm:$0xff]
        %v433 = vld [vmem:[%s376 + $0x8] sm:$0xff]
        %v434 = vld [vmem:[%s376 + $0x10] sm:$0xff]
        %v435 = vld [vmem:[%s376 + $0x18] sm:$0xff]
        %v436 = vld [vmem:[%s384] sm:$0xf]
        %v437 = vld [vmem:[%s384 + $0x4] sm:$0xf]
        %v438 = vld [vmem:[%s384 + $0x8] sm:$0xf]
        %v439 = vld [vmem:[%s384 + $0xc] sm:$0xf]
        %v440 = vld [vmem:[%s384 + $0x10] sm:$0xf]
        %v441 = vld [vmem:[%s384 + $0x14] sm:$0xf]
        %v442 = vld [vmem:[%s384 + $0x18] sm:$0xf]
        %v443 = vld [vmem:[%s384 + $0x1c] sm:$0xf]
        %v444 = vld [vmem:[%s384 + $0x20] sm:$0xf]
        %v445 = vld [vmem:[%s384 + $0x24] sm:$0xf]
        %v446 = vld [vmem:[%s384 + $0x28] sm:$0xf]
        %v447 = vld [vmem:[%s384 + $0x2c] sm:$0xf]
        %v448 = vld [vmem:[%s384 + $0x30] sm:$0xf]
        %v449 = vld [vmem:[%s384 + $0x34] sm:$0xf]
        %v450 = vld [vmem:[%s384 + $0x38] sm:$0xf]
        %v451 = vld [vmem:[%s384 + $0x3c] sm:$0xf]
        %v452 = vld [vmem:[%s384 + $0x40] sm:$0xf]
        %v453 = vld [vmem:[%s384 + $0x44] sm:$0xf]
        %v454 = vld [vmem:[%s384 + $0x48] sm:$0xf]
        %v455 = vld [vmem:[%s384 + $0x4c] sm:$0xf]
        %v456 = vld [vmem:[%s384 + $0x50] sm:$0xf]
        %v457 = vld [vmem:[%s384 + $0x54] sm:$0xf]
        %v458 = vld [vmem:[%s384 + $0x58] sm:$0xf]
        %v459 = vld [vmem:[%s384 + $0x5c] sm:$0xf]
        %v460 = vld [vmem:[%s384 + $0x60] sm:$0xf]
        %v461 = vld [vmem:[%s384 + $0x64] sm:$0xf]
        %v462 = vld [vmem:[%s384 + $0x68] sm:$0xf]
        %v463 = vld [vmem:[%s384 + $0x6c] sm:$0xf]
        %v464 = vld [vmem:[%s384 + $0x70] sm:$0xf]
        %v465 = vld [vmem:[%s384 + $0x74] sm:$0xf]
        %v466 = vld [vmem:[%s384 + $0x78] sm:$0xf]
        %v467 = vld [vmem:[%s384 + $0x7c] sm:$0xf]
        %v472 = vunpack.c.l.b16 %v432
        %v473 = vunpack.c.h.b16 %v432
        %v474 = vunpack.c.l.b16 %v433
        %v475 = vunpack.c.h.b16 %v433
        %v476 = vunpack.c.l.b16 %v434
        %v477 = vunpack.c.h.b16 %v434
        %v478 = vunpack.c.l.b16 %v435
        %v479 = vunpack.c.h.b16 %v435
        %v480 = vpack.c.b16 %v474, %v472
        %v481 = vpack.c.b16 %v475, %v473
        %v482 = vpack.c.b16 %v478, %v476
        %v483 = vpack.c.b16 %v479, %v477
        %v520 = vunpack.c.l.b16 %v436
        %v521 = vunpack.c.l.b16 %v437
        %v522 = vunpack.c.l.b16 %v438
        %v523 = vunpack.c.l.b16 %v439
        %v524 = vunpack.c.l.b16 %v440
        %v525 = vunpack.c.l.b16 %v441
        %v526 = vunpack.c.l.b16 %v442
        %v527 = vunpack.c.l.b16 %v443
        %v528 = vunpack.c.l.b16 %v444
        %v529 = vunpack.c.l.b16 %v445
        %v530 = vunpack.c.l.b16 %v446
        %v531 = vunpack.c.l.b16 %v447
        %v532 = vunpack.c.l.b16 %v448
        %v533 = vunpack.c.l.b16 %v449
        %v534 = vunpack.c.l.b16 %v450
        %v535 = vunpack.c.l.b16 %v451
        %v536 = vunpack.c.l.b16 %v452
        %v537 = vunpack.c.l.b16 %v453
        %v538 = vunpack.c.l.b16 %v454
        %v539 = vunpack.c.l.b16 %v455
        %v540 = vunpack.c.l.b16 %v456
        %v541 = vunpack.c.l.b16 %v457
        %v542 = vunpack.c.l.b16 %v458
        %v543 = vunpack.c.l.b16 %v459
        %v544 = vunpack.c.l.b16 %v460
        %v545 = vunpack.c.l.b16 %v461
        %v546 = vunpack.c.l.b16 %v462
        %v547 = vunpack.c.l.b16 %v463
        %v548 = vunpack.c.l.b16 %v464
        %v549 = vunpack.c.l.b16 %v465
        %v550 = vunpack.c.l.b16 %v466
        %v551 = vunpack.c.l.b16 %v467
        %v552 = vpack.c.b16 %v521, %v520
        %v553 = vpack.c.b16 %v523, %v522
        %v554 = vpack.c.b16 %v525, %v524
        %v555 = vpack.c.b16 %v527, %v526
        %v556 = vpack.c.b16 %v529, %v528
        %v557 = vpack.c.b16 %v531, %v530
        %v558 = vpack.c.b16 %v533, %v532
        %v559 = vpack.c.b16 %v535, %v534
        %v560 = vpack.c.b16 %v537, %v536
        %v561 = vpack.c.b16 %v539, %v538
        %v562 = vpack.c.b16 %v541, %v540
        %v563 = vpack.c.b16 %v543, %v542
        %v564 = vpack.c.b16 %v545, %v544
        %v565 = vpack.c.b16 %v547, %v546
        %v566 = vpack.c.b16 %v549, %v548
        %v567 = vpack.c.b16 %v551, %v550
        %584 = vmatprep.subr.bf16.mxu0 0
        %585 = vmatpush1.bf16.msra.mxu0 %v552
        %586 = vmatprep.subr.bf16.mxu0 0
        %587 = vmatpush1.bf16.msra.mxu0 %v553
        %588 = vmatprep.subr.bf16.mxu0 0
        %589 = vmatpush1.bf16.msra.mxu0 %v554
        %590 = vmatprep.subr.bf16.mxu0 0
        %591 = vmatpush1.bf16.msra.mxu0 %v555
        %592 = vmatprep.subr.bf16.mxu0 0
        %593 = vmatpush1.bf16.msra.mxu0 %v556
        %594 = vmatprep.subr.bf16.mxu0 0
        %595 = vmatpush1.bf16.msra.mxu0 %v557
        %596 = vmatprep.subr.bf16.mxu0 0
        %597 = vmatpush1.bf16.msra.mxu0 %v558
        %598 = vmatprep.subr.bf16.mxu0 0
        %599 = vmatpush1.bf16.msra.mxu0 %v559
        %600 = vmatprep.subr.bf16.mxu0 0
        %601 = vmatpush1.bf16.msra.mxu0 %v560
        %602 = vmatprep.subr.bf16.mxu0 0
        %603 = vmatpush1.bf16.msra.mxu0 %v561
        %604 = vmatprep.subr.bf16.mxu0 0
        %605 = vmatpush1.bf16.msra.mxu0 %v562
        %606 = vmatprep.subr.bf16.mxu0 0
        %607 = vmatpush1.bf16.msra.mxu0 %v563
        %608 = vmatprep.subr.bf16.mxu0 0
        %609 = vmatpush1.bf16.msra.mxu0 %v564
        %610 = vmatprep.subr.bf16.mxu0 0
        %611 = vmatpush1.bf16.msra.mxu0 %v565
        %612 = vmatprep.subr.bf16.mxu0 0
        %613 = vmatpush1.bf16.msra.mxu0 %v566
        %614 = vmatprep.subr.bf16.mxu0 0
        %615 = vmatpush1.bf16.msra.mxu0 %v567
        %616 = vmatprep.mubr.bf16.mxu0 %v481
        %617 = vmatmul.mubr.bf16.gmra.mrb[0].mxu0 %v480
        %v618 = vpop.f32.mrb[0].mxu0
        %v619 = vadd.f32 0.0, %v618
        %v620 = vpop.f32.mrb[0].mxu0
        %v621 = vpop.f32.mrb[0].mxu0
        %v622 = vadd.f32 0.0, %v621
        %v623 = vpop.f32.mrb[0].mxu0
        %624 = vmatprep.mubr.bf16.mxu0 %v483
        %625 = vmatmul.mubr.bf16.gmra.mrb[0].mxu0 %v482
        %v626 = vpop.f32.mrb[0].mxu0
        %v627 = vadd.f32 0.0, %v626
        %v628 = vpop.f32.mrb[0].mxu0
        %v629 = vpop.f32.mrb[0].mxu0
        %v630 = vadd.f32 0.0, %v629
        %v631 = vpop.f32.mrb[0].mxu0
        %632 = vdwg.mxu0
        %v633 = vadd.f32 %v428, %v619
        %v634 = vadd.f32 %v429, %v622
        %v635 = vadd.f32 %v430, %v627
        %v636 = vadd.f32 %v431, %v630
        %637 = vst [vmem:[#allocation2] sm:$0xff] %v633
        %638 = vst [vmem:[#allocation2 + $0x8] sm:$0xff] %v634
        %639 = vst [vmem:[#allocation2 + $0x10] sm:$0xff] %v635
        %640 = vst [vmem:[#allocation2 + $0x18] sm:$0xff] %v636
        %p641 = scmp.eq.s32.totalorder %s24, 8
        // Predicated region
        $region82: #{inpaint_generator_forward.50} parent=68 // pred_check
          %p642 = pneg %p641
        $region83: #{inpaint_generator_forward.50} parent=68 // pred_check_branch
          %644 = sbr.rel (%p642) target = $region85
        $region84: #{inpaint_generator_forward.50} parent=68 // pred_region
          %v645 = vld [vmem:[#allocation2] sm:$0xff]
          %v646 = vld [vmem:[#allocation2 + $0x8] sm:$0xff]
          %v647 = vld [vmem:[#allocation2 + $0x10] sm:$0xff]
          %v648 = vld [vmem:[#allocation2 + $0x18] sm:$0xff]
          %v649 = vld [vmem:[%s417] sm:$0x1]
          %v651 = vlaneseq
          %v652 = vshrl.u32 %v651, 7
          %v653 = vsub.s32 0, %v652
          %v654 = vrot.slane %v649, %v653
          %v656 = vadd.f32 %v645, %v654
          %v657 = vadd.f32 %v646, %v654
          %v658 = vadd.f32 %v647, %v654
          %v659 = vadd.f32 %v648, %v654
          %v660 = vpack.c.bf16 %v657, %v656
          %v661 = vpack.c.bf16 %v659, %v658
          %v664 = vunpack.c.l.b16 %v660
          %v665 = vunpack.c.h.b16 %v660
          %v666 = vunpack.c.l.b16 %v661
          %v667 = vunpack.c.h.b16 %v661
          %v668 = vpack.c.b16 %v664, %v664
          %v669 = vpack.c.b16 %v665, %v665
          %v670 = vpack.c.b16 %v666, %v666
          %v671 = vpack.c.b16 %v667, %v667
          %676 = vst [vmem:[%s411] sm:$0xf] %v668
          %677 = vst [vmem:[%s411 + $0x4] sm:$0xf] %v669
          %678 = vst [vmem:[%s411 + $0x8] sm:$0xf] %v670
          %679 = vst [vmem:[%s411 + $0xc] sm:$0xf] %v671
        $region85: #{inpaint_generator_forward.50} parent=68 // pred_fallthru
          _
        %s680 = sand.u32 %s128, 1
        %s681 = sand.u32 %s128, 1
        %s682 = smul.addr %s681, 16
        %s683 = scalar_lea.vmem [#allocation6], %s682
        // Predicated region
        $region86: #{inpaint_generator_forward.50} parent=68 // pred_check
          %p684 = pneg %p138
        $region87: #{inpaint_generator_forward.50} parent=68 // pred_check_branch
          %686 = sbr.rel (%p684) target = $region89
        $region88: #{inpaint_generator_forward.50} parent=68 // pred_region
          %s687 = smul.u32 4, %s22
          %s688 = smul.addr %s687, 2
          %s689 = sadd.s32 %s23, %s688
          %s690 = smul.addr %s689, 4
          %s691 = scalar_lea.vmem %s3, %s690
          // Predicated region
          $region90: #{inpaint_generator_forward.50} parent=88 // pred_check
            _
          $region91: #{inpaint_generator_forward.50} parent=88 // pred_check_branch
            %693 = sbr.rel (0) target = $region93
          $region92: #{inpaint_generator_forward.50} parent=88 // pred_region
            // Predicated region
            $region94: #{inpaint_generator_forward.50} parent=92 // pred_check
              _
            $region95: #{inpaint_generator_forward.50} parent=92 // pred_check_branch
              %695 = sbr.rel target = $region97
            $region96: #{inpaint_generator_forward.50} parent=92 // pred_region
              // Predicated region
              $region109: #{inpaint_generator_forward.50} parent=96 // pred_check
                _
              $region110: #{inpaint_generator_forward.50} parent=96 // pred_check_branch
                %716 = sbr.rel (0) target = $region112
              $region111: #{inpaint_generator_forward.50} parent=96 // pred_region
                loop: start=0, step=1, limit=1
                $region113: #{inpaint_generator_forward.50} parent=111 // loop_pre_header
                  _
                $region114: #{inpaint_generator_forward.50} parent=111 // loop_header
                  %s718 = sphi 0, %s722
                  %p719 = scmp.ge.s32.totalorder %s718, 1
                  %s723 = sphi %s683, %s683
                  %s724 = sphi %s691, %s691
                $region115: #{inpaint_generator_forward.50} parent=111 // loop_header_branch
                  %721 = sbr.rel (%p719) target = $region119
                $region116: #{inpaint_generator_forward.50} parent=111 // loop_body
                  _
                $region117: #{inpaint_generator_forward.50} parent=111 // loop_footer
                  %s722 = sadd.s32 1, %s718
                $region118: #{inpaint_generator_forward.50} parent=111 // loop_footer_branch
                  %717 = sbr.rel target = $region114
                $region119: #{inpaint_generator_forward.50} parent=111 // loop_exit
                  _
                loop: start=0, step=1, limit=1
                $region120: #{inpaint_generator_forward.50} parent=111 // loop_pre_header
                  _
                $region121: #{inpaint_generator_forward.50} parent=111 // loop_header
                  %s727 = sphi 0, %s731
                  %p728 = scmp.ge.s32.totalorder %s727, 1
                  %s732 = sphi %s683, %s683
                  %s733 = sphi %s691, %s691
                $region122: #{inpaint_generator_forward.50} parent=111 // loop_header_branch
                  %730 = sbr.rel (%p728) target = $region126
                $region123: #{inpaint_generator_forward.50} parent=111 // loop_body
                  %v734 = vld [vmem:[%s732] sm:$0xf]
                  %735 = vst [vmem:[%s733] sm:$0xf] %v734
                  %v736 = vld [vmem:[%s732 + $0x4] sm:$0xf]
                  %737 = vst [vmem:[%s733 + $0x8] sm:$0xf] %v736
                  %v738 = vld [vmem:[%s732 + $0x8] sm:$0xf]
                  %739 = vst [vmem:[%s733 + $0x10] sm:$0xf] %v738
                  %v740 = vld [vmem:[%s732 + $0xc] sm:$0xf]
                  %741 = vst [vmem:[%s733 + $0x18] sm:$0xf] %v740
                $region124: #{inpaint_generator_forward.50} parent=111 // loop_footer
                  %s731 = sadd.s32 1, %s727
                $region125: #{inpaint_generator_forward.50} parent=111 // loop_footer_branch
                  %726 = sbr.rel target = $region121
                $region126: #{inpaint_generator_forward.50} parent=111 // loop_exit
                  _
              $region112: #{inpaint_generator_forward.50} parent=96 // pred_fallthru
                _
            $region97: #{inpaint_generator_forward.50} parent=92 // pred_fallthru
              _
            // Predicated region
            $region98: #{inpaint_generator_forward.50} parent=92 // pred_check
              _
            $region99: #{inpaint_generator_forward.50} parent=92 // pred_check_branch
              %697 = sbr.rel (0) target = $region101
            $region100: #{inpaint_generator_forward.50} parent=92 // pred_region
              loop: start=0, step=1, limit=1
              $region102: #{inpaint_generator_forward.50} parent=100 // loop_pre_header
                _
              $region103: #{inpaint_generator_forward.50} parent=100 // loop_header
                %s700 = sphi 0, %s704
                %p701 = scmp.ge.s32.totalorder %s700, 1
                %s705 = sphi %s683, %s683
                %s706 = sphi %s691, %s691
              $region104: #{inpaint_generator_forward.50} parent=100 // loop_header_branch
                %703 = sbr.rel (%p701) target = $region108
              $region105: #{inpaint_generator_forward.50} parent=100 // loop_body
                %v707 = vld [vmem:[%s705] sm:$0xf]
                %708 = vst [vmem:[%s706] sm:$0xf] %v707
                %v709 = vld [vmem:[%s705 + $0x4] sm:$0xf]
                %710 = vst [vmem:[%s706 + $0x8] sm:$0xf] %v709
                %v711 = vld [vmem:[%s705 + $0x8] sm:$0xf]
                %712 = vst [vmem:[%s706 + $0x10] sm:$0xf] %v711
                %v713 = vld [vmem:[%s705 + $0xc] sm:$0xf]
                %714 = vst [vmem:[%s706 + $0x18] sm:$0xf] %v713
              $region106: #{inpaint_generator_forward.50} parent=100 // loop_footer
                %s704 = sadd.s32 1, %s700
              $region107: #{inpaint_generator_forward.50} parent=100 // loop_footer_branch
                %699 = sbr.rel target = $region103
              $region108: #{inpaint_generator_forward.50} parent=100 // loop_exit
                _
            $region101: #{inpaint_generator_forward.50} parent=92 // pred_fallthru
              _
          $region93: #{inpaint_generator_forward.50} parent=88 // pred_fallthru
            _
          %742 = vnop
        $region89: #{inpaint_generator_forward.50} parent=68 // pred_fallthru
          _
      $region69: #{inpaint_generator_forward.50} parent=5 // pred_fallthru
        _
      %p743 = scmp.le.s32.totalorder 2, %s12
      // Predicated region
      $region127: #{inpaint_generator_forward.50} parent=5 // pred_check
        %p744 = pneg %p743
      $region128: #{inpaint_generator_forward.50} parent=5 // pred_check_branch
        %746 = sbr.rel (%p744) target = $region130
      $region129: #{inpaint_generator_forward.50} parent=5 // pred_region
        %s747 = ssub.s32 %s12, 2
        // Predicated region
        $region131: #{inpaint_generator_forward.50} parent=129 // pred_check
          %p748 = pneg %p144
        $region132: #{inpaint_generator_forward.50} parent=129 // pred_check_branch
          %750 = sbr.rel (%p748) target = $region134
        $region133: #{inpaint_generator_forward.50} parent=129 // pred_region
          %s751 = sand.u32 %s129, 1
          %s752 = sand.u32 %s129, 1
          %s753 = smul.addr %s752, 16
          %s754 = scalar_lea.vmem [#allocation6], %s753
        $region134: #{inpaint_generator_forward.50} parent=129 // pred_fallthru
          _
      $region130: #{inpaint_generator_forward.50} parent=5 // pred_fallthru
        _
    $region6: #{inpaint_generator_forward.50} parent=1 // loop_footer
      %s16 = sadd.s32 1, %s12
    $region7: #{inpaint_generator_forward.50} parent=1 // loop_footer_branch
      %11 = sbr.rel target = $region3
    $region8: #{inpaint_generator_forward.50} parent=1 // loop_exit
      _
    %755 = vsyncpa [#allocation4], 1
    %s756 = scalar_lea.sflag [#allocation4], 1
    %757 = vsyncpa %s756, 1

// kernel: inpaint_generator_forward.78
$region0: #{inpaint_generator_forward.78}
  #allocation0 [shape = 'u32[]', space=smem, size = 0x4, offset = 0x4, fixed_abs, tag = 'smem constant byte address 0x4 - core index']
  #allocation1 [shape = 'u32[144,128]{1,0:T(1,128)}', space=vmem, size = 0x12000, scoped, tag = 'internal scratch']
  #allocation2 [shape = 'f32[32,128]{1,0:T(8,128)}', space=vmem, size = 0x4000, scoped, tag = 'scratch operand']
  %s0 = inlined_call_operand.vmem [shape: bf16[32,1024], index: 0, kind: input, shape index: {}]
  %s1 = inlined_call_operand.vmem [shape: bf16[1024,128], index: 1, kind: input, shape index: {}]
  %s2 = inlined_call_operand.vmem [shape: f32[1,128], index: 2, kind: input, shape index: {}]
  %s3 = inlined_call_operand.vmem [shape: bf16[32,128], index: 3, kind: output, shape index: {}]
  %s4 = sld [smem:[#allocation0]]
  $region91: #{inpaint_generator_forward.78} parent=0
    _
  %s6 = ssub.s32 1, %s4
  %s7 = scalar_select 0, %s6, %s4
  $region1: #{inpaint_generator_forward.78} parent=0
    #allocation3 [shape = 'u8[32768]{0}', space=vmem, size = 0x8000, scoped, tag = 'input window, operand 0']
    loop: start=0, step=1, limit=6
    $region2: #{inpaint_generator_forward.78} parent=1 // loop_pre_header
      _
    $region3: #{inpaint_generator_forward.78} parent=1 // loop_header
      %s9 = sphi 0, %s13
      %p10 = scmp.ge.s32.totalorder %s9, 6
      %s16 = sphi 0, %s35
      %s17 = sphi 0, %s31
      %s18 = sphi 0, %s27
      %s19 = sphi 0, %s16
      %s20 = sphi 0, %s17
      %s21 = sphi 0, %s18
      %s22 = sphi 0, %s19
      %s23 = sphi 0, %s20
      %s24 = sphi 0, %s21
      %s40 = sphi 0, %s42
      %s43 = sphi 0, %s40
      %s44 = sphi 0, %s43
      %s60 = sphi 0, %s44
      %s68 = sphi 0, %s70
      %s71 = sphi 0, %s68
      %s72 = sphi 0, %s71
      %s88 = sphi 0, %s72
      %s94 = sphi 0, %s96
      %s97 = sphi 0, %s94
      %s98 = sphi 0, %s97
      %s114 = sphi 0, %s98
      %s122 = sphi 0, %s124
      %s125 = sphi 0, %s122
      %s126 = sphi 0, %s125
      %s142 = sphi 0, %s126
    $region4: #{inpaint_generator_forward.78} parent=1 // loop_header_branch
      %12 = sbr.rel (%p10) target = $region8
    $region5: #{inpaint_generator_forward.78} parent=1 // loop_body
      %s14 = ssub.s32 %s9, 1
      %s15 = ssub.s32 %s9, 2
      %s25 = sadd.s32 1, %s18
      %p26 = scmp.ge.s32.totalorder %s25, 4
      %s27 = scalar_select %p26, 0, %s25
      %s28 = sadd.s32 1, %s17
      %s29 = scalar_select %p26, %s28, %s17
      %p30 = scmp.ge.s32.totalorder %s29, 1
      %s31 = scalar_select %p30, 0, %s29
      %s32 = sadd.s32 1, %s16
      %s33 = scalar_select %p30, %s32, %s16
      %p34 = scmp.ge.s32.totalorder %s33, 1
      %s35 = scalar_select %p34, 0, %s33
      %s36 = ssub.s32 %s16, %s35
      %s37 = ssub.s32 %s18, %s27
      %s38 = sor.u32 %s36, %s37
      %p39 = scmp.eq.s32.totalorder %s38, 0
      %s41 = sadd.s32 %s40, 1
      %s42 = scalar_select %p39, %s40, %s41
      %p45 = pneg %p39
      %p46 = scmp.eq.s32.totalorder %s9, 3
      %p47 = por %p45, %p46
      %p48 = scmp.ne.s32.totalorder %s40, %s43
      %p49 = scmp.eq.s32.totalorder %s9, 0
      %p50 = por %p48, %p49
      %p51 = scmp.ne.s32.totalorder %s40, %s43
      %p52 = scmp.eq.s32.totalorder %s14, 3
      %p53 = por %p51, %p52
      %p54 = scmp.ne.s32.totalorder %s43, %s44
      %p55 = scmp.eq.s32.totalorder %s14, 0
      %p56 = por %p54, %p55
      %p57 = scmp.ne.s32.totalorder %s43, %s44
      %p58 = scmp.eq.s32.totalorder %s15, 3
      %p59 = por %p57, %p58
      %p61 = scmp.ne.s32.totalorder %s44, %s60
      %p62 = scmp.eq.s32.totalorder %s15, 0
      %p63 = por %p61, %p62
      %s64 = ssub.s32 %s18, %s27
      %s65 = ssub.s32 %s17, %s31
      %s66 = sor.u32 %s64, %s65
      %p67 = scmp.eq.s32.totalorder %s66, 0
      %s69 = sadd.s32 %s68, 1
      %s70 = scalar_select %p67, %s68, %s69
      %p73 = pneg %p67
      %p74 = scmp.eq.s32.totalorder %s9, 3
      %p75 = por %p73, %p74
      %p76 = scmp.ne.s32.totalorder %s68, %s71
      %p77 = scmp.eq.s32.totalorder %s9, 0
      %p78 = por %p76, %p77
      %p79 = scmp.ne.s32.totalorder %s68, %s71
      %p80 = scmp.eq.s32.totalorder %s14, 3
      %p81 = por %p79, %p80
      %p82 = scmp.ne.s32.totalorder %s71, %s72
      %p83 = scmp.eq.s32.totalorder %s14, 0
      %p84 = por %p82, %p83
      %p85 = scmp.ne.s32.totalorder %s71, %s72
      %p86 = scmp.eq.s32.totalorder %s15, 3
      %p87 = por %p85, %p86
      %p89 = scmp.ne.s32.totalorder %s72, %s88
      %p90 = scmp.eq.s32.totalorder %s15, 0
      %p91 = por %p89, %p90
      %s92 = ssub.s32 %s17, %s31
      %p93 = scmp.eq.s32.totalorder %s92, 0
      %s95 = sadd.s32 %s94, 1
      %s96 = scalar_select %p93, %s94, %s95
      %p99 = pneg %p93
      %p100 = scmp.eq.s32.totalorder %s9, 3
      %p101 = por %p99, %p100
      %p102 = scmp.ne.s32.totalorder %s94, %s97
      %p103 = scmp.eq.s32.totalorder %s9, 0
      %p104 = por %p102, %p103
      %p105 = scmp.ne.s32.totalorder %s94, %s97
      %p106 = scmp.eq.s32.totalorder %s14, 3
      %p107 = por %p105, %p106
      %p108 = scmp.ne.s32.totalorder %s97, %s98
      %p109 = scmp.eq.s32.totalorder %s14, 0
      %p110 = por %p108, %p109
      %p111 = scmp.ne.s32.totalorder %s97, %s98
      %p112 = scmp.eq.s32.totalorder %s15, 3
      %p113 = por %p111, %p112
      %p115 = scmp.ne.s32.totalorder %s98, %s114
      %p116 = scmp.eq.s32.totalorder %s15, 0
      %p117 = por %p115, %p116
      %s118 = ssub.s32 %s16, %s35
      %s119 = ssub.s32 %s17, %s31
      %s120 = sor.u32 %s118, %s119
      %p121 = scmp.eq.s32.totalorder %s120, 0
      %s123 = sadd.s32 %s122, 1
      %s124 = scalar_select %p121, %s122, %s123
      %p127 = pneg %p121
      %p128 = scmp.eq.s32.totalorder %s9, 3
      %p129 = por %p127, %p128
      %p130 = scmp.ne.s32.totalorder %s122, %s125
      %p131 = scmp.eq.s32.totalorder %s9, 0
      %p132 = por %p130, %p131
      %p133 = scmp.ne.s32.totalorder %s122, %s125
      %p134 = scmp.eq.s32.totalorder %s14, 3
      %p135 = por %p133, %p134
      %p136 = scmp.ne.s32.totalorder %s125, %s126
      %p137 = scmp.eq.s32.totalorder %s14, 0
      %p138 = por %p136, %p137
      %p139 = scmp.ne.s32.totalorder %s125, %s126
      %p140 = scmp.eq.s32.totalorder %s15, 3
      %p141 = por %p139, %p140
      %p143 = scmp.ne.s32.totalorder %s126, %s142
      %p144 = scmp.eq.s32.totalorder %s15, 0
      %p145 = por %p143, %p144
      %p146 = scmp.le.s32.totalorder 1, %s9
      %p147 = scmp.lt.s32.totalorder %s9, 5
      %p148 = pnand %p146, %p147
      %p149 = pneg %p148
      // Predicated region
      $region9: #{inpaint_generator_forward.78} parent=5 // pred_check
        _
      $region10: #{inpaint_generator_forward.78} parent=5 // pred_check_branch
        %151 = sbr.rel (%p148) target = $region12
      $region11: #{inpaint_generator_forward.78} parent=5 // pred_region
        %s152 = ssub.s32 %s9, 1
        // Predicated region
        $region13: #{inpaint_generator_forward.78} parent=11 // pred_check
          %p153 = pneg %p110
        $region14: #{inpaint_generator_forward.78} parent=11 // pred_check_branch
          %155 = sbr.rel (%p153) target = $region16
        $region15: #{inpaint_generator_forward.78} parent=11 // pred_region
          %p156 = scmp.lt.s32.totalorder %s20, 0
          %s157 = scalar_select %p156, %s20, 0
          %s158 = scalar_lea.vmem %s2, %s157
        $region16: #{inpaint_generator_forward.78} parent=11 // pred_fallthru
          _
      $region12: #{inpaint_generator_forward.78} parent=5 // pred_fallthru
        _
      %p159 = scmp.lt.s32.totalorder %s9, 4
      // Predicated region
      $region17: #{inpaint_generator_forward.78} parent=5 // pred_check
        %p160 = pneg %p159
      $region18: #{inpaint_generator_forward.78} parent=5 // pred_check_branch
        %162 = sbr.rel (%p160) target = $region20
      $region19: #{inpaint_generator_forward.78} parent=5 // pred_region
        // Predicated region
        $region21: #{inpaint_generator_forward.78} parent=19 // pred_check
          %p163 = pneg %p50
        $region22: #{inpaint_generator_forward.78} parent=19 // pred_check_branch
          %165 = sbr.rel (%p163) target = $region24
        $region23: #{inpaint_generator_forward.78} parent=19 // pred_region
          %s166 = sand.u32 %s40, 1
          %s167 = sand.u32 %s40, 1
          %s168 = smul.addr %s167, 32
          %s169 = scalar_lea.vmem [#allocation3], %s168
          %s170 = smul.u32 4, %s16
          %s171 = smul.u32 2, %s18
          %s172 = smul.addr %s170, 8
          %s173 = sadd.s32 %s171, %s172
          %s174 = smul.addr %s173, 4
          %s175 = scalar_lea.vmem %s0, %s174
          // Predicated region
          $region25: #{inpaint_generator_forward.78} parent=23 // pred_check
            _
          $region26: #{inpaint_generator_forward.78} parent=23 // pred_check_branch
            %177 = sbr.rel (0) target = $region28
          $region27: #{inpaint_generator_forward.78} parent=23 // pred_region
            // Predicated region
            $region29: #{inpaint_generator_forward.78} parent=27 // pred_check
              _
            $region30: #{inpaint_generator_forward.78} parent=27 // pred_check_branch
              %179 = sbr.rel (0) target = $region32
            $region31: #{inpaint_generator_forward.78} parent=27 // pred_region
              // Predicated region
              $region44: #{inpaint_generator_forward.78} parent=31 // pred_check
                _
              $region45: #{inpaint_generator_forward.78} parent=31 // pred_check_branch
                %200 = sbr.rel (0) target = $region47
              $region46: #{inpaint_generator_forward.78} parent=31 // pred_region
                loop: start=0, step=1, limit=1
                $region48: #{inpaint_generator_forward.78} parent=46 // loop_pre_header
                  _
                $region49: #{inpaint_generator_forward.78} parent=46 // loop_header
                  %s202 = sphi 0, %s206
                  %p203 = scmp.ge.s32.totalorder %s202, 1
                  %s207 = sphi %s175, %s175
                  %s208 = sphi %s169, %s169
                $region50: #{inpaint_generator_forward.78} parent=46 // loop_header_branch
                  %205 = sbr.rel (%p203) target = $region54
                $region51: #{inpaint_generator_forward.78} parent=46 // loop_body
                  %v209 = vld [vmem:[%s207] sm:$0xff]
                  %210 = vst [vmem:[%s208] sm:$0xff] %v209
                  %v211 = vld [vmem:[%s207 + $0x20] sm:$0xff]
                  %212 = vst [vmem:[%s208 + $0x8] sm:$0xff] %v211
                  %v213 = vld [vmem:[%s207 + $0x40] sm:$0xff]
                  %214 = vst [vmem:[%s208 + $0x10] sm:$0xff] %v213
                  %v215 = vld [vmem:[%s207 + $0x60] sm:$0xff]
                  %216 = vst [vmem:[%s208 + $0x18] sm:$0xff] %v215
                $region52: #{inpaint_generator_forward.78} parent=46 // loop_footer
                  %s206 = sadd.s32 1, %s202
                $region53: #{inpaint_generator_forward.78} parent=46 // loop_footer_branch
                  %201 = sbr.rel target = $region49
                $region54: #{inpaint_generator_forward.78} parent=46 // loop_exit
                  _
              $region47: #{inpaint_generator_forward.78} parent=31 // pred_fallthru
                _
              // Predicated region
              $region55: #{inpaint_generator_forward.78} parent=31 // pred_check
                _
              $region56: #{inpaint_generator_forward.78} parent=31 // pred_check_branch
                %218 = sbr.rel target = $region58
              $region57: #{inpaint_generator_forward.78} parent=31 // pred_region
                _
              $region58: #{inpaint_generator_forward.78} parent=31 // pred_fallthru
                _
            $region32: #{inpaint_generator_forward.78} parent=27 // pred_fallthru
              _
            // Predicated region
            $region33: #{inpaint_generator_forward.78} parent=27 // pred_check
              _
            $region34: #{inpaint_generator_forward.78} parent=27 // pred_check_branch
              %181 = sbr.rel target = $region36
            $region35: #{inpaint_generator_forward.78} parent=27 // pred_region
              loop: start=0, step=1, limit=1
              $region37: #{inpaint_generator_forward.78} parent=35 // loop_pre_header
                _
              $region38: #{inpaint_generator_forward.78} parent=35 // loop_header
                %s184 = sphi 0, %s188
                %p185 = scmp.ge.s32.totalorder %s184, 1
                %s189 = sphi %s175, %s175
                %s190 = sphi %s169, %s169
              $region39: #{inpaint_generator_forward.78} parent=35 // loop_header_branch
                %187 = sbr.rel (%p185) target = $region43
              $region40: #{inpaint_generator_forward.78} parent=35 // loop_body
                %v191 = vld [vmem:[%s189] sm:$0xff]
                %192 = vst [vmem:[%s190] sm:$0xff] %v191
                %v193 = vld [vmem:[%s189 + $0x20] sm:$0xff]
                %194 = vst [vmem:[%s190 + $0x8] sm:$0xff] %v193
                %v195 = vld [vmem:[%s189 + $0x40] sm:$0xff]
                %196 = vst [vmem:[%s190 + $0x10] sm:$0xff] %v195
                %v197 = vld [vmem:[%s189 + $0x60] sm:$0xff]
                %198 = vst [vmem:[%s190 + $0x18] sm:$0xff] %v197
              $region41: #{inpaint_generator_forward.78} parent=35 // loop_footer
                %s188 = sadd.s32 1, %s184
              $region42: #{inpaint_generator_forward.78} parent=35 // loop_footer_branch
                %183 = sbr.rel target = $region38
              $region43: #{inpaint_generator_forward.78} parent=35 // loop_exit
                _
            $region36: #{inpaint_generator_forward.78} parent=27 // pred_fallthru
              _
          $region28: #{inpaint_generator_forward.78} parent=23 // pred_fallthru
            _
          %219 = vnop
        $region24: #{inpaint_generator_forward.78} parent=19 // pred_fallthru
          _
        // Predicated region
        $region59: #{inpaint_generator_forward.78} parent=19 // pred_check
          %p220 = pneg %p78
        $region60: #{inpaint_generator_forward.78} parent=19 // pred_check_branch
          %222 = sbr.rel (%p220) target = $region62
        $region61: #{inpaint_generator_forward.78} parent=19 // pred_region
          %s223 = smul.u32 32, %s18
          %p224 = scmp.lt.s32.totalorder %s223, 127
          %s225 = scalar_select %p224, %s223, 127
          %p226 = scmp.lt.s32.totalorder %s17, 0
          %s227 = scalar_select %p226, %s17, 0
          %s228 = sadd.s32 %s227, %s225
          %s229 = smul.addr %s228, 4
          %s230 = scalar_lea.vmem %s1, %s229
          %s231 = smul.u32 32, %s18
        $region62: #{inpaint_generator_forward.78} parent=19 // pred_fallthru
          _
      $region20: #{inpaint_generator_forward.78} parent=5 // pred_fallthru
        _
      %p232 = scmp.le.s32.totalorder 1, %s9
      %p233 = scmp.lt.s32.totalorder %s9, 5
      %p234 = pnand %p232, %p233
      %p235 = pneg %p234
      // Predicated region
      $region63: #{inpaint_generator_forward.78} parent=5 // pred_check
        _
      $region64: #{inpaint_generator_forward.78} parent=5 // pred_check_branch
        %237 = sbr.rel (%p234) target = $region66
      $region65: #{inpaint_generator_forward.78} parent=5 // pred_region
        %s238 = ssub.s32 %s9, 1
        %s239 = sand.u32 %s43, 1
        %s240 = sand.u32 %s43, 1
        %s241 = smul.addr %s240, 32
        %s242 = scalar_lea.vmem [#allocation3], %s241
        // Predicated region
        $region67: #{inpaint_generator_forward.78} parent=65 // pred_check
          %p243 = pneg %p56
        $region68: #{inpaint_generator_forward.78} parent=65 // pred_check_branch
          %245 = sbr.rel (%p243) target = $region70
        $region69: #{inpaint_generator_forward.78} parent=65 // pred_region
          _
        $region70: #{inpaint_generator_forward.78} parent=65 // pred_fallthru
          _
        %s246 = sand.u32 %s43, 1
        %s247 = sand.u32 %s43, 1
        %s248 = smul.addr %s247, 32
        %s249 = scalar_lea.vmem [#allocation3], %s248
        %p250 = pneg %p56
        %p251 = pneg %p53
        %s252 = smul.u32 32, %s21
        %p253 = scmp.lt.s32.totalorder %s252, 127
        %s254 = scalar_select %p253, %s252, 127
        %p255 = scmp.lt.s32.totalorder %s20, 0
        %s256 = scalar_select %p255, %s20, 0
        %s257 = sadd.s32 %s256, %s254
        %s258 = smul.addr %s257, 4
        %s259 = scalar_lea.vmem %s1, %s258
        %p260 = pneg %p84
        %p261 = pneg %p81
        %p262 = scmp.lt.s32.totalorder %s20, 0
        %s263 = scalar_select %p262, %s20, 0
        %s264 = scalar_lea.vmem %s2, %s263
        %p265 = pneg %p110
        %p266 = pneg %p107
        %p267 = pneg %p138
        %p268 = pneg %p135
        %s269 = smul.u32 4, %s19
        %p270 = scmp.lt.s32.totalorder %s269, 3
        %s271 = scalar_select %p270, %s269, 3
        %p272 = scmp.lt.s32.totalorder %s20, 0
        %s273 = scalar_select %p272, %s20, 0
        %s274 = sadd.s32 %s273, %s271
        %s275 = smul.addr %s274, 4
        %s276 = scalar_lea.vmem %s3, %s275
        %s277 = smul.u32 4, %s19
        %s278 = smul.u32 2, %s21
        %s279 = smul.u32 32, %s21
        %p280 = scmp.lt.s32.totalorder %s279, 127
        %s281 = scalar_select %p280, %s279, 127
        %p282 = scmp.lt.s32.totalorder %s20, 0
        %s283 = scalar_select %p282, %s20, 0
        %s284 = sadd.s32 %s283, %s281
        %s285 = smul.addr %s284, 4
        %s286 = scalar_lea.vmem %s1, %s285
        %s287 = smul.u32 32, %s21
        %p288 = scmp.lt.s32.totalorder %s20, 0
        %s289 = scalar_select %p288, %s20, 0
        %s290 = scalar_lea.vmem %s2, %s289
        %s291 = smul.u32 4, %s19
        %p292 = scmp.lt.s32.totalorder %s291, 3
        %s293 = scalar_select %p292, %s291, 3
        %p294 = scmp.lt.s32.totalorder %s20, 0
        %s295 = scalar_select %p294, %s20, 0
        %s296 = sadd.s32 %s295, %s293
        %s297 = smul.addr %s296, 4
        %s298 = scalar_lea.vmem %s3, %s297
        %s299 = smul.u32 4, %s19
        %p301 = scmp.eq.s32.totalorder %s21, 0
        // Predicated region
        $region71: #{inpaint_generator_forward.78} parent=65 // pred_check
          %p302 = pneg %p301
        $region72: #{inpaint_generator_forward.78} parent=65 // pred_check_branch
          %304 = sbr.rel (%p302) target = $region74
        $region73: #{inpaint_generator_forward.78} parent=65 // pred_region
          %305 = vst [vmem:[#allocation2] sm:$0xff] 0.0
          %306 = vst [vmem:[#allocation2 + $0x8] sm:$0xff] 0.0
          %307 = vst [vmem:[#allocation2 + $0x10] sm:$0xff] 0.0
          %308 = vst [vmem:[#allocation2 + $0x18] sm:$0xff] 0.0
        $region74: #{inpaint_generator_forward.78} parent=65 // pred_fallthru
          _
        %v309 = vld [vmem:[#allocation2] sm:$0xff]
        %v310 = vld [vmem:[#allocation2 + $0x8] sm:$0xff]
        %v311 = vld [vmem:[#allocation2 + $0x10] sm:$0xff]
        %v312 = vld [vmem:[#allocation2 + $0x18] sm:$0xff]
        %v313 = vld [vmem:[%s242] sm:$0xff]
        %v314 = vld [vmem:[%s242 + $0x8] sm:$0xff]
        %v315 = vld [vmem:[%s242 + $0x10] sm:$0xff]
        %v316 = vld [vmem:[%s242 + $0x18] sm:$0xff]
        %v317 = vld [vmem:[%s286] sm:$0xf]
        %v318 = vld [vmem:[%s286 + $0x4] sm:$0xf]
        %v319 = vld [vmem:[%s286 + $0x8] sm:$0xf]
        %v320 = vld [vmem:[%s286 + $0xc] sm:$0xf]
        %v321 = vld [vmem:[%s286 + $0x10] sm:$0xf]
        %v322 = vld [vmem:[%s286 + $0x14] sm:$0xf]
        %v323 = vld [vmem:[%s286 + $0x18] sm:$0xf]
        %v324 = vld [vmem:[%s286 + $0x1c] sm:$0xf]
        %v325 = vld [vmem:[%s286 + $0x20] sm:$0xf]
        %v326 = vld [vmem:[%s286 + $0x24] sm:$0xf]
        %v327 = vld [vmem:[%s286 + $0x28] sm:$0xf]
        %v328 = vld [vmem:[%s286 + $0x2c] sm:$0xf]
        %v329 = vld [vmem:[%s286 + $0x30] sm:$0xf]
        %v330 = vld [vmem:[%s286 + $0x34] sm:$0xf]
        %v331 = vld [vmem:[%s286 + $0x38] sm:$0xf]
        %v332 = vld [vmem:[%s286 + $0x3c] sm:$0xf]
        %v333 = vld [vmem:[%s286 + $0x40] sm:$0xf]
        %v334 = vld [vmem:[%s286 + $0x44] sm:$0xf]
        %v335 = vld [vmem:[%s286 + $0x48] sm:$0xf]
        %v336 = vld [vmem:[%s286 + $0x4c] sm:$0xf]
        %v337 = vld [vmem:[%s286 + $0x50] sm:$0xf]
        %v338 = vld [vmem:[%s286 + $0x54] sm:$0xf]
        %v339 = vld [vmem:[%s286 + $0x58] sm:$0xf]
        %v340 = vld [vmem:[%s286 + $0x5c] sm:$0xf]
        %v341 = vld [vmem:[%s286 + $0x60] sm:$0xf]
        %v342 = vld [vmem:[%s286 + $0x64] sm:$0xf]
        %v343 = vld [vmem:[%s286 + $0x68] sm:$0xf]
        %v344 = vld [vmem:[%s286 + $0x6c] sm:$0xf]
        %v345 = vld [vmem:[%s286 + $0x70] sm:$0xf]
        %v346 = vld [vmem:[%s286 + $0x74] sm:$0xf]
        %v347 = vld [vmem:[%s286 + $0x78] sm:$0xf]
        %v348 = vld [vmem:[%s286 + $0x7c] sm:$0xf]
        %v353 = vunpack.c.l.b16 %v313
        %v354 = vunpack.c.h.b16 %v313
        %v355 = vunpack.c.l.b16 %v314
        %v356 = vunpack.c.h.b16 %v314
        %v357 = vunpack.c.l.b16 %v315
        %v358 = vunpack.c.h.b16 %v315
        %v359 = vunpack.c.l.b16 %v316
        %v360 = vunpack.c.h.b16 %v316
        %v361 = vpack.c.b16 %v355, %v353
        %v362 = vpack.c.b16 %v356, %v354
        %v363 = vpack.c.b16 %v359, %v357
        %v364 = vpack.c.b16 %v360, %v358
        %v401 = vunpack.c.l.b16 %v317
        %v402 = vunpack.c.l.b16 %v318
        %v403 = vunpack.c.l.b16 %v319
        %v404 = vunpack.c.l.b16 %v320
        %v405 = vunpack.c.l.b16 %v321
        %v406 = vunpack.c.l.b16 %v322
        %v407 = vunpack.c.l.b16 %v323
        %v408 = vunpack.c.l.b16 %v324
        %v409 = vunpack.c.l.b16 %v325
        %v410 = vunpack.c.l.b16 %v326
        %v411 = vunpack.c.l.b16 %v327
        %v412 = vunpack.c.l.b16 %v328
        %v413 = vunpack.c.l.b16 %v329
        %v414 = vunpack.c.l.b16 %v330
        %v415 = vunpack.c.l.b16 %v331
        %v416 = vunpack.c.l.b16 %v332
        %v417 = vunpack.c.l.b16 %v333
        %v418 = vunpack.c.l.b16 %v334
        %v419 = vunpack.c.l.b16 %v335
        %v420 = vunpack.c.l.b16 %v336
        %v421 = vunpack.c.l.b16 %v337
        %v422 = vunpack.c.l.b16 %v338
        %v423 = vunpack.c.l.b16 %v339
        %v424 = vunpack.c.l.b16 %v340
        %v425 = vunpack.c.l.b16 %v341
        %v426 = vunpack.c.l.b16 %v342
        %v427 = vunpack.c.l.b16 %v343
        %v428 = vunpack.c.l.b16 %v344
        %v429 = vunpack.c.l.b16 %v345
        %v430 = vunpack.c.l.b16 %v346
        %v431 = vunpack.c.l.b16 %v347
        %v432 = vunpack.c.l.b16 %v348
        %v433 = vpack.c.b16 %v402, %v401
        %v434 = vpack.c.b16 %v404, %v403
        %v435 = vpack.c.b16 %v406, %v405
        %v436 = vpack.c.b16 %v408, %v407
        %v437 = vpack.c.b16 %v410, %v409
        %v438 = vpack.c.b16 %v412, %v411
        %v439 = vpack.c.b16 %v414, %v413
        %v440 = vpack.c.b16 %v416, %v415
        %v441 = vpack.c.b16 %v418, %v417
        %v442 = vpack.c.b16 %v420, %v419
        %v443 = vpack.c.b16 %v422, %v421
        %v444 = vpack.c.b16 %v424, %v423
        %v445 = vpack.c.b16 %v426, %v425
        %v446 = vpack.c.b16 %v428, %v427
        %v447 = vpack.c.b16 %v430, %v429
        %v448 = vpack.c.b16 %v432, %v431
        %465 = vmatprep.subr.bf16.mxu0 0
        %466 = vmatpush1.bf16.msra.mxu0 %v433
        %467 = vmatprep.subr.bf16.mxu0 0
        %468 = vmatpush1.bf16.msra.mxu0 %v434
        %469 = vmatprep.subr.bf16.mxu0 0
        %470 = vmatpush1.bf16.msra.mxu0 %v435
        %471 = vmatprep.subr.bf16.mxu0 0
        %472 = vmatpush1.bf16.msra.mxu0 %v436
        %473 = vmatprep.subr.bf16.mxu0 0
        %474 = vmatpush1.bf16.msra.mxu0 %v437
        %475 = vmatprep.subr.bf16.mxu0 0
        %476 = vmatpush1.bf16.msra.mxu0 %v438
        %477 = vmatprep.subr.bf16.mxu0 0
        %478 = vmatpush1.bf16.msra.mxu0 %v439
        %479 = vmatprep.subr.bf16.mxu0 0
        %480 = vmatpush1.bf16.msra.mxu0 %v440
        %481 = vmatprep.subr.bf16.mxu0 0
        %482 = vmatpush1.bf16.msra.mxu0 %v441
        %483 = vmatprep.subr.bf16.mxu0 0
        %484 = vmatpush1.bf16.msra.mxu0 %v442
        %485 = vmatprep.subr.bf16.mxu0 0
        %486 = vmatpush1.bf16.msra.mxu0 %v443
        %487 = vmatprep.subr.bf16.mxu0 0
        %488 = vmatpush1.bf16.msra.mxu0 %v444
        %489 = vmatprep.subr.bf16.mxu0 0
        %490 = vmatpush1.bf16.msra.mxu0 %v445
        %491 = vmatprep.subr.bf16.mxu0 0
        %492 = vmatpush1.bf16.msra.mxu0 %v446
        %493 = vmatprep.subr.bf16.mxu0 0
        %494 = vmatpush1.bf16.msra.mxu0 %v447
        %495 = vmatprep.subr.bf16.mxu0 0
        %496 = vmatpush1.bf16.msra.mxu0 %v448
        %497 = vmatprep.mubr.bf16.mxu0 %v362
        %498 = vmatmul.mubr.bf16.gmra.mrb[0].mxu0 %v361
        %v499 = vpop.f32.mrb[0].mxu0
        %v500 = vadd.f32 0.0, %v499
        %v501 = vpop.f32.mrb[0].mxu0
        %v502 = vpop.f32.mrb[0].mxu0
        %v503 = vadd.f32 0.0, %v502
        %v504 = vpop.f32.mrb[0].mxu0
        %505 = vmatprep.mubr.bf16.mxu0 %v364
        %506 = vmatmul.mubr.bf16.gmra.mrb[0].mxu0 %v363
        %v507 = vpop.f32.mrb[0].mxu0
        %v508 = vadd.f32 0.0, %v507
        %v509 = vpop.f32.mrb[0].mxu0
        %v510 = vpop.f32.mrb[0].mxu0
        %v511 = vadd.f32 0.0, %v510
        %v512 = vpop.f32.mrb[0].mxu0
        %513 = vdwg.mxu0
        %v514 = vadd.f32 %v309, %v500
        %v515 = vadd.f32 %v310, %v503
        %v516 = vadd.f32 %v311, %v508
        %v517 = vadd.f32 %v312, %v511
        %518 = vst [vmem:[#allocation2] sm:$0xff] %v514
        %519 = vst [vmem:[#allocation2 + $0x8] sm:$0xff] %v515
        %520 = vst [vmem:[#allocation2 + $0x10] sm:$0xff] %v516
        %521 = vst [vmem:[#allocation2 + $0x18] sm:$0xff] %v517
        %p522 = scmp.eq.s32.totalorder %s21, 3
        // Predicated region
        $region75: #{inpaint_generator_forward.78} parent=65 // pred_check
          %p523 = pneg %p522
        $region76: #{inpaint_generator_forward.78} parent=65 // pred_check_branch
          %525 = sbr.rel (%p523) target = $region78
        $region77: #{inpaint_generator_forward.78} parent=65 // pred_region
          %v526 = vld [vmem:[#allocation2] sm:$0xff]
          %v527 = vld [vmem:[#allocation2 + $0x8] sm:$0xff]
          %v528 = vld [vmem:[#allocation2 + $0x10] sm:$0xff]
          %v529 = vld [vmem:[#allocation2 + $0x18] sm:$0xff]
          %v530 = vld [vmem:[%s290] sm:$0x1]
          %v532 = vlaneseq
          %v533 = vshrl.u32 %v532, 7
          %v534 = vsub.s32 0, %v533
          %v535 = vrot.slane %v530, %v534
          %v537 = vadd.f32 %v526, %v535
          %v538 = vadd.f32 %v527, %v535
          %v539 = vadd.f32 %v528, %v535
          %v540 = vadd.f32 %v529, %v535
          %v541 = vmax.f32 %v537, 0.0
          %v542 = vmax.f32 %v538, 0.0
          %v543 = vmax.f32 %v539, 0.0
          %v544 = vmax.f32 %v540, 0.0
          %v545 = vpack.c.bf16 %v542, %v541
          %v546 = vpack.c.bf16 %v544, %v543
          %v549 = vunpack.c.l.b16 %v545
          %v550 = vunpack.c.h.b16 %v545
          %v551 = vunpack.c.l.b16 %v546
          %v552 = vunpack.c.h.b16 %v546
          %v553 = vpack.c.b16 %v549, %v549
          %v554 = vpack.c.b16 %v550, %v550
          %v555 = vpack.c.b16 %v551, %v551
          %v556 = vpack.c.b16 %v552, %v552
          %561 = vst [vmem:[%s298] sm:$0xf] %v553
          %562 = vst [vmem:[%s298 + $0x4] sm:$0xf] %v554
          %563 = vst [vmem:[%s298 + $0x8] sm:$0xf] %v555
          %564 = vst [vmem:[%s298 + $0xc] sm:$0xf] %v556
        $region78: #{inpaint_generator_forward.78} parent=65 // pred_fallthru
          _
        %s565 = smul.u32 4, %s19
        %p566 = scmp.lt.s32.totalorder %s565, 3
        %s567 = scalar_select %p566, %s565, 3
        %p568 = scmp.lt.s32.totalorder %s20, 0
        %s569 = scalar_select %p568, %s20, 0
        %s570 = sadd.s32 %s569, %s567
        %s571 = smul.addr %s570, 4
        %s572 = scalar_lea.vmem %s3, %s571
        // Predicated region
        $region79: #{inpaint_generator_forward.78} parent=65 // pred_check
          %p573 = pneg %p135
        $region80: #{inpaint_generator_forward.78} parent=65 // pred_check_branch
          %575 = sbr.rel (%p573) target = $region82
        $region81: #{inpaint_generator_forward.78} parent=65 // pred_region
          %s576 = smul.u32 4, %s19
        $region82: #{inpaint_generator_forward.78} parent=65 // pred_fallthru
          _
        // Predicated region
        $region83: #{inpaint_generator_forward.78} parent=65 // pred_check
          %p577 = pneg %p135
        $region84: #{inpaint_generator_forward.78} parent=65 // pred_check_branch
          %579 = sbr.rel (%p577) target = $region86
        $region85: #{inpaint_generator_forward.78} parent=65 // pred_region
          %s580 = smul.u32 4, %s19
          %p581 = scmp.lt.s32.totalorder %s580, 3
          %s582 = scalar_select %p581, %s580, 3
          %p583 = scmp.lt.s32.totalorder %s20, 0
          %s584 = scalar_select %p583, %s20, 0
          %s585 = sadd.s32 %s584, %s582
          %s586 = smul.addr %s585, 4
          %s587 = scalar_lea.vmem %s3, %s586
        $region86: #{inpaint_generator_forward.78} parent=65 // pred_fallthru
          _
      $region66: #{inpaint_generator_forward.78} parent=5 // pred_fallthru
        _
      %p588 = scmp.le.s32.totalorder 2, %s9
      // Predicated region
      $region87: #{inpaint_generator_forward.78} parent=5 // pred_check
        %p589 = pneg %p588
      $region88: #{inpaint_generator_forward.78} parent=5 // pred_check_branch
        %591 = sbr.rel (%p589) target = $region90
      $region89: #{inpaint_generator_forward.78} parent=5 // pred_region
        %s592 = ssub.s32 %s9, 2
      $region90: #{inpaint_generator_forward.78} parent=5 // pred_fallthru
        _
    $region6: #{inpaint_generator_forward.78} parent=1 // loop_footer
      %s13 = sadd.s32 1, %s9
    $region7: #{inpaint_generator_forward.78} parent=1 // loop_footer_branch
      %8 = sbr.rel target = $region3
    $region8: #{inpaint_generator_forward.78} parent=1 // loop_exit
      _

// kernel: inpaint_generator_forward.82
$region0: #{inpaint_generator_forward.82}
  #allocation0 [shape = 'u32[]', space=smem, size = 0x4, offset = 0x4, fixed_abs, tag = 'smem constant byte address 0x4 - core index']
  #allocation1 [shape = 'u32[144,128]{1,0:T(1,128)}', space=vmem, size = 0x12000, scoped, tag = 'internal scratch']
  #allocation2 [shape = 'f32[128,128]{1,0:T(8,128)}', space=vmem, size = 0x10000, scoped, tag = 'scratch operand']
  %s0 = inlined_call_operand.vmem [shape: bf16[128,512], index: 0, kind: input, shape index: {}]
  %s1 = inlined_call_operand.vmem [shape: bf16[512,128], index: 1, kind: input, shape index: {}]
  %s2 = inlined_call_operand.vmem [shape: f32[1,128], index: 2, kind: input, shape index: {}]
  %s3 = inlined_call_operand.vmem [shape: bf16[128,128], index: 3, kind: output, shape index: {}]
  %s4 = sld [smem:[#allocation0]]
  $region91: #{inpaint_generator_forward.82} parent=0
    _
  %s6 = ssub.s32 1, %s4
  %s7 = scalar_select 0, %s6, %s4
  $region1: #{inpaint_generator_forward.82} parent=0
    #allocation3 [shape = 'u8[131072]{0}', space=vmem, size = 0x20000, scoped, tag = 'input window, operand 0']
    loop: start=0, step=1, limit=4
    $region2: #{inpaint_generator_forward.82} parent=1 // loop_pre_header
      _
    $region3: #{inpaint_generator_forward.82} parent=1 // loop_header
      %s9 = sphi 0, %s13
      %p10 = scmp.ge.s32.totalorder %s9, 4
      %s16 = sphi 0, %s35
      %s17 = sphi 0, %s31
      %s18 = sphi 0, %s27
      %s19 = sphi 0, %s16
      %s20 = sphi 0, %s17
      %s21 = sphi 0, %s18
      %s22 = sphi 0, %s19
      %s23 = sphi 0, %s20
      %s24 = sphi 0, %s21
      %s40 = sphi 0, %s42
      %s43 = sphi 0, %s40
      %s44 = sphi 0, %s43
      %s60 = sphi 0, %s44
      %s68 = sphi 0, %s70
      %s71 = sphi 0, %s68
      %s72 = sphi 0, %s71
      %s88 = sphi 0, %s72
      %s94 = sphi 0, %s96
      %s97 = sphi 0, %s94
      %s98 = sphi 0, %s97
      %s114 = sphi 0, %s98
      %s122 = sphi 0, %s124
      %s125 = sphi 0, %s122
      %s126 = sphi 0, %s125
      %s142 = sphi 0, %s126
    $region4: #{inpaint_generator_forward.82} parent=1 // loop_header_branch
      %12 = sbr.rel (%p10) target = $region8
    $region5: #{inpaint_generator_forward.82} parent=1 // loop_body
      %s14 = ssub.s32 %s9, 1
      %s15 = ssub.s32 %s9, 2
      %s25 = sadd.s32 1, %s18
      %p26 = scmp.ge.s32.totalorder %s25, 2
      %s27 = scalar_select %p26, 0, %s25
      %s28 = sadd.s32 1, %s17
      %s29 = scalar_select %p26, %s28, %s17
      %p30 = scmp.ge.s32.totalorder %s29, 1
      %s31 = scalar_select %p30, 0, %s29
      %s32 = sadd.s32 1, %s16
      %s33 = scalar_select %p30, %s32, %s16
      %p34 = scmp.ge.s32.totalorder %s33, 1
      %s35 = scalar_select %p34, 0, %s33
      %s36 = ssub.s32 %s16, %s35
      %s37 = ssub.s32 %s18, %s27
      %s38 = sor.u32 %s36, %s37
      %p39 = scmp.eq.s32.totalorder %s38, 0
      %s41 = sadd.s32 %s40, 1
      %s42 = scalar_select %p39, %s40, %s41
      %p45 = pneg %p39
      %p46 = scmp.eq.s32.totalorder %s9, 1
      %p47 = por %p45, %p46
      %p48 = scmp.ne.s32.totalorder %s40, %s43
      %p49 = scmp.eq.s32.totalorder %s9, 0
      %p50 = por %p48, %p49
      %p51 = scmp.ne.s32.totalorder %s40, %s43
      %p52 = scmp.eq.s32.totalorder %s14, 1
      %p53 = por %p51, %p52
      %p54 = scmp.ne.s32.totalorder %s43, %s44
      %p55 = scmp.eq.s32.totalorder %s14, 0
      %p56 = por %p54, %p55
      %p57 = scmp.ne.s32.totalorder %s43, %s44
      %p58 = scmp.eq.s32.totalorder %s15, 1
      %p59 = por %p57, %p58
      %p61 = scmp.ne.s32.totalorder %s44, %s60
      %p62 = scmp.eq.s32.totalorder %s15, 0
      %p63 = por %p61, %p62
      %s64 = ssub.s32 %s18, %s27
      %s65 = ssub.s32 %s17, %s31
      %s66 = sor.u32 %s64, %s65
      %p67 = scmp.eq.s32.totalorder %s66, 0
      %s69 = sadd.s32 %s68, 1
      %s70 = scalar_select %p67, %s68, %s69
      %p73 = pneg %p67
      %p74 = scmp.eq.s32.totalorder %s9, 1
      %p75 = por %p73, %p74
      %p76 = scmp.ne.s32.totalorder %s68, %s71
      %p77 = scmp.eq.s32.totalorder %s9, 0
      %p78 = por %p76, %p77
      %p79 = scmp.ne.s32.totalorder %s68, %s71
      %p80 = scmp.eq.s32.totalorder %s14, 1
      %p81 = por %p79, %p80
      %p82 = scmp.ne.s32.totalorder %s71, %s72
      %p83 = scmp.eq.s32.totalorder %s14, 0
      %p84 = por %p82, %p83
      %p85 = scmp.ne.s32.totalorder %s71, %s72
      %p86 = scmp.eq.s32.totalorder %s15, 1
      %p87 = por %p85, %p86
      %p89 = scmp.ne.s32.totalorder %s72, %s88
      %p90 = scmp.eq.s32.totalorder %s15, 0
      %p91 = por %p89, %p90
      %s92 = ssub.s32 %s17, %s31
      %p93 = scmp.eq.s32.totalorder %s92, 0
      %s95 = sadd.s32 %s94, 1
      %s96 = scalar_select %p93, %s94, %s95
      %p99 = pneg %p93
      %p100 = scmp.eq.s32.totalorder %s9, 1
      %p101 = por %p99, %p100
      %p102 = scmp.ne.s32.totalorder %s94, %s97
      %p103 = scmp.eq.s32.totalorder %s9, 0
      %p104 = por %p102, %p103
      %p105 = scmp.ne.s32.totalorder %s94, %s97
      %p106 = scmp.eq.s32.totalorder %s14, 1
      %p107 = por %p105, %p106
      %p108 = scmp.ne.s32.totalorder %s97, %s98
      %p109 = scmp.eq.s32.totalorder %s14, 0
      %p110 = por %p108, %p109
      %p111 = scmp.ne.s32.totalorder %s97, %s98
      %p112 = scmp.eq.s32.totalorder %s15, 1
      %p113 = por %p111, %p112
      %p115 = scmp.ne.s32.totalorder %s98, %s114
      %p116 = scmp.eq.s32.totalorder %s15, 0
      %p117 = por %p115, %p116
      %s118 = ssub.s32 %s16, %s35
      %s119 = ssub.s32 %s17, %s31
      %s120 = sor.u32 %s118, %s119
      %p121 = scmp.eq.s32.totalorder %s120, 0
      %s123 = sadd.s32 %s122, 1
      %s124 = scalar_select %p121, %s122, %s123
      %p127 = pneg %p121
      %p128 = scmp.eq.s32.totalorder %s9, 1
      %p129 = por %p127, %p128
      %p130 = scmp.ne.s32.totalorder %s122, %s125
      %p131 = scmp.eq.s32.totalorder %s9, 0
      %p132 = por %p130, %p131
      %p133 = scmp.ne.s32.totalorder %s122, %s125
      %p134 = scmp.eq.s32.totalorder %s14, 1
      %p135 = por %p133, %p134
      %p136 = scmp.ne.s32.totalorder %s125, %s126
      %p137 = scmp.eq.s32.totalorder %s14, 0
      %p138 = por %p136, %p137
      %p139 = scmp.ne.s32.totalorder %s125, %s126
      %p140 = scmp.eq.s32.totalorder %s15, 1
      %p141 = por %p139, %p140
      %p143 = scmp.ne.s32.totalorder %s126, %s142
      %p144 = scmp.eq.s32.totalorder %s15, 0
      %p145 = por %p143, %p144
      %p146 = scmp.le.s32.totalorder 1, %s9
      %p147 = scmp.lt.s32.totalorder %s9, 3
      %p148 = pnand %p146, %p147
      %p149 = pneg %p148
      // Predicated region
      $region9: #{inpaint_generator_forward.82} parent=5 // pred_check
        _
      $region10: #{inpaint_generator_forward.82} parent=5 // pred_check_branch
        %151 = sbr.rel (%p148) target = $region12
      $region11: #{inpaint_generator_forward.82} parent=5 // pred_region
        %s152 = ssub.s32 %s9, 1
        // Predicated region
        $region13: #{inpaint_generator_forward.82} parent=11 // pred_check
          %p153 = pneg %p110
        $region14: #{inpaint_generator_forward.82} parent=11 // pred_check_branch
          %155 = sbr.rel (%p153) target = $region16
        $region15: #{inpaint_generator_forward.82} parent=11 // pred_region
          %p156 = scmp.lt.s32.totalorder %s20, 0
          %s157 = scalar_select %p156, %s20, 0
          %s158 = scalar_lea.vmem %s2, %s157
        $region16: #{inpaint_generator_forward.82} parent=11 // pred_fallthru
          _
      $region12: #{inpaint_generator_forward.82} parent=5 // pred_fallthru
        _
      %p159 = scmp.lt.s32.totalorder %s9, 2
      // Predicated region
      $region17: #{inpaint_generator_forward.82} parent=5 // pred_check
        %p160 = pneg %p159
      $region18: #{inpaint_generator_forward.82} parent=5 // pred_check_branch
        %162 = sbr.rel (%p160) target = $region20
      $region19: #{inpaint_generator_forward.82} parent=5 // pred_region
        // Predicated region
        $region21: #{inpaint_generator_forward.82} parent=19 // pred_check
          %p163 = pneg %p50
        $region22: #{inpaint_generator_forward.82} parent=19 // pred_check_branch
          %165 = sbr.rel (%p163) target = $region24
        $region23: #{inpaint_generator_forward.82} parent=19 // pred_region
          %s166 = sand.u32 %s40, 1
          %s167 = sand.u32 %s40, 1
          %s168 = smul.addr %s167, 128
          %s169 = scalar_lea.vmem [#allocation3], %s168
          %s170 = smul.u32 16, %s16
          %s171 = smul.u32 2, %s18
          %s172 = smul.addr %s170, 4
          %s173 = sadd.s32 %s171, %s172
          %s174 = smul.addr %s173, 4
          %s175 = scalar_lea.vmem %s0, %s174
          // Predicated region
          $region25: #{inpaint_generator_forward.82} parent=23 // pred_check
            _
          $region26: #{inpaint_generator_forward.82} parent=23 // pred_check_branch
            %177 = sbr.rel (0) target = $region28
          $region27: #{inpaint_generator_forward.82} parent=23 // pred_region
            // Predicated region
            $region29: #{inpaint_generator_forward.82} parent=27 // pred_check
              _
            $region30: #{inpaint_generator_forward.82} parent=27 // pred_check_branch
              %179 = sbr.rel (0) target = $region32
            $region31: #{inpaint_generator_forward.82} parent=27 // pred_region
              // Predicated region
              $region44: #{inpaint_generator_forward.82} parent=31 // pred_check
                _
              $region45: #{inpaint_generator_forward.82} parent=31 // pred_check_branch
                %224 = sbr.rel (0) target = $region47
              $region46: #{inpaint_generator_forward.82} parent=31 // pred_region
                loop: start=0, step=1, limit=1
                $region48: #{inpaint_generator_forward.82} parent=46 // loop_pre_header
                  _
                $region49: #{inpaint_generator_forward.82} parent=46 // loop_header
                  %s226 = sphi 0, %s230
                  %p227 = scmp.ge.s32.totalorder %s226, 1
                  %s231 = sphi %s175, %s175
                  %s232 = sphi %s169, %s169
                $region50: #{inpaint_generator_forward.82} parent=46 // loop_header_branch
                  %229 = sbr.rel (%p227) target = $region54
                $region51: #{inpaint_generator_forward.82} parent=46 // loop_body
                  %v233 = vld [vmem:[%s231] sm:$0xff]
                  %234 = vst [vmem:[%s232] sm:$0xff] %v233
                  %v235 = vld [vmem:[%s231 + $0x10] sm:$0xff]
                  %236 = vst [vmem:[%s232 + $0x8] sm:$0xff] %v235
                  %v237 = vld [vmem:[%s231 + $0x20] sm:$0xff]
                  %238 = vst [vmem:[%s232 + $0x10] sm:$0xff] %v237
                  %v239 = vld [vmem:[%s231 + $0x30] sm:$0xff]
                  %240 = vst [vmem:[%s232 + $0x18] sm:$0xff] %v239
                  %v241 = vld [vmem:[%s231 + $0x40] sm:$0xff]
                  %242 = vst [vmem:[%s232 + $0x20] sm:$0xff] %v241
                  %v243 = vld [vmem:[%s231 + $0x50] sm:$0xff]
                  %244 = vst [vmem:[%s232 + $0x28] sm:$0xff] %v243
                  %v245 = vld [vmem:[%s231 + $0x60] sm:$0xff]
                  %246 = vst [vmem:[%s232 + $0x30] sm:$0xff] %v245
                  %v247 = vld [vmem:[%s231 + $0x70] sm:$0xff]
                  %248 = vst [vmem:[%s232 + $0x38] sm:$0xff] %v247
                  %v249 = vld [vmem:[%s231 + $0x80] sm:$0xff]
                  %250 = vst [vmem:[%s232 + $0x40] sm:$0xff] %v249
                  %v251 = vld [vmem:[%s231 + $0x90] sm:$0xff]
                  %252 = vst [vmem:[%s232 + $0x48] sm:$0xff] %v251
                  %v253 = vld [vmem:[%s231 + $0xa0] sm:$0xff]
                  %254 = vst [vmem:[%s232 + $0x50] sm:$0xff] %v253
                  %v255 = vld [vmem:[%s231 + $0xb0] sm:$0xff]
                  %256 = vst [vmem:[%s232 + $0x58] sm:$0xff] %v255
                  %v257 = vld [vmem:[%s231 + $0xc0] sm:$0xff]
                  %258 = vst [vmem:[%s232 + $0x60] sm:$0xff] %v257
                  %v259 = vld [vmem:[%s231 + $0xd0] sm:$0xff]
                  %260 = vst [vmem:[%s232 + $0x68] sm:$0xff] %v259
                  %v261 = vld [vmem:[%s231 + $0xe0] sm:$0xff]
                  %262 = vst [vmem:[%s232 + $0x70] sm:$0xff] %v261
                  %v263 = vld [vmem:[%s231 + $0xf0] sm:$0xff]
                  %264 = vst [vmem:[%s232 + $0x78] sm:$0xff] %v263
                $region52: #{inpaint_generator_forward.82} parent=46 // loop_footer
                  %s230 = sadd.s32 1, %s226
                $region53: #{inpaint_generator_forward.82} parent=46 // loop_footer_branch
                  %225 = sbr.rel target = $region49
                $region54: #{inpaint_generator_forward.82} parent=46 // loop_exit
                  _
              $region47: #{inpaint_generator_forward.82} parent=31 // pred_fallthru
                _
              // Predicated region
              $region55: #{inpaint_generator_forward.82} parent=31 // pred_check
                _
              $region56: #{inpaint_generator_forward.82} parent=31 // pred_check_branch
                %266 = sbr.rel target = $region58
              $region57: #{inpaint_generator_forward.82} parent=31 // pred_region
                _
              $region58: #{inpaint_generator_forward.82} parent=31 // pred_fallthru
                _
            $region32: #{inpaint_generator_forward.82} parent=27 // pred_fallthru
              _
            // Predicated region
            $region33: #{inpaint_generator_forward.82} parent=27 // pred_check
              _
            $region34: #{inpaint_generator_forward.82} parent=27 // pred_check_branch
              %181 = sbr.rel target = $region36
            $region35: #{inpaint_generator_forward.82} parent=27 // pred_region
              loop: start=0, step=1, limit=1
              $region37: #{inpaint_generator_forward.82} parent=35 // loop_pre_header
                _
              $region38: #{inpaint_generator_forward.82} parent=35 // loop_header
                %s184 = sphi 0, %s188
                %p185 = scmp.ge.s32.totalorder %s184, 1
                %s189 = sphi %s175, %s175
                %s190 = sphi %s169, %s169
              $region39: #{inpaint_generator_forward.82} parent=35 // loop_header_branch
                %187 = sbr.rel (%p185) target = $region43
              $region40: #{inpaint_generator_forward.82} parent=35 // loop_body
                %v191 = vld [vmem:[%s189] sm:$0xff]
                %192 = vst [vmem:[%s190] sm:$0xff] %v191
                %v193 = vld [vmem:[%s189 + $0x10] sm:$0xff]
                %194 = vst [vmem:[%s190 + $0x8] sm:$0xff] %v193
                %v195 = vld [vmem:[%s189 + $0x20] sm:$0xff]
                %196 = vst [vmem:[%s190 + $0x10] sm:$0xff] %v195
                %v197 = vld [vmem:[%s189 + $0x30] sm:$0xff]
                %198 = vst [vmem:[%s190 + $0x18] sm:$0xff] %v197
                %v199 = vld [vmem:[%s189 + $0x40] sm:$0xff]
                %200 = vst [vmem:[%s190 + $0x20] sm:$0xff] %v199
                %v201 = vld [vmem:[%s189 + $0x50] sm:$0xff]
                %202 = vst [vmem:[%s190 + $0x28] sm:$0xff] %v201
                %v203 = vld [vmem:[%s189 + $0x60] sm:$0xff]
                %204 = vst [vmem:[%s190 + $0x30] sm:$0xff] %v203
                %v205 = vld [vmem:[%s189 + $0x70] sm:$0xff]
                %206 = vst [vmem:[%s190 + $0x38] sm:$0xff] %v205
                %v207 = vld [vmem:[%s189 + $0x80] sm:$0xff]
                %208 = vst [vmem:[%s190 + $0x40] sm:$0xff] %v207
                %v209 = vld [vmem:[%s189 + $0x90] sm:$0xff]
                %210 = vst [vmem:[%s190 + $0x48] sm:$0xff] %v209
                %v211 = vld [vmem:[%s189 + $0xa0] sm:$0xff]
                %212 = vst [vmem:[%s190 + $0x50] sm:$0xff] %v211
                %v213 = vld [vmem:[%s189 + $0xb0] sm:$0xff]
                %214 = vst [vmem:[%s190 + $0x58] sm:$0xff] %v213
                %v215 = vld [vmem:[%s189 + $0xc0] sm:$0xff]
                %216 = vst [vmem:[%s190 + $0x60] sm:$0xff] %v215
                %v217 = vld [vmem:[%s189 + $0xd0] sm:$0xff]
                %218 = vst [vmem:[%s190 + $0x68] sm:$0xff] %v217
                %v219 = vld [vmem:[%s189 + $0xe0] sm:$0xff]
                %220 = vst [vmem:[%s190 + $0x70] sm:$0xff] %v219
                %v221 = vld [vmem:[%s189 + $0xf0] sm:$0xff]
                %222 = vst [vmem:[%s190 + $0x78] sm:$0xff] %v221
              $region41: #{inpaint_generator_forward.82} parent=35 // loop_footer
                %s188 = sadd.s32 1, %s184
              $region42: #{inpaint_generator_forward.82} parent=35 // loop_footer_branch
                %183 = sbr.rel target = $region38
              $region43: #{inpaint_generator_forward.82} parent=35 // loop_exit
                _
            $region36: #{inpaint_generator_forward.82} parent=27 // pred_fallthru
              _
          $region28: #{inpaint_generator_forward.82} parent=23 // pred_fallthru
            _
          %267 = vnop
        $region24: #{inpaint_generator_forward.82} parent=19 // pred_fallthru
          _
        // Predicated region
        $region59: #{inpaint_generator_forward.82} parent=19 // pred_check
          %p268 = pneg %p78
        $region60: #{inpaint_generator_forward.82} parent=19 // pred_check_branch
          %270 = sbr.rel (%p268) target = $region62
        $region61: #{inpaint_generator_forward.82} parent=19 // pred_region
          %s271 = smul.u32 32, %s18
          %p272 = scmp.lt.s32.totalorder %s271, 63
          %s273 = scalar_select %p272, %s271, 63
          %p274 = scmp.lt.s32.totalorder %s17, 0
          %s275 = scalar_select %p274, %s17, 0
          %s276 = sadd.s32 %s275, %s273
          %s277 = smul.addr %s276, 4
          %s278 = scalar_lea.vmem %s1, %s277
          %s279 = smul.u32 32, %s18
        $region62: #{inpaint_generator_forward.82} parent=19 // pred_fallthru
          _
      $region20: #{inpaint_generator_forward.82} parent=5 // pred_fallthru
        _
      %p280 = scmp.le.s32.totalorder 1, %s9
      %p281 = scmp.lt.s32.totalorder %s9, 3
      %p282 = pnand %p280, %p281
      %p283 = pneg %p282
      // Predicated region
      $region63: #{inpaint_generator_forward.82} parent=5 // pred_check
        _
      $region64: #{inpaint_generator_forward.82} parent=5 // pred_check_branch
        %285 = sbr.rel (%p282) target = $region66
      $region65: #{inpaint_generator_forward.82} parent=5 // pred_region
        %s286 = ssub.s32 %s9, 1
        %s287 = sand.u32 %s43, 1
        %s288 = sand.u32 %s43, 1
        %s289 = smul.addr %s288, 128
        %s290 = scalar_lea.vmem [#allocation3], %s289
        // Predicated region
        $region67: #{inpaint_generator_forward.82} parent=65 // pred_check
          %p291 = pneg %p56
        $region68: #{inpaint_generator_forward.82} parent=65 // pred_check_branch
          %293 = sbr.rel (%p291) target = $region70
        $region69: #{inpaint_generator_forward.82} parent=65 // pred_region
          _
        $region70: #{inpaint_generator_forward.82} parent=65 // pred_fallthru
          _
        %s294 = sand.u32 %s43, 1
        %s295 = sand.u32 %s43, 1
        %s296 = smul.addr %s295, 128
        %s297 = scalar_lea.vmem [#allocation3], %s296
        %p298 = pneg %p56
        %p299 = pneg %p53
        %s300 = smul.u32 32, %s21
        %p301 = scmp.lt.s32.totalorder %s300, 63
        %s302 = scalar_select %p301, %s300, 63
        %p303 = scmp.lt.s32.totalorder %s20, 0
        %s304 = scalar_select %p303, %s20, 0
        %s305 = sadd.s32 %s304, %s302
        %s306 = smul.addr %s305, 4
        %s307 = scalar_lea.vmem %s1, %s306
        %p308 = pneg %p84
        %p309 = pneg %p81
        %p310 = scmp.lt.s32.totalorder %s20, 0
        %s311 = scalar_select %p310, %s20, 0
        %s312 = scalar_lea.vmem %s2, %s311
        %p313 = pneg %p110
        %p314 = pneg %p107
        %p315 = pneg %p138
        %p316 = pneg %p135
        %s317 = smul.u32 16, %s19
        %p318 = scmp.lt.s32.totalorder %s317, 15
        %s319 = scalar_select %p318, %s317, 15
        %p320 = scmp.lt.s32.totalorder %s20, 0
        %s321 = scalar_select %p320, %s20, 0
        %s322 = sadd.s32 %s321, %s319
        %s323 = smul.addr %s322, 4
        %s324 = scalar_lea.vmem %s3, %s323
        %s325 = smul.u32 16, %s19
        %s326 = smul.u32 2, %s21
        %s327 = smul.u32 32, %s21
        %p328 = scmp.lt.s32.totalorder %s327, 63
        %s329 = scalar_select %p328, %s327, 63
        %p330 = scmp.lt.s32.totalorder %s20, 0
        %s331 = scalar_select %p330, %s20, 0
        %s332 = sadd.s32 %s331, %s329
        %s333 = smul.addr %s332, 4
        %s334 = scalar_lea.vmem %s1, %s333
        %s335 = smul.u32 32, %s21
        %p336 = scmp.lt.s32.totalorder %s20, 0
        %s337 = scalar_select %p336, %s20, 0
        %s338 = scalar_lea.vmem %s2, %s337
        %s339 = smul.u32 16, %s19
        %p340 = scmp.lt.s32.totalorder %s339, 15
        %s341 = scalar_select %p340, %s339, 15
        %p342 = scmp.lt.s32.totalorder %s20, 0
        %s343 = scalar_select %p342, %s20, 0
        %s344 = sadd.s32 %s343, %s341
        %s345 = smul.addr %s344, 4
        %s346 = scalar_lea.vmem %s3, %s345
        %s347 = smul.u32 16, %s19
        %p349 = scmp.eq.s32.totalorder %s21, 0
        // Predicated region
        $region71: #{inpaint_generator_forward.82} parent=65 // pred_check
          %p350 = pneg %p349
        $region72: #{inpaint_generator_forward.82} parent=65 // pred_check_branch
          %352 = sbr.rel (%p350) target = $region74
        $region73: #{inpaint_generator_forward.82} parent=65 // pred_region
          %353 = vst [vmem:[#allocation2] sm:$0xff] 0.0
          %354 = vst [vmem:[#allocation2 + $0x8] sm:$0xff] 0.0
          %355 = vst [vmem:[#allocation2 + $0x10] sm:$0xff] 0.0
          %356 = vst [vmem:[#allocation2 + $0x18] sm:$0xff] 0.0
          %357 = vst [vmem:[#allocation2 + $0x20] sm:$0xff] 0.0
          %358 = vst [vmem:[#allocation2 + $0x28] sm:$0xff] 0.0
          %359 = vst [vmem:[#allocation2 + $0x30] sm:$0xff] 0.0
          %360 = vst [vmem:[#allocation2 + $0x38] sm:$0xff] 0.0
          %361 = vst [vmem:[#allocation2 + $0x40] sm:$0xff] 0.0
          %362 = vst [vmem:[#allocation2 + $0x48] sm:$0xff] 0.0
          %363 = vst [vmem:[#allocation2 + $0x50] sm:$0xff] 0.0
          %364 = vst [vmem:[#allocation2 + $0x58] sm:$0xff] 0.0
          %365 = vst [vmem:[#allocation2 + $0x60] sm:$0xff] 0.0
          %366 = vst [vmem:[#allocation2 + $0x68] sm:$0xff] 0.0
          %367 = vst [vmem:[#allocation2 + $0x70] sm:$0xff] 0.0
          %368 = vst [vmem:[#allocation2 + $0x78] sm:$0xff] 0.0
        $region74: #{inpaint_generator_forward.82} parent=65 // pred_fallthru
          _
        %v369 = vld [vmem:[#allocation2] sm:$0xff]
        %v370 = vld [vmem:[#allocation2 + $0x8] sm:$0xff]
        %v371 = vld [vmem:[#allocation2 + $0x10] sm:$0xff]
        %v372 = vld [vmem:[#allocation2 + $0x18] sm:$0xff]
        %v373 = vld [vmem:[#allocation2 + $0x20] sm:$0xff]
        %v374 = vld [vmem:[#allocation2 + $0x28] sm:$0xff]
        %v375 = vld [vmem:[#allocation2 + $0x30] sm:$0xff]
        %v376 = vld [vmem:[#allocation2 + $0x38] sm:$0xff]
        %v377 = vld [vmem:[#allocation2 + $0x40] sm:$0xff]
        %v378 = vld [vmem:[#allocation2 + $0x48] sm:$0xff]
        %v379 = vld [vmem:[#allocation2 + $0x50] sm:$0xff]
        %v380 = vld [vmem:[#allocation2 + $0x58] sm:$0xff]
        %v381 = vld [vmem:[#allocation2 + $0x60] sm:$0xff]
        %v382 = vld [vmem:[#allocation2 + $0x68] sm:$0xff]
        %v383 = vld [vmem:[#allocation2 + $0x70] sm:$0xff]
        %v384 = vld [vmem:[#allocation2 + $0x78] sm:$0xff]
        %v385 = vld [vmem:[%s290] sm:$0xff]
        %v386 = vld [vmem:[%s290 + $0x8] sm:$0xff]
        %v387 = vld [vmem:[%s290 + $0x10] sm:$0xff]
        %v388 = vld [vmem:[%s290 + $0x18] sm:$0xff]
        %v389 = vld [vmem:[%s290 + $0x20] sm:$0xff]
        %v390 = vld [vmem:[%s290 + $0x28] sm:$0xff]
        %v391 = vld [vmem:[%s290 + $0x30] sm:$0xff]
        %v392 = vld [vmem:[%s290 + $0x38] sm:$0xff]
        %v393 = vld [vmem:[%s290 + $0x40] sm:$0xff]
        %v394 = vld [vmem:[%s290 + $0x48] sm:$0xff]
        %v395 = vld [vmem:[%s290 + $0x50] sm:$0xff]
        %v396 = vld [vmem:[%s290 + $0x58] sm:$0xff]
        %v397 = vld [vmem:[%s290 + $0x60] sm:$0xff]
        %v398 = vld [vmem:[%s290 + $0x68] sm:$0xff]
        %v399 = vld [vmem:[%s290 + $0x70] sm:$0xff]
        %v400 = vld [vmem:[%s290 + $0x78] sm:$0xff]
        %v401 = vld [vmem:[%s334] sm:$0xf]
        %v402 = vld [vmem:[%s334 + $0x4] sm:$0xf]
        %v403 = vld [vmem:[%s334 + $0x8] sm:$0xf]
        %v404 = vld [vmem:[%s334 + $0xc] sm:$0xf]
        %v405 = vld [vmem:[%s334 + $0x10] sm:$0xf]
        %v406 = vld [vmem:[%s334 + $0x14] sm:$0xf]
        %v407 = vld [vmem:[%s334 + $0x18] sm:$0xf]
        %v408 = vld [vmem:[%s334 + $0x1c] sm:$0xf]
        %v409 = vld [vmem:[%s334 + $0x20] sm:$0xf]
        %v410 = vld [vmem:[%s334 + $0x24] sm:$0xf]
        %v411 = vld [vmem:[%s334 + $0x28] sm:$0xf]
        %v412 = vld [vmem:[%s334 + $0x2c] sm:$0xf]
        %v413 = vld [vmem:[%s334 + $0x30] sm:$0xf]
        %v414 = vld [vmem:[%s334 + $0x34] sm:$0xf]
        %v415 = vld [vmem:[%s334 + $0x38] sm:$0xf]
        %v416 = vld [vmem:[%s334 + $0x3c] sm:$0xf]
        %v417 = vld [vmem:[%s334 + $0x40] sm:$0xf]
        %v418 = vld [vmem:[%s334 + $0x44] sm:$0xf]
        %v419 = vld [vmem:[%s334 + $0x48] sm:$0xf]
        %v420 = vld [vmem:[%s334 + $0x4c] sm:$0xf]
        %v421 = vld [vmem:[%s334 + $0x50] sm:$0xf]
        %v422 = vld [vmem:[%s334 + $0x54] sm:$0xf]
        %v423 = vld [vmem:[%s334 + $0x58] sm:$0xf]
        %v424 = vld [vmem:[%s334 + $0x5c] sm:$0xf]
        %v425 = vld [vmem:[%s334 + $0x60] sm:$0xf]
        %v426 = vld [vmem:[%s334 + $0x64] sm:$0xf]
        %v427 = vld [vmem:[%s334 + $0x68] sm:$0xf]
        %v428 = vld [vmem:[%s334 + $0x6c] sm:$0xf]
        %v429 = vld [vmem:[%s334 + $0x70] sm:$0xf]
        %v430 = vld [vmem:[%s334 + $0x74] sm:$0xf]
        %v431 = vld [vmem:[%s334 + $0x78] sm:$0xf]
        %v432 = vld [vmem:[%s334 + $0x7c] sm:$0xf]
        %v449 = vunpack.c.l.b16 %v385
        %v450 = vunpack.c.h.b16 %v385
        %v451 = vunpack.c.l.b16 %v386
        %v452 = vunpack.c.h.b16 %v386
        %v453 = vunpack.c.l.b16 %v387
        %v454 = vunpack.c.h.b16 %v387
        %v455 = vunpack.c.l.b16 %v388
        %v456 = vunpack.c.h.b16 %v388
        %v457 = vunpack.c.l.b16 %v389
        %v458 = vunpack.c.h.b16 %v389
        %v459 = vunpack.c.l.b16 %v390
        %v460 = vunpack.c.h.b16 %v390
        %v461 = vunpack.c.l.b16 %v391
        %v462 = vunpack.c.h.b16 %v391
        %v463 = vunpack.c.l.b16 %v392
        %v464 = vunpack.c.h.b16 %v392
        %v465 = vunpack.c.l.b16 %v393
        %v466 = vunpack.c.h.b16 %v393
        %v467 = vunpack.c.l.b16 %v394
        %v468 = vunpack.c.h.b16 %v394
        %v469 = vunpack.c.l.b16 %v395
        %v470 = vunpack.c.h.b16 %v395
        %v471 = vunpack.c.l.b16 %v396
        %v472 = vunpack.c.h.b16 %v396
        %v473 = vunpack.c.l.b16 %v397
        %v474 = vunpack.c.h.b16 %v397
        %v475 = vunpack.c.l.b16 %v398
        %v476 = vunpack.c.h.b16 %v398
        %v477 = vunpack.c.l.b16 %v399
        %v478 = vunpack.c.h.b16 %v399
        %v479 = vunpack.c.l.b16 %v400
        %v480 = vunpack.c.h.b16 %v400
        %v481 = vpack.c.b16 %v451, %v449
        %v482 = vpack.c.b16 %v452, %v450
        %v483 = vpack.c.b16 %v455, %v453
        %v484 = vpack.c.b16 %v456, %v454
        %v485 = vpack.c.b16 %v459, %v457
        %v486 = vpack.c.b16 %v460, %v458
        %v487 = vpack.c.b16 %v463, %v461
        %v488 = vpack.c.b16 %v464, %v462
        %v489 = vpack.c.b16 %v467, %v465
        %v490 = vpack.c.b16 %v468, %v466
        %v491 = vpack.c.b16 %v471, %v469
        %v492 = vpack.c.b16 %v472, %v470
        %v493 = vpack.c.b16 %v475, %v473
        %v494 = vpack.c.b16 %v476, %v474
        %v495 = vpack.c.b16 %v479, %v477
        %v496 = vpack.c.b16 %v480, %v478
        %v545 = vunpack.c.l.b16 %v401
        %v546 = vunpack.c.l.b16 %v402
        %v547 = vunpack.c.l.b16 %v403
        %v548 = vunpack.c.l.b16 %v404
        %v549 = vunpack.c.l.b16 %v405
        %v550 = vunpack.c.l.b16 %v406
        %v551 = vunpack.c.l.b16 %v407
        %v552 = vunpack.c.l.b16 %v408
        %v553 = vunpack.c.l.b16 %v409
        %v554 = vunpack.c.l.b16 %v410
        %v555 = vunpack.c.l.b16 %v411
        %v556 = vunpack.c.l.b16 %v412
        %v557 = vunpack.c.l.b16 %v413
        %v558 = vunpack.c.l.b16 %v414
        %v559 = vunpack.c.l.b16 %v415
        %v560 = vunpack.c.l.b16 %v416
        %v561 = vunpack.c.l.b16 %v417
        %v562 = vunpack.c.l.b16 %v418
        %v563 = vunpack.c.l.b16 %v419
        %v564 = vunpack.c.l.b16 %v420
        %v565 = vunpack.c.l.b16 %v421
        %v566 = vunpack.c.l.b16 %v422
        %v567 = vunpack.c.l.b16 %v423
        %v568 = vunpack.c.l.b16 %v424
        %v569 = vunpack.c.l.b16 %v425
        %v570 = vunpack.c.l.b16 %v426
        %v571 = vunpack.c.l.b16 %v427
        %v572 = vunpack.c.l.b16 %v428
        %v573 = vunpack.c.l.b16 %v429
        %v574 = vunpack.c.l.b16 %v430
        %v575 = vunpack.c.l.b16 %v431
        %v576 = vunpack.c.l.b16 %v432
        %v577 = vpack.c.b16 %v546, %v545
        %v578 = vpack.c.b16 %v548, %v547
        %v579 = vpack.c.b16 %v550, %v549
        %v580 = vpack.c.b16 %v552, %v551
        %v581 = vpack.c.b16 %v554, %v553
        %v582 = vpack.c.b16 %v556, %v555
        %v583 = vpack.c.b16 %v558, %v557
        %v584 = vpack.c.b16 %v560, %v559
        %v585 = vpack.c.b16 %v562, %v561
        %v586 = vpack.c.b16 %v564, %v563
        %v587 = vpack.c.b16 %v566, %v565
        %v588 = vpack.c.b16 %v568, %v567
        %v589 = vpack.c.b16 %v570, %v569
        %v590 = vpack.c.b16 %v572, %v571
        %v591 = vpack.c.b16 %v574, %v573
        %v592 = vpack.c.b16 %v576, %v575
        %609 = vmatprep.subr.bf16.mxu0 0
        %610 = vmatpush1.bf16.msra.mxu0 %v577
        %611 = vmatprep.subr.bf16.mxu0 0
        %612 = vmatpush1.bf16.msra.mxu0 %v578
        %613 = vmatprep.subr.bf16.mxu0 0
        %614 = vmatpush1.bf16.msra.mxu0 %v579
        %615 = vmatprep.subr.bf16.mxu0 0
        %616 = vmatpush1.bf16.msra.mxu0 %v580
        %617 = vmatprep.subr.bf16.mxu0 0
        %618 = vmatpush1.bf16.msra.mxu0 %v581
        %619 = vmatprep.subr.bf16.mxu0 0
        %620 = vmatpush1.bf16.msra.mxu0 %v582
        %621 = vmatprep.subr.bf16.mxu0 0
        %622 = vmatpush1.bf16.msra.mxu0 %v583
        %623 = vmatprep.subr.bf16.mxu0 0
        %624 = vmatpush1.bf16.msra.mxu0 %v584
        %625 = vmatprep.subr.bf16.mxu0 0
        %626 = vmatpush1.bf16.msra.mxu0 %v585
        %627 = vmatprep.subr.bf16.mxu0 0
        %628 = vmatpush1.bf16.msra.mxu0 %v586
        %629 = vmatprep.subr.bf16.mxu0 0
        %630 = vmatpush1.bf16.msra.mxu0 %v587
        %631 = vmatprep.subr.bf16.mxu0 0
        %632 = vmatpush1.bf16.msra.mxu0 %v588
        %633 = vmatprep.subr.bf16.mxu0 0
        %634 = vmatpush1.bf16.msra.mxu0 %v589
        %635 = vmatprep.subr.bf16.mxu0 0
        %636 = vmatpush1.bf16.msra.mxu0 %v590
        %637 = vmatprep.subr.bf16.mxu0 0
        %638 = vmatpush1.bf16.msra.mxu0 %v591
        %639 = vmatprep.subr.bf16.mxu0 0
        %640 = vmatpush1.bf16.msra.mxu0 %v592
        %641 = vmatprep.mubr.bf16.mxu0 %v482
        %642 = vmatmul.mubr.bf16.gmra.mrb[0].mxu0 %v481
        %v643 = vpop.f32.mrb[0].mxu0
        %v644 = vadd.f32 0.0, %v643
        %v645 = vpop.f32.mrb[0].mxu0
        %v646 = vpop.f32.mrb[0].mxu0
        %v647 = vadd.f32 0.0, %v646
        %v648 = vpop.f32.mrb[0].mxu0
        %649 = vmatprep.mubr.bf16.mxu0 %v484
        %650 = vmatmul.mubr.bf16.gmra.mrb[0].mxu0 %v483
        %v651 = vpop.f32.mrb[0].mxu0
        %v652 = vadd.f32 0.0, %v651
        %v653 = vpop.f32.mrb[0].mxu0
        %v654 = vpop.f32.mrb[0].mxu0
        %v655 = vadd.f32 0.0, %v654
        %v656 = vpop.f32.mrb[0].mxu0
        %657 = vmatprep.mubr.bf16.mxu0 %v486
        %658 = vmatmul.mubr.bf16.gmra.mrb[0].mxu0 %v485
        %v659 = vpop.f32.mrb[0].mxu0
        %v660 = vadd.f32 0.0, %v659
        %v661 = vpop.f32.mrb[0].mxu0
        %v662 = vpop.f32.mrb[0].mxu0
        %v663 = vadd.f32 0.0, %v662
        %v664 = vpop.f32.mrb[0].mxu0
        %665 = vmatprep.mubr.bf16.mxu0 %v488
        %666 = vmatmul.mubr.bf16.gmra.mrb[0].mxu0 %v487
        %v667 = vpop.f32.mrb[0].mxu0
        %v668 = vadd.f32 0.0, %v667
        %v669 = vpop.f32.mrb[0].mxu0
        %v670 = vpop.f32.mrb[0].mxu0
        %v671 = vadd.f32 0.0, %v670
        %v672 = vpop.f32.mrb[0].mxu0
        %673 = vmatprep.mubr.bf16.mxu0 %v490
        %674 = vmatmul.mubr.bf16.gmra.mrb[0].mxu0 %v489
        %v675 = vpop.f32.mrb[0].mxu0
        %v676 = vadd.f32 0.0, %v675
        %v677 = vpop.f32.mrb[0].mxu0
        %v678 = vpop.f32.mrb[0].mxu0
        %v679 = vadd.f32 0.0, %v678
        %v680 = vpop.f32.mrb[0].mxu0
        %681 = vmatprep.mubr.bf16.mxu0 %v492
        %682 = vmatmul.mubr.bf16.gmra.mrb[0].mxu0 %v491
        %v683 = vpop.f32.mrb[0].mxu0
        %v684 = vadd.f32 0.0, %v683
        %v685 = vpop.f32.mrb[0].mxu0
        %v686 = vpop.f32.mrb[0].mxu0
        %v687 = vadd.f32 0.0, %v686
        %v688 = vpop.f32.mrb[0].mxu0
        %689 = vmatprep.mubr.bf16.mxu0 %v494
        %690 = vmatmul.mubr.bf16.gmra.mrb[0].mxu0 %v493
        %v691 = vpop.f32.mrb[0].mxu0
        %v692 = vadd.f32 0.0, %v691
        %v693 = vpop.f32.mrb[0].mxu0
        %v694 = vpop.f32.mrb[0].mxu0
        %v695 = vadd.f32 0.0, %v694
        %v696 = vpop.f32.mrb[0].mxu0
        %697 = vmatprep.mubr.bf16.mxu0 %v496
        %698 = vmatmul.mubr.bf16.gmra.mrb[0].mxu0 %v495
        %v699 = vpop.f32.mrb[0].mxu0
        %v700 = vadd.f32 0.0, %v699
        %v701 = vpop.f32.mrb[0].mxu0
        %v702 = vpop.f32.mrb[0].mxu0
        %v703 = vadd.f32 0.0, %v702
        %v704 = vpop.f32.mrb[0].mxu0
        %705 = vdwg.mxu0
        %v706 = vadd.f32 %v369, %v644
        %v707 = vadd.f32 %v370, %v647
        %v708 = vadd.f32 %v371, %v652
        %v709 = vadd.f32 %v372, %v655
        %v710 = vadd.f32 %v373, %v660
        %v711 = vadd.f32 %v374, %v663
        %v712 = vadd.f32 %v375, %v668
        %v713 = vadd.f32 %v376, %v671
        %v714 = vadd.f32 %v377, %v676
        %v715 = vadd.f32 %v378, %v679
        %v716 = vadd.f32 %v379, %v684
        %v717 = vadd.f32 %v380, %v687
        %v718 = vadd.f32 %v381, %v692
        %v719 = vadd.f32 %v382, %v695
        %v720 = vadd.f32 %v383, %v700
        %v721 = vadd.f32 %v384, %v703
        %722 = vst [vmem:[#allocation2] sm:$0xff] %v706
        %723 = vst [vmem:[#allocation2 + $0x8] sm:$0xff] %v707
        %724 = vst [vmem:[#allocation2 + $0x10] sm:$0xff] %v708
        %725 = vst [vmem:[#allocation2 + $0x18] sm:$0xff] %v709
        %726 = vst [vmem:[#allocation2 + $0x20] sm:$0xff] %v710
        %727 = vst [vmem:[#allocation2 + $0x28] sm:$0xff] %v711
        %728 = vst [vmem:[#allocation2 + $0x30] sm:$0xff] %v712
        %729 = vst [vmem:[#allocation2 + $0x38] sm:$0xff] %v713
        %730 = vst [vmem:[#allocation2 + $0x40] sm:$0xff] %v714
        %731 = vst [vmem:[#allocation2 + $0x48] sm:$0xff] %v715
        %732 = vst [vmem:[#allocation2 + $0x50] sm:$0xff] %v716
        %733 = vst [vmem:[#allocation2 + $0x58] sm:$0xff] %v717
        %734 = vst [vmem:[#allocation2 + $0x60] sm:$0xff] %v718
        %735 = vst [vmem:[#allocation2 + $0x68] sm:$0xff] %v719
        %736 = vst [vmem:[#allocation2 + $0x70] sm:$0xff] %v720
        %737 = vst [vmem:[#allocation2 + $0x78] sm:$0xff] %v721
        %p738 = scmp.eq.s32.totalorder %s21, 1
        // Predicated region
        $region75: #{inpaint_generator_forward.82} parent=65 // pred_check
          %p739 = pneg %p738
        $region76: #{inpaint_generator_forward.82} parent=65 // pred_check_branch
          %741 = sbr.rel (%p739) target = $region78
        $region77: #{inpaint_generator_forward.82} parent=65 // pred_region
          %v742 = vld [vmem:[#allocation2] sm:$0xff]
          %v743 = vld [vmem:[#allocation2 + $0x8] sm:$0xff]
          %v744 = vld [vmem:[#allocation2 + $0x10] sm:$0xff]
          %v745 = vld [vmem:[#allocation2 + $0x18] sm:$0xff]
          %v746 = vld [vmem:[#allocation2 + $0x20] sm:$0xff]
          %v747 = vld [vmem:[#allocation2 + $0x28] sm:$0xff]
          %v748 = vld [vmem:[#allocation2 + $0x30] sm:$0xff]
          %v749 = vld [vmem:[#allocation2 + $0x38] sm:$0xff]
          %v750 = vld [vmem:[#allocation2 + $0x40] sm:$0xff]
          %v751 = vld [vmem:[#allocation2 + $0x48] sm:$0xff]
          %v752 = vld [vmem:[#allocation2 + $0x50] sm:$0xff]
          %v753 = vld [vmem:[#allocation2 + $0x58] sm:$0xff]
          %v754 = vld [vmem:[#allocation2 + $0x60] sm:$0xff]
          %v755 = vld [vmem:[#allocation2 + $0x68] sm:$0xff]
          %v756 = vld [vmem:[#allocation2 + $0x70] sm:$0xff]
          %v757 = vld [vmem:[#allocation2 + $0x78] sm:$0xff]
          %v758 = vld [vmem:[%s338] sm:$0x1]
          %v760 = vlaneseq
          %v761 = vshrl.u32 %v760, 7
          %v762 = vsub.s32 0, %v761
          %v763 = vrot.slane %v758, %v762
          %v765 = vadd.f32 %v742, %v763
          %v766 = vadd.f32 %v743, %v763
          %v767 = vadd.f32 %v744, %v763
          %v768 = vadd.f32 %v745, %v763
          %v769 = vadd.f32 %v746, %v763
          %v770 = vadd.f32 %v747, %v763
          %v771 = vadd.f32 %v748, %v763
          %v772 = vadd.f32 %v749, %v763
          %v773 = vadd.f32 %v750, %v763
          %v774 = vadd.f32 %v751, %v763
          %v775 = vadd.f32 %v752, %v763
          %v776 = vadd.f32 %v753, %v763
          %v777 = vadd.f32 %v754, %v763
          %v778 = vadd.f32 %v755, %v763
          %v779 = vadd.f32 %v756, %v763
          %v780 = vadd.f32 %v757, %v763
          %v781 = vmax.f32 %v765, 0.0
          %v782 = vmax.f32 %v766, 0.0
          %v783 = vmax.f32 %v767, 0.0
          %v784 = vmax.f32 %v768, 0.0
          %v785 = vmax.f32 %v769, 0.0
          %v786 = vmax.f32 %v770, 0.0
          %v787 = vmax.f32 %v771, 0.0
          %v788 = vmax.f32 %v772, 0.0
          %v789 = vmax.f32 %v773, 0.0
          %v790 = vmax.f32 %v774, 0.0
          %v791 = vmax.f32 %v775, 0.0
          %v792 = vmax.f32 %v776, 0.0
          %v793 = vmax.f32 %v777, 0.0
          %v794 = vmax.f32 %v778, 0.0
          %v795 = vmax.f32 %v779, 0.0
          %v796 = vmax.f32 %v780, 0.0
          %v797 = vpack.c.bf16 %v782, %v781
          %v798 = vpack.c.bf16 %v784, %v783
          %v799 = vpack.c.bf16 %v786, %v785
          %v800 = vpack.c.bf16 %v788, %v787
          %v801 = vpack.c.bf16 %v790, %v789
          %v802 = vpack.c.bf16 %v792, %v791
          %v803 = vpack.c.bf16 %v794, %v793
          %v804 = vpack.c.bf16 %v796, %v795
          %v813 = vunpack.c.l.b16 %v797
          %v814 = vunpack.c.h.b16 %v797
          %v815 = vunpack.c.l.b16 %v798
          %v816 = vunpack.c.h.b16 %v798
          %v817 = vunpack.c.l.b16 %v799
          %v818 = vunpack.c.h.b16 %v799
          %v819 = vunpack.c.l.b16 %v800
          %v820 = vunpack.c.h.b16 %v800
          %v821 = vunpack.c.l.b16 %v801
          %v822 = vunpack.c.h.b16 %v801
          %v823 = vunpack.c.l.b16 %v802
          %v824 = vunpack.c.h.b16 %v802
          %v825 = vunpack.c.l.b16 %v803
          %v826 = vunpack.c.h.b16 %v803
          %v827 = vunpack.c.l.b16 %v804
          %v828 = vunpack.c.h.b16 %v804
          %v829 = vpack.c.b16 %v813, %v813
          %v830 = vpack.c.b16 %v814, %v814
          %v831 = vpack.c.b16 %v815, %v815
          %v832 = vpack.c.b16 %v816, %v816
          %v833 = vpack.c.b16 %v817, %v817
          %v834 = vpack.c.b16 %v818, %v818
          %v835 = vpack.c.b16 %v819, %v819
          %v836 = vpack.c.b16 %v820, %v820
          %v837 = vpack.c.b16 %v821, %v821
          %v838 = vpack.c.b16 %v822, %v822
          %v839 = vpack.c.b16 %v823, %v823
          %v840 = vpack.c.b16 %v824, %v824
          %v841 = vpack.c.b16 %v825, %v825
          %v842 = vpack.c.b16 %v826, %v826
          %v843 = vpack.c.b16 %v827, %v827
          %v844 = vpack.c.b16 %v828, %v828
          %861 = vst [vmem:[%s346] sm:$0xf] %v829
          %862 = vst [vmem:[%s346 + $0x4] sm:$0xf] %v830
          %863 = vst [vmem:[%s346 + $0x8] sm:$0xf] %v831
          %864 = vst [vmem:[%s346 + $0xc] sm:$0xf] %v832
          %865 = vst [vmem:[%s346 + $0x10] sm:$0xf] %v833
          %866 = vst [vmem:[%s346 + $0x14] sm:$0xf] %v834
          %867 = vst [vmem:[%s346 + $0x18] sm:$0xf] %v835
          %868 = vst [vmem:[%s346 + $0x1c] sm:$0xf] %v836
          %869 = vst [vmem:[%s346 + $0x20] sm:$0xf] %v837
          %870 = vst [vmem:[%s346 + $0x24] sm:$0xf] %v838
          %871 = vst [vmem:[%s346 + $0x28] sm:$0xf] %v839
          %872 = vst [vmem:[%s346 + $0x2c] sm:$0xf] %v840
          %873 = vst [vmem:[%s346 + $0x30] sm:$0xf] %v841
          %874 = vst [vmem:[%s346 + $0x34] sm:$0xf] %v842
          %875 = vst [vmem:[%s346 + $0x38] sm:$0xf] %v843
          %876 = vst [vmem:[%s346 + $0x3c] sm:$0xf] %v844
        $region78: #{inpaint_generator_forward.82} parent=65 // pred_fallthru
          _
        %s877 = smul.u32 16, %s19
        %p878 = scmp.lt.s32.totalorder %s877, 15
        %s879 = scalar_select %p878, %s877, 15
        %p880 = scmp.lt.s32.totalorder %s20, 0
        %s881 = scalar_select %p880, %s20, 0
        %s882 = sadd.s32 %s881, %s879
        %s883 = smul.addr %s882, 4
        %s884 = scalar_lea.vmem %s3, %s883
        // Predicated region
        $region79: #{inpaint_generator_forward.82} parent=65 // pred_check
          %p885 = pneg %p135
        $region80: #{inpaint_generator_forward.82} parent=65 // pred_check_branch
          %887 = sbr.rel (%p885) target = $region82
        $region81: #{inpaint_generator_forward.82} parent=65 // pred_region
          %s888 = smul.u32 16, %s19
        $region82: #{inpaint_generator_forward.82} parent=65 // pred_fallthru
          _
        // Predicated region
        $region83: #{inpaint_generator_forward.82} parent=65 // pred_check
          %p889 = pneg %p135
        $region84: #{inpaint_generator_forward.82} parent=65 // pred_check_branch
          %891 = sbr.rel (%p889) target = $region86
        $region85: #{inpaint_generator_forward.82} parent=65 // pred_region
          %s892 = smul.u32 16, %s19
          %p893 = scmp.lt.s32.totalorder %s892, 15
          %s894 = scalar_select %p893, %s892, 15
          %p895 = scmp.lt.s32.totalorder %s20, 0
          %s896 = scalar_select %p895, %s20, 0
          %s897 = sadd.s32 %s896, %s894
          %s898 = smul.addr %s897, 4
          %s899 = scalar_lea.vmem %s3, %s898
        $region86: #{inpaint_generator_forward.82} parent=65 // pred_fallthru
          _
      $region66: #{inpaint_generator_forward.82} parent=5 // pred_fallthru
        _
      %p900 = scmp.le.s32.totalorder 2, %s9
      // Predicated region
      $region87: #{inpaint_generator_forward.82} parent=5 // pred_check
        %p901 = pneg %p900
      $region88: #{inpaint_generator_forward.82} parent=5 // pred_check_branch
        %903 = sbr.rel (%p901) target = $region90
      $region89: #{inpaint_generator_forward.82} parent=5 // pred_region
        %s904 = ssub.s32 %s9, 2
      $region90: #{inpaint_generator_forward.82} parent=5 // pred_fallthru
        _
    $region6: #{inpaint_generator_forward.82} parent=1 // loop_footer
      %s13 = sadd.s32 1, %s9
    $region7: #{inpaint_generator_forward.82} parent=1 // loop_footer_branch
      %8 = sbr.rel target = $region3
    $region8: #{inpaint_generator_forward.82} parent=1 // loop_exit
      _

</llo_original>
